<compile_context>
chip_gen: v5e
topology: v5e:2x2
jax: 0.10.0
libtpu: 0.0.40
codegen_flags: <defaults>
</compile_context>

<pallas_src>
import jax
import jax.numpy as jnp
from jax.experimental import pallas as pl
from jax.experimental.pallas import tpu as pltpu


# -----------------------------------------------------------------------------
# Pallas kernel: one full image per grid step (grid over batch).
# -----------------------------------------------------------------------------
def src_block_kernel(
    xp_ref,    # (1, H+4, W+4, C)  spatially pre-padded input (pad=2, zeros), f32
    wf_ref,    # (25, C)  fused depthwise 5x5 weights, row-major taps, f32
    bf_ref,    # (1,  C)  fused depthwise bias, f32
    pw1_ref,   # (C, 4C)  pointconv1 weight (in, out) with LN gamma folded in, bf16
    pb1_ref,   # (1, 4C)  pointconv1 bias with LN beta folded in, f32
    gg_ref,    # (1, 4C)  GRN gamma, f32
    pw2_ref,   # (4C, C)  pointconv2 weight (in, out), bf16
    pb2_ref,   # (1,  C)  pointconv2 bias with GRN beta folded in, f32
    out_ref,   # (1, H, W, C)
):
    xp = xp_ref[0]                               # (H+4, W+4, C) f32
    Hp, Wp, C = xp.shape
    H, W = Hp - 4, Wp - 4

    # 5 W-shifted views (one sublane-shift copy each), reused for all 5 row offsets.
    xw = [xp[:, dw:dw + W, :] for dw in range(5)]
    shortcut = xw[2][2:2 + H]                    # == original (unpadded) image

    # ---- fused depthwise 5x5 conv  (== (dw1x1 + dw3x3 + dw5x5) / 3) ----------
    wf = wf_ref[...]                             # (25, C), loaded once
    acc = xw[0][0:H] * wf[0] + bf_ref[0]         # first tap initializes the accumulator
    for dh in range(5):
        for dw in range(5):
            if dh == 0 and dw == 0:
                continue
            acc = acc + xw[dw][dh:dh + H] * wf[dh * 5 + dw]

    # ---- LayerNorm over channels (affine folded into pointconv1) -------------
    mu = jnp.mean(acc, axis=-1, keepdims=True)
    ms = jnp.mean(acc * acc, axis=-1, keepdims=True)
    y = (acc - mu) * jax.lax.rsqrt(ms - mu * mu + 1e-6)

    # ---- pointconv1 (Linear dim -> 4*dim): bf16 MXU, f32 accumulation --------
    yf = y.reshape(H * W, C).astype(jnp.bfloat16)
    h = jnp.dot(yf, pw1_ref[...], preferred_element_type=jnp.float32) + pb1_ref[0]

    # ---- exact GELU (erf-based, matches torch.nn.GELU default) ---------------
    h = 0.5 * h * (1.0 + jax.lax.erf(h * 0.7071067811865476))

    # ---- GRN: L2 norm over spatial positions per channel ---------------------
    # grn(h) = gg*(h*nx) + gb + h  ==  h*(gg*nx + 1) + gb   (gb folded into pb2)
    gx = jnp.sqrt(jnp.sum(h * h, axis=0, keepdims=True))            # (1, 4C)
    inv = pl.reciprocal(jnp.mean(gx, axis=-1, keepdims=True) + 1e-6, approx=True)
    h = h * (gg_ref[0] * (gx * inv) + 1.0)

    # ---- pointconv2 (Linear 4*dim -> dim): bf16 MXU, f32 accumulation --------
    o = jnp.dot(h.astype(jnp.bfloat16), pw2_ref[...],
                preferred_element_type=jnp.float32) + pb2_ref[0]

    # ---- residual -------------------------------------------------------------
    # TODO(synk): DropPath (stochastic depth) is identity in eval mode; training-mode
    #             randomness is not implemented.
    out_ref[0] = shortcut + o.reshape(H, W, C)


# -----------------------------------------------------------------------------
# Wrapper: NCHW in / NCHW out, grid over batch.
# -----------------------------------------------------------------------------
@jax.jit
def src_block_pallas(x_nchw, params):
    N, C, H, W = x_nchw.shape

    # Layout change + pad=2 (fused by XLA into one relayout op).
    x = jnp.transpose(x_nchw, (0, 2, 3, 1))                       # -> NHWC
    xp = jnp.pad(x, ((0, 0), (2, 2), (2, 2), (0, 0)))             # (N, H+4, W+4, C)

    # Fuse the three depthwise convs into one 5x5 depthwise conv (exact algebra).
    wf = params["w5"].reshape(5, 5, C)
    wf = wf.at[1:4, 1:4, :].add(params["w3"].reshape(3, 3, C))
    wf = wf.at[2, 2, :].add(params["w1"][0])
    wf = (wf / 3.0).reshape(25, C)
    bf = (params["b1"] + params["b3"] + params["b5"]) / 3.0       # (1, C)

    # Fold the LayerNorm affine into pointconv1 (exact f32 algebra; bf16 cast after fold):
    #   (z*gamma + beta) @ W1 + b1  ==  z @ (gamma[:,None]*W1) + (beta @ W1 + b1)
    pw1 = (params["ln_w"][0][:, None] * params["pw1"]).astype(jnp.bfloat16)   # (C, 4C)
    pb1 = params["pb1"] + params["ln_b"] @ params["pw1"]                       # (1, 4C)

    # Fold the GRN beta into pointconv2's bias (exact f32 algebra):
    #   (h*(gg*nx+1) + gb) @ W2 + b2  ==  (h*(gg*nx+1)) @ W2 + (gb @ W2 + b2)
    pw2 = params["pw2"].astype(jnp.bfloat16)                                   # (4C, C)
    pb2 = params["pb2"] + params["grn_b"] @ params["pw2"]                      # (1, C)

    param_list = [wf, bf, pw1, pb1, params["grn_g"], pw2, pb2]

    # Constant index_maps: parameters are fetched once (block index never changes).
    def full_spec(p):
        nd = p.ndim
        return pl.BlockSpec(p.shape, lambda b, _nd=nd: (0,) * _nd)

    in_specs = [pl.BlockSpec((1, H + 4, W + 4, C), lambda b: (b, 0, 0, 0))] + [
        full_spec(p) for p in param_list
    ]

    out = pl.pallas_call(
        src_block_kernel,
        out_shape=jax.ShapeDtypeStruct((N, H, W, C), jnp.float32),
        grid_spec=pltpu.PrefetchScalarGridSpec(
            num_scalar_prefetch=0,
            grid=(N,),
            in_specs=in_specs,
            out_specs=pl.BlockSpec((1, H, W, C), lambda b: (b, 0, 0, 0)),
        ),
        compiler_params=pltpu.CompilerParams(
            dimension_semantics=("parallel",)),
    )(xp, *param_list)

    return jnp.transpose(out, (0, 3, 1, 2))                       # -> NCHW


# -----------------------------------------------------------------------------
# Pure-JAX reference (mirrors the PyTorch module, eval mode, full f32).
# -----------------------------------------------------------------------------
def src_block_ref(x, p):
    N, C, H, W = x.shape

    def dwconv(x_nchw, w_kkc, b_c, k):
        w_oihw = jnp.transpose(w_kkc.reshape(k, k, C), (2, 0, 1))[:, None]  # (C,1,k,k)
        y = jax.lax.conv_general_dilated(
            x_nchw, w_oihw, window_strides=(1, 1),
            padding=[(k // 2, k // 2)] * 2,
            dimension_numbers=("NCHW", "OIHW", "NCHW"),
            feature_group_count=C)
        return y + b_c[0][None, :, None, None]

    shortcut = x
    y = (dwconv(x, p["w1"], p["b1"], 1)
         + dwconv(x, p["w3"], p["b3"], 3)
         + dwconv(x, p["w5"], p["b5"], 5)) / 3.0

    # LayerNorm channels_first
    mu = jnp.mean(y, axis=1, keepdims=True)
    var = jnp.mean((y - mu) ** 2, axis=1, keepdims=True)
    y = (y - mu) / jnp.sqrt(var + 1e-6)
    y = p["ln_w"][0][None, :, None, None] * y + p["ln_b"][0][None, :, None, None]

    y = jnp.transpose(y, (0, 2, 3, 1))                        # NHWC
    y = y @ p["pw1"] + p["pb1"][0]                            # Linear dim -> 4dim
    y = jax.nn.gelu(y, approximate=False)
    gx = jnp.sqrt(jnp.sum(y * y, axis=(1, 2), keepdims=True))  # (N,1,1,4C)
    nx = gx / (jnp.mean(gx, axis=-1, keepdims=True) + 1e-6)
    y = p["grn_g"][0][None, None, None, :] * (y * nx) + p["grn_b"][0][None, None, None, :] + y
    y = y @ p["pw2"] + p["pb2"][0]                            # Linear 4dim -> dim
    y = jnp.transpose(y, (0, 3, 1, 2))                        # NCHW
    return shortcut + y


# -----------------------------------------------------------------------------
def make_params(key, dim):
    ks = jax.random.split(key, 14)
    f = jnp.float32
    d4 = 4 * dim
    return {
        "w1":    0.3 * jax.random.normal(ks[0], (1, dim), f),
        "b1":    0.1 * jax.random.normal(ks[1], (1, dim), f),
        "w3":    0.2 * jax.random.normal(ks[2], (9, dim), f),
        "b3":    0.1 * jax.random.normal(ks[3], (1, dim), f),
        "w5":    0.1 * jax.random.normal(ks[4], (25, dim), f),
        "b5":    0.1 * jax.random.normal(ks[5], (1, dim), f),
        "ln_w":  1.0 + 0.1 * jax.random.normal(ks[6], (1, dim), f),
        "ln_b":  0.1 * jax.random.normal(ks[7], (1, dim), f),
        "pw1":   0.2 * jax.random.normal(ks[8], (dim, d4), f),
        "pb1":   0.1 * jax.random.normal(ks[9], (1, d4), f),
        "grn_g": 0.5 * jax.random.normal(ks[10], (1, d4), f),
        "grn_b": 0.1 * jax.random.normal(ks[11], (1, d4), f),
        "pw2":   0.2 * jax.random.normal(ks[12], (d4, dim), f),
        "pb2":   0.1 * jax.random.normal(ks[13], (1, dim), f),
    }


if __name__ == "__main__":
    key = jax.random.PRNGKey(0)
    k_x, k_p = jax.random.split(key)

    N, C, H, W = 2, 4, 16, 16                       # batch=2, dim=4, spatial=16
    x = jax.random.normal(k_x, (N, C, H, W), jnp.float32)
    params = make_params(k_p, C)

    out = src_block_pallas(x, params)
    out = jax.block_until_ready(out)

    ref = src_block_ref(x, params)
    assert out.shape == (N, C, H, W), out.shape
    # Tolerance loosened vs. a pure-f32 check because the two pointwise matmuls use
    # bf16 operands (f32 accumulation) and the GRN divide uses an approx reciprocal.
    assert jnp.allclose(out, ref, atol=5e-2, rtol=5e-2), (
        float(jnp.max(jnp.abs(out - ref))))

    print("KERNEL_OK")
</pallas_src>

<mosaic_0001>
module attributes {stable_mosaic.version = 11 : i64} {
  func.func @src_block_kernel(%arg0: i32, %arg1: memref<1x20x20x4xf32, #tpu.memory_space<vmem>>, %arg2: memref<25x4xf32, #tpu.memory_space<vmem>>, %arg3: memref<1x4xf32, #tpu.memory_space<vmem>>, %arg4: memref<4x16xbf16, #tpu.memory_space<vmem>>, %arg5: memref<1x16xf32, #tpu.memory_space<vmem>>, %arg6: memref<1x16xf32, #tpu.memory_space<vmem>>, %arg7: memref<16x4xbf16, #tpu.memory_space<vmem>>, %arg8: memref<1x4xf32, #tpu.memory_space<vmem>>, %arg9: memref<1x16x16x4xf32, #tpu.memory_space<vmem>>) attributes {dimension_semantics = [#tpu.dimension_semantics<parallel>], iteration_bounds = array<i64: 2>, scalar_prefetch = 0 : i64, scratch_operands = 0 : i64, tpu.core_type = #tpu.core_type<tc>, window_params = [{transform_indices = @transform_0, window_bounds = array<i64: 1, 20, 20, 4>}, {pipeline_mode = #tpu.pipeline_mode<synchronous>, transform_indices = @transform_1, window_bounds = array<i64: 25, 4>}, {pipeline_mode = #tpu.pipeline_mode<synchronous>, transform_indices = @transform_2, window_bounds = array<i64: 1, 4>}, {pipeline_mode = #tpu.pipeline_mode<synchronous>, transform_indices = @transform_3, window_bounds = array<i64: 4, 16>}, {pipeline_mode = #tpu.pipeline_mode<synchronous>, transform_indices = @transform_4, window_bounds = array<i64: 1, 16>}, {pipeline_mode = #tpu.pipeline_mode<synchronous>, transform_indices = @transform_5, window_bounds = array<i64: 1, 16>}, {pipeline_mode = #tpu.pipeline_mode<synchronous>, transform_indices = @transform_6, window_bounds = array<i64: 16, 4>}, {pipeline_mode = #tpu.pipeline_mode<synchronous>, transform_indices = @transform_7, window_bounds = array<i64: 1, 4>}, {transform_indices = @transform_8, window_bounds = array<i64: 1, 16, 16, 4>}]} {
    %c0 = arith.constant 0 : index
    %c0_0 = arith.constant 0 : index
    %c0_1 = arith.constant 0 : index
    %c0_2 = arith.constant 0 : index
    %0 = vector.load %arg1[%c0, %c0_0, %c0_1, %c0_2] : memref<1x20x20x4xf32, #tpu.memory_space<vmem>>, vector<1x20x20x4xf32>
    %1 = vector.shape_cast %0 : vector<1x20x20x4xf32> to vector<20x20x4xf32>
    %2 = vector.extract_strided_slice %1 {offsets = [0, 0, 0], sizes = [20, 16, 4], strides = [1, 1, 1]} : vector<20x20x4xf32> to vector<20x16x4xf32>
    %3 = vector.extract_strided_slice %1 {offsets = [0, 1, 0], sizes = [20, 16, 4], strides = [1, 1, 1]} : vector<20x20x4xf32> to vector<20x16x4xf32>
    %4 = vector.extract_strided_slice %1 {offsets = [0, 2, 0], sizes = [20, 16, 4], strides = [1, 1, 1]} : vector<20x20x4xf32> to vector<20x16x4xf32>
    %5 = vector.extract_strided_slice %1 {offsets = [0, 3, 0], sizes = [20, 16, 4], strides = [1, 1, 1]} : vector<20x20x4xf32> to vector<20x16x4xf32>
    %6 = vector.extract_strided_slice %1 {offsets = [0, 4, 0], sizes = [20, 16, 4], strides = [1, 1, 1]} : vector<20x20x4xf32> to vector<20x16x4xf32>
    %7 = vector.extract_strided_slice %4 {offsets = [2, 0, 0], sizes = [16, 16, 4], strides = [1, 1, 1]} : vector<20x16x4xf32> to vector<16x16x4xf32>
    %c0_3 = arith.constant 0 : index
    %c0_4 = arith.constant 0 : index
    %8 = vector.load %arg2[%c0_3, %c0_4] : memref<25x4xf32, #tpu.memory_space<vmem>>, vector<25x4xf32>
    %9 = vector.extract_strided_slice %2 {offsets = [0, 0, 0], sizes = [16, 16, 4], strides = [1, 1, 1]} : vector<20x16x4xf32> to vector<16x16x4xf32>
    %10 = vector.extract_strided_slice %8 {offsets = [0, 0], sizes = [1, 4], strides = [1, 1]} : vector<25x4xf32> to vector<1x4xf32>
    %11 = vector.shape_cast %10 : vector<1x4xf32> to vector<4xf32>
    %12 = vector.shape_cast %11 : vector<4xf32> to vector<1x1x4xf32>
    %13 = vector.broadcast %12 : vector<1x1x4xf32> to vector<16x16x4xf32>
    %14 = arith.mulf %9, %13 : vector<16x16x4xf32>
    %c0_5 = arith.constant 0 : index
    %c0_6 = arith.constant 0 : index
    %15 = vector.load %arg3[%c0_5, %c0_6] : memref<1x4xf32, #tpu.memory_space<vmem>>, vector<1x4xf32>
    %16 = vector.shape_cast %15 : vector<1x4xf32> to vector<4xf32>
    %17 = vector.shape_cast %16 : vector<4xf32> to vector<1x1x4xf32>
    %18 = vector.broadcast %17 : vector<1x1x4xf32> to vector<16x16x4xf32>
    %19 = arith.addf %14, %18 : vector<16x16x4xf32>
    %20 = vector.extract_strided_slice %3 {offsets = [0, 0, 0], sizes = [16, 16, 4], strides = [1, 1, 1]} : vector<20x16x4xf32> to vector<16x16x4xf32>
    %21 = vector.extract_strided_slice %8 {offsets = [1, 0], sizes = [1, 4], strides = [1, 1]} : vector<25x4xf32> to vector<1x4xf32>
    %22 = vector.shape_cast %21 : vector<1x4xf32> to vector<4xf32>
    %23 = vector.shape_cast %22 : vector<4xf32> to vector<1x1x4xf32>
    %24 = vector.broadcast %23 : vector<1x1x4xf32> to vector<16x16x4xf32>
    %25 = arith.mulf %20, %24 : vector<16x16x4xf32>
    %26 = arith.addf %19, %25 : vector<16x16x4xf32>
    %27 = vector.extract_strided_slice %4 {offsets = [0, 0, 0], sizes = [16, 16, 4], strides = [1, 1, 1]} : vector<20x16x4xf32> to vector<16x16x4xf32>
    %28 = vector.extract_strided_slice %8 {offsets = [2, 0], sizes = [1, 4], strides = [1, 1]} : vector<25x4xf32> to vector<1x4xf32>
    %29 = vector.shape_cast %28 : vector<1x4xf32> to vector<4xf32>
    %30 = vector.shape_cast %29 : vector<4xf32> to vector<1x1x4xf32>
    %31 = vector.broadcast %30 : vector<1x1x4xf32> to vector<16x16x4xf32>
    %32 = arith.mulf %27, %31 : vector<16x16x4xf32>
    %33 = arith.addf %26, %32 : vector<16x16x4xf32>
    %34 = vector.extract_strided_slice %5 {offsets = [0, 0, 0], sizes = [16, 16, 4], strides = [1, 1, 1]} : vector<20x16x4xf32> to vector<16x16x4xf32>
    %35 = vector.extract_strided_slice %8 {offsets = [3, 0], sizes = [1, 4], strides = [1, 1]} : vector<25x4xf32> to vector<1x4xf32>
    %36 = vector.shape_cast %35 : vector<1x4xf32> to vector<4xf32>
    %37 = vector.shape_cast %36 : vector<4xf32> to vector<1x1x4xf32>
    %38 = vector.broadcast %37 : vector<1x1x4xf32> to vector<16x16x4xf32>
    %39 = arith.mulf %34, %38 : vector<16x16x4xf32>
    %40 = arith.addf %33, %39 : vector<16x16x4xf32>
    %41 = vector.extract_strided_slice %6 {offsets = [0, 0, 0], sizes = [16, 16, 4], strides = [1, 1, 1]} : vector<20x16x4xf32> to vector<16x16x4xf32>
    %42 = vector.extract_strided_slice %8 {offsets = [4, 0], sizes = [1, 4], strides = [1, 1]} : vector<25x4xf32> to vector<1x4xf32>
    %43 = vector.shape_cast %42 : vector<1x4xf32> to vector<4xf32>
    %44 = vector.shape_cast %43 : vector<4xf32> to vector<1x1x4xf32>
    %45 = vector.broadcast %44 : vector<1x1x4xf32> to vector<16x16x4xf32>
    %46 = arith.mulf %41, %45 : vector<16x16x4xf32>
    %47 = arith.addf %40, %46 : vector<16x16x4xf32>
    %48 = vector.extract_strided_slice %2 {offsets = [1, 0, 0], sizes = [16, 16, 4], strides = [1, 1, 1]} : vector<20x16x4xf32> to vector<16x16x4xf32>
    %49 = vector.extract_strided_slice %8 {offsets = [5, 0], sizes = [1, 4], strides = [1, 1]} : vector<25x4xf32> to vector<1x4xf32>
    %50 = vector.shape_cast %49 : vector<1x4xf32> to vector<4xf32>
    %51 = vector.shape_cast %50 : vector<4xf32> to vector<1x1x4xf32>
    %52 = vector.broadcast %51 : vector<1x1x4xf32> to vector<16x16x4xf32>
    %53 = arith.mulf %48, %52 : vector<16x16x4xf32>
    %54 = arith.addf %47, %53 : vector<16x16x4xf32>
    %55 = vector.extract_strided_slice %3 {offsets = [1, 0, 0], sizes = [16, 16, 4], strides = [1, 1, 1]} : vector<20x16x4xf32> to vector<16x16x4xf32>
    %56 = vector.extract_strided_slice %8 {offsets = [6, 0], sizes = [1, 4], strides = [1, 1]} : vector<25x4xf32> to vector<1x4xf32>
    %57 = vector.shape_cast %56 : vector<1x4xf32> to vector<4xf32>
    %58 = vector.shape_cast %57 : vector<4xf32> to vector<1x1x4xf32>
    %59 = vector.broadcast %58 : vector<1x1x4xf32> to vector<16x16x4xf32>
    %60 = arith.mulf %55, %59 : vector<16x16x4xf32>
    %61 = arith.addf %54, %60 : vector<16x16x4xf32>
    %62 = vector.extract_strided_slice %4 {offsets = [1, 0, 0], sizes = [16, 16, 4], strides = [1, 1, 1]} : vector<20x16x4xf32> to vector<16x16x4xf32>
    %63 = vector.extract_strided_slice %8 {offsets = [7, 0], sizes = [1, 4], strides = [1, 1]} : vector<25x4xf32> to vector<1x4xf32>
    %64 = vector.shape_cast %63 : vector<1x4xf32> to vector<4xf32>
    %65 = vector.shape_cast %64 : vector<4xf32> to vector<1x1x4xf32>
    %66 = vector.broadcast %65 : vector<1x1x4xf32> to vector<16x16x4xf32>
    %67 = arith.mulf %62, %66 : vector<16x16x4xf32>
    %68 = arith.addf %61, %67 : vector<16x16x4xf32>
    %69 = vector.extract_strided_slice %5 {offsets = [1, 0, 0], sizes = [16, 16, 4], strides = [1, 1, 1]} : vector<20x16x4xf32> to vector<16x16x4xf32>
    %70 = vector.extract_strided_slice %8 {offsets = [8, 0], sizes = [1, 4], strides = [1, 1]} : vector<25x4xf32> to vector<1x4xf32>
    %71 = vector.shape_cast %70 : vector<1x4xf32> to vector<4xf32>
    %72 = vector.shape_cast %71 : vector<4xf32> to vector<1x1x4xf32>
    %73 = vector.broadcast %72 : vector<1x1x4xf32> to vector<16x16x4xf32>
    %74 = arith.mulf %69, %73 : vector<16x16x4xf32>
    %75 = arith.addf %68, %74 : vector<16x16x4xf32>
    %76 = vector.extract_strided_slice %6 {offsets = [1, 0, 0], sizes = [16, 16, 4], strides = [1, 1, 1]} : vector<20x16x4xf32> to vector<16x16x4xf32>
    %77 = vector.extract_strided_slice %8 {offsets = [9, 0], sizes = [1, 4], strides = [1, 1]} : vector<25x4xf32> to vector<1x4xf32>
    %78 = vector.shape_cast %77 : vector<1x4xf32> to vector<4xf32>
    %79 = vector.shape_cast %78 : vector<4xf32> to vector<1x1x4xf32>
    %80 = vector.broadcast %79 : vector<1x1x4xf32> to vector<16x16x4xf32>
    %81 = arith.mulf %76, %80 : vector<16x16x4xf32>
    %82 = arith.addf %75, %81 : vector<16x16x4xf32>
    %83 = vector.extract_strided_slice %2 {offsets = [2, 0, 0], sizes = [16, 16, 4], strides = [1, 1, 1]} : vector<20x16x4xf32> to vector<16x16x4xf32>
    %84 = vector.extract_strided_slice %8 {offsets = [10, 0], sizes = [1, 4], strides = [1, 1]} : vector<25x4xf32> to vector<1x4xf32>
    %85 = vector.shape_cast %84 : vector<1x4xf32> to vector<4xf32>
    %86 = vector.shape_cast %85 : vector<4xf32> to vector<1x1x4xf32>
    %87 = vector.broadcast %86 : vector<1x1x4xf32> to vector<16x16x4xf32>
    %88 = arith.mulf %83, %87 : vector<16x16x4xf32>
    %89 = arith.addf %82, %88 : vector<16x16x4xf32>
    %90 = vector.extract_strided_slice %3 {offsets = [2, 0, 0], sizes = [16, 16, 4], strides = [1, 1, 1]} : vector<20x16x4xf32> to vector<16x16x4xf32>
    %91 = vector.extract_strided_slice %8 {offsets = [11, 0], sizes = [1, 4], strides = [1, 1]} : vector<25x4xf32> to vector<1x4xf32>
    %92 = vector.shape_cast %91 : vector<1x4xf32> to vector<4xf32>
    %93 = vector.shape_cast %92 : vector<4xf32> to vector<1x1x4xf32>
    %94 = vector.broadcast %93 : vector<1x1x4xf32> to vector<16x16x4xf32>
    %95 = arith.mulf %90, %94 : vector<16x16x4xf32>
    %96 = arith.addf %89, %95 : vector<16x16x4xf32>
    %97 = vector.extract_strided_slice %4 {offsets = [2, 0, 0], sizes = [16, 16, 4], strides = [1, 1, 1]} : vector<20x16x4xf32> to vector<16x16x4xf32>
    %98 = vector.extract_strided_slice %8 {offsets = [12, 0], sizes = [1, 4], strides = [1, 1]} : vector<25x4xf32> to vector<1x4xf32>
    %99 = vector.shape_cast %98 : vector<1x4xf32> to vector<4xf32>
    %100 = vector.shape_cast %99 : vector<4xf32> to vector<1x1x4xf32>
    %101 = vector.broadcast %100 : vector<1x1x4xf32> to vector<16x16x4xf32>
    %102 = arith.mulf %97, %101 : vector<16x16x4xf32>
    %103 = arith.addf %96, %102 : vector<16x16x4xf32>
    %104 = vector.extract_strided_slice %5 {offsets = [2, 0, 0], sizes = [16, 16, 4], strides = [1, 1, 1]} : vector<20x16x4xf32> to vector<16x16x4xf32>
    %105 = vector.extract_strided_slice %8 {offsets = [13, 0], sizes = [1, 4], strides = [1, 1]} : vector<25x4xf32> to vector<1x4xf32>
    %106 = vector.shape_cast %105 : vector<1x4xf32> to vector<4xf32>
    %107 = vector.shape_cast %106 : vector<4xf32> to vector<1x1x4xf32>
    %108 = vector.broadcast %107 : vector<1x1x4xf32> to vector<16x16x4xf32>
    %109 = arith.mulf %104, %108 : vector<16x16x4xf32>
    %110 = arith.addf %103, %109 : vector<16x16x4xf32>
    %111 = vector.extract_strided_slice %6 {offsets = [2, 0, 0], sizes = [16, 16, 4], strides = [1, 1, 1]} : vector<20x16x4xf32> to vector<16x16x4xf32>
    %112 = vector.extract_strided_slice %8 {offsets = [14, 0], sizes = [1, 4], strides = [1, 1]} : vector<25x4xf32> to vector<1x4xf32>
    %113 = vector.shape_cast %112 : vector<1x4xf32> to vector<4xf32>
    %114 = vector.shape_cast %113 : vector<4xf32> to vector<1x1x4xf32>
    %115 = vector.broadcast %114 : vector<1x1x4xf32> to vector<16x16x4xf32>
    %116 = arith.mulf %111, %115 : vector<16x16x4xf32>
    %117 = arith.addf %110, %116 : vector<16x16x4xf32>
    %118 = vector.extract_strided_slice %2 {offsets = [3, 0, 0], sizes = [16, 16, 4], strides = [1, 1, 1]} : vector<20x16x4xf32> to vector<16x16x4xf32>
    %119 = vector.extract_strided_slice %8 {offsets = [15, 0], sizes = [1, 4], strides = [1, 1]} : vector<25x4xf32> to vector<1x4xf32>
    %120 = vector.shape_cast %119 : vector<1x4xf32> to vector<4xf32>
    %121 = vector.shape_cast %120 : vector<4xf32> to vector<1x1x4xf32>
    %122 = vector.broadcast %121 : vector<1x1x4xf32> to vector<16x16x4xf32>
    %123 = arith.mulf %118, %122 : vector<16x16x4xf32>
    %124 = arith.addf %117, %123 : vector<16x16x4xf32>
    %125 = vector.extract_strided_slice %3 {offsets = [3, 0, 0], sizes = [16, 16, 4], strides = [1, 1, 1]} : vector<20x16x4xf32> to vector<16x16x4xf32>
    %126 = vector.extract_strided_slice %8 {offsets = [16, 0], sizes = [1, 4], strides = [1, 1]} : vector<25x4xf32> to vector<1x4xf32>
    %127 = vector.shape_cast %126 : vector<1x4xf32> to vector<4xf32>
    %128 = vector.shape_cast %127 : vector<4xf32> to vector<1x1x4xf32>
    %129 = vector.broadcast %128 : vector<1x1x4xf32> to vector<16x16x4xf32>
    %130 = arith.mulf %125, %129 : vector<16x16x4xf32>
    %131 = arith.addf %124, %130 : vector<16x16x4xf32>
    %132 = vector.extract_strided_slice %4 {offsets = [3, 0, 0], sizes = [16, 16, 4], strides = [1, 1, 1]} : vector<20x16x4xf32> to vector<16x16x4xf32>
    %133 = vector.extract_strided_slice %8 {offsets = [17, 0], sizes = [1, 4], strides = [1, 1]} : vector<25x4xf32> to vector<1x4xf32>
    %134 = vector.shape_cast %133 : vector<1x4xf32> to vector<4xf32>
    %135 = vector.shape_cast %134 : vector<4xf32> to vector<1x1x4xf32>
    %136 = vector.broadcast %135 : vector<1x1x4xf32> to vector<16x16x4xf32>
    %137 = arith.mulf %132, %136 : vector<16x16x4xf32>
    %138 = arith.addf %131, %137 : vector<16x16x4xf32>
    %139 = vector.extract_strided_slice %5 {offsets = [3, 0, 0], sizes = [16, 16, 4], strides = [1, 1, 1]} : vector<20x16x4xf32> to vector<16x16x4xf32>
    %140 = vector.extract_strided_slice %8 {offsets = [18, 0], sizes = [1, 4], strides = [1, 1]} : vector<25x4xf32> to vector<1x4xf32>
    %141 = vector.shape_cast %140 : vector<1x4xf32> to vector<4xf32>
    %142 = vector.shape_cast %141 : vector<4xf32> to vector<1x1x4xf32>
    %143 = vector.broadcast %142 : vector<1x1x4xf32> to vector<16x16x4xf32>
    %144 = arith.mulf %139, %143 : vector<16x16x4xf32>
    %145 = arith.addf %138, %144 : vector<16x16x4xf32>
    %146 = vector.extract_strided_slice %6 {offsets = [3, 0, 0], sizes = [16, 16, 4], strides = [1, 1, 1]} : vector<20x16x4xf32> to vector<16x16x4xf32>
    %147 = vector.extract_strided_slice %8 {offsets = [19, 0], sizes = [1, 4], strides = [1, 1]} : vector<25x4xf32> to vector<1x4xf32>
    %148 = vector.shape_cast %147 : vector<1x4xf32> to vector<4xf32>
    %149 = vector.shape_cast %148 : vector<4xf32> to vector<1x1x4xf32>
    %150 = vector.broadcast %149 : vector<1x1x4xf32> to vector<16x16x4xf32>
    %151 = arith.mulf %146, %150 : vector<16x16x4xf32>
    %152 = arith.addf %145, %151 : vector<16x16x4xf32>
    %153 = vector.extract_strided_slice %2 {offsets = [4, 0, 0], sizes = [16, 16, 4], strides = [1, 1, 1]} : vector<20x16x4xf32> to vector<16x16x4xf32>
    %154 = vector.extract_strided_slice %8 {offsets = [20, 0], sizes = [1, 4], strides = [1, 1]} : vector<25x4xf32> to vector<1x4xf32>
    %155 = vector.shape_cast %154 : vector<1x4xf32> to vector<4xf32>
    %156 = vector.shape_cast %155 : vector<4xf32> to vector<1x1x4xf32>
    %157 = vector.broadcast %156 : vector<1x1x4xf32> to vector<16x16x4xf32>
    %158 = arith.mulf %153, %157 : vector<16x16x4xf32>
    %159 = arith.addf %152, %158 : vector<16x16x4xf32>
    %160 = vector.extract_strided_slice %3 {offsets = [4, 0, 0], sizes = [16, 16, 4], strides = [1, 1, 1]} : vector<20x16x4xf32> to vector<16x16x4xf32>
    %161 = vector.extract_strided_slice %8 {offsets = [21, 0], sizes = [1, 4], strides = [1, 1]} : vector<25x4xf32> to vector<1x4xf32>
    %162 = vector.shape_cast %161 : vector<1x4xf32> to vector<4xf32>
    %163 = vector.shape_cast %162 : vector<4xf32> to vector<1x1x4xf32>
    %164 = vector.broadcast %163 : vector<1x1x4xf32> to vector<16x16x4xf32>
    %165 = arith.mulf %160, %164 : vector<16x16x4xf32>
    %166 = arith.addf %159, %165 : vector<16x16x4xf32>
    %167 = vector.extract_strided_slice %4 {offsets = [4, 0, 0], sizes = [16, 16, 4], strides = [1, 1, 1]} : vector<20x16x4xf32> to vector<16x16x4xf32>
    %168 = vector.extract_strided_slice %8 {offsets = [22, 0], sizes = [1, 4], strides = [1, 1]} : vector<25x4xf32> to vector<1x4xf32>
    %169 = vector.shape_cast %168 : vector<1x4xf32> to vector<4xf32>
    %170 = vector.shape_cast %169 : vector<4xf32> to vector<1x1x4xf32>
    %171 = vector.broadcast %170 : vector<1x1x4xf32> to vector<16x16x4xf32>
    %172 = arith.mulf %167, %171 : vector<16x16x4xf32>
    %173 = arith.addf %166, %172 : vector<16x16x4xf32>
    %174 = vector.extract_strided_slice %5 {offsets = [4, 0, 0], sizes = [16, 16, 4], strides = [1, 1, 1]} : vector<20x16x4xf32> to vector<16x16x4xf32>
    %175 = vector.extract_strided_slice %8 {offsets = [23, 0], sizes = [1, 4], strides = [1, 1]} : vector<25x4xf32> to vector<1x4xf32>
    %176 = vector.shape_cast %175 : vector<1x4xf32> to vector<4xf32>
    %177 = vector.shape_cast %176 : vector<4xf32> to vector<1x1x4xf32>
    %178 = vector.broadcast %177 : vector<1x1x4xf32> to vector<16x16x4xf32>
    %179 = arith.mulf %174, %178 : vector<16x16x4xf32>
    %180 = arith.addf %173, %179 : vector<16x16x4xf32>
    %181 = vector.extract_strided_slice %6 {offsets = [4, 0, 0], sizes = [16, 16, 4], strides = [1, 1, 1]} : vector<20x16x4xf32> to vector<16x16x4xf32>
    %182 = vector.extract_strided_slice %8 {offsets = [24, 0], sizes = [1, 4], strides = [1, 1]} : vector<25x4xf32> to vector<1x4xf32>
    %183 = vector.shape_cast %182 : vector<1x4xf32> to vector<4xf32>
    %184 = vector.shape_cast %183 : vector<4xf32> to vector<1x1x4xf32>
    %185 = vector.broadcast %184 : vector<1x1x4xf32> to vector<16x16x4xf32>
    %186 = arith.mulf %181, %185 : vector<16x16x4xf32>
    %187 = arith.addf %180, %186 : vector<16x16x4xf32>
    %cst = arith.constant dense<0.000000e+00> : vector<16x16xf32>
    %188 = vector.multi_reduction <add>, %187, %cst [2] : vector<16x16x4xf32> to vector<16x16xf32>
    %189 = vector.shape_cast %188 : vector<16x16xf32> to vector<16x16x1xf32>
    %cst_7 = arith.constant 4.000000e+00 : f32
    %190 = vector.broadcast %cst_7 : f32 to vector<16x16x1xf32>
    %191 = arith.divf %189, %190 : vector<16x16x1xf32>
    %192 = arith.mulf %187, %187 : vector<16x16x4xf32>
    %cst_8 = arith.constant dense<0.000000e+00> : vector<16x16xf32>
    %193 = vector.multi_reduction <add>, %192, %cst_8 [2] : vector<16x16x4xf32> to vector<16x16xf32>
    %194 = vector.shape_cast %193 : vector<16x16xf32> to vector<16x16x1xf32>
    %cst_9 = arith.constant 4.000000e+00 : f32
    %195 = vector.broadcast %cst_9 : f32 to vector<16x16x1xf32>
    %196 = arith.divf %194, %195 : vector<16x16x1xf32>
    %197 = vector.broadcast %191 : vector<16x16x1xf32> to vector<16x16x4xf32>
    %198 = arith.subf %187, %197 : vector<16x16x4xf32>
    %199 = arith.mulf %191, %191 : vector<16x16x1xf32>
    %200 = arith.subf %196, %199 : vector<16x16x1xf32>
    %cst_10 = arith.constant 9.99999997E-7 : f32
    %201 = vector.broadcast %cst_10 : f32 to vector<16x16x1xf32>
    %202 = arith.addf %200, %201 : vector<16x16x1xf32>
    %203 = math.rsqrt %202 : vector<16x16x1xf32>
    %204 = vector.broadcast %203 : vector<16x16x1xf32> to vector<16x16x4xf32>
    %205 = arith.mulf %198, %204 : vector<16x16x4xf32>
    %206 = vector.shape_cast %205 : vector<16x16x4xf32> to vector<256x4xf32>
    %207 = arith.truncf %206 : vector<256x4xf32> to vector<256x4xbf16>
    %c0_11 = arith.constant 0 : index
    %c0_12 = arith.constant 0 : index
    %208 = vector.load %arg4[%c0_11, %c0_12] : memref<4x16xbf16, #tpu.memory_space<vmem>>, vector<4x16xbf16>
    %cst_13 = arith.constant dense<0.000000e+00> : vector<256x16xf32>
    %209 = tpu.matmul %207, %208, %cst_13 {dimension_numbers = #tpu.dot_dimension_numbers<[1], [0], [0], [1], [0, 0, 1, 1], [], []>} : vector<256x4xbf16>, vector<4x16xbf16>, vector<256x16xf32> -> vector<256x16xf32>
    %c0_14 = arith.constant 0 : index
    %c0_15 = arith.constant 0 : index
    %210 = vector.load %arg5[%c0_14, %c0_15] : memref<1x16xf32, #tpu.memory_space<vmem>>, vector<1x16xf32>
    %211 = vector.shape_cast %210 : vector<1x16xf32> to vector<16xf32>
    %212 = vector.shape_cast %211 : vector<16xf32> to vector<1x16xf32>
    %213 = vector.broadcast %212 : vector<1x16xf32> to vector<256x16xf32>
    %214 = arith.addf %209, %213 : vector<256x16xf32>
    %cst_16 = arith.constant 5.000000e-01 : f32
    %215 = vector.broadcast %cst_16 : f32 to vector<256x16xf32>
    %216 = arith.mulf %215, %214 : vector<256x16xf32>
    %cst_17 = arith.constant 0.707106769 : f32
    %217 = vector.broadcast %cst_17 : f32 to vector<256x16xf32>
    %218 = arith.mulf %214, %217 : vector<256x16xf32>
    %219 = math.erf %218 : vector<256x16xf32>
    %cst_18 = arith.constant 1.000000e+00 : f32
    %220 = vector.broadcast %cst_18 : f32 to vector<256x16xf32>
    %221 = arith.addf %220, %219 : vector<256x16xf32>
    %222 = arith.mulf %216, %221 : vector<256x16xf32>
    %223 = arith.mulf %222, %222 : vector<256x16xf32>
    %cst_19 = arith.constant dense<0.000000e+00> : vector<16xf32>
    %224 = vector.multi_reduction <add>, %223, %cst_19 [0] : vector<256x16xf32> to vector<16xf32>
    %225 = vector.shape_cast %224 : vector<16xf32> to vector<1x16xf32>
    %226 = math.sqrt %225 : vector<1x16xf32>
    %cst_20 = arith.constant dense<0.000000e+00> : vector<1xf32>
    %227 = vector.multi_reduction <add>, %226, %cst_20 [1] : vector<1x16xf32> to vector<1xf32>
    %228 = vector.shape_cast %227 : vector<1xf32> to vector<1x1xf32>
    %cst_21 = arith.constant 1.600000e+01 : f32
    %229 = vector.broadcast %cst_21 : f32 to vector<1x1xf32>
    %230 = arith.divf %228, %229 : vector<1x1xf32>
    %cst_22 = arith.constant 9.99999997E-7 : f32
    %231 = vector.broadcast %cst_22 : f32 to vector<1x1xf32>
    %232 = arith.addf %230, %231 : vector<1x1xf32>
    %233 = tpu.reciprocal %232 {approx = true} : vector<1x1xf32> -> vector<1x1xf32>
    %c0_23 = arith.constant 0 : index
    %c0_24 = arith.constant 0 : index
    %234 = vector.load %arg6[%c0_23, %c0_24] : memref<1x16xf32, #tpu.memory_space<vmem>>, vector<1x16xf32>
    %235 = vector.shape_cast %234 : vector<1x16xf32> to vector<16xf32>
    %236 = vector.broadcast %233 : vector<1x1xf32> to vector<1x16xf32>
    %237 = arith.mulf %226, %236 : vector<1x16xf32>
    %238 = vector.shape_cast %235 : vector<16xf32> to vector<1x16xf32>
    %239 = arith.mulf %238, %237 : vector<1x16xf32>
    %cst_25 = arith.constant 1.000000e+00 : f32
    %240 = vector.broadcast %cst_25 : f32 to vector<1x16xf32>
    %241 = arith.addf %239, %240 : vector<1x16xf32>
    %242 = vector.broadcast %241 : vector<1x16xf32> to vector<256x16xf32>
    %243 = arith.mulf %222, %242 : vector<256x16xf32>
    %244 = arith.truncf %243 : vector<256x16xf32> to vector<256x16xbf16>
    %c0_26 = arith.constant 0 : index
    %c0_27 = arith.constant 0 : index
    %245 = vector.load %arg7[%c0_26, %c0_27] : memref<16x4xbf16, #tpu.memory_space<vmem>>, vector<16x4xbf16>
    %cst_28 = arith.constant dense<0.000000e+00> : vector<256x4xf32>
    %246 = tpu.matmul %244, %245, %cst_28 {dimension_numbers = #tpu.dot_dimension_numbers<[1], [0], [0], [1], [0, 0, 1, 1], [], []>} : vector<256x16xbf16>, vector<16x4xbf16>, vector<256x4xf32> -> vector<256x4xf32>
    %c0_29 = arith.constant 0 : index
    %c0_30 = arith.constant 0 : index
    %247 = vector.load %arg8[%c0_29, %c0_30] : memref<1x4xf32, #tpu.memory_space<vmem>>, vector<1x4xf32>
    %248 = vector.shape_cast %247 : vector<1x4xf32> to vector<4xf32>
    %249 = vector.shape_cast %248 : vector<4xf32> to vector<1x4xf32>
    %250 = vector.broadcast %249 : vector<1x4xf32> to vector<256x4xf32>
    %251 = arith.addf %246, %250 : vector<256x4xf32>
    %252 = vector.shape_cast %251 : vector<256x4xf32> to vector<16x16x4xf32>
    %253 = arith.addf %7, %252 : vector<16x16x4xf32>
    %c0_31 = arith.constant 0 : index
    %c0_32 = arith.constant 0 : index
    %c0_33 = arith.constant 0 : index
    %c0_34 = arith.constant 0 : index
    %254 = vector.load %arg9[%c0_31, %c0_32, %c0_33, %c0_34] : memref<1x16x16x4xf32, #tpu.memory_space<vmem>>, vector<1x16x16x4xf32>
    %255 = vector.shape_cast %254 : vector<1x16x16x4xf32> to vector<16x16x4xf32>
    %256 = vector.shape_cast %253 : vector<16x16x4xf32> to vector<1x16x16x4xf32>
    tpu.vector_store %arg9[%c0_31, %c0_32, %c0_33, %c0_34], %256 {strides = array<i32>} : memref<1x16x16x4xf32, #tpu.memory_space<vmem>>, vector<1x16x16x4xf32>,
    return
  }
  func.func @transform_0(%arg0: i32) -> (i32, i32, i32, i32) {
    %c0_i32 = arith.constant 0 : i32
    %c0_i32_0 = arith.constant 0 : i32
    %c0_i32_1 = arith.constant 0 : i32
    %c0_i32_2 = arith.constant 0 : i32
    return %arg0, %c0_i32, %c0_i32_0, %c0_i32_1 : i32, i32, i32, i32
  }
  func.func @transform_1(%arg0: i32) -> (i32, i32) {
    %c0_i32 = arith.constant 0 : i32
    %c0_i32_0 = arith.constant 0 : i32
    %c0_i32_1 = arith.constant 0 : i32
    return %c0_i32, %c0_i32_0 : i32, i32
  }
  func.func @transform_2(%arg0: i32) -> (i32, i32) {
    %c0_i32 = arith.constant 0 : i32
    %c0_i32_0 = arith.constant 0 : i32
    %c0_i32_1 = arith.constant 0 : i32
    return %c0_i32, %c0_i32_0 : i32, i32
  }
  func.func @transform_3(%arg0: i32) -> (i32, i32) {
    %c0_i32 = arith.constant 0 : i32
    %c0_i32_0 = arith.constant 0 : i32
    %c0_i32_1 = arith.constant 0 : i32
    return %c0_i32, %c0_i32_0 : i32, i32
  }
  func.func @transform_4(%arg0: i32) -> (i32, i32) {
    %c0_i32 = arith.constant 0 : i32
    %c0_i32_0 = arith.constant 0 : i32
    %c0_i32_1 = arith.constant 0 : i32
    return %c0_i32, %c0_i32_0 : i32, i32
  }
  func.func @transform_5(%arg0: i32) -> (i32, i32) {
    %c0_i32 = arith.constant 0 : i32
    %c0_i32_0 = arith.constant 0 : i32
    %c0_i32_1 = arith.constant 0 : i32
    return %c0_i32, %c0_i32_0 : i32, i32
  }
  func.func @transform_6(%arg0: i32) -> (i32, i32) {
    %c0_i32 = arith.constant 0 : i32
    %c0_i32_0 = arith.constant 0 : i32
    %c0_i32_1 = arith.constant 0 : i32
    return %c0_i32, %c0_i32_0 : i32, i32
  }
  func.func @transform_7(%arg0: i32) -> (i32, i32) {
    %c0_i32 = arith.constant 0 : i32
    %c0_i32_0 = arith.constant 0 : i32
    %c0_i32_1 = arith.constant 0 : i32
    return %c0_i32, %c0_i32_0 : i32, i32
  }
  func.func @transform_8(%arg0: i32) -> (i32, i32, i32, i32) {
    %c0_i32 = arith.constant 0 : i32
    %c0_i32_0 = arith.constant 0 : i32
    %c0_i32_1 = arith.constant 0 : i32
    %c0_i32_2 = arith.constant 0 : i32
    return %arg0, %c0_i32, %c0_i32_0, %c0_i32_1 : i32, i32, i32, i32
  }
}

</mosaic_0001>

<llo_original>
// kernel: src_block_pallas.1
$region0: #{src_block_pallas.1}
  #allocation0 [shape = 'u32[]', space=smem, size = 0x4, offset = 0x4, fixed_abs, tag = 'smem constant byte address 0x4 - core index']
  #allocation1 [shape = 'u32[72,128]{1,0:T(1,128)}', space=vmem, size = 0x9000, scoped, tag = 'internal scratch']
  %s0 = inlined_call_operand.vmem [shape: f32[2,20,20,4], index: 0, kind: input, shape index: {}]
  %s1 = inlined_call_operand.vmem [shape: f32[25,4], index: 1, kind: input, shape index: {}]
  %s2 = inlined_call_operand.vmem [shape: f32[1,4], index: 2, kind: input, shape index: {}]
  %s3 = inlined_call_operand.vmem [shape: bf16[4,16], index: 3, kind: input, shape index: {}]
  %s4 = inlined_call_operand.vmem [shape: f32[1,16], index: 4, kind: input, shape index: {}]
  %s5 = inlined_call_operand.vmem [shape: f32[1,16], index: 5, kind: input, shape index: {}]
  %s6 = inlined_call_operand.vmem [shape: bf16[16,4], index: 6, kind: input, shape index: {}]
  %s7 = inlined_call_operand.vmem [shape: f32[1,4], index: 7, kind: input, shape index: {}]
  %s8 = inlined_call_operand.vmem [shape: f32[2,16,16,4], index: 8, kind: output, shape index: {}]
  %s9 = sld [smem:[#allocation0]]
  $region65: #{src_block_pallas.1} parent=0
    _
  %s11 = ssub.s32 1, %s9
  %s12 = scalar_select 0, %s11, %s9
  loop: start=0, step=1, limit=4
  $region2: #{src_block_pallas.1} parent=0 // loop_pre_header
    _
  $region3: #{src_block_pallas.1} parent=0 // loop_header
    %s14 = sphi 0, %s18
    %p15 = scmp.ge.s32.totalorder %s14, 4
    %s24 = sphi 0, %s26
    %s27 = sphi 0, %s24
    %s28 = sphi 0, %s27
    %s44 = sphi 0, %s28
    %s48 = sphi 0, %s48
    %s50 = sphi 0, %s48
    %s51 = sphi 0, %s50
    %s65 = sphi 0, %s51
    %s69 = sphi 0, %s69
    %s71 = sphi 0, %s69
    %s72 = sphi 0, %s71
    %s86 = sphi 0, %s72
    %s90 = sphi 0, %s90
    %s92 = sphi 0, %s90
    %s93 = sphi 0, %s92
    %s107 = sphi 0, %s93
    %s111 = sphi 0, %s111
    %s113 = sphi 0, %s111
    %s114 = sphi 0, %s113
    %s128 = sphi 0, %s114
    %s132 = sphi 0, %s132
    %s134 = sphi 0, %s132
    %s135 = sphi 0, %s134
    %s149 = sphi 0, %s135
    %s153 = sphi 0, %s153
    %s155 = sphi 0, %s153
    %s156 = sphi 0, %s155
    %s170 = sphi 0, %s156
    %s174 = sphi 0, %s174
    %s176 = sphi 0, %s174
    %s177 = sphi 0, %s176
    %s191 = sphi 0, %s177
    %s197 = sphi 0, %s199
    %s200 = sphi 0, %s197
    %s201 = sphi 0, %s200
    %s217 = sphi 0, %s201
  $region4: #{src_block_pallas.1} parent=0 // loop_header_branch
    %17 = sbr.rel (%p15) target = $region8
  $region5: #{src_block_pallas.1} parent=0 // loop_body
    %s19 = ssub.s32 %s14, 1
    %s20 = ssub.s32 %s14, 2
    %s21 = sadd.s32 %s14, 1
    %s22 = ssub.s32 %s14, %s21
    %p23 = scmp.eq.s32.totalorder %s22, 0
    %s25 = sadd.s32 %s24, 1
    %s26 = scalar_select %p23, %s24, %s25
    %p29 = pneg %p23
    %p30 = scmp.eq.s32.totalorder %s14, 1
    %p31 = por %p29, %p30
    %p32 = scmp.ne.s32.totalorder %s24, %s27
    %p33 = scmp.eq.s32.totalorder %s14, 0
    %p34 = por %p32, %p33
    %p35 = scmp.ne.s32.totalorder %s24, %s27
    %p36 = scmp.eq.s32.totalorder %s19, 1
    %p37 = por %p35, %p36
    %p38 = scmp.ne.s32.totalorder %s27, %s28
    %p39 = scmp.eq.s32.totalorder %s19, 0
    %p40 = por %p38, %p39
    %p41 = scmp.ne.s32.totalorder %s27, %s28
    %p42 = scmp.eq.s32.totalorder %s20, 1
    %p43 = por %p41, %p42
    %p45 = scmp.ne.s32.totalorder %s28, %s44
    %p46 = scmp.eq.s32.totalorder %s20, 0
    %p47 = por %p45, %p46
    %s49 = sadd.s32 %s48, 1
    %p52 = scmp.eq.s32.totalorder %s14, 1
    %p53 = scmp.ne.s32.totalorder %s48, %s50
    %p54 = scmp.eq.s32.totalorder %s14, 0
    %p55 = por %p53, %p54
    %p56 = scmp.ne.s32.totalorder %s48, %s50
    %p57 = scmp.eq.s32.totalorder %s19, 1
    %p58 = por %p56, %p57
    %p59 = scmp.ne.s32.totalorder %s50, %s51
    %p60 = scmp.eq.s32.totalorder %s19, 0
    %p61 = por %p59, %p60
    %p62 = scmp.ne.s32.totalorder %s50, %s51
    %p63 = scmp.eq.s32.totalorder %s20, 1
    %p64 = por %p62, %p63
    %p66 = scmp.ne.s32.totalorder %s51, %s65
    %p67 = scmp.eq.s32.totalorder %s20, 0
    %p68 = por %p66, %p67
    %s70 = sadd.s32 %s69, 1
    %p73 = scmp.eq.s32.totalorder %s14, 1
    %p74 = scmp.ne.s32.totalorder %s69, %s71
    %p75 = scmp.eq.s32.totalorder %s14, 0
    %p76 = por %p74, %p75
    %p77 = scmp.ne.s32.totalorder %s69, %s71
    %p78 = scmp.eq.s32.totalorder %s19, 1
    %p79 = por %p77, %p78
    %p80 = scmp.ne.s32.totalorder %s71, %s72
    %p81 = scmp.eq.s32.totalorder %s19, 0
    %p82 = por %p80, %p81
    %p83 = scmp.ne.s32.totalorder %s71, %s72
    %p84 = scmp.eq.s32.totalorder %s20, 1
    %p85 = por %p83, %p84
    %p87 = scmp.ne.s32.totalorder %s72, %s86
    %p88 = scmp.eq.s32.totalorder %s20, 0
    %p89 = por %p87, %p88
    %s91 = sadd.s32 %s90, 1
    %p94 = scmp.eq.s32.totalorder %s14, 1
    %p95 = scmp.ne.s32.totalorder %s90, %s92
    %p96 = scmp.eq.s32.totalorder %s14, 0
    %p97 = por %p95, %p96
    %p98 = scmp.ne.s32.totalorder %s90, %s92
    %p99 = scmp.eq.s32.totalorder %s19, 1
    %p100 = por %p98, %p99
    %p101 = scmp.ne.s32.totalorder %s92, %s93
    %p102 = scmp.eq.s32.totalorder %s19, 0
    %p103 = por %p101, %p102
    %p104 = scmp.ne.s32.totalorder %s92, %s93
    %p105 = scmp.eq.s32.totalorder %s20, 1
    %p106 = por %p104, %p105
    %p108 = scmp.ne.s32.totalorder %s93, %s107
    %p109 = scmp.eq.s32.totalorder %s20, 0
    %p110 = por %p108, %p109
    %s112 = sadd.s32 %s111, 1
    %p115 = scmp.eq.s32.totalorder %s14, 1
    %p116 = scmp.ne.s32.totalorder %s111, %s113
    %p117 = scmp.eq.s32.totalorder %s14, 0
    %p118 = por %p116, %p117
    %p119 = scmp.ne.s32.totalorder %s111, %s113
    %p120 = scmp.eq.s32.totalorder %s19, 1
    %p121 = por %p119, %p120
    %p122 = scmp.ne.s32.totalorder %s113, %s114
    %p123 = scmp.eq.s32.totalorder %s19, 0
    %p124 = por %p122, %p123
    %p125 = scmp.ne.s32.totalorder %s113, %s114
    %p126 = scmp.eq.s32.totalorder %s20, 1
    %p127 = por %p125, %p126
    %p129 = scmp.ne.s32.totalorder %s114, %s128
    %p130 = scmp.eq.s32.totalorder %s20, 0
    %p131 = por %p129, %p130
    %s133 = sadd.s32 %s132, 1
    %p136 = scmp.eq.s32.totalorder %s14, 1
    %p137 = scmp.ne.s32.totalorder %s132, %s134
    %p138 = scmp.eq.s32.totalorder %s14, 0
    %p139 = por %p137, %p138
    %p140 = scmp.ne.s32.totalorder %s132, %s134
    %p141 = scmp.eq.s32.totalorder %s19, 1
    %p142 = por %p140, %p141
    %p143 = scmp.ne.s32.totalorder %s134, %s135
    %p144 = scmp.eq.s32.totalorder %s19, 0
    %p145 = por %p143, %p144
    %p146 = scmp.ne.s32.totalorder %s134, %s135
    %p147 = scmp.eq.s32.totalorder %s20, 1
    %p148 = por %p146, %p147
    %p150 = scmp.ne.s32.totalorder %s135, %s149
    %p151 = scmp.eq.s32.totalorder %s20, 0
    %p152 = por %p150, %p151
    %s154 = sadd.s32 %s153, 1
    %p157 = scmp.eq.s32.totalorder %s14, 1
    %p158 = scmp.ne.s32.totalorder %s153, %s155
    %p159 = scmp.eq.s32.totalorder %s14, 0
    %p160 = por %p158, %p159
    %p161 = scmp.ne.s32.totalorder %s153, %s155
    %p162 = scmp.eq.s32.totalorder %s19, 1
    %p163 = por %p161, %p162
    %p164 = scmp.ne.s32.totalorder %s155, %s156
    %p165 = scmp.eq.s32.totalorder %s19, 0
    %p166 = por %p164, %p165
    %p167 = scmp.ne.s32.totalorder %s155, %s156
    %p168 = scmp.eq.s32.totalorder %s20, 1
    %p169 = por %p167, %p168
    %p171 = scmp.ne.s32.totalorder %s156, %s170
    %p172 = scmp.eq.s32.totalorder %s20, 0
    %p173 = por %p171, %p172
    %s175 = sadd.s32 %s174, 1
    %p178 = scmp.eq.s32.totalorder %s14, 1
    %p179 = scmp.ne.s32.totalorder %s174, %s176
    %p180 = scmp.eq.s32.totalorder %s14, 0
    %p181 = por %p179, %p180
    %p182 = scmp.ne.s32.totalorder %s174, %s176
    %p183 = scmp.eq.s32.totalorder %s19, 1
    %p184 = por %p182, %p183
    %p185 = scmp.ne.s32.totalorder %s176, %s177
    %p186 = scmp.eq.s32.totalorder %s19, 0
    %p187 = por %p185, %p186
    %p188 = scmp.ne.s32.totalorder %s176, %s177
    %p189 = scmp.eq.s32.totalorder %s20, 1
    %p190 = por %p188, %p189
    %p192 = scmp.ne.s32.totalorder %s177, %s191
    %p193 = scmp.eq.s32.totalorder %s20, 0
    %p194 = por %p192, %p193
    %s195 = ssub.s32 %s14, %s21
    %p196 = scmp.eq.s32.totalorder %s195, 0
    %s198 = sadd.s32 %s197, 1
    %s199 = scalar_select %p196, %s197, %s198
    %p202 = pneg %p196
    %p203 = scmp.eq.s32.totalorder %s14, 1
    %p204 = por %p202, %p203
    %p205 = scmp.ne.s32.totalorder %s197, %s200
    %p206 = scmp.eq.s32.totalorder %s14, 0
    %p207 = por %p205, %p206
    %p208 = scmp.ne.s32.totalorder %s197, %s200
    %p209 = scmp.eq.s32.totalorder %s19, 1
    %p210 = por %p208, %p209
    %p211 = scmp.ne.s32.totalorder %s200, %s201
    %p212 = scmp.eq.s32.totalorder %s19, 0
    %p213 = por %p211, %p212
    %p214 = scmp.ne.s32.totalorder %s200, %s201
    %p215 = scmp.eq.s32.totalorder %s20, 1
    %p216 = por %p214, %p215
    %p218 = scmp.ne.s32.totalorder %s201, %s217
    %p219 = scmp.eq.s32.totalorder %s20, 0
    %p220 = por %p218, %p219
    %p221 = scmp.le.s32.totalorder 1, %s14
    %p222 = scmp.lt.s32.totalorder %s14, 3
    %p223 = pnand %p221, %p222
    %p224 = pneg %p223
    // Predicated region
    $region9: #{src_block_pallas.1} parent=5 // pred_check
      _
    $region10: #{src_block_pallas.1} parent=5 // pred_check_branch
      %226 = sbr.rel (%p223) target = $region12
    $region11: #{src_block_pallas.1} parent=5 // pred_region
      %s227 = ssub.s32 %s14, 1
      // Predicated region
      $region13: #{src_block_pallas.1} parent=11 // pred_check
        %p228 = pneg %p61
      $region14: #{src_block_pallas.1} parent=11 // pred_check_branch
        %230 = sbr.rel (%p228) target = $region16
      $region15: #{src_block_pallas.1} parent=11 // pred_region
        _
      $region16: #{src_block_pallas.1} parent=11 // pred_fallthru
        _
      // Predicated region
      $region17: #{src_block_pallas.1} parent=11 // pred_check
        %p231 = pneg %p82
      $region18: #{src_block_pallas.1} parent=11 // pred_check_branch
        %233 = sbr.rel (%p231) target = $region20
      $region19: #{src_block_pallas.1} parent=11 // pred_region
        _
      $region20: #{src_block_pallas.1} parent=11 // pred_fallthru
        _
      // Predicated region
      $region21: #{src_block_pallas.1} parent=11 // pred_check
        %p234 = pneg %p103
      $region22: #{src_block_pallas.1} parent=11 // pred_check_branch
        %236 = sbr.rel (%p234) target = $region24
      $region23: #{src_block_pallas.1} parent=11 // pred_region
        _
      $region24: #{src_block_pallas.1} parent=11 // pred_fallthru
        _
      // Predicated region
      $region25: #{src_block_pallas.1} parent=11 // pred_check
        %p237 = pneg %p124
      $region26: #{src_block_pallas.1} parent=11 // pred_check_branch
        %239 = sbr.rel (%p237) target = $region28
      $region27: #{src_block_pallas.1} parent=11 // pred_region
        _
      $region28: #{src_block_pallas.1} parent=11 // pred_fallthru
        _
      // Predicated region
      $region29: #{src_block_pallas.1} parent=11 // pred_check
        %p240 = pneg %p145
      $region30: #{src_block_pallas.1} parent=11 // pred_check_branch
        %242 = sbr.rel (%p240) target = $region32
      $region31: #{src_block_pallas.1} parent=11 // pred_region
        _
      $region32: #{src_block_pallas.1} parent=11 // pred_fallthru
        _
      // Predicated region
      $region33: #{src_block_pallas.1} parent=11 // pred_check
        %p243 = pneg %p166
      $region34: #{src_block_pallas.1} parent=11 // pred_check_branch
        %245 = sbr.rel (%p243) target = $region36
      $region35: #{src_block_pallas.1} parent=11 // pred_region
        _
      $region36: #{src_block_pallas.1} parent=11 // pred_fallthru
        _
      // Predicated region
      $region37: #{src_block_pallas.1} parent=11 // pred_check
        %p246 = pneg %p187
      $region38: #{src_block_pallas.1} parent=11 // pred_check_branch
        %248 = sbr.rel (%p246) target = $region40
      $region39: #{src_block_pallas.1} parent=11 // pred_region
        _
      $region40: #{src_block_pallas.1} parent=11 // pred_fallthru
        _
    $region12: #{src_block_pallas.1} parent=5 // pred_fallthru
      _
    %p249 = scmp.lt.s32.totalorder %s14, 2
    // Predicated region
    $region41: #{src_block_pallas.1} parent=5 // pred_check
      %p250 = pneg %p249
    $region42: #{src_block_pallas.1} parent=5 // pred_check_branch
      %252 = sbr.rel (%p250) target = $region44
    $region43: #{src_block_pallas.1} parent=5 // pred_region
      // Predicated region
      $region45: #{src_block_pallas.1} parent=43 // pred_check
        %p253 = pneg %p34
      $region46: #{src_block_pallas.1} parent=43 // pred_check_branch
        %255 = sbr.rel (%p253) target = $region48
      $region47: #{src_block_pallas.1} parent=43 // pred_region
        %p256 = scmp.lt.s32.totalorder %s14, 1
        %s257 = scalar_select %p256, %s14, 1
        %s258 = smul.addr %s257, 60
        %s259 = smul.addr %s258, 8
        %s260 = scalar_lea.vmem %s0, %s259
      $region48: #{src_block_pallas.1} parent=43 // pred_fallthru
        _
    $region44: #{src_block_pallas.1} parent=5 // pred_fallthru
      _
    %p261 = scmp.le.s32.totalorder 1, %s14
    %p262 = scmp.lt.s32.totalorder %s14, 3
    %p263 = pnand %p261, %p262
    %p264 = pneg %p263
    // Predicated region
    $region49: #{src_block_pallas.1} parent=5 // pred_check
      _
    $region50: #{src_block_pallas.1} parent=5 // pred_check_branch
      %266 = sbr.rel (%p263) target = $region52
    $region51: #{src_block_pallas.1} parent=5 // pred_region
      %s267 = ssub.s32 %s14, 1
      %p268 = scmp.lt.s32.totalorder %s19, 1
      %s269 = scalar_select %p268, %s19, 1
      %s270 = smul.addr %s269, 60
      %s271 = smul.addr %s270, 8
      %s272 = scalar_lea.vmem %s0, %s271
      %p273 = pneg %p40
      %p274 = pneg %p37
      %p275 = pneg %p61
      %p276 = pneg %p58
      %p277 = pneg %p82
      %p278 = pneg %p79
      %p279 = pneg %p103
      %p280 = pneg %p100
      %p281 = pneg %p124
      %p282 = pneg %p121
      %p283 = pneg %p145
      %p284 = pneg %p142
      %p285 = pneg %p166
      %p286 = pneg %p163
      %p287 = pneg %p187
      %p288 = pneg %p184
      %p289 = pneg %p213
      %p290 = pneg %p210
      %p291 = scmp.lt.s32.totalorder %s19, 1
      %s292 = scalar_select %p291, %s19, 1
      %s293 = smul.addr %s292, 32
      %s294 = smul.addr %s293, 8
      %s295 = scalar_lea.vmem %s8, %s294
      %p296 = scmp.lt.s32.totalorder %s19, 1
      %s297 = scalar_select %p296, %s19, 1
      %s298 = smul.addr %s297, 60
      %s299 = smul.addr %s298, 8
      %s300 = scalar_lea.vmem %s0, %s299
      %p301 = scmp.lt.s32.totalorder %s19, 1
      %s302 = scalar_select %p301, %s19, 1
      %s303 = smul.addr %s302, 32
      %s304 = smul.addr %s303, 8
      %s305 = scalar_lea.vmem %s8, %s304
      %v307 = vld [vmem:[%s300] sm:$0xff]
      %v308 = vld [vmem:[%s300 + $0x8] sm:$0xff]
      %v309 = vld [vmem:[%s300 + $0x10] sm:$0xf]
      %v310 = vld [vmem:[%s300 + $0x18] sm:$0xff]
      %v311 = vld [vmem:[%s300 + $0x20] sm:$0xff]
      %v312 = vld [vmem:[%s300 + $0x28] sm:$0xf]
      %v313 = vld [vmem:[%s300 + $0x30] sm:$0xff]
      %v314 = vld [vmem:[%s300 + $0x38] sm:$0xff]
      %v315 = vld [vmem:[%s300 + $0x40] sm:$0xf]
      %v316 = vld [vmem:[%s300 + $0x48] sm:$0xff]
      %v317 = vld [vmem:[%s300 + $0x50] sm:$0xff]
      %v318 = vld [vmem:[%s300 + $0x58] sm:$0xf]
      %v319 = vld [vmem:[%s300 + $0x60] sm:$0xff]
      %v320 = vld [vmem:[%s300 + $0x68] sm:$0xff]
      %v321 = vld [vmem:[%s300 + $0x70] sm:$0xf]
      %v322 = vld [vmem:[%s300 + $0x78] sm:$0xff]
      %v323 = vld [vmem:[%s300 + $0x80] sm:$0xff]
      %v324 = vld [vmem:[%s300 + $0x88] sm:$0xf]
      %v325 = vld [vmem:[%s300 + $0x90] sm:$0xff]
      %v326 = vld [vmem:[%s300 + $0x98] sm:$0xff]
      %v327 = vld [vmem:[%s300 + $0xa0] sm:$0xf]
      %v328 = vld [vmem:[%s300 + $0xa8] sm:$0xff]
      %v329 = vld [vmem:[%s300 + $0xb0] sm:$0xff]
      %v330 = vld [vmem:[%s300 + $0xb8] sm:$0xf]
      %v331 = vld [vmem:[%s300 + $0xc0] sm:$0xff]
      %v332 = vld [vmem:[%s300 + $0xc8] sm:$0xff]
      %v333 = vld [vmem:[%s300 + $0xd0] sm:$0xf]
      %v334 = vld [vmem:[%s300 + $0xd8] sm:$0xff]
      %v335 = vld [vmem:[%s300 + $0xe0] sm:$0xff]
      %v336 = vld [vmem:[%s300 + $0xe8] sm:$0xf]
      %v337 = vld [vmem:[%s300 + $0xf0] sm:$0xff]
      %v338 = vld [vmem:[%s300 + $0xf8] sm:$0xff]
      %v339 = vld [vmem:[%s300 + $0x100] sm:$0xf]
      %v340 = vld [vmem:[%s300 + $0x108] sm:$0xff]
      %v341 = vld [vmem:[%s300 + $0x110] sm:$0xff]
      %v342 = vld [vmem:[%s300 + $0x118] sm:$0xf]
      %v343 = vld [vmem:[%s300 + $0x120] sm:$0xff]
      %v344 = vld [vmem:[%s300 + $0x128] sm:$0xff]
      %v345 = vld [vmem:[%s300 + $0x130] sm:$0xf]
      %v346 = vld [vmem:[%s300 + $0x138] sm:$0xff]
      %v347 = vld [vmem:[%s300 + $0x140] sm:$0xff]
      %v348 = vld [vmem:[%s300 + $0x148] sm:$0xf]
      %v349 = vld [vmem:[%s300 + $0x150] sm:$0xff]
      %v350 = vld [vmem:[%s300 + $0x158] sm:$0xff]
      %v351 = vld [vmem:[%s300 + $0x160] sm:$0xf]
      %v352 = vld [vmem:[%s300 + $0x168] sm:$0xff]
      %v353 = vld [vmem:[%s300 + $0x170] sm:$0xff]
      %v354 = vld [vmem:[%s300 + $0x178] sm:$0xf]
      %v355 = vld [vmem:[%s300 + $0x180] sm:$0xff]
      %v356 = vld [vmem:[%s300 + $0x188] sm:$0xff]
      %v357 = vld [vmem:[%s300 + $0x190] sm:$0xf]
      %v358 = vld [vmem:[%s300 + $0x198] sm:$0xff]
      %v359 = vld [vmem:[%s300 + $0x1a0] sm:$0xff]
      %v360 = vld [vmem:[%s300 + $0x1a8] sm:$0xf]
      %v361 = vld [vmem:[%s300 + $0x1b0] sm:$0xff]
      %v362 = vld [vmem:[%s300 + $0x1b8] sm:$0xff]
      %v363 = vld [vmem:[%s300 + $0x1c0] sm:$0xf]
      %v364 = vld [vmem:[%s300 + $0x1c8] sm:$0xff]
      %v365 = vld [vmem:[%s300 + $0x1d0] sm:$0xff]
      %v366 = vld [vmem:[%s300 + $0x1d8] sm:$0xf]
      %v367 = vld [vmem:[%s1] sm:$0xff]
      %v368 = vld [vmem:[%s1 + $0x8] sm:$0xff]
      %v369 = vld [vmem:[%s1 + $0x10] sm:$0xff]
      %v370 = vld [vmem:[%s1 + $0x18] sm:$0x1]
      %v371 = vperm.slane %v367, 0
      %v372 = vmul.f32 %v307, %v371
      %v373 = vmul.f32 %v308, %v371
      %v374 = vmul.f32 %v310, %v371
      %v375 = vmul.f32 %v311, %v371
      %v376 = vmul.f32 %v313, %v371
      %v377 = vmul.f32 %v314, %v371
      %v378 = vmul.f32 %v316, %v371
      %v379 = vmul.f32 %v317, %v371
      %v380 = vmul.f32 %v319, %v371
      %v381 = vmul.f32 %v320, %v371
      %v382 = vmul.f32 %v322, %v371
      %v383 = vmul.f32 %v323, %v371
      %v384 = vmul.f32 %v325, %v371
      %v385 = vmul.f32 %v326, %v371
      %v386 = vmul.f32 %v328, %v371
      %v387 = vmul.f32 %v329, %v371
      %v388 = vmul.f32 %v331, %v371
      %v389 = vmul.f32 %v332, %v371
      %v390 = vmul.f32 %v334, %v371
      %v391 = vmul.f32 %v335, %v371
      %v392 = vmul.f32 %v337, %v371
      %v393 = vmul.f32 %v338, %v371
      %v394 = vmul.f32 %v340, %v371
      %v395 = vmul.f32 %v341, %v371
      %v396 = vmul.f32 %v343, %v371
      %v397 = vmul.f32 %v344, %v371
      %v398 = vmul.f32 %v346, %v371
      %v399 = vmul.f32 %v347, %v371
      %v400 = vmul.f32 %v349, %v371
      %v401 = vmul.f32 %v350, %v371
      %v402 = vmul.f32 %v352, %v371
      %v403 = vmul.f32 %v353, %v371
      %v404 = vld [vmem:[%s2] sm:$0x1]
      %v406 = vperm.slane %v404, 0
      %v408 = vadd.f32 %v372, %v406
      %v409 = vadd.f32 %v373, %v406
      %v410 = vadd.f32 %v374, %v406
      %v411 = vadd.f32 %v375, %v406
      %v412 = vadd.f32 %v376, %v406
      %v413 = vadd.f32 %v377, %v406
      %v414 = vadd.f32 %v378, %v406
      %v415 = vadd.f32 %v379, %v406
      %v416 = vadd.f32 %v380, %v406
      %v417 = vadd.f32 %v381, %v406
      %v418 = vadd.f32 %v382, %v406
      %v419 = vadd.f32 %v383, %v406
      %v420 = vadd.f32 %v384, %v406
      %v421 = vadd.f32 %v385, %v406
      %v422 = vadd.f32 %v386, %v406
      %v423 = vadd.f32 %v387, %v406
      %v424 = vadd.f32 %v388, %v406
      %v425 = vadd.f32 %v389, %v406
      %v426 = vadd.f32 %v390, %v406
      %v427 = vadd.f32 %v391, %v406
      %v428 = vadd.f32 %v392, %v406
      %v429 = vadd.f32 %v393, %v406
      %v430 = vadd.f32 %v394, %v406
      %v431 = vadd.f32 %v395, %v406
      %v432 = vadd.f32 %v396, %v406
      %v433 = vadd.f32 %v397, %v406
      %v434 = vadd.f32 %v398, %v406
      %v435 = vadd.f32 %v399, %v406
      %v436 = vadd.f32 %v400, %v406
      %v437 = vadd.f32 %v401, %v406
      %v438 = vadd.f32 %v402, %v406
      %v439 = vadd.f32 %v403, %v406
      %v440 = vperm.slane %v367, 1
      %v441 = vmul.f32 %v307, %v440
      %v442 = vmul.f32 %v308, %v440
      %v443 = vmul.f32 %v309, %v440
      %v444 = vmul.f32 %v310, %v440
      %v445 = vmul.f32 %v311, %v440
      %v446 = vmul.f32 %v312, %v440
      %v447 = vmul.f32 %v313, %v440
      %v448 = vmul.f32 %v314, %v440
      %v449 = vmul.f32 %v315, %v440
      %v450 = vmul.f32 %v316, %v440
      %v451 = vmul.f32 %v317, %v440
      %v452 = vmul.f32 %v318, %v440
      %v453 = vmul.f32 %v319, %v440
      %v454 = vmul.f32 %v320, %v440
      %v455 = vmul.f32 %v321, %v440
      %v456 = vmul.f32 %v322, %v440
      %v457 = vmul.f32 %v323, %v440
      %v458 = vmul.f32 %v324, %v440
      %v459 = vmul.f32 %v325, %v440
      %v460 = vmul.f32 %v326, %v440
      %v461 = vmul.f32 %v327, %v440
      %v462 = vmul.f32 %v328, %v440
      %v463 = vmul.f32 %v329, %v440
      %v464 = vmul.f32 %v330, %v440
      %v465 = vmul.f32 %v331, %v440
      %v466 = vmul.f32 %v332, %v440
      %v467 = vmul.f32 %v333, %v440
      %v468 = vmul.f32 %v334, %v440
      %v469 = vmul.f32 %v335, %v440
      %v470 = vmul.f32 %v336, %v440
      %v471 = vmul.f32 %v337, %v440
      %v472 = vmul.f32 %v338, %v440
      %v473 = vmul.f32 %v339, %v440
      %v474 = vmul.f32 %v340, %v440
      %v475 = vmul.f32 %v341, %v440
      %v476 = vmul.f32 %v342, %v440
      %v477 = vmul.f32 %v343, %v440
      %v478 = vmul.f32 %v344, %v440
      %v479 = vmul.f32 %v345, %v440
      %v480 = vmul.f32 %v346, %v440
      %v481 = vmul.f32 %v347, %v440
      %v482 = vmul.f32 %v348, %v440
      %v483 = vmul.f32 %v349, %v440
      %v484 = vmul.f32 %v350, %v440
      %v485 = vmul.f32 %v351, %v440
      %v486 = vmul.f32 %v352, %v440
      %v487 = vmul.f32 %v353, %v440
      %v488 = vmul.f32 %v354, %v440
      %vm537 = vcmask 1046528
      %v538 = vrot.slane %v441, 1
      %v539 = vrot.slane %v442, 1
      %v540 = vsel %vm537, %v538, %v539
      %v541 = vrot.slane %v443, 1
      %v542 = vsel %vm537, %v539, %v541
      %v543 = vrot.slane %v444, 1
      %v544 = vrot.slane %v445, 1
      %v545 = vsel %vm537, %v543, %v544
      %v546 = vrot.slane %v446, 1
      %v547 = vsel %vm537, %v544, %v546
      %v548 = vrot.slane %v447, 1
      %v549 = vrot.slane %v448, 1
      %v550 = vsel %vm537, %v548, %v549
      %v551 = vrot.slane %v449, 1
      %v552 = vsel %vm537, %v549, %v551
      %v553 = vrot.slane %v450, 1
      %v554 = vrot.slane %v451, 1
      %v555 = vsel %vm537, %v553, %v554
      %v556 = vrot.slane %v452, 1
      %v557 = vsel %vm537, %v554, %v556
      %v558 = vrot.slane %v453, 1
      %v559 = vrot.slane %v454, 1
      %v560 = vsel %vm537, %v558, %v559
      %v561 = vrot.slane %v455, 1
      %v562 = vsel %vm537, %v559, %v561
      %v563 = vrot.slane %v456, 1
      %v564 = vrot.slane %v457, 1
      %v565 = vsel %vm537, %v563, %v564
      %v566 = vrot.slane %v458, 1
      %v567 = vsel %vm537, %v564, %v566
      %v568 = vrot.slane %v459, 1
      %v569 = vrot.slane %v460, 1
      %v570 = vsel %vm537, %v568, %v569
      %v571 = vrot.slane %v461, 1
      %v572 = vsel %vm537, %v569, %v571
      %v573 = vrot.slane %v462, 1
      %v574 = vrot.slane %v463, 1
      %v575 = vsel %vm537, %v573, %v574
      %v576 = vrot.slane %v464, 1
      %v577 = vsel %vm537, %v574, %v576
      %v578 = vrot.slane %v465, 1
      %v579 = vrot.slane %v466, 1
      %v580 = vsel %vm537, %v578, %v579
      %v581 = vrot.slane %v467, 1
      %v582 = vsel %vm537, %v579, %v581
      %v583 = vrot.slane %v468, 1
      %v584 = vrot.slane %v469, 1
      %v585 = vsel %vm537, %v583, %v584
      %v586 = vrot.slane %v470, 1
      %v587 = vsel %vm537, %v584, %v586
      %v588 = vrot.slane %v471, 1
      %v589 = vrot.slane %v472, 1
      %v590 = vsel %vm537, %v588, %v589
      %v591 = vrot.slane %v473, 1
      %v592 = vsel %vm537, %v589, %v591
      %v593 = vrot.slane %v474, 1
      %v594 = vrot.slane %v475, 1
      %v595 = vsel %vm537, %v593, %v594
      %v596 = vrot.slane %v476, 1
      %v597 = vsel %vm537, %v594, %v596
      %v598 = vrot.slane %v477, 1
      %v599 = vrot.slane %v478, 1
      %v600 = vsel %vm537, %v598, %v599
      %v601 = vrot.slane %v479, 1
      %v602 = vsel %vm537, %v599, %v601
      %v603 = vrot.slane %v480, 1
      %v604 = vrot.slane %v481, 1
      %v605 = vsel %vm537, %v603, %v604
      %v606 = vrot.slane %v482, 1
      %v607 = vsel %vm537, %v604, %v606
      %v608 = vrot.slane %v483, 1
      %v609 = vrot.slane %v484, 1
      %v610 = vsel %vm537, %v608, %v609
      %v611 = vrot.slane %v485, 1
      %v612 = vsel %vm537, %v609, %v611
      %v613 = vrot.slane %v486, 1
      %v614 = vrot.slane %v487, 1
      %v615 = vsel %vm537, %v613, %v614
      %v616 = vrot.slane %v488, 1
      %v617 = vsel %vm537, %v614, %v616
      %v650 = vadd.f32 %v408, %v540
      %v651 = vadd.f32 %v409, %v542
      %v652 = vadd.f32 %v410, %v545
      %v653 = vadd.f32 %v411, %v547
      %v654 = vadd.f32 %v412, %v550
      %v655 = vadd.f32 %v413, %v552
      %v656 = vadd.f32 %v414, %v555
      %v657 = vadd.f32 %v415, %v557
      %v658 = vadd.f32 %v416, %v560
      %v659 = vadd.f32 %v417, %v562
      %v660 = vadd.f32 %v418, %v565
      %v661 = vadd.f32 %v419, %v567
      %v662 = vadd.f32 %v420, %v570
      %v663 = vadd.f32 %v421, %v572
      %v664 = vadd.f32 %v422, %v575
      %v665 = vadd.f32 %v423, %v577
      %v666 = vadd.f32 %v424, %v580
      %v667 = vadd.f32 %v425, %v582
      %v668 = vadd.f32 %v426, %v585
      %v669 = vadd.f32 %v427, %v587
      %v670 = vadd.f32 %v428, %v590
      %v671 = vadd.f32 %v429, %v592
      %v672 = vadd.f32 %v430, %v595
      %v673 = vadd.f32 %v431, %v597
      %v674 = vadd.f32 %v432, %v600
      %v675 = vadd.f32 %v433, %v602
      %v676 = vadd.f32 %v434, %v605
      %v677 = vadd.f32 %v435, %v607
      %v678 = vadd.f32 %v436, %v610
      %v679 = vadd.f32 %v437, %v612
      %v680 = vadd.f32 %v438, %v615
      %v681 = vadd.f32 %v439, %v617
      %v682 = vperm.slane %v367, 2
      %v683 = vmul.f32 %v307, %v682
      %v684 = vmul.f32 %v308, %v682
      %v685 = vmul.f32 %v309, %v682
      %v686 = vmul.f32 %v310, %v682
      %v687 = vmul.f32 %v311, %v682
      %v688 = vmul.f32 %v312, %v682
      %v689 = vmul.f32 %v313, %v682
      %v690 = vmul.f32 %v314, %v682
      %v691 = vmul.f32 %v315, %v682
      %v692 = vmul.f32 %v316, %v682
      %v693 = vmul.f32 %v317, %v682
      %v694 = vmul.f32 %v318, %v682
      %v695 = vmul.f32 %v319, %v682
      %v696 = vmul.f32 %v320, %v682
      %v697 = vmul.f32 %v321, %v682
      %v698 = vmul.f32 %v322, %v682
      %v699 = vmul.f32 %v323, %v682
      %v700 = vmul.f32 %v324, %v682
      %v701 = vmul.f32 %v325, %v682
      %v702 = vmul.f32 %v326, %v682
      %v703 = vmul.f32 %v327, %v682
      %v704 = vmul.f32 %v328, %v682
      %v705 = vmul.f32 %v329, %v682
      %v706 = vmul.f32 %v330, %v682
      %v707 = vmul.f32 %v331, %v682
      %v708 = vmul.f32 %v332, %v682
      %v709 = vmul.f32 %v333, %v682
      %v710 = vmul.f32 %v334, %v682
      %v711 = vmul.f32 %v335, %v682
      %v712 = vmul.f32 %v336, %v682
      %v713 = vmul.f32 %v337, %v682
      %v714 = vmul.f32 %v338, %v682
      %v715 = vmul.f32 %v339, %v682
      %v716 = vmul.f32 %v340, %v682
      %v717 = vmul.f32 %v341, %v682
      %v718 = vmul.f32 %v342, %v682
      %v719 = vmul.f32 %v343, %v682
      %v720 = vmul.f32 %v344, %v682
      %v721 = vmul.f32 %v345, %v682
      %v722 = vmul.f32 %v346, %v682
      %v723 = vmul.f32 %v347, %v682
      %v724 = vmul.f32 %v348, %v682
      %v725 = vmul.f32 %v349, %v682
      %v726 = vmul.f32 %v350, %v682
      %v727 = vmul.f32 %v351, %v682
      %v728 = vmul.f32 %v352, %v682
      %v729 = vmul.f32 %v353, %v682
      %v730 = vmul.f32 %v354, %v682
      %vm779 = vcmask 1045504
      %v780 = vrot.slane %v683, 2
      %v781 = vrot.slane %v684, 2
      %v782 = vsel %vm779, %v780, %v781
      %v783 = vrot.slane %v685, 2
      %v784 = vsel %vm779, %v781, %v783
      %v785 = vrot.slane %v686, 2
      %v786 = vrot.slane %v687, 2
      %v787 = vsel %vm779, %v785, %v786
      %v788 = vrot.slane %v688, 2
      %v789 = vsel %vm779, %v786, %v788
      %v790 = vrot.slane %v689, 2
      %v791 = vrot.slane %v690, 2
      %v792 = vsel %vm779, %v790, %v791
      %v793 = vrot.slane %v691, 2
      %v794 = vsel %vm779, %v791, %v793
      %v795 = vrot.slane %v692, 2
      %v796 = vrot.slane %v693, 2
      %v797 = vsel %vm779, %v795, %v796
      %v798 = vrot.slane %v694, 2
      %v799 = vsel %vm779, %v796, %v798
      %v800 = vrot.slane %v695, 2
      %v801 = vrot.slane %v696, 2
      %v802 = vsel %vm779, %v800, %v801
      %v803 = vrot.slane %v697, 2
      %v804 = vsel %vm779, %v801, %v803
      %v805 = vrot.slane %v698, 2
      %v806 = vrot.slane %v699, 2
      %v807 = vsel %vm779, %v805, %v806
      %v808 = vrot.slane %v700, 2
      %v809 = vsel %vm779, %v806, %v808
      %v810 = vrot.slane %v701, 2
      %v811 = vrot.slane %v702, 2
      %v812 = vsel %vm779, %v810, %v811
      %v813 = vrot.slane %v703, 2
      %v814 = vsel %vm779, %v811, %v813
      %v815 = vrot.slane %v704, 2
      %v816 = vrot.slane %v705, 2
      %v817 = vsel %vm779, %v815, %v816
      %v818 = vrot.slane %v706, 2
      %v819 = vsel %vm779, %v816, %v818
      %v820 = vrot.slane %v707, 2
      %v821 = vrot.slane %v708, 2
      %v822 = vsel %vm779, %v820, %v821
      %v823 = vrot.slane %v709, 2
      %v824 = vsel %vm779, %v821, %v823
      %v825 = vrot.slane %v710, 2
      %v826 = vrot.slane %v711, 2
      %v827 = vsel %vm779, %v825, %v826
      %v828 = vrot.slane %v712, 2
      %v829 = vsel %vm779, %v826, %v828
      %v830 = vrot.slane %v713, 2
      %v831 = vrot.slane %v714, 2
      %v832 = vsel %vm779, %v830, %v831
      %v833 = vrot.slane %v715, 2
      %v834 = vsel %vm779, %v831, %v833
      %v835 = vrot.slane %v716, 2
      %v836 = vrot.slane %v717, 2
      %v837 = vsel %vm779, %v835, %v836
      %v838 = vrot.slane %v718, 2
      %v839 = vsel %vm779, %v836, %v838
      %v840 = vrot.slane %v719, 2
      %v841 = vrot.slane %v720, 2
      %v842 = vsel %vm779, %v840, %v841
      %v843 = vrot.slane %v721, 2
      %v844 = vsel %vm779, %v841, %v843
      %v845 = vrot.slane %v722, 2
      %v846 = vrot.slane %v723, 2
      %v847 = vsel %vm779, %v845, %v846
      %v848 = vrot.slane %v724, 2
      %v849 = vsel %vm779, %v846, %v848
      %v850 = vrot.slane %v725, 2
      %v851 = vrot.slane %v726, 2
      %v852 = vsel %vm779, %v850, %v851
      %v853 = vrot.slane %v727, 2
      %v854 = vsel %vm779, %v851, %v853
      %v855 = vrot.slane %v728, 2
      %v856 = vrot.slane %v729, 2
      %v857 = vsel %vm779, %v855, %v856
      %v858 = vrot.slane %v730, 2
      %v859 = vsel %vm779, %v856, %v858
      %v892 = vadd.f32 %v650, %v782
      %v893 = vadd.f32 %v651, %v784
      %v894 = vadd.f32 %v652, %v787
      %v895 = vadd.f32 %v653, %v789
      %v896 = vadd.f32 %v654, %v792
      %v897 = vadd.f32 %v655, %v794
      %v898 = vadd.f32 %v656, %v797
      %v899 = vadd.f32 %v657, %v799
      %v900 = vadd.f32 %v658, %v802
      %v901 = vadd.f32 %v659, %v804
      %v902 = vadd.f32 %v660, %v807
      %v903 = vadd.f32 %v661, %v809
      %v904 = vadd.f32 %v662, %v812
      %v905 = vadd.f32 %v663, %v814
      %v906 = vadd.f32 %v664, %v817
      %v907 = vadd.f32 %v665, %v819
      %v908 = vadd.f32 %v666, %v822
      %v909 = vadd.f32 %v667, %v824
      %v910 = vadd.f32 %v668, %v827
      %v911 = vadd.f32 %v669, %v829
      %v912 = vadd.f32 %v670, %v832
      %v913 = vadd.f32 %v671, %v834
      %v914 = vadd.f32 %v672, %v837
      %v915 = vadd.f32 %v673, %v839
      %v916 = vadd.f32 %v674, %v842
      %v917 = vadd.f32 %v675, %v844
      %v918 = vadd.f32 %v676, %v847
      %v919 = vadd.f32 %v677, %v849
      %v920 = vadd.f32 %v678, %v852
      %v921 = vadd.f32 %v679, %v854
      %v922 = vadd.f32 %v680, %v857
      %v923 = vadd.f32 %v681, %v859
      %v924 = vperm.slane %v367, 3
      %v925 = vmul.f32 %v307, %v924
      %v926 = vmul.f32 %v308, %v924
      %v927 = vmul.f32 %v309, %v924
      %v928 = vmul.f32 %v310, %v924
      %v929 = vmul.f32 %v311, %v924
      %v930 = vmul.f32 %v312, %v924
      %v931 = vmul.f32 %v313, %v924
      %v932 = vmul.f32 %v314, %v924
      %v933 = vmul.f32 %v315, %v924
      %v934 = vmul.f32 %v316, %v924
      %v935 = vmul.f32 %v317, %v924
      %v936 = vmul.f32 %v318, %v924
      %v937 = vmul.f32 %v319, %v924
      %v938 = vmul.f32 %v320, %v924
      %v939 = vmul.f32 %v321, %v924
      %v940 = vmul.f32 %v322, %v924
      %v941 = vmul.f32 %v323, %v924
      %v942 = vmul.f32 %v324, %v924
      %v943 = vmul.f32 %v325, %v924
      %v944 = vmul.f32 %v326, %v924
      %v945 = vmul.f32 %v327, %v924
      %v946 = vmul.f32 %v328, %v924
      %v947 = vmul.f32 %v329, %v924
      %v948 = vmul.f32 %v330, %v924
      %v949 = vmul.f32 %v331, %v924
      %v950 = vmul.f32 %v332, %v924
      %v951 = vmul.f32 %v333, %v924
      %v952 = vmul.f32 %v334, %v924
      %v953 = vmul.f32 %v335, %v924
      %v954 = vmul.f32 %v336, %v924
      %v955 = vmul.f32 %v337, %v924
      %v956 = vmul.f32 %v338, %v924
      %v957 = vmul.f32 %v339, %v924
      %v958 = vmul.f32 %v340, %v924
      %v959 = vmul.f32 %v341, %v924
      %v960 = vmul.f32 %v342, %v924
      %v961 = vmul.f32 %v343, %v924
      %v962 = vmul.f32 %v344, %v924
      %v963 = vmul.f32 %v345, %v924
      %v964 = vmul.f32 %v346, %v924
      %v965 = vmul.f32 %v347, %v924
      %v966 = vmul.f32 %v348, %v924
      %v967 = vmul.f32 %v349, %v924
      %v968 = vmul.f32 %v350, %v924
      %v969 = vmul.f32 %v351, %v924
      %v970 = vmul.f32 %v352, %v924
      %v971 = vmul.f32 %v353, %v924
      %v972 = vmul.f32 %v354, %v924
      %vm1021 = vcmask 1044480
      %v1022 = vrot.slane %v925, 3
      %v1023 = vrot.slane %v926, 3
      %v1024 = vsel %vm1021, %v1022, %v1023
      %v1025 = vrot.slane %v927, 3
      %v1026 = vsel %vm1021, %v1023, %v1025
      %v1027 = vrot.slane %v928, 3
      %v1028 = vrot.slane %v929, 3
      %v1029 = vsel %vm1021, %v1027, %v1028
      %v1030 = vrot.slane %v930, 3
      %v1031 = vsel %vm1021, %v1028, %v1030
      %v1032 = vrot.slane %v931, 3
      %v1033 = vrot.slane %v932, 3
      %v1034 = vsel %vm1021, %v1032, %v1033
      %v1035 = vrot.slane %v933, 3
      %v1036 = vsel %vm1021, %v1033, %v1035
      %v1037 = vrot.slane %v934, 3
      %v1038 = vrot.slane %v935, 3
      %v1039 = vsel %vm1021, %v1037, %v1038
      %v1040 = vrot.slane %v936, 3
      %v1041 = vsel %vm1021, %v1038, %v1040
      %v1042 = vrot.slane %v937, 3
      %v1043 = vrot.slane %v938, 3
      %v1044 = vsel %vm1021, %v1042, %v1043
      %v1045 = vrot.slane %v939, 3
      %v1046 = vsel %vm1021, %v1043, %v1045
      %v1047 = vrot.slane %v940, 3
      %v1048 = vrot.slane %v941, 3
      %v1049 = vsel %vm1021, %v1047, %v1048
      %v1050 = vrot.slane %v942, 3
      %v1051 = vsel %vm1021, %v1048, %v1050
      %v1052 = vrot.slane %v943, 3
      %v1053 = vrot.slane %v944, 3
      %v1054 = vsel %vm1021, %v1052, %v1053
      %v1055 = vrot.slane %v945, 3
      %v1056 = vsel %vm1021, %v1053, %v1055
      %v1057 = vrot.slane %v946, 3
      %v1058 = vrot.slane %v947, 3
      %v1059 = vsel %vm1021, %v1057, %v1058
      %v1060 = vrot.slane %v948, 3
      %v1061 = vsel %vm1021, %v1058, %v1060
      %v1062 = vrot.slane %v949, 3
      %v1063 = vrot.slane %v950, 3
      %v1064 = vsel %vm1021, %v1062, %v1063
      %v1065 = vrot.slane %v951, 3
      %v1066 = vsel %vm1021, %v1063, %v1065
      %v1067 = vrot.slane %v952, 3
      %v1068 = vrot.slane %v953, 3
      %v1069 = vsel %vm1021, %v1067, %v1068
      %v1070 = vrot.slane %v954, 3
      %v1071 = vsel %vm1021, %v1068, %v1070
      %v1072 = vrot.slane %v955, 3
      %v1073 = vrot.slane %v956, 3
      %v1074 = vsel %vm1021, %v1072, %v1073
      %v1075 = vrot.slane %v957, 3
      %v1076 = vsel %vm1021, %v1073, %v1075
      %v1077 = vrot.slane %v958, 3
      %v1078 = vrot.slane %v959, 3
      %v1079 = vsel %vm1021, %v1077, %v1078
      %v1080 = vrot.slane %v960, 3
      %v1081 = vsel %vm1021, %v1078, %v1080
      %v1082 = vrot.slane %v961, 3
      %v1083 = vrot.slane %v962, 3
      %v1084 = vsel %vm1021, %v1082, %v1083
      %v1085 = vrot.slane %v963, 3
      %v1086 = vsel %vm1021, %v1083, %v1085
      %v1087 = vrot.slane %v964, 3
      %v1088 = vrot.slane %v965, 3
      %v1089 = vsel %vm1021, %v1087, %v1088
      %v1090 = vrot.slane %v966, 3
      %v1091 = vsel %vm1021, %v1088, %v1090
      %v1092 = vrot.slane %v967, 3
      %v1093 = vrot.slane %v968, 3
      %v1094 = vsel %vm1021, %v1092, %v1093
      %v1095 = vrot.slane %v969, 3
      %v1096 = vsel %vm1021, %v1093, %v1095
      %v1097 = vrot.slane %v970, 3
      %v1098 = vrot.slane %v971, 3
      %v1099 = vsel %vm1021, %v1097, %v1098
      %v1100 = vrot.slane %v972, 3
      %v1101 = vsel %vm1021, %v1098, %v1100
      %v1134 = vadd.f32 %v892, %v1024
      %v1135 = vadd.f32 %v893, %v1026
      %v1136 = vadd.f32 %v894, %v1029
      %v1137 = vadd.f32 %v895, %v1031
      %v1138 = vadd.f32 %v896, %v1034
      %v1139 = vadd.f32 %v897, %v1036
      %v1140 = vadd.f32 %v898, %v1039
      %v1141 = vadd.f32 %v899, %v1041
      %v1142 = vadd.f32 %v900, %v1044
      %v1143 = vadd.f32 %v901, %v1046
      %v1144 = vadd.f32 %v902, %v1049
      %v1145 = vadd.f32 %v903, %v1051
      %v1146 = vadd.f32 %v904, %v1054
      %v1147 = vadd.f32 %v905, %v1056
      %v1148 = vadd.f32 %v906, %v1059
      %v1149 = vadd.f32 %v907, %v1061
      %v1150 = vadd.f32 %v908, %v1064
      %v1151 = vadd.f32 %v909, %v1066
      %v1152 = vadd.f32 %v910, %v1069
      %v1153 = vadd.f32 %v911, %v1071
      %v1154 = vadd.f32 %v912, %v1074
      %v1155 = vadd.f32 %v913, %v1076
      %v1156 = vadd.f32 %v914, %v1079
      %v1157 = vadd.f32 %v915, %v1081
      %v1158 = vadd.f32 %v916, %v1084
      %v1159 = vadd.f32 %v917, %v1086
      %v1160 = vadd.f32 %v918, %v1089
      %v1161 = vadd.f32 %v919, %v1091
      %v1162 = vadd.f32 %v920, %v1094
      %v1163 = vadd.f32 %v921, %v1096
      %v1164 = vadd.f32 %v922, %v1099
      %v1165 = vadd.f32 %v923, %v1101
      %v1166 = vperm.slane %v367, 4
      %v1167 = vmul.f32 %v307, %v1166
      %v1168 = vmul.f32 %v308, %v1166
      %v1169 = vmul.f32 %v309, %v1166
      %v1170 = vmul.f32 %v310, %v1166
      %v1171 = vmul.f32 %v311, %v1166
      %v1172 = vmul.f32 %v312, %v1166
      %v1173 = vmul.f32 %v313, %v1166
      %v1174 = vmul.f32 %v314, %v1166
      %v1175 = vmul.f32 %v315, %v1166
      %v1176 = vmul.f32 %v316, %v1166
      %v1177 = vmul.f32 %v317, %v1166
      %v1178 = vmul.f32 %v318, %v1166
      %v1179 = vmul.f32 %v319, %v1166
      %v1180 = vmul.f32 %v320, %v1166
      %v1181 = vmul.f32 %v321, %v1166
      %v1182 = vmul.f32 %v322, %v1166
      %v1183 = vmul.f32 %v323, %v1166
      %v1184 = vmul.f32 %v324, %v1166
      %v1185 = vmul.f32 %v325, %v1166
      %v1186 = vmul.f32 %v326, %v1166
      %v1187 = vmul.f32 %v327, %v1166
      %v1188 = vmul.f32 %v328, %v1166
      %v1189 = vmul.f32 %v329, %v1166
      %v1190 = vmul.f32 %v330, %v1166
      %v1191 = vmul.f32 %v331, %v1166
      %v1192 = vmul.f32 %v332, %v1166
      %v1193 = vmul.f32 %v333, %v1166
      %v1194 = vmul.f32 %v334, %v1166
      %v1195 = vmul.f32 %v335, %v1166
      %v1196 = vmul.f32 %v336, %v1166
      %v1197 = vmul.f32 %v337, %v1166
      %v1198 = vmul.f32 %v338, %v1166
      %v1199 = vmul.f32 %v339, %v1166
      %v1200 = vmul.f32 %v340, %v1166
      %v1201 = vmul.f32 %v341, %v1166
      %v1202 = vmul.f32 %v342, %v1166
      %v1203 = vmul.f32 %v343, %v1166
      %v1204 = vmul.f32 %v344, %v1166
      %v1205 = vmul.f32 %v345, %v1166
      %v1206 = vmul.f32 %v346, %v1166
      %v1207 = vmul.f32 %v347, %v1166
      %v1208 = vmul.f32 %v348, %v1166
      %v1209 = vmul.f32 %v349, %v1166
      %v1210 = vmul.f32 %v350, %v1166
      %v1211 = vmul.f32 %v351, %v1166
      %v1212 = vmul.f32 %v352, %v1166
      %v1213 = vmul.f32 %v353, %v1166
      %v1214 = vmul.f32 %v354, %v1166
      %vm1263 = vcmask 1043456
      %v1264 = vrot.slane %v1167, 4
      %v1265 = vrot.slane %v1168, 4
      %v1266 = vsel %vm1263, %v1264, %v1265
      %v1267 = vrot.slane %v1169, 4
      %v1268 = vsel %vm1263, %v1265, %v1267
      %v1269 = vrot.slane %v1170, 4
      %v1270 = vrot.slane %v1171, 4
      %v1271 = vsel %vm1263, %v1269, %v1270
      %v1272 = vrot.slane %v1172, 4
      %v1273 = vsel %vm1263, %v1270, %v1272
      %v1274 = vrot.slane %v1173, 4
      %v1275 = vrot.slane %v1174, 4
      %v1276 = vsel %vm1263, %v1274, %v1275
      %v1277 = vrot.slane %v1175, 4
      %v1278 = vsel %vm1263, %v1275, %v1277
      %v1279 = vrot.slane %v1176, 4
      %v1280 = vrot.slane %v1177, 4
      %v1281 = vsel %vm1263, %v1279, %v1280
      %v1282 = vrot.slane %v1178, 4
      %v1283 = vsel %vm1263, %v1280, %v1282
      %v1284 = vrot.slane %v1179, 4
      %v1285 = vrot.slane %v1180, 4
      %v1286 = vsel %vm1263, %v1284, %v1285
      %v1287 = vrot.slane %v1181, 4
      %v1288 = vsel %vm1263, %v1285, %v1287
      %v1289 = vrot.slane %v1182, 4
      %v1290 = vrot.slane %v1183, 4
      %v1291 = vsel %vm1263, %v1289, %v1290
      %v1292 = vrot.slane %v1184, 4
      %v1293 = vsel %vm1263, %v1290, %v1292
      %v1294 = vrot.slane %v1185, 4
      %v1295 = vrot.slane %v1186, 4
      %v1296 = vsel %vm1263, %v1294, %v1295
      %v1297 = vrot.slane %v1187, 4
      %v1298 = vsel %vm1263, %v1295, %v1297
      %v1299 = vrot.slane %v1188, 4
      %v1300 = vrot.slane %v1189, 4
      %v1301 = vsel %vm1263, %v1299, %v1300
      %v1302 = vrot.slane %v1190, 4
      %v1303 = vsel %vm1263, %v1300, %v1302
      %v1304 = vrot.slane %v1191, 4
      %v1305 = vrot.slane %v1192, 4
      %v1306 = vsel %vm1263, %v1304, %v1305
      %v1307 = vrot.slane %v1193, 4
      %v1308 = vsel %vm1263, %v1305, %v1307
      %v1309 = vrot.slane %v1194, 4
      %v1310 = vrot.slane %v1195, 4
      %v1311 = vsel %vm1263, %v1309, %v1310
      %v1312 = vrot.slane %v1196, 4
      %v1313 = vsel %vm1263, %v1310, %v1312
      %v1314 = vrot.slane %v1197, 4
      %v1315 = vrot.slane %v1198, 4
      %v1316 = vsel %vm1263, %v1314, %v1315
      %v1317 = vrot.slane %v1199, 4
      %v1318 = vsel %vm1263, %v1315, %v1317
      %v1319 = vrot.slane %v1200, 4
      %v1320 = vrot.slane %v1201, 4
      %v1321 = vsel %vm1263, %v1319, %v1320
      %v1322 = vrot.slane %v1202, 4
      %v1323 = vsel %vm1263, %v1320, %v1322
      %v1324 = vrot.slane %v1203, 4
      %v1325 = vrot.slane %v1204, 4
      %v1326 = vsel %vm1263, %v1324, %v1325
      %v1327 = vrot.slane %v1205, 4
      %v1328 = vsel %vm1263, %v1325, %v1327
      %v1329 = vrot.slane %v1206, 4
      %v1330 = vrot.slane %v1207, 4
      %v1331 = vsel %vm1263, %v1329, %v1330
      %v1332 = vrot.slane %v1208, 4
      %v1333 = vsel %vm1263, %v1330, %v1332
      %v1334 = vrot.slane %v1209, 4
      %v1335 = vrot.slane %v1210, 4
      %v1336 = vsel %vm1263, %v1334, %v1335
      %v1337 = vrot.slane %v1211, 4
      %v1338 = vsel %vm1263, %v1335, %v1337
      %v1339 = vrot.slane %v1212, 4
      %v1340 = vrot.slane %v1213, 4
      %v1341 = vsel %vm1263, %v1339, %v1340
      %v1342 = vrot.slane %v1214, 4
      %v1343 = vsel %vm1263, %v1340, %v1342
      %v1376 = vadd.f32 %v1134, %v1266
      %v1377 = vadd.f32 %v1135, %v1268
      %v1378 = vadd.f32 %v1136, %v1271
      %v1379 = vadd.f32 %v1137, %v1273
      %v1380 = vadd.f32 %v1138, %v1276
      %v1381 = vadd.f32 %v1139, %v1278
      %v1382 = vadd.f32 %v1140, %v1281
      %v1383 = vadd.f32 %v1141, %v1283
      %v1384 = vadd.f32 %v1142, %v1286
      %v1385 = vadd.f32 %v1143, %v1288
      %v1386 = vadd.f32 %v1144, %v1291
      %v1387 = vadd.f32 %v1145, %v1293
      %v1388 = vadd.f32 %v1146, %v1296
      %v1389 = vadd.f32 %v1147, %v1298
      %v1390 = vadd.f32 %v1148, %v1301
      %v1391 = vadd.f32 %v1149, %v1303
      %v1392 = vadd.f32 %v1150, %v1306
      %v1393 = vadd.f32 %v1151, %v1308
      %v1394 = vadd.f32 %v1152, %v1311
      %v1395 = vadd.f32 %v1153, %v1313
      %v1396 = vadd.f32 %v1154, %v1316
      %v1397 = vadd.f32 %v1155, %v1318
      %v1398 = vadd.f32 %v1156, %v1321
      %v1399 = vadd.f32 %v1157, %v1323
      %v1400 = vadd.f32 %v1158, %v1326
      %v1401 = vadd.f32 %v1159, %v1328
      %v1402 = vadd.f32 %v1160, %v1331
      %v1403 = vadd.f32 %v1161, %v1333
      %v1404 = vadd.f32 %v1162, %v1336
      %v1405 = vadd.f32 %v1163, %v1338
      %v1406 = vadd.f32 %v1164, %v1341
      %v1407 = vadd.f32 %v1165, %v1343
      %v1408 = vperm.slane %v367, 5
      %v1409 = vmul.f32 %v310, %v1408
      %v1410 = vmul.f32 %v311, %v1408
      %v1411 = vmul.f32 %v313, %v1408
      %v1412 = vmul.f32 %v314, %v1408
      %v1413 = vmul.f32 %v316, %v1408
      %v1414 = vmul.f32 %v317, %v1408
      %v1415 = vmul.f32 %v319, %v1408
      %v1416 = vmul.f32 %v320, %v1408
      %v1417 = vmul.f32 %v322, %v1408
      %v1418 = vmul.f32 %v323, %v1408
      %v1419 = vmul.f32 %v325, %v1408
      %v1420 = vmul.f32 %v326, %v1408
      %v1421 = vmul.f32 %v328, %v1408
      %v1422 = vmul.f32 %v329, %v1408
      %v1423 = vmul.f32 %v331, %v1408
      %v1424 = vmul.f32 %v332, %v1408
      %v1425 = vmul.f32 %v334, %v1408
      %v1426 = vmul.f32 %v335, %v1408
      %v1427 = vmul.f32 %v337, %v1408
      %v1428 = vmul.f32 %v338, %v1408
      %v1429 = vmul.f32 %v340, %v1408
      %v1430 = vmul.f32 %v341, %v1408
      %v1431 = vmul.f32 %v343, %v1408
      %v1432 = vmul.f32 %v344, %v1408
      %v1433 = vmul.f32 %v346, %v1408
      %v1434 = vmul.f32 %v347, %v1408
      %v1435 = vmul.f32 %v349, %v1408
      %v1436 = vmul.f32 %v350, %v1408
      %v1437 = vmul.f32 %v352, %v1408
      %v1438 = vmul.f32 %v353, %v1408
      %v1439 = vmul.f32 %v355, %v1408
      %v1440 = vmul.f32 %v356, %v1408
      %v1441 = vadd.f32 %v1376, %v1409
      %v1442 = vadd.f32 %v1377, %v1410
      %v1443 = vadd.f32 %v1378, %v1411
      %v1444 = vadd.f32 %v1379, %v1412
      %v1445 = vadd.f32 %v1380, %v1413
      %v1446 = vadd.f32 %v1381, %v1414
      %v1447 = vadd.f32 %v1382, %v1415
      %v1448 = vadd.f32 %v1383, %v1416
      %v1449 = vadd.f32 %v1384, %v1417
      %v1450 = vadd.f32 %v1385, %v1418
      %v1451 = vadd.f32 %v1386, %v1419
      %v1452 = vadd.f32 %v1387, %v1420
      %v1453 = vadd.f32 %v1388, %v1421
      %v1454 = vadd.f32 %v1389, %v1422
      %v1455 = vadd.f32 %v1390, %v1423
      %v1456 = vadd.f32 %v1391, %v1424
      %v1457 = vadd.f32 %v1392, %v1425
      %v1458 = vadd.f32 %v1393, %v1426
      %v1459 = vadd.f32 %v1394, %v1427
      %v1460 = vadd.f32 %v1395, %v1428
      %v1461 = vadd.f32 %v1396, %v1429
      %v1462 = vadd.f32 %v1397, %v1430
      %v1463 = vadd.f32 %v1398, %v1431
      %v1464 = vadd.f32 %v1399, %v1432
      %v1465 = vadd.f32 %v1400, %v1433
      %v1466 = vadd.f32 %v1401, %v1434
      %v1467 = vadd.f32 %v1402, %v1435
      %v1468 = vadd.f32 %v1403, %v1436
      %v1469 = vadd.f32 %v1404, %v1437
      %v1470 = vadd.f32 %v1405, %v1438
      %v1471 = vadd.f32 %v1406, %v1439
      %v1472 = vadd.f32 %v1407, %v1440
      %v1473 = vperm.slane %v367, 6
      %v1474 = vmul.f32 %v310, %v1473
      %v1475 = vmul.f32 %v311, %v1473
      %v1476 = vmul.f32 %v312, %v1473
      %v1477 = vmul.f32 %v313, %v1473
      %v1478 = vmul.f32 %v314, %v1473
      %v1479 = vmul.f32 %v315, %v1473
      %v1480 = vmul.f32 %v316, %v1473
      %v1481 = vmul.f32 %v317, %v1473
      %v1482 = vmul.f32 %v318, %v1473
      %v1483 = vmul.f32 %v319, %v1473
      %v1484 = vmul.f32 %v320, %v1473
      %v1485 = vmul.f32 %v321, %v1473
      %v1486 = vmul.f32 %v322, %v1473
      %v1487 = vmul.f32 %v323, %v1473
      %v1488 = vmul.f32 %v324, %v1473
      %v1489 = vmul.f32 %v325, %v1473
      %v1490 = vmul.f32 %v326, %v1473
      %v1491 = vmul.f32 %v327, %v1473
      %v1492 = vmul.f32 %v328, %v1473
      %v1493 = vmul.f32 %v329, %v1473
      %v1494 = vmul.f32 %v330, %v1473
      %v1495 = vmul.f32 %v331, %v1473
      %v1496 = vmul.f32 %v332, %v1473
      %v1497 = vmul.f32 %v333, %v1473
      %v1498 = vmul.f32 %v334, %v1473
      %v1499 = vmul.f32 %v335, %v1473
      %v1500 = vmul.f32 %v336, %v1473
      %v1501 = vmul.f32 %v337, %v1473
      %v1502 = vmul.f32 %v338, %v1473
      %v1503 = vmul.f32 %v339, %v1473
      %v1504 = vmul.f32 %v340, %v1473
      %v1505 = vmul.f32 %v341, %v1473
      %v1506 = vmul.f32 %v342, %v1473
      %v1507 = vmul.f32 %v343, %v1473
      %v1508 = vmul.f32 %v344, %v1473
      %v1509 = vmul.f32 %v345, %v1473
      %v1510 = vmul.f32 %v346, %v1473
      %v1511 = vmul.f32 %v347, %v1473
      %v1512 = vmul.f32 %v348, %v1473
      %v1513 = vmul.f32 %v349, %v1473
      %v1514 = vmul.f32 %v350, %v1473
      %v1515 = vmul.f32 %v351, %v1473
      %v1516 = vmul.f32 %v352, %v1473
      %v1517 = vmul.f32 %v353, %v1473
      %v1518 = vmul.f32 %v354, %v1473
      %v1519 = vmul.f32 %v355, %v1473
      %v1520 = vmul.f32 %v356, %v1473
      %v1521 = vmul.f32 %v357, %v1473
      %v1570 = vrot.slane %v1474, 1
      %v1571 = vrot.slane %v1475, 1
      %v1572 = vsel %vm537, %v1570, %v1571
      %v1573 = vrot.slane %v1476, 1
      %v1574 = vsel %vm537, %v1571, %v1573
      %v1575 = vrot.slane %v1477, 1
      %v1576 = vrot.slane %v1478, 1
      %v1577 = vsel %vm537, %v1575, %v1576
      %v1578 = vrot.slane %v1479, 1
      %v1579 = vsel %vm537, %v1576, %v1578
      %v1580 = vrot.slane %v1480, 1
      %v1581 = vrot.slane %v1481, 1
      %v1582 = vsel %vm537, %v1580, %v1581
      %v1583 = vrot.slane %v1482, 1
      %v1584 = vsel %vm537, %v1581, %v1583
      %v1585 = vrot.slane %v1483, 1
      %v1586 = vrot.slane %v1484, 1
      %v1587 = vsel %vm537, %v1585, %v1586
      %v1588 = vrot.slane %v1485, 1
      %v1589 = vsel %vm537, %v1586, %v1588
      %v1590 = vrot.slane %v1486, 1
      %v1591 = vrot.slane %v1487, 1
      %v1592 = vsel %vm537, %v1590, %v1591
      %v1593 = vrot.slane %v1488, 1
      %v1594 = vsel %vm537, %v1591, %v1593
      %v1595 = vrot.slane %v1489, 1
      %v1596 = vrot.slane %v1490, 1
      %v1597 = vsel %vm537, %v1595, %v1596
      %v1598 = vrot.slane %v1491, 1
      %v1599 = vsel %vm537, %v1596, %v1598
      %v1600 = vrot.slane %v1492, 1
      %v1601 = vrot.slane %v1493, 1
      %v1602 = vsel %vm537, %v1600, %v1601
      %v1603 = vrot.slane %v1494, 1
      %v1604 = vsel %vm537, %v1601, %v1603
      %v1605 = vrot.slane %v1495, 1
      %v1606 = vrot.slane %v1496, 1
      %v1607 = vsel %vm537, %v1605, %v1606
      %v1608 = vrot.slane %v1497, 1
      %v1609 = vsel %vm537, %v1606, %v1608
      %v1610 = vrot.slane %v1498, 1
      %v1611 = vrot.slane %v1499, 1
      %v1612 = vsel %vm537, %v1610, %v1611
      %v1613 = vrot.slane %v1500, 1
      %v1614 = vsel %vm537, %v1611, %v1613
      %v1615 = vrot.slane %v1501, 1
      %v1616 = vrot.slane %v1502, 1
      %v1617 = vsel %vm537, %v1615, %v1616
      %v1618 = vrot.slane %v1503, 1
      %v1619 = vsel %vm537, %v1616, %v1618
      %v1620 = vrot.slane %v1504, 1
      %v1621 = vrot.slane %v1505, 1
      %v1622 = vsel %vm537, %v1620, %v1621
      %v1623 = vrot.slane %v1506, 1
      %v1624 = vsel %vm537, %v1621, %v1623
      %v1625 = vrot.slane %v1507, 1
      %v1626 = vrot.slane %v1508, 1
      %v1627 = vsel %vm537, %v1625, %v1626
      %v1628 = vrot.slane %v1509, 1
      %v1629 = vsel %vm537, %v1626, %v1628
      %v1630 = vrot.slane %v1510, 1
      %v1631 = vrot.slane %v1511, 1
      %v1632 = vsel %vm537, %v1630, %v1631
      %v1633 = vrot.slane %v1512, 1
      %v1634 = vsel %vm537, %v1631, %v1633
      %v1635 = vrot.slane %v1513, 1
      %v1636 = vrot.slane %v1514, 1
      %v1637 = vsel %vm537, %v1635, %v1636
      %v1638 = vrot.slane %v1515, 1
      %v1639 = vsel %vm537, %v1636, %v1638
      %v1640 = vrot.slane %v1516, 1
      %v1641 = vrot.slane %v1517, 1
      %v1642 = vsel %vm537, %v1640, %v1641
      %v1643 = vrot.slane %v1518, 1
      %v1644 = vsel %vm537, %v1641, %v1643
      %v1645 = vrot.slane %v1519, 1
      %v1646 = vrot.slane %v1520, 1
      %v1647 = vsel %vm537, %v1645, %v1646
      %v1648 = vrot.slane %v1521, 1
      %v1649 = vsel %vm537, %v1646, %v1648
      %v1682 = vadd.f32 %v1441, %v1572
      %v1683 = vadd.f32 %v1442, %v1574
      %v1684 = vadd.f32 %v1443, %v1577
      %v1685 = vadd.f32 %v1444, %v1579
      %v1686 = vadd.f32 %v1445, %v1582
      %v1687 = vadd.f32 %v1446, %v1584
      %v1688 = vadd.f32 %v1447, %v1587
      %v1689 = vadd.f32 %v1448, %v1589
      %v1690 = vadd.f32 %v1449, %v1592
      %v1691 = vadd.f32 %v1450, %v1594
      %v1692 = vadd.f32 %v1451, %v1597
      %v1693 = vadd.f32 %v1452, %v1599
      %v1694 = vadd.f32 %v1453, %v1602
      %v1695 = vadd.f32 %v1454, %v1604
      %v1696 = vadd.f32 %v1455, %v1607
      %v1697 = vadd.f32 %v1456, %v1609
      %v1698 = vadd.f32 %v1457, %v1612
      %v1699 = vadd.f32 %v1458, %v1614
      %v1700 = vadd.f32 %v1459, %v1617
      %v1701 = vadd.f32 %v1460, %v1619
      %v1702 = vadd.f32 %v1461, %v1622
      %v1703 = vadd.f32 %v1462, %v1624
      %v1704 = vadd.f32 %v1463, %v1627
      %v1705 = vadd.f32 %v1464, %v1629
      %v1706 = vadd.f32 %v1465, %v1632
      %v1707 = vadd.f32 %v1466, %v1634
      %v1708 = vadd.f32 %v1467, %v1637
      %v1709 = vadd.f32 %v1468, %v1639
      %v1710 = vadd.f32 %v1469, %v1642
      %v1711 = vadd.f32 %v1470, %v1644
      %v1712 = vadd.f32 %v1471, %v1647
      %v1713 = vadd.f32 %v1472, %v1649
      %v1714 = vperm.slane %v367, 7
      %v1715 = vmul.f32 %v310, %v1714
      %v1716 = vmul.f32 %v311, %v1714
      %v1717 = vmul.f32 %v312, %v1714
      %v1718 = vmul.f32 %v313, %v1714
      %v1719 = vmul.f32 %v314, %v1714
      %v1720 = vmul.f32 %v315, %v1714
      %v1721 = vmul.f32 %v316, %v1714
      %v1722 = vmul.f32 %v317, %v1714
      %v1723 = vmul.f32 %v318, %v1714
      %v1724 = vmul.f32 %v319, %v1714
      %v1725 = vmul.f32 %v320, %v1714
      %v1726 = vmul.f32 %v321, %v1714
      %v1727 = vmul.f32 %v322, %v1714
      %v1728 = vmul.f32 %v323, %v1714
      %v1729 = vmul.f32 %v324, %v1714
      %v1730 = vmul.f32 %v325, %v1714
      %v1731 = vmul.f32 %v326, %v1714
      %v1732 = vmul.f32 %v327, %v1714
      %v1733 = vmul.f32 %v328, %v1714
      %v1734 = vmul.f32 %v329, %v1714
      %v1735 = vmul.f32 %v330, %v1714
      %v1736 = vmul.f32 %v331, %v1714
      %v1737 = vmul.f32 %v332, %v1714
      %v1738 = vmul.f32 %v333, %v1714
      %v1739 = vmul.f32 %v334, %v1714
      %v1740 = vmul.f32 %v335, %v1714
      %v1741 = vmul.f32 %v336, %v1714
      %v1742 = vmul.f32 %v337, %v1714
      %v1743 = vmul.f32 %v338, %v1714
      %v1744 = vmul.f32 %v339, %v1714
      %v1745 = vmul.f32 %v340, %v1714
      %v1746 = vmul.f32 %v341, %v1714
      %v1747 = vmul.f32 %v342, %v1714
      %v1748 = vmul.f32 %v343, %v1714
      %v1749 = vmul.f32 %v344, %v1714
      %v1750 = vmul.f32 %v345, %v1714
      %v1751 = vmul.f32 %v346, %v1714
      %v1752 = vmul.f32 %v347, %v1714
      %v1753 = vmul.f32 %v348, %v1714
      %v1754 = vmul.f32 %v349, %v1714
      %v1755 = vmul.f32 %v350, %v1714
      %v1756 = vmul.f32 %v351, %v1714
      %v1757 = vmul.f32 %v352, %v1714
      %v1758 = vmul.f32 %v353, %v1714
      %v1759 = vmul.f32 %v354, %v1714
      %v1760 = vmul.f32 %v355, %v1714
      %v1761 = vmul.f32 %v356, %v1714
      %v1762 = vmul.f32 %v357, %v1714
      %v1811 = vrot.slane %v1715, 2
      %v1812 = vrot.slane %v1716, 2
      %v1813 = vsel %vm779, %v1811, %v1812
      %v1814 = vrot.slane %v1717, 2
      %v1815 = vsel %vm779, %v1812, %v1814
      %v1816 = vrot.slane %v1718, 2
      %v1817 = vrot.slane %v1719, 2
      %v1818 = vsel %vm779, %v1816, %v1817
      %v1819 = vrot.slane %v1720, 2
      %v1820 = vsel %vm779, %v1817, %v1819
      %v1821 = vrot.slane %v1721, 2
      %v1822 = vrot.slane %v1722, 2
      %v1823 = vsel %vm779, %v1821, %v1822
      %v1824 = vrot.slane %v1723, 2
      %v1825 = vsel %vm779, %v1822, %v1824
      %v1826 = vrot.slane %v1724, 2
      %v1827 = vrot.slane %v1725, 2
      %v1828 = vsel %vm779, %v1826, %v1827
      %v1829 = vrot.slane %v1726, 2
      %v1830 = vsel %vm779, %v1827, %v1829
      %v1831 = vrot.slane %v1727, 2
      %v1832 = vrot.slane %v1728, 2
      %v1833 = vsel %vm779, %v1831, %v1832
      %v1834 = vrot.slane %v1729, 2
      %v1835 = vsel %vm779, %v1832, %v1834
      %v1836 = vrot.slane %v1730, 2
      %v1837 = vrot.slane %v1731, 2
      %v1838 = vsel %vm779, %v1836, %v1837
      %v1839 = vrot.slane %v1732, 2
      %v1840 = vsel %vm779, %v1837, %v1839
      %v1841 = vrot.slane %v1733, 2
      %v1842 = vrot.slane %v1734, 2
      %v1843 = vsel %vm779, %v1841, %v1842
      %v1844 = vrot.slane %v1735, 2
      %v1845 = vsel %vm779, %v1842, %v1844
      %v1846 = vrot.slane %v1736, 2
      %v1847 = vrot.slane %v1737, 2
      %v1848 = vsel %vm779, %v1846, %v1847
      %v1849 = vrot.slane %v1738, 2
      %v1850 = vsel %vm779, %v1847, %v1849
      %v1851 = vrot.slane %v1739, 2
      %v1852 = vrot.slane %v1740, 2
      %v1853 = vsel %vm779, %v1851, %v1852
      %v1854 = vrot.slane %v1741, 2
      %v1855 = vsel %vm779, %v1852, %v1854
      %v1856 = vrot.slane %v1742, 2
      %v1857 = vrot.slane %v1743, 2
      %v1858 = vsel %vm779, %v1856, %v1857
      %v1859 = vrot.slane %v1744, 2
      %v1860 = vsel %vm779, %v1857, %v1859
      %v1861 = vrot.slane %v1745, 2
      %v1862 = vrot.slane %v1746, 2
      %v1863 = vsel %vm779, %v1861, %v1862
      %v1864 = vrot.slane %v1747, 2
      %v1865 = vsel %vm779, %v1862, %v1864
      %v1866 = vrot.slane %v1748, 2
      %v1867 = vrot.slane %v1749, 2
      %v1868 = vsel %vm779, %v1866, %v1867
      %v1869 = vrot.slane %v1750, 2
      %v1870 = vsel %vm779, %v1867, %v1869
      %v1871 = vrot.slane %v1751, 2
      %v1872 = vrot.slane %v1752, 2
      %v1873 = vsel %vm779, %v1871, %v1872
      %v1874 = vrot.slane %v1753, 2
      %v1875 = vsel %vm779, %v1872, %v1874
      %v1876 = vrot.slane %v1754, 2
      %v1877 = vrot.slane %v1755, 2
      %v1878 = vsel %vm779, %v1876, %v1877
      %v1879 = vrot.slane %v1756, 2
      %v1880 = vsel %vm779, %v1877, %v1879
      %v1881 = vrot.slane %v1757, 2
      %v1882 = vrot.slane %v1758, 2
      %v1883 = vsel %vm779, %v1881, %v1882
      %v1884 = vrot.slane %v1759, 2
      %v1885 = vsel %vm779, %v1882, %v1884
      %v1886 = vrot.slane %v1760, 2
      %v1887 = vrot.slane %v1761, 2
      %v1888 = vsel %vm779, %v1886, %v1887
      %v1889 = vrot.slane %v1762, 2
      %v1890 = vsel %vm779, %v1887, %v1889
      %v1923 = vadd.f32 %v1682, %v1813
      %v1924 = vadd.f32 %v1683, %v1815
      %v1925 = vadd.f32 %v1684, %v1818
      %v1926 = vadd.f32 %v1685, %v1820
      %v1927 = vadd.f32 %v1686, %v1823
      %v1928 = vadd.f32 %v1687, %v1825
      %v1929 = vadd.f32 %v1688, %v1828
      %v1930 = vadd.f32 %v1689, %v1830
      %v1931 = vadd.f32 %v1690, %v1833
      %v1932 = vadd.f32 %v1691, %v1835
      %v1933 = vadd.f32 %v1692, %v1838
      %v1934 = vadd.f32 %v1693, %v1840
      %v1935 = vadd.f32 %v1694, %v1843
      %v1936 = vadd.f32 %v1695, %v1845
      %v1937 = vadd.f32 %v1696, %v1848
      %v1938 = vadd.f32 %v1697, %v1850
      %v1939 = vadd.f32 %v1698, %v1853
      %v1940 = vadd.f32 %v1699, %v1855
      %v1941 = vadd.f32 %v1700, %v1858
      %v1942 = vadd.f32 %v1701, %v1860
      %v1943 = vadd.f32 %v1702, %v1863
      %v1944 = vadd.f32 %v1703, %v1865
      %v1945 = vadd.f32 %v1704, %v1868
      %v1946 = vadd.f32 %v1705, %v1870
      %v1947 = vadd.f32 %v1706, %v1873
      %v1948 = vadd.f32 %v1707, %v1875
      %v1949 = vadd.f32 %v1708, %v1878
      %v1950 = vadd.f32 %v1709, %v1880
      %v1951 = vadd.f32 %v1710, %v1883
      %v1952 = vadd.f32 %v1711, %v1885
      %v1953 = vadd.f32 %v1712, %v1888
      %v1954 = vadd.f32 %v1713, %v1890
      %v1955 = vperm.slane %v368, 0
      %v1956 = vmul.f32 %v310, %v1955
      %v1957 = vmul.f32 %v311, %v1955
      %v1958 = vmul.f32 %v312, %v1955
      %v1959 = vmul.f32 %v313, %v1955
      %v1960 = vmul.f32 %v314, %v1955
      %v1961 = vmul.f32 %v315, %v1955
      %v1962 = vmul.f32 %v316, %v1955
      %v1963 = vmul.f32 %v317, %v1955
      %v1964 = vmul.f32 %v318, %v1955
      %v1965 = vmul.f32 %v319, %v1955
      %v1966 = vmul.f32 %v320, %v1955
      %v1967 = vmul.f32 %v321, %v1955
      %v1968 = vmul.f32 %v322, %v1955
      %v1969 = vmul.f32 %v323, %v1955
      %v1970 = vmul.f32 %v324, %v1955
      %v1971 = vmul.f32 %v325, %v1955
      %v1972 = vmul.f32 %v326, %v1955
      %v1973 = vmul.f32 %v327, %v1955
      %v1974 = vmul.f32 %v328, %v1955
      %v1975 = vmul.f32 %v329, %v1955
      %v1976 = vmul.f32 %v330, %v1955
      %v1977 = vmul.f32 %v331, %v1955
      %v1978 = vmul.f32 %v332, %v1955
      %v1979 = vmul.f32 %v333, %v1955
      %v1980 = vmul.f32 %v334, %v1955
      %v1981 = vmul.f32 %v335, %v1955
      %v1982 = vmul.f32 %v336, %v1955
      %v1983 = vmul.f32 %v337, %v1955
      %v1984 = vmul.f32 %v338, %v1955
      %v1985 = vmul.f32 %v339, %v1955
      %v1986 = vmul.f32 %v340, %v1955
      %v1987 = vmul.f32 %v341, %v1955
      %v1988 = vmul.f32 %v342, %v1955
      %v1989 = vmul.f32 %v343, %v1955
      %v1990 = vmul.f32 %v344, %v1955
      %v1991 = vmul.f32 %v345, %v1955
      %v1992 = vmul.f32 %v346, %v1955
      %v1993 = vmul.f32 %v347, %v1955
      %v1994 = vmul.f32 %v348, %v1955
      %v1995 = vmul.f32 %v349, %v1955
      %v1996 = vmul.f32 %v350, %v1955
      %v1997 = vmul.f32 %v351, %v1955
      %v1998 = vmul.f32 %v352, %v1955
      %v1999 = vmul.f32 %v353, %v1955
      %v2000 = vmul.f32 %v354, %v1955
      %v2001 = vmul.f32 %v355, %v1955
      %v2002 = vmul.f32 %v356, %v1955
      %v2003 = vmul.f32 %v357, %v1955
      %v2052 = vrot.slane %v1956, 3
      %v2053 = vrot.slane %v1957, 3
      %v2054 = vsel %vm1021, %v2052, %v2053
      %v2055 = vrot.slane %v1958, 3
      %v2056 = vsel %vm1021, %v2053, %v2055
      %v2057 = vrot.slane %v1959, 3
      %v2058 = vrot.slane %v1960, 3
      %v2059 = vsel %vm1021, %v2057, %v2058
      %v2060 = vrot.slane %v1961, 3
      %v2061 = vsel %vm1021, %v2058, %v2060
      %v2062 = vrot.slane %v1962, 3
      %v2063 = vrot.slane %v1963, 3
      %v2064 = vsel %vm1021, %v2062, %v2063
      %v2065 = vrot.slane %v1964, 3
      %v2066 = vsel %vm1021, %v2063, %v2065
      %v2067 = vrot.slane %v1965, 3
      %v2068 = vrot.slane %v1966, 3
      %v2069 = vsel %vm1021, %v2067, %v2068
      %v2070 = vrot.slane %v1967, 3
      %v2071 = vsel %vm1021, %v2068, %v2070
      %v2072 = vrot.slane %v1968, 3
      %v2073 = vrot.slane %v1969, 3
      %v2074 = vsel %vm1021, %v2072, %v2073
      %v2075 = vrot.slane %v1970, 3
      %v2076 = vsel %vm1021, %v2073, %v2075
      %v2077 = vrot.slane %v1971, 3
      %v2078 = vrot.slane %v1972, 3
      %v2079 = vsel %vm1021, %v2077, %v2078
      %v2080 = vrot.slane %v1973, 3
      %v2081 = vsel %vm1021, %v2078, %v2080
      %v2082 = vrot.slane %v1974, 3
      %v2083 = vrot.slane %v1975, 3
      %v2084 = vsel %vm1021, %v2082, %v2083
      %v2085 = vrot.slane %v1976, 3
      %v2086 = vsel %vm1021, %v2083, %v2085
      %v2087 = vrot.slane %v1977, 3
      %v2088 = vrot.slane %v1978, 3
      %v2089 = vsel %vm1021, %v2087, %v2088
      %v2090 = vrot.slane %v1979, 3
      %v2091 = vsel %vm1021, %v2088, %v2090
      %v2092 = vrot.slane %v1980, 3
      %v2093 = vrot.slane %v1981, 3
      %v2094 = vsel %vm1021, %v2092, %v2093
      %v2095 = vrot.slane %v1982, 3
      %v2096 = vsel %vm1021, %v2093, %v2095
      %v2097 = vrot.slane %v1983, 3
      %v2098 = vrot.slane %v1984, 3
      %v2099 = vsel %vm1021, %v2097, %v2098
      %v2100 = vrot.slane %v1985, 3
      %v2101 = vsel %vm1021, %v2098, %v2100
      %v2102 = vrot.slane %v1986, 3
      %v2103 = vrot.slane %v1987, 3
      %v2104 = vsel %vm1021, %v2102, %v2103
      %v2105 = vrot.slane %v1988, 3
      %v2106 = vsel %vm1021, %v2103, %v2105
      %v2107 = vrot.slane %v1989, 3
      %v2108 = vrot.slane %v1990, 3
      %v2109 = vsel %vm1021, %v2107, %v2108
      %v2110 = vrot.slane %v1991, 3
      %v2111 = vsel %vm1021, %v2108, %v2110
      %v2112 = vrot.slane %v1992, 3
      %v2113 = vrot.slane %v1993, 3
      %v2114 = vsel %vm1021, %v2112, %v2113
      %v2115 = vrot.slane %v1994, 3
      %v2116 = vsel %vm1021, %v2113, %v2115
      %v2117 = vrot.slane %v1995, 3
      %v2118 = vrot.slane %v1996, 3
      %v2119 = vsel %vm1021, %v2117, %v2118
      %v2120 = vrot.slane %v1997, 3
      %v2121 = vsel %vm1021, %v2118, %v2120
      %v2122 = vrot.slane %v1998, 3
      %v2123 = vrot.slane %v1999, 3
      %v2124 = vsel %vm1021, %v2122, %v2123
      %v2125 = vrot.slane %v2000, 3
      %v2126 = vsel %vm1021, %v2123, %v2125
      %v2127 = vrot.slane %v2001, 3
      %v2128 = vrot.slane %v2002, 3
      %v2129 = vsel %vm1021, %v2127, %v2128
      %v2130 = vrot.slane %v2003, 3
      %v2131 = vsel %vm1021, %v2128, %v2130
      %v2164 = vadd.f32 %v1923, %v2054
      %v2165 = vadd.f32 %v1924, %v2056
      %v2166 = vadd.f32 %v1925, %v2059
      %v2167 = vadd.f32 %v1926, %v2061
      %v2168 = vadd.f32 %v1927, %v2064
      %v2169 = vadd.f32 %v1928, %v2066
      %v2170 = vadd.f32 %v1929, %v2069
      %v2171 = vadd.f32 %v1930, %v2071
      %v2172 = vadd.f32 %v1931, %v2074
      %v2173 = vadd.f32 %v1932, %v2076
      %v2174 = vadd.f32 %v1933, %v2079
      %v2175 = vadd.f32 %v1934, %v2081
      %v2176 = vadd.f32 %v1935, %v2084
      %v2177 = vadd.f32 %v1936, %v2086
      %v2178 = vadd.f32 %v1937, %v2089
      %v2179 = vadd.f32 %v1938, %v2091
      %v2180 = vadd.f32 %v1939, %v2094
      %v2181 = vadd.f32 %v1940, %v2096
      %v2182 = vadd.f32 %v1941, %v2099
      %v2183 = vadd.f32 %v1942, %v2101
      %v2184 = vadd.f32 %v1943, %v2104
      %v2185 = vadd.f32 %v1944, %v2106
      %v2186 = vadd.f32 %v1945, %v2109
      %v2187 = vadd.f32 %v1946, %v2111
      %v2188 = vadd.f32 %v1947, %v2114
      %v2189 = vadd.f32 %v1948, %v2116
      %v2190 = vadd.f32 %v1949, %v2119
      %v2191 = vadd.f32 %v1950, %v2121
      %v2192 = vadd.f32 %v1951, %v2124
      %v2193 = vadd.f32 %v1952, %v2126
      %v2194 = vadd.f32 %v1953, %v2129
      %v2195 = vadd.f32 %v1954, %v2131
      %v2196 = vperm.slane %v368, 1
      %v2197 = vmul.f32 %v310, %v2196
      %v2198 = vmul.f32 %v311, %v2196
      %v2199 = vmul.f32 %v312, %v2196
      %v2200 = vmul.f32 %v313, %v2196
      %v2201 = vmul.f32 %v314, %v2196
      %v2202 = vmul.f32 %v315, %v2196
      %v2203 = vmul.f32 %v316, %v2196
      %v2204 = vmul.f32 %v317, %v2196
      %v2205 = vmul.f32 %v318, %v2196
      %v2206 = vmul.f32 %v319, %v2196
      %v2207 = vmul.f32 %v320, %v2196
      %v2208 = vmul.f32 %v321, %v2196
      %v2209 = vmul.f32 %v322, %v2196
      %v2210 = vmul.f32 %v323, %v2196
      %v2211 = vmul.f32 %v324, %v2196
      %v2212 = vmul.f32 %v325, %v2196
      %v2213 = vmul.f32 %v326, %v2196
      %v2214 = vmul.f32 %v327, %v2196
      %v2215 = vmul.f32 %v328, %v2196
      %v2216 = vmul.f32 %v329, %v2196
      %v2217 = vmul.f32 %v330, %v2196
      %v2218 = vmul.f32 %v331, %v2196
      %v2219 = vmul.f32 %v332, %v2196
      %v2220 = vmul.f32 %v333, %v2196
      %v2221 = vmul.f32 %v334, %v2196
      %v2222 = vmul.f32 %v335, %v2196
      %v2223 = vmul.f32 %v336, %v2196
      %v2224 = vmul.f32 %v337, %v2196
      %v2225 = vmul.f32 %v338, %v2196
      %v2226 = vmul.f32 %v339, %v2196
      %v2227 = vmul.f32 %v340, %v2196
      %v2228 = vmul.f32 %v341, %v2196
      %v2229 = vmul.f32 %v342, %v2196
      %v2230 = vmul.f32 %v343, %v2196
      %v2231 = vmul.f32 %v344, %v2196
      %v2232 = vmul.f32 %v345, %v2196
      %v2233 = vmul.f32 %v346, %v2196
      %v2234 = vmul.f32 %v347, %v2196
      %v2235 = vmul.f32 %v348, %v2196
      %v2236 = vmul.f32 %v349, %v2196
      %v2237 = vmul.f32 %v350, %v2196
      %v2238 = vmul.f32 %v351, %v2196
      %v2239 = vmul.f32 %v352, %v2196
      %v2240 = vmul.f32 %v353, %v2196
      %v2241 = vmul.f32 %v354, %v2196
      %v2242 = vmul.f32 %v355, %v2196
      %v2243 = vmul.f32 %v356, %v2196
      %v2244 = vmul.f32 %v357, %v2196
      %v2293 = vrot.slane %v2197, 4
      %v2294 = vrot.slane %v2198, 4
      %v2295 = vsel %vm1263, %v2293, %v2294
      %v2296 = vrot.slane %v2199, 4
      %v2297 = vsel %vm1263, %v2294, %v2296
      %v2298 = vrot.slane %v2200, 4
      %v2299 = vrot.slane %v2201, 4
      %v2300 = vsel %vm1263, %v2298, %v2299
      %v2301 = vrot.slane %v2202, 4
      %v2302 = vsel %vm1263, %v2299, %v2301
      %v2303 = vrot.slane %v2203, 4
      %v2304 = vrot.slane %v2204, 4
      %v2305 = vsel %vm1263, %v2303, %v2304
      %v2306 = vrot.slane %v2205, 4
      %v2307 = vsel %vm1263, %v2304, %v2306
      %v2308 = vrot.slane %v2206, 4
      %v2309 = vrot.slane %v2207, 4
      %v2310 = vsel %vm1263, %v2308, %v2309
      %v2311 = vrot.slane %v2208, 4
      %v2312 = vsel %vm1263, %v2309, %v2311
      %v2313 = vrot.slane %v2209, 4
      %v2314 = vrot.slane %v2210, 4
      %v2315 = vsel %vm1263, %v2313, %v2314
      %v2316 = vrot.slane %v2211, 4
      %v2317 = vsel %vm1263, %v2314, %v2316
      %v2318 = vrot.slane %v2212, 4
      %v2319 = vrot.slane %v2213, 4
      %v2320 = vsel %vm1263, %v2318, %v2319
      %v2321 = vrot.slane %v2214, 4
      %v2322 = vsel %vm1263, %v2319, %v2321
      %v2323 = vrot.slane %v2215, 4
      %v2324 = vrot.slane %v2216, 4
      %v2325 = vsel %vm1263, %v2323, %v2324
      %v2326 = vrot.slane %v2217, 4
      %v2327 = vsel %vm1263, %v2324, %v2326
      %v2328 = vrot.slane %v2218, 4
      %v2329 = vrot.slane %v2219, 4
      %v2330 = vsel %vm1263, %v2328, %v2329
      %v2331 = vrot.slane %v2220, 4
      %v2332 = vsel %vm1263, %v2329, %v2331
      %v2333 = vrot.slane %v2221, 4
      %v2334 = vrot.slane %v2222, 4
      %v2335 = vsel %vm1263, %v2333, %v2334
      %v2336 = vrot.slane %v2223, 4
      %v2337 = vsel %vm1263, %v2334, %v2336
      %v2338 = vrot.slane %v2224, 4
      %v2339 = vrot.slane %v2225, 4
      %v2340 = vsel %vm1263, %v2338, %v2339
      %v2341 = vrot.slane %v2226, 4
      %v2342 = vsel %vm1263, %v2339, %v2341
      %v2343 = vrot.slane %v2227, 4
      %v2344 = vrot.slane %v2228, 4
      %v2345 = vsel %vm1263, %v2343, %v2344
      %v2346 = vrot.slane %v2229, 4
      %v2347 = vsel %vm1263, %v2344, %v2346
      %v2348 = vrot.slane %v2230, 4
      %v2349 = vrot.slane %v2231, 4
      %v2350 = vsel %vm1263, %v2348, %v2349
      %v2351 = vrot.slane %v2232, 4
      %v2352 = vsel %vm1263, %v2349, %v2351
      %v2353 = vrot.slane %v2233, 4
      %v2354 = vrot.slane %v2234, 4
      %v2355 = vsel %vm1263, %v2353, %v2354
      %v2356 = vrot.slane %v2235, 4
      %v2357 = vsel %vm1263, %v2354, %v2356
      %v2358 = vrot.slane %v2236, 4
      %v2359 = vrot.slane %v2237, 4
      %v2360 = vsel %vm1263, %v2358, %v2359
      %v2361 = vrot.slane %v2238, 4
      %v2362 = vsel %vm1263, %v2359, %v2361
      %v2363 = vrot.slane %v2239, 4
      %v2364 = vrot.slane %v2240, 4
      %v2365 = vsel %vm1263, %v2363, %v2364
      %v2366 = vrot.slane %v2241, 4
      %v2367 = vsel %vm1263, %v2364, %v2366
      %v2368 = vrot.slane %v2242, 4
      %v2369 = vrot.slane %v2243, 4
      %v2370 = vsel %vm1263, %v2368, %v2369
      %v2371 = vrot.slane %v2244, 4
      %v2372 = vsel %vm1263, %v2369, %v2371
      %v2405 = vadd.f32 %v2164, %v2295
      %v2406 = vadd.f32 %v2165, %v2297
      %v2407 = vadd.f32 %v2166, %v2300
      %v2408 = vadd.f32 %v2167, %v2302
      %v2409 = vadd.f32 %v2168, %v2305
      %v2410 = vadd.f32 %v2169, %v2307
      %v2411 = vadd.f32 %v2170, %v2310
      %v2412 = vadd.f32 %v2171, %v2312
      %v2413 = vadd.f32 %v2172, %v2315
      %v2414 = vadd.f32 %v2173, %v2317
      %v2415 = vadd.f32 %v2174, %v2320
      %v2416 = vadd.f32 %v2175, %v2322
      %v2417 = vadd.f32 %v2176, %v2325
      %v2418 = vadd.f32 %v2177, %v2327
      %v2419 = vadd.f32 %v2178, %v2330
      %v2420 = vadd.f32 %v2179, %v2332
      %v2421 = vadd.f32 %v2180, %v2335
      %v2422 = vadd.f32 %v2181, %v2337
      %v2423 = vadd.f32 %v2182, %v2340
      %v2424 = vadd.f32 %v2183, %v2342
      %v2425 = vadd.f32 %v2184, %v2345
      %v2426 = vadd.f32 %v2185, %v2347
      %v2427 = vadd.f32 %v2186, %v2350
      %v2428 = vadd.f32 %v2187, %v2352
      %v2429 = vadd.f32 %v2188, %v2355
      %v2430 = vadd.f32 %v2189, %v2357
      %v2431 = vadd.f32 %v2190, %v2360
      %v2432 = vadd.f32 %v2191, %v2362
      %v2433 = vadd.f32 %v2192, %v2365
      %v2434 = vadd.f32 %v2193, %v2367
      %v2435 = vadd.f32 %v2194, %v2370
      %v2436 = vadd.f32 %v2195, %v2372
      %v2437 = vperm.slane %v368, 2
      %v2438 = vmul.f32 %v313, %v2437
      %v2439 = vmul.f32 %v314, %v2437
      %v2440 = vmul.f32 %v316, %v2437
      %v2441 = vmul.f32 %v317, %v2437
      %v2442 = vmul.f32 %v319, %v2437
      %v2443 = vmul.f32 %v320, %v2437
      %v2444 = vmul.f32 %v322, %v2437
      %v2445 = vmul.f32 %v323, %v2437
      %v2446 = vmul.f32 %v325, %v2437
      %v2447 = vmul.f32 %v326, %v2437
      %v2448 = vmul.f32 %v328, %v2437
      %v2449 = vmul.f32 %v329, %v2437
      %v2450 = vmul.f32 %v331, %v2437
      %v2451 = vmul.f32 %v332, %v2437
      %v2452 = vmul.f32 %v334, %v2437
      %v2453 = vmul.f32 %v335, %v2437
      %v2454 = vmul.f32 %v337, %v2437
      %v2455 = vmul.f32 %v338, %v2437
      %v2456 = vmul.f32 %v340, %v2437
      %v2457 = vmul.f32 %v341, %v2437
      %v2458 = vmul.f32 %v343, %v2437
      %v2459 = vmul.f32 %v344, %v2437
      %v2460 = vmul.f32 %v346, %v2437
      %v2461 = vmul.f32 %v347, %v2437
      %v2462 = vmul.f32 %v349, %v2437
      %v2463 = vmul.f32 %v350, %v2437
      %v2464 = vmul.f32 %v352, %v2437
      %v2465 = vmul.f32 %v353, %v2437
      %v2466 = vmul.f32 %v355, %v2437
      %v2467 = vmul.f32 %v356, %v2437
      %v2468 = vmul.f32 %v358, %v2437
      %v2469 = vmul.f32 %v359, %v2437
      %v2470 = vadd.f32 %v2405, %v2438
      %v2471 = vadd.f32 %v2406, %v2439
      %v2472 = vadd.f32 %v2407, %v2440
      %v2473 = vadd.f32 %v2408, %v2441
      %v2474 = vadd.f32 %v2409, %v2442
      %v2475 = vadd.f32 %v2410, %v2443
      %v2476 = vadd.f32 %v2411, %v2444
      %v2477 = vadd.f32 %v2412, %v2445
      %v2478 = vadd.f32 %v2413, %v2446
      %v2479 = vadd.f32 %v2414, %v2447
      %v2480 = vadd.f32 %v2415, %v2448
      %v2481 = vadd.f32 %v2416, %v2449
      %v2482 = vadd.f32 %v2417, %v2450
      %v2483 = vadd.f32 %v2418, %v2451
      %v2484 = vadd.f32 %v2419, %v2452
      %v2485 = vadd.f32 %v2420, %v2453
      %v2486 = vadd.f32 %v2421, %v2454
      %v2487 = vadd.f32 %v2422, %v2455
      %v2488 = vadd.f32 %v2423, %v2456
      %v2489 = vadd.f32 %v2424, %v2457
      %v2490 = vadd.f32 %v2425, %v2458
      %v2491 = vadd.f32 %v2426, %v2459
      %v2492 = vadd.f32 %v2427, %v2460
      %v2493 = vadd.f32 %v2428, %v2461
      %v2494 = vadd.f32 %v2429, %v2462
      %v2495 = vadd.f32 %v2430, %v2463
      %v2496 = vadd.f32 %v2431, %v2464
      %v2497 = vadd.f32 %v2432, %v2465
      %v2498 = vadd.f32 %v2433, %v2466
      %v2499 = vadd.f32 %v2434, %v2467
      %v2500 = vadd.f32 %v2435, %v2468
      %v2501 = vadd.f32 %v2436, %v2469
      %v2502 = vperm.slane %v368, 3
      %v2503 = vmul.f32 %v313, %v2502
      %v2504 = vmul.f32 %v314, %v2502
      %v2505 = vmul.f32 %v315, %v2502
      %v2506 = vmul.f32 %v316, %v2502
      %v2507 = vmul.f32 %v317, %v2502
      %v2508 = vmul.f32 %v318, %v2502
      %v2509 = vmul.f32 %v319, %v2502
      %v2510 = vmul.f32 %v320, %v2502
      %v2511 = vmul.f32 %v321, %v2502
      %v2512 = vmul.f32 %v322, %v2502
      %v2513 = vmul.f32 %v323, %v2502
      %v2514 = vmul.f32 %v324, %v2502
      %v2515 = vmul.f32 %v325, %v2502
      %v2516 = vmul.f32 %v326, %v2502
      %v2517 = vmul.f32 %v327, %v2502
      %v2518 = vmul.f32 %v328, %v2502
      %v2519 = vmul.f32 %v329, %v2502
      %v2520 = vmul.f32 %v330, %v2502
      %v2521 = vmul.f32 %v331, %v2502
      %v2522 = vmul.f32 %v332, %v2502
      %v2523 = vmul.f32 %v333, %v2502
      %v2524 = vmul.f32 %v334, %v2502
      %v2525 = vmul.f32 %v335, %v2502
      %v2526 = vmul.f32 %v336, %v2502
      %v2527 = vmul.f32 %v337, %v2502
      %v2528 = vmul.f32 %v338, %v2502
      %v2529 = vmul.f32 %v339, %v2502
      %v2530 = vmul.f32 %v340, %v2502
      %v2531 = vmul.f32 %v341, %v2502
      %v2532 = vmul.f32 %v342, %v2502
      %v2533 = vmul.f32 %v343, %v2502
      %v2534 = vmul.f32 %v344, %v2502
      %v2535 = vmul.f32 %v345, %v2502
      %v2536 = vmul.f32 %v346, %v2502
      %v2537 = vmul.f32 %v347, %v2502
      %v2538 = vmul.f32 %v348, %v2502
      %v2539 = vmul.f32 %v349, %v2502
      %v2540 = vmul.f32 %v350, %v2502
      %v2541 = vmul.f32 %v351, %v2502
      %v2542 = vmul.f32 %v352, %v2502
      %v2543 = vmul.f32 %v353, %v2502
      %v2544 = vmul.f32 %v354, %v2502
      %v2545 = vmul.f32 %v355, %v2502
      %v2546 = vmul.f32 %v356, %v2502
      %v2547 = vmul.f32 %v357, %v2502
      %v2548 = vmul.f32 %v358, %v2502
      %v2549 = vmul.f32 %v359, %v2502
      %v2550 = vmul.f32 %v360, %v2502
      %v2599 = vrot.slane %v2503, 1
      %v2600 = vrot.slane %v2504, 1
      %v2601 = vsel %vm537, %v2599, %v2600
      %v2602 = vrot.slane %v2505, 1
      %v2603 = vsel %vm537, %v2600, %v2602
      %v2604 = vrot.slane %v2506, 1
      %v2605 = vrot.slane %v2507, 1
      %v2606 = vsel %vm537, %v2604, %v2605
      %v2607 = vrot.slane %v2508, 1
      %v2608 = vsel %vm537, %v2605, %v2607
      %v2609 = vrot.slane %v2509, 1
      %v2610 = vrot.slane %v2510, 1
      %v2611 = vsel %vm537, %v2609, %v2610
      %v2612 = vrot.slane %v2511, 1
      %v2613 = vsel %vm537, %v2610, %v2612
      %v2614 = vrot.slane %v2512, 1
      %v2615 = vrot.slane %v2513, 1
      %v2616 = vsel %vm537, %v2614, %v2615
      %v2617 = vrot.slane %v2514, 1
      %v2618 = vsel %vm537, %v2615, %v2617
      %v2619 = vrot.slane %v2515, 1
      %v2620 = vrot.slane %v2516, 1
      %v2621 = vsel %vm537, %v2619, %v2620
      %v2622 = vrot.slane %v2517, 1
      %v2623 = vsel %vm537, %v2620, %v2622
      %v2624 = vrot.slane %v2518, 1
      %v2625 = vrot.slane %v2519, 1
      %v2626 = vsel %vm537, %v2624, %v2625
      %v2627 = vrot.slane %v2520, 1
      %v2628 = vsel %vm537, %v2625, %v2627
      %v2629 = vrot.slane %v2521, 1
      %v2630 = vrot.slane %v2522, 1
      %v2631 = vsel %vm537, %v2629, %v2630
      %v2632 = vrot.slane %v2523, 1
      %v2633 = vsel %vm537, %v2630, %v2632
      %v2634 = vrot.slane %v2524, 1
      %v2635 = vrot.slane %v2525, 1
      %v2636 = vsel %vm537, %v2634, %v2635
      %v2637 = vrot.slane %v2526, 1
      %v2638 = vsel %vm537, %v2635, %v2637
      %v2639 = vrot.slane %v2527, 1
      %v2640 = vrot.slane %v2528, 1
      %v2641 = vsel %vm537, %v2639, %v2640
      %v2642 = vrot.slane %v2529, 1
      %v2643 = vsel %vm537, %v2640, %v2642
      %v2644 = vrot.slane %v2530, 1
      %v2645 = vrot.slane %v2531, 1
      %v2646 = vsel %vm537, %v2644, %v2645
      %v2647 = vrot.slane %v2532, 1
      %v2648 = vsel %vm537, %v2645, %v2647
      %v2649 = vrot.slane %v2533, 1
      %v2650 = vrot.slane %v2534, 1
      %v2651 = vsel %vm537, %v2649, %v2650
      %v2652 = vrot.slane %v2535, 1
      %v2653 = vsel %vm537, %v2650, %v2652
      %v2654 = vrot.slane %v2536, 1
      %v2655 = vrot.slane %v2537, 1
      %v2656 = vsel %vm537, %v2654, %v2655
      %v2657 = vrot.slane %v2538, 1
      %v2658 = vsel %vm537, %v2655, %v2657
      %v2659 = vrot.slane %v2539, 1
      %v2660 = vrot.slane %v2540, 1
      %v2661 = vsel %vm537, %v2659, %v2660
      %v2662 = vrot.slane %v2541, 1
      %v2663 = vsel %vm537, %v2660, %v2662
      %v2664 = vrot.slane %v2542, 1
      %v2665 = vrot.slane %v2543, 1
      %v2666 = vsel %vm537, %v2664, %v2665
      %v2667 = vrot.slane %v2544, 1
      %v2668 = vsel %vm537, %v2665, %v2667
      %v2669 = vrot.slane %v2545, 1
      %v2670 = vrot.slane %v2546, 1
      %v2671 = vsel %vm537, %v2669, %v2670
      %v2672 = vrot.slane %v2547, 1
      %v2673 = vsel %vm537, %v2670, %v2672
      %v2674 = vrot.slane %v2548, 1
      %v2675 = vrot.slane %v2549, 1
      %v2676 = vsel %vm537, %v2674, %v2675
      %v2677 = vrot.slane %v2550, 1
      %v2678 = vsel %vm537, %v2675, %v2677
      %v2711 = vadd.f32 %v2470, %v2601
      %v2712 = vadd.f32 %v2471, %v2603
      %v2713 = vadd.f32 %v2472, %v2606
      %v2714 = vadd.f32 %v2473, %v2608
      %v2715 = vadd.f32 %v2474, %v2611
      %v2716 = vadd.f32 %v2475, %v2613
      %v2717 = vadd.f32 %v2476, %v2616
      %v2718 = vadd.f32 %v2477, %v2618
      %v2719 = vadd.f32 %v2478, %v2621
      %v2720 = vadd.f32 %v2479, %v2623
      %v2721 = vadd.f32 %v2480, %v2626
      %v2722 = vadd.f32 %v2481, %v2628
      %v2723 = vadd.f32 %v2482, %v2631
      %v2724 = vadd.f32 %v2483, %v2633
      %v2725 = vadd.f32 %v2484, %v2636
      %v2726 = vadd.f32 %v2485, %v2638
      %v2727 = vadd.f32 %v2486, %v2641
      %v2728 = vadd.f32 %v2487, %v2643
      %v2729 = vadd.f32 %v2488, %v2646
      %v2730 = vadd.f32 %v2489, %v2648
      %v2731 = vadd.f32 %v2490, %v2651
      %v2732 = vadd.f32 %v2491, %v2653
      %v2733 = vadd.f32 %v2492, %v2656
      %v2734 = vadd.f32 %v2493, %v2658
      %v2735 = vadd.f32 %v2494, %v2661
      %v2736 = vadd.f32 %v2495, %v2663
      %v2737 = vadd.f32 %v2496, %v2666
      %v2738 = vadd.f32 %v2497, %v2668
      %v2739 = vadd.f32 %v2498, %v2671
      %v2740 = vadd.f32 %v2499, %v2673
      %v2741 = vadd.f32 %v2500, %v2676
      %v2742 = vadd.f32 %v2501, %v2678
      %v2743 = vperm.slane %v368, 4
      %v2744 = vmul.f32 %v313, %v2743
      %v2745 = vmul.f32 %v314, %v2743
      %v2746 = vmul.f32 %v315, %v2743
      %v2747 = vmul.f32 %v316, %v2743
      %v2748 = vmul.f32 %v317, %v2743
      %v2749 = vmul.f32 %v318, %v2743
      %v2750 = vmul.f32 %v319, %v2743
      %v2751 = vmul.f32 %v320, %v2743
      %v2752 = vmul.f32 %v321, %v2743
      %v2753 = vmul.f32 %v322, %v2743
      %v2754 = vmul.f32 %v323, %v2743
      %v2755 = vmul.f32 %v324, %v2743
      %v2756 = vmul.f32 %v325, %v2743
      %v2757 = vmul.f32 %v326, %v2743
      %v2758 = vmul.f32 %v327, %v2743
      %v2759 = vmul.f32 %v328, %v2743
      %v2760 = vmul.f32 %v329, %v2743
      %v2761 = vmul.f32 %v330, %v2743
      %v2762 = vmul.f32 %v331, %v2743
      %v2763 = vmul.f32 %v332, %v2743
      %v2764 = vmul.f32 %v333, %v2743
      %v2765 = vmul.f32 %v334, %v2743
      %v2766 = vmul.f32 %v335, %v2743
      %v2767 = vmul.f32 %v336, %v2743
      %v2768 = vmul.f32 %v337, %v2743
      %v2769 = vmul.f32 %v338, %v2743
      %v2770 = vmul.f32 %v339, %v2743
      %v2771 = vmul.f32 %v340, %v2743
      %v2772 = vmul.f32 %v341, %v2743
      %v2773 = vmul.f32 %v342, %v2743
      %v2774 = vmul.f32 %v343, %v2743
      %v2775 = vmul.f32 %v344, %v2743
      %v2776 = vmul.f32 %v345, %v2743
      %v2777 = vmul.f32 %v346, %v2743
      %v2778 = vmul.f32 %v347, %v2743
      %v2779 = vmul.f32 %v348, %v2743
      %v2780 = vmul.f32 %v349, %v2743
      %v2781 = vmul.f32 %v350, %v2743
      %v2782 = vmul.f32 %v351, %v2743
      %v2783 = vmul.f32 %v352, %v2743
      %v2784 = vmul.f32 %v353, %v2743
      %v2785 = vmul.f32 %v354, %v2743
      %v2786 = vmul.f32 %v355, %v2743
      %v2787 = vmul.f32 %v356, %v2743
      %v2788 = vmul.f32 %v357, %v2743
      %v2789 = vmul.f32 %v358, %v2743
      %v2790 = vmul.f32 %v359, %v2743
      %v2791 = vmul.f32 %v360, %v2743
      %v2840 = vrot.slane %v2744, 2
      %v2841 = vrot.slane %v2745, 2
      %v2842 = vsel %vm779, %v2840, %v2841
      %v2843 = vrot.slane %v2746, 2
      %v2844 = vsel %vm779, %v2841, %v2843
      %v2845 = vrot.slane %v2747, 2
      %v2846 = vrot.slane %v2748, 2
      %v2847 = vsel %vm779, %v2845, %v2846
      %v2848 = vrot.slane %v2749, 2
      %v2849 = vsel %vm779, %v2846, %v2848
      %v2850 = vrot.slane %v2750, 2
      %v2851 = vrot.slane %v2751, 2
      %v2852 = vsel %vm779, %v2850, %v2851
      %v2853 = vrot.slane %v2752, 2
      %v2854 = vsel %vm779, %v2851, %v2853
      %v2855 = vrot.slane %v2753, 2
      %v2856 = vrot.slane %v2754, 2
      %v2857 = vsel %vm779, %v2855, %v2856
      %v2858 = vrot.slane %v2755, 2
      %v2859 = vsel %vm779, %v2856, %v2858
      %v2860 = vrot.slane %v2756, 2
      %v2861 = vrot.slane %v2757, 2
      %v2862 = vsel %vm779, %v2860, %v2861
      %v2863 = vrot.slane %v2758, 2
      %v2864 = vsel %vm779, %v2861, %v2863
      %v2865 = vrot.slane %v2759, 2
      %v2866 = vrot.slane %v2760, 2
      %v2867 = vsel %vm779, %v2865, %v2866
      %v2868 = vrot.slane %v2761, 2
      %v2869 = vsel %vm779, %v2866, %v2868
      %v2870 = vrot.slane %v2762, 2
      %v2871 = vrot.slane %v2763, 2
      %v2872 = vsel %vm779, %v2870, %v2871
      %v2873 = vrot.slane %v2764, 2
      %v2874 = vsel %vm779, %v2871, %v2873
      %v2875 = vrot.slane %v2765, 2
      %v2876 = vrot.slane %v2766, 2
      %v2877 = vsel %vm779, %v2875, %v2876
      %v2878 = vrot.slane %v2767, 2
      %v2879 = vsel %vm779, %v2876, %v2878
      %v2880 = vrot.slane %v2768, 2
      %v2881 = vrot.slane %v2769, 2
      %v2882 = vsel %vm779, %v2880, %v2881
      %v2883 = vrot.slane %v2770, 2
      %v2884 = vsel %vm779, %v2881, %v2883
      %v2885 = vrot.slane %v2771, 2
      %v2886 = vrot.slane %v2772, 2
      %v2887 = vsel %vm779, %v2885, %v2886
      %v2888 = vrot.slane %v2773, 2
      %v2889 = vsel %vm779, %v2886, %v2888
      %v2890 = vrot.slane %v2774, 2
      %v2891 = vrot.slane %v2775, 2
      %v2892 = vsel %vm779, %v2890, %v2891
      %v2893 = vrot.slane %v2776, 2
      %v2894 = vsel %vm779, %v2891, %v2893
      %v2895 = vrot.slane %v2777, 2
      %v2896 = vrot.slane %v2778, 2
      %v2897 = vsel %vm779, %v2895, %v2896
      %v2898 = vrot.slane %v2779, 2
      %v2899 = vsel %vm779, %v2896, %v2898
      %v2900 = vrot.slane %v2780, 2
      %v2901 = vrot.slane %v2781, 2
      %v2902 = vsel %vm779, %v2900, %v2901
      %v2903 = vrot.slane %v2782, 2
      %v2904 = vsel %vm779, %v2901, %v2903
      %v2905 = vrot.slane %v2783, 2
      %v2906 = vrot.slane %v2784, 2
      %v2907 = vsel %vm779, %v2905, %v2906
      %v2908 = vrot.slane %v2785, 2
      %v2909 = vsel %vm779, %v2906, %v2908
      %v2910 = vrot.slane %v2786, 2
      %v2911 = vrot.slane %v2787, 2
      %v2912 = vsel %vm779, %v2910, %v2911
      %v2913 = vrot.slane %v2788, 2
      %v2914 = vsel %vm779, %v2911, %v2913
      %v2915 = vrot.slane %v2789, 2
      %v2916 = vrot.slane %v2790, 2
      %v2917 = vsel %vm779, %v2915, %v2916
      %v2918 = vrot.slane %v2791, 2
      %v2919 = vsel %vm779, %v2916, %v2918
      %v2952 = vadd.f32 %v2711, %v2842
      %v2953 = vadd.f32 %v2712, %v2844
      %v2954 = vadd.f32 %v2713, %v2847
      %v2955 = vadd.f32 %v2714, %v2849
      %v2956 = vadd.f32 %v2715, %v2852
      %v2957 = vadd.f32 %v2716, %v2854
      %v2958 = vadd.f32 %v2717, %v2857
      %v2959 = vadd.f32 %v2718, %v2859
      %v2960 = vadd.f32 %v2719, %v2862
      %v2961 = vadd.f32 %v2720, %v2864
      %v2962 = vadd.f32 %v2721, %v2867
      %v2963 = vadd.f32 %v2722, %v2869
      %v2964 = vadd.f32 %v2723, %v2872
      %v2965 = vadd.f32 %v2724, %v2874
      %v2966 = vadd.f32 %v2725, %v2877
      %v2967 = vadd.f32 %v2726, %v2879
      %v2968 = vadd.f32 %v2727, %v2882
      %v2969 = vadd.f32 %v2728, %v2884
      %v2970 = vadd.f32 %v2729, %v2887
      %v2971 = vadd.f32 %v2730, %v2889
      %v2972 = vadd.f32 %v2731, %v2892
      %v2973 = vadd.f32 %v2732, %v2894
      %v2974 = vadd.f32 %v2733, %v2897
      %v2975 = vadd.f32 %v2734, %v2899
      %v2976 = vadd.f32 %v2735, %v2902
      %v2977 = vadd.f32 %v2736, %v2904
      %v2978 = vadd.f32 %v2737, %v2907
      %v2979 = vadd.f32 %v2738, %v2909
      %v2980 = vadd.f32 %v2739, %v2912
      %v2981 = vadd.f32 %v2740, %v2914
      %v2982 = vadd.f32 %v2741, %v2917
      %v2983 = vadd.f32 %v2742, %v2919
      %v2984 = vperm.slane %v368, 5
      %v2985 = vmul.f32 %v313, %v2984
      %v2986 = vmul.f32 %v314, %v2984
      %v2987 = vmul.f32 %v315, %v2984
      %v2988 = vmul.f32 %v316, %v2984
      %v2989 = vmul.f32 %v317, %v2984
      %v2990 = vmul.f32 %v318, %v2984
      %v2991 = vmul.f32 %v319, %v2984
      %v2992 = vmul.f32 %v320, %v2984
      %v2993 = vmul.f32 %v321, %v2984
      %v2994 = vmul.f32 %v322, %v2984
      %v2995 = vmul.f32 %v323, %v2984
      %v2996 = vmul.f32 %v324, %v2984
      %v2997 = vmul.f32 %v325, %v2984
      %v2998 = vmul.f32 %v326, %v2984
      %v2999 = vmul.f32 %v327, %v2984
      %v3000 = vmul.f32 %v328, %v2984
      %v3001 = vmul.f32 %v329, %v2984
      %v3002 = vmul.f32 %v330, %v2984
      %v3003 = vmul.f32 %v331, %v2984
      %v3004 = vmul.f32 %v332, %v2984
      %v3005 = vmul.f32 %v333, %v2984
      %v3006 = vmul.f32 %v334, %v2984
      %v3007 = vmul.f32 %v335, %v2984
      %v3008 = vmul.f32 %v336, %v2984
      %v3009 = vmul.f32 %v337, %v2984
      %v3010 = vmul.f32 %v338, %v2984
      %v3011 = vmul.f32 %v339, %v2984
      %v3012 = vmul.f32 %v340, %v2984
      %v3013 = vmul.f32 %v341, %v2984
      %v3014 = vmul.f32 %v342, %v2984
      %v3015 = vmul.f32 %v343, %v2984
      %v3016 = vmul.f32 %v344, %v2984
      %v3017 = vmul.f32 %v345, %v2984
      %v3018 = vmul.f32 %v346, %v2984
      %v3019 = vmul.f32 %v347, %v2984
      %v3020 = vmul.f32 %v348, %v2984
      %v3021 = vmul.f32 %v349, %v2984
      %v3022 = vmul.f32 %v350, %v2984
      %v3023 = vmul.f32 %v351, %v2984
      %v3024 = vmul.f32 %v352, %v2984
      %v3025 = vmul.f32 %v353, %v2984
      %v3026 = vmul.f32 %v354, %v2984
      %v3027 = vmul.f32 %v355, %v2984
      %v3028 = vmul.f32 %v356, %v2984
      %v3029 = vmul.f32 %v357, %v2984
      %v3030 = vmul.f32 %v358, %v2984
      %v3031 = vmul.f32 %v359, %v2984
      %v3032 = vmul.f32 %v360, %v2984
      %v3081 = vrot.slane %v2985, 3
      %v3082 = vrot.slane %v2986, 3
      %v3083 = vsel %vm1021, %v3081, %v3082
      %v3084 = vrot.slane %v2987, 3
      %v3085 = vsel %vm1021, %v3082, %v3084
      %v3086 = vrot.slane %v2988, 3
      %v3087 = vrot.slane %v2989, 3
      %v3088 = vsel %vm1021, %v3086, %v3087
      %v3089 = vrot.slane %v2990, 3
      %v3090 = vsel %vm1021, %v3087, %v3089
      %v3091 = vrot.slane %v2991, 3
      %v3092 = vrot.slane %v2992, 3
      %v3093 = vsel %vm1021, %v3091, %v3092
      %v3094 = vrot.slane %v2993, 3
      %v3095 = vsel %vm1021, %v3092, %v3094
      %v3096 = vrot.slane %v2994, 3
      %v3097 = vrot.slane %v2995, 3
      %v3098 = vsel %vm1021, %v3096, %v3097
      %v3099 = vrot.slane %v2996, 3
      %v3100 = vsel %vm1021, %v3097, %v3099
      %v3101 = vrot.slane %v2997, 3
      %v3102 = vrot.slane %v2998, 3
      %v3103 = vsel %vm1021, %v3101, %v3102
      %v3104 = vrot.slane %v2999, 3
      %v3105 = vsel %vm1021, %v3102, %v3104
      %v3106 = vrot.slane %v3000, 3
      %v3107 = vrot.slane %v3001, 3
      %v3108 = vsel %vm1021, %v3106, %v3107
      %v3109 = vrot.slane %v3002, 3
      %v3110 = vsel %vm1021, %v3107, %v3109
      %v3111 = vrot.slane %v3003, 3
      %v3112 = vrot.slane %v3004, 3
      %v3113 = vsel %vm1021, %v3111, %v3112
      %v3114 = vrot.slane %v3005, 3
      %v3115 = vsel %vm1021, %v3112, %v3114
      %v3116 = vrot.slane %v3006, 3
      %v3117 = vrot.slane %v3007, 3
      %v3118 = vsel %vm1021, %v3116, %v3117
      %v3119 = vrot.slane %v3008, 3
      %v3120 = vsel %vm1021, %v3117, %v3119
      %v3121 = vrot.slane %v3009, 3
      %v3122 = vrot.slane %v3010, 3
      %v3123 = vsel %vm1021, %v3121, %v3122
      %v3124 = vrot.slane %v3011, 3
      %v3125 = vsel %vm1021, %v3122, %v3124
      %v3126 = vrot.slane %v3012, 3
      %v3127 = vrot.slane %v3013, 3
      %v3128 = vsel %vm1021, %v3126, %v3127
      %v3129 = vrot.slane %v3014, 3
      %v3130 = vsel %vm1021, %v3127, %v3129
      %v3131 = vrot.slane %v3015, 3
      %v3132 = vrot.slane %v3016, 3
      %v3133 = vsel %vm1021, %v3131, %v3132
      %v3134 = vrot.slane %v3017, 3
      %v3135 = vsel %vm1021, %v3132, %v3134
      %v3136 = vrot.slane %v3018, 3
      %v3137 = vrot.slane %v3019, 3
      %v3138 = vsel %vm1021, %v3136, %v3137
      %v3139 = vrot.slane %v3020, 3
      %v3140 = vsel %vm1021, %v3137, %v3139
      %v3141 = vrot.slane %v3021, 3
      %v3142 = vrot.slane %v3022, 3
      %v3143 = vsel %vm1021, %v3141, %v3142
      %v3144 = vrot.slane %v3023, 3
      %v3145 = vsel %vm1021, %v3142, %v3144
      %v3146 = vrot.slane %v3024, 3
      %v3147 = vrot.slane %v3025, 3
      %v3148 = vsel %vm1021, %v3146, %v3147
      %v3149 = vrot.slane %v3026, 3
      %v3150 = vsel %vm1021, %v3147, %v3149
      %v3151 = vrot.slane %v3027, 3
      %v3152 = vrot.slane %v3028, 3
      %v3153 = vsel %vm1021, %v3151, %v3152
      %v3154 = vrot.slane %v3029, 3
      %v3155 = vsel %vm1021, %v3152, %v3154
      %v3156 = vrot.slane %v3030, 3
      %v3157 = vrot.slane %v3031, 3
      %v3158 = vsel %vm1021, %v3156, %v3157
      %v3159 = vrot.slane %v3032, 3
      %v3160 = vsel %vm1021, %v3157, %v3159
      %v3193 = vadd.f32 %v2952, %v3083
      %v3194 = vadd.f32 %v2953, %v3085
      %v3195 = vadd.f32 %v2954, %v3088
      %v3196 = vadd.f32 %v2955, %v3090
      %v3197 = vadd.f32 %v2956, %v3093
      %v3198 = vadd.f32 %v2957, %v3095
      %v3199 = vadd.f32 %v2958, %v3098
      %v3200 = vadd.f32 %v2959, %v3100
      %v3201 = vadd.f32 %v2960, %v3103
      %v3202 = vadd.f32 %v2961, %v3105
      %v3203 = vadd.f32 %v2962, %v3108
      %v3204 = vadd.f32 %v2963, %v3110
      %v3205 = vadd.f32 %v2964, %v3113
      %v3206 = vadd.f32 %v2965, %v3115
      %v3207 = vadd.f32 %v2966, %v3118
      %v3208 = vadd.f32 %v2967, %v3120
      %v3209 = vadd.f32 %v2968, %v3123
      %v3210 = vadd.f32 %v2969, %v3125
      %v3211 = vadd.f32 %v2970, %v3128
      %v3212 = vadd.f32 %v2971, %v3130
      %v3213 = vadd.f32 %v2972, %v3133
      %v3214 = vadd.f32 %v2973, %v3135
      %v3215 = vadd.f32 %v2974, %v3138
      %v3216 = vadd.f32 %v2975, %v3140
      %v3217 = vadd.f32 %v2976, %v3143
      %v3218 = vadd.f32 %v2977, %v3145
      %v3219 = vadd.f32 %v2978, %v3148
      %v3220 = vadd.f32 %v2979, %v3150
      %v3221 = vadd.f32 %v2980, %v3153
      %v3222 = vadd.f32 %v2981, %v3155
      %v3223 = vadd.f32 %v2982, %v3158
      %v3224 = vadd.f32 %v2983, %v3160
      %v3225 = vperm.slane %v368, 6
      %v3226 = vmul.f32 %v313, %v3225
      %v3227 = vmul.f32 %v314, %v3225
      %v3228 = vmul.f32 %v315, %v3225
      %v3229 = vmul.f32 %v316, %v3225
      %v3230 = vmul.f32 %v317, %v3225
      %v3231 = vmul.f32 %v318, %v3225
      %v3232 = vmul.f32 %v319, %v3225
      %v3233 = vmul.f32 %v320, %v3225
      %v3234 = vmul.f32 %v321, %v3225
      %v3235 = vmul.f32 %v322, %v3225
      %v3236 = vmul.f32 %v323, %v3225
      %v3237 = vmul.f32 %v324, %v3225
      %v3238 = vmul.f32 %v325, %v3225
      %v3239 = vmul.f32 %v326, %v3225
      %v3240 = vmul.f32 %v327, %v3225
      %v3241 = vmul.f32 %v328, %v3225
      %v3242 = vmul.f32 %v329, %v3225
      %v3243 = vmul.f32 %v330, %v3225
      %v3244 = vmul.f32 %v331, %v3225
      %v3245 = vmul.f32 %v332, %v3225
      %v3246 = vmul.f32 %v333, %v3225
      %v3247 = vmul.f32 %v334, %v3225
      %v3248 = vmul.f32 %v335, %v3225
      %v3249 = vmul.f32 %v336, %v3225
      %v3250 = vmul.f32 %v337, %v3225
      %v3251 = vmul.f32 %v338, %v3225
      %v3252 = vmul.f32 %v339, %v3225
      %v3253 = vmul.f32 %v340, %v3225
      %v3254 = vmul.f32 %v341, %v3225
      %v3255 = vmul.f32 %v342, %v3225
      %v3256 = vmul.f32 %v343, %v3225
      %v3257 = vmul.f32 %v344, %v3225
      %v3258 = vmul.f32 %v345, %v3225
      %v3259 = vmul.f32 %v346, %v3225
      %v3260 = vmul.f32 %v347, %v3225
      %v3261 = vmul.f32 %v348, %v3225
      %v3262 = vmul.f32 %v349, %v3225
      %v3263 = vmul.f32 %v350, %v3225
      %v3264 = vmul.f32 %v351, %v3225
      %v3265 = vmul.f32 %v352, %v3225
      %v3266 = vmul.f32 %v353, %v3225
      %v3267 = vmul.f32 %v354, %v3225
      %v3268 = vmul.f32 %v355, %v3225
      %v3269 = vmul.f32 %v356, %v3225
      %v3270 = vmul.f32 %v357, %v3225
      %v3271 = vmul.f32 %v358, %v3225
      %v3272 = vmul.f32 %v359, %v3225
      %v3273 = vmul.f32 %v360, %v3225
      %v3322 = vrot.slane %v3226, 4
      %v3323 = vrot.slane %v3227, 4
      %v3324 = vsel %vm1263, %v3322, %v3323
      %v3325 = vrot.slane %v3228, 4
      %v3326 = vsel %vm1263, %v3323, %v3325
      %v3327 = vrot.slane %v3229, 4
      %v3328 = vrot.slane %v3230, 4
      %v3329 = vsel %vm1263, %v3327, %v3328
      %v3330 = vrot.slane %v3231, 4
      %v3331 = vsel %vm1263, %v3328, %v3330
      %v3332 = vrot.slane %v3232, 4
      %v3333 = vrot.slane %v3233, 4
      %v3334 = vsel %vm1263, %v3332, %v3333
      %v3335 = vrot.slane %v3234, 4
      %v3336 = vsel %vm1263, %v3333, %v3335
      %v3337 = vrot.slane %v3235, 4
      %v3338 = vrot.slane %v3236, 4
      %v3339 = vsel %vm1263, %v3337, %v3338
      %v3340 = vrot.slane %v3237, 4
      %v3341 = vsel %vm1263, %v3338, %v3340
      %v3342 = vrot.slane %v3238, 4
      %v3343 = vrot.slane %v3239, 4
      %v3344 = vsel %vm1263, %v3342, %v3343
      %v3345 = vrot.slane %v3240, 4
      %v3346 = vsel %vm1263, %v3343, %v3345
      %v3347 = vrot.slane %v3241, 4
      %v3348 = vrot.slane %v3242, 4
      %v3349 = vsel %vm1263, %v3347, %v3348
      %v3350 = vrot.slane %v3243, 4
      %v3351 = vsel %vm1263, %v3348, %v3350
      %v3352 = vrot.slane %v3244, 4
      %v3353 = vrot.slane %v3245, 4
      %v3354 = vsel %vm1263, %v3352, %v3353
      %v3355 = vrot.slane %v3246, 4
      %v3356 = vsel %vm1263, %v3353, %v3355
      %v3357 = vrot.slane %v3247, 4
      %v3358 = vrot.slane %v3248, 4
      %v3359 = vsel %vm1263, %v3357, %v3358
      %v3360 = vrot.slane %v3249, 4
      %v3361 = vsel %vm1263, %v3358, %v3360
      %v3362 = vrot.slane %v3250, 4
      %v3363 = vrot.slane %v3251, 4
      %v3364 = vsel %vm1263, %v3362, %v3363
      %v3365 = vrot.slane %v3252, 4
      %v3366 = vsel %vm1263, %v3363, %v3365
      %v3367 = vrot.slane %v3253, 4
      %v3368 = vrot.slane %v3254, 4
      %v3369 = vsel %vm1263, %v3367, %v3368
      %v3370 = vrot.slane %v3255, 4
      %v3371 = vsel %vm1263, %v3368, %v3370
      %v3372 = vrot.slane %v3256, 4
      %v3373 = vrot.slane %v3257, 4
      %v3374 = vsel %vm1263, %v3372, %v3373
      %v3375 = vrot.slane %v3258, 4
      %v3376 = vsel %vm1263, %v3373, %v3375
      %v3377 = vrot.slane %v3259, 4
      %v3378 = vrot.slane %v3260, 4
      %v3379 = vsel %vm1263, %v3377, %v3378
      %v3380 = vrot.slane %v3261, 4
      %v3381 = vsel %vm1263, %v3378, %v3380
      %v3382 = vrot.slane %v3262, 4
      %v3383 = vrot.slane %v3263, 4
      %v3384 = vsel %vm1263, %v3382, %v3383
      %v3385 = vrot.slane %v3264, 4
      %v3386 = vsel %vm1263, %v3383, %v3385
      %v3387 = vrot.slane %v3265, 4
      %v3388 = vrot.slane %v3266, 4
      %v3389 = vsel %vm1263, %v3387, %v3388
      %v3390 = vrot.slane %v3267, 4
      %v3391 = vsel %vm1263, %v3388, %v3390
      %v3392 = vrot.slane %v3268, 4
      %v3393 = vrot.slane %v3269, 4
      %v3394 = vsel %vm1263, %v3392, %v3393
      %v3395 = vrot.slane %v3270, 4
      %v3396 = vsel %vm1263, %v3393, %v3395
      %v3397 = vrot.slane %v3271, 4
      %v3398 = vrot.slane %v3272, 4
      %v3399 = vsel %vm1263, %v3397, %v3398
      %v3400 = vrot.slane %v3273, 4
      %v3401 = vsel %vm1263, %v3398, %v3400
      %v3434 = vadd.f32 %v3193, %v3324
      %v3435 = vadd.f32 %v3194, %v3326
      %v3436 = vadd.f32 %v3195, %v3329
      %v3437 = vadd.f32 %v3196, %v3331
      %v3438 = vadd.f32 %v3197, %v3334
      %v3439 = vadd.f32 %v3198, %v3336
      %v3440 = vadd.f32 %v3199, %v3339
      %v3441 = vadd.f32 %v3200, %v3341
      %v3442 = vadd.f32 %v3201, %v3344
      %v3443 = vadd.f32 %v3202, %v3346
      %v3444 = vadd.f32 %v3203, %v3349
      %v3445 = vadd.f32 %v3204, %v3351
      %v3446 = vadd.f32 %v3205, %v3354
      %v3447 = vadd.f32 %v3206, %v3356
      %v3448 = vadd.f32 %v3207, %v3359
      %v3449 = vadd.f32 %v3208, %v3361
      %v3450 = vadd.f32 %v3209, %v3364
      %v3451 = vadd.f32 %v3210, %v3366
      %v3452 = vadd.f32 %v3211, %v3369
      %v3453 = vadd.f32 %v3212, %v3371
      %v3454 = vadd.f32 %v3213, %v3374
      %v3455 = vadd.f32 %v3214, %v3376
      %v3456 = vadd.f32 %v3215, %v3379
      %v3457 = vadd.f32 %v3216, %v3381
      %v3458 = vadd.f32 %v3217, %v3384
      %v3459 = vadd.f32 %v3218, %v3386
      %v3460 = vadd.f32 %v3219, %v3389
      %v3461 = vadd.f32 %v3220, %v3391
      %v3462 = vadd.f32 %v3221, %v3394
      %v3463 = vadd.f32 %v3222, %v3396
      %v3464 = vadd.f32 %v3223, %v3399
      %v3465 = vadd.f32 %v3224, %v3401
      %v3466 = vperm.slane %v368, 7
      %v3467 = vmul.f32 %v316, %v3466
      %v3468 = vmul.f32 %v317, %v3466
      %v3469 = vmul.f32 %v319, %v3466
      %v3470 = vmul.f32 %v320, %v3466
      %v3471 = vmul.f32 %v322, %v3466
      %v3472 = vmul.f32 %v323, %v3466
      %v3473 = vmul.f32 %v325, %v3466
      %v3474 = vmul.f32 %v326, %v3466
      %v3475 = vmul.f32 %v328, %v3466
      %v3476 = vmul.f32 %v329, %v3466
      %v3477 = vmul.f32 %v331, %v3466
      %v3478 = vmul.f32 %v332, %v3466
      %v3479 = vmul.f32 %v334, %v3466
      %v3480 = vmul.f32 %v335, %v3466
      %v3481 = vmul.f32 %v337, %v3466
      %v3482 = vmul.f32 %v338, %v3466
      %v3483 = vmul.f32 %v340, %v3466
      %v3484 = vmul.f32 %v341, %v3466
      %v3485 = vmul.f32 %v343, %v3466
      %v3486 = vmul.f32 %v344, %v3466
      %v3487 = vmul.f32 %v346, %v3466
      %v3488 = vmul.f32 %v347, %v3466
      %v3489 = vmul.f32 %v349, %v3466
      %v3490 = vmul.f32 %v350, %v3466
      %v3491 = vmul.f32 %v352, %v3466
      %v3492 = vmul.f32 %v353, %v3466
      %v3493 = vmul.f32 %v355, %v3466
      %v3494 = vmul.f32 %v356, %v3466
      %v3495 = vmul.f32 %v358, %v3466
      %v3496 = vmul.f32 %v359, %v3466
      %v3497 = vmul.f32 %v361, %v3466
      %v3498 = vmul.f32 %v362, %v3466
      %v3499 = vadd.f32 %v3434, %v3467
      %v3500 = vadd.f32 %v3435, %v3468
      %v3501 = vadd.f32 %v3436, %v3469
      %v3502 = vadd.f32 %v3437, %v3470
      %v3503 = vadd.f32 %v3438, %v3471
      %v3504 = vadd.f32 %v3439, %v3472
      %v3505 = vadd.f32 %v3440, %v3473
      %v3506 = vadd.f32 %v3441, %v3474
      %v3507 = vadd.f32 %v3442, %v3475
      %v3508 = vadd.f32 %v3443, %v3476
      %v3509 = vadd.f32 %v3444, %v3477
      %v3510 = vadd.f32 %v3445, %v3478
      %v3511 = vadd.f32 %v3446, %v3479
      %v3512 = vadd.f32 %v3447, %v3480
      %v3513 = vadd.f32 %v3448, %v3481
      %v3514 = vadd.f32 %v3449, %v3482
      %v3515 = vadd.f32 %v3450, %v3483
      %v3516 = vadd.f32 %v3451, %v3484
      %v3517 = vadd.f32 %v3452, %v3485
      %v3518 = vadd.f32 %v3453, %v3486
      %v3519 = vadd.f32 %v3454, %v3487
      %v3520 = vadd.f32 %v3455, %v3488
      %v3521 = vadd.f32 %v3456, %v3489
      %v3522 = vadd.f32 %v3457, %v3490
      %v3523 = vadd.f32 %v3458, %v3491
      %v3524 = vadd.f32 %v3459, %v3492
      %v3525 = vadd.f32 %v3460, %v3493
      %v3526 = vadd.f32 %v3461, %v3494
      %v3527 = vadd.f32 %v3462, %v3495
      %v3528 = vadd.f32 %v3463, %v3496
      %v3529 = vadd.f32 %v3464, %v3497
      %v3530 = vadd.f32 %v3465, %v3498
      %v3531 = vperm.slane %v369, 0
      %v3532 = vmul.f32 %v316, %v3531
      %v3533 = vmul.f32 %v317, %v3531
      %v3534 = vmul.f32 %v318, %v3531
      %v3535 = vmul.f32 %v319, %v3531
      %v3536 = vmul.f32 %v320, %v3531
      %v3537 = vmul.f32 %v321, %v3531
      %v3538 = vmul.f32 %v322, %v3531
      %v3539 = vmul.f32 %v323, %v3531
      %v3540 = vmul.f32 %v324, %v3531
      %v3541 = vmul.f32 %v325, %v3531
      %v3542 = vmul.f32 %v326, %v3531
      %v3543 = vmul.f32 %v327, %v3531
      %v3544 = vmul.f32 %v328, %v3531
      %v3545 = vmul.f32 %v329, %v3531
      %v3546 = vmul.f32 %v330, %v3531
      %v3547 = vmul.f32 %v331, %v3531
      %v3548 = vmul.f32 %v332, %v3531
      %v3549 = vmul.f32 %v333, %v3531
      %v3550 = vmul.f32 %v334, %v3531
      %v3551 = vmul.f32 %v335, %v3531
      %v3552 = vmul.f32 %v336, %v3531
      %v3553 = vmul.f32 %v337, %v3531
      %v3554 = vmul.f32 %v338, %v3531
      %v3555 = vmul.f32 %v339, %v3531
      %v3556 = vmul.f32 %v340, %v3531
      %v3557 = vmul.f32 %v341, %v3531
      %v3558 = vmul.f32 %v342, %v3531
      %v3559 = vmul.f32 %v343, %v3531
      %v3560 = vmul.f32 %v344, %v3531
      %v3561 = vmul.f32 %v345, %v3531
      %v3562 = vmul.f32 %v346, %v3531
      %v3563 = vmul.f32 %v347, %v3531
      %v3564 = vmul.f32 %v348, %v3531
      %v3565 = vmul.f32 %v349, %v3531
      %v3566 = vmul.f32 %v350, %v3531
      %v3567 = vmul.f32 %v351, %v3531
      %v3568 = vmul.f32 %v352, %v3531
      %v3569 = vmul.f32 %v353, %v3531
      %v3570 = vmul.f32 %v354, %v3531
      %v3571 = vmul.f32 %v355, %v3531
      %v3572 = vmul.f32 %v356, %v3531
      %v3573 = vmul.f32 %v357, %v3531
      %v3574 = vmul.f32 %v358, %v3531
      %v3575 = vmul.f32 %v359, %v3531
      %v3576 = vmul.f32 %v360, %v3531
      %v3577 = vmul.f32 %v361, %v3531
      %v3578 = vmul.f32 %v362, %v3531
      %v3579 = vmul.f32 %v363, %v3531
      %v3628 = vrot.slane %v3532, 1
      %v3629 = vrot.slane %v3533, 1
      %v3630 = vsel %vm537, %v3628, %v3629
      %v3631 = vrot.slane %v3534, 1
      %v3632 = vsel %vm537, %v3629, %v3631
      %v3633 = vrot.slane %v3535, 1
      %v3634 = vrot.slane %v3536, 1
      %v3635 = vsel %vm537, %v3633, %v3634
      %v3636 = vrot.slane %v3537, 1
      %v3637 = vsel %vm537, %v3634, %v3636
      %v3638 = vrot.slane %v3538, 1
      %v3639 = vrot.slane %v3539, 1
      %v3640 = vsel %vm537, %v3638, %v3639
      %v3641 = vrot.slane %v3540, 1
      %v3642 = vsel %vm537, %v3639, %v3641
      %v3643 = vrot.slane %v3541, 1
      %v3644 = vrot.slane %v3542, 1
      %v3645 = vsel %vm537, %v3643, %v3644
      %v3646 = vrot.slane %v3543, 1
      %v3647 = vsel %vm537, %v3644, %v3646
      %v3648 = vrot.slane %v3544, 1
      %v3649 = vrot.slane %v3545, 1
      %v3650 = vsel %vm537, %v3648, %v3649
      %v3651 = vrot.slane %v3546, 1
      %v3652 = vsel %vm537, %v3649, %v3651
      %v3653 = vrot.slane %v3547, 1
      %v3654 = vrot.slane %v3548, 1
      %v3655 = vsel %vm537, %v3653, %v3654
      %v3656 = vrot.slane %v3549, 1
      %v3657 = vsel %vm537, %v3654, %v3656
      %v3658 = vrot.slane %v3550, 1
      %v3659 = vrot.slane %v3551, 1
      %v3660 = vsel %vm537, %v3658, %v3659
      %v3661 = vrot.slane %v3552, 1
      %v3662 = vsel %vm537, %v3659, %v3661
      %v3663 = vrot.slane %v3553, 1
      %v3664 = vrot.slane %v3554, 1
      %v3665 = vsel %vm537, %v3663, %v3664
      %v3666 = vrot.slane %v3555, 1
      %v3667 = vsel %vm537, %v3664, %v3666
      %v3668 = vrot.slane %v3556, 1
      %v3669 = vrot.slane %v3557, 1
      %v3670 = vsel %vm537, %v3668, %v3669
      %v3671 = vrot.slane %v3558, 1
      %v3672 = vsel %vm537, %v3669, %v3671
      %v3673 = vrot.slane %v3559, 1
      %v3674 = vrot.slane %v3560, 1
      %v3675 = vsel %vm537, %v3673, %v3674
      %v3676 = vrot.slane %v3561, 1
      %v3677 = vsel %vm537, %v3674, %v3676
      %v3678 = vrot.slane %v3562, 1
      %v3679 = vrot.slane %v3563, 1
      %v3680 = vsel %vm537, %v3678, %v3679
      %v3681 = vrot.slane %v3564, 1
      %v3682 = vsel %vm537, %v3679, %v3681
      %v3683 = vrot.slane %v3565, 1
      %v3684 = vrot.slane %v3566, 1
      %v3685 = vsel %vm537, %v3683, %v3684
      %v3686 = vrot.slane %v3567, 1
      %v3687 = vsel %vm537, %v3684, %v3686
      %v3688 = vrot.slane %v3568, 1
      %v3689 = vrot.slane %v3569, 1
      %v3690 = vsel %vm537, %v3688, %v3689
      %v3691 = vrot.slane %v3570, 1
      %v3692 = vsel %vm537, %v3689, %v3691
      %v3693 = vrot.slane %v3571, 1
      %v3694 = vrot.slane %v3572, 1
      %v3695 = vsel %vm537, %v3693, %v3694
      %v3696 = vrot.slane %v3573, 1
      %v3697 = vsel %vm537, %v3694, %v3696
      %v3698 = vrot.slane %v3574, 1
      %v3699 = vrot.slane %v3575, 1
      %v3700 = vsel %vm537, %v3698, %v3699
      %v3701 = vrot.slane %v3576, 1
      %v3702 = vsel %vm537, %v3699, %v3701
      %v3703 = vrot.slane %v3577, 1
      %v3704 = vrot.slane %v3578, 1
      %v3705 = vsel %vm537, %v3703, %v3704
      %v3706 = vrot.slane %v3579, 1
      %v3707 = vsel %vm537, %v3704, %v3706
      %v3740 = vadd.f32 %v3499, %v3630
      %v3741 = vadd.f32 %v3500, %v3632
      %v3742 = vadd.f32 %v3501, %v3635
      %v3743 = vadd.f32 %v3502, %v3637
      %v3744 = vadd.f32 %v3503, %v3640
      %v3745 = vadd.f32 %v3504, %v3642
      %v3746 = vadd.f32 %v3505, %v3645
      %v3747 = vadd.f32 %v3506, %v3647
      %v3748 = vadd.f32 %v3507, %v3650
      %v3749 = vadd.f32 %v3508, %v3652
      %v3750 = vadd.f32 %v3509, %v3655
      %v3751 = vadd.f32 %v3510, %v3657
      %v3752 = vadd.f32 %v3511, %v3660
      %v3753 = vadd.f32 %v3512, %v3662
      %v3754 = vadd.f32 %v3513, %v3665
      %v3755 = vadd.f32 %v3514, %v3667
      %v3756 = vadd.f32 %v3515, %v3670
      %v3757 = vadd.f32 %v3516, %v3672
      %v3758 = vadd.f32 %v3517, %v3675
      %v3759 = vadd.f32 %v3518, %v3677
      %v3760 = vadd.f32 %v3519, %v3680
      %v3761 = vadd.f32 %v3520, %v3682
      %v3762 = vadd.f32 %v3521, %v3685
      %v3763 = vadd.f32 %v3522, %v3687
      %v3764 = vadd.f32 %v3523, %v3690
      %v3765 = vadd.f32 %v3524, %v3692
      %v3766 = vadd.f32 %v3525, %v3695
      %v3767 = vadd.f32 %v3526, %v3697
      %v3768 = vadd.f32 %v3527, %v3700
      %v3769 = vadd.f32 %v3528, %v3702
      %v3770 = vadd.f32 %v3529, %v3705
      %v3771 = vadd.f32 %v3530, %v3707
      %v3772 = vperm.slane %v369, 1
      %v3773 = vmul.f32 %v316, %v3772
      %v3774 = vmul.f32 %v317, %v3772
      %v3775 = vmul.f32 %v318, %v3772
      %v3776 = vmul.f32 %v319, %v3772
      %v3777 = vmul.f32 %v320, %v3772
      %v3778 = vmul.f32 %v321, %v3772
      %v3779 = vmul.f32 %v322, %v3772
      %v3780 = vmul.f32 %v323, %v3772
      %v3781 = vmul.f32 %v324, %v3772
      %v3782 = vmul.f32 %v325, %v3772
      %v3783 = vmul.f32 %v326, %v3772
      %v3784 = vmul.f32 %v327, %v3772
      %v3785 = vmul.f32 %v328, %v3772
      %v3786 = vmul.f32 %v329, %v3772
      %v3787 = vmul.f32 %v330, %v3772
      %v3788 = vmul.f32 %v331, %v3772
      %v3789 = vmul.f32 %v332, %v3772
      %v3790 = vmul.f32 %v333, %v3772
      %v3791 = vmul.f32 %v334, %v3772
      %v3792 = vmul.f32 %v335, %v3772
      %v3793 = vmul.f32 %v336, %v3772
      %v3794 = vmul.f32 %v337, %v3772
      %v3795 = vmul.f32 %v338, %v3772
      %v3796 = vmul.f32 %v339, %v3772
      %v3797 = vmul.f32 %v340, %v3772
      %v3798 = vmul.f32 %v341, %v3772
      %v3799 = vmul.f32 %v342, %v3772
      %v3800 = vmul.f32 %v343, %v3772
      %v3801 = vmul.f32 %v344, %v3772
      %v3802 = vmul.f32 %v345, %v3772
      %v3803 = vmul.f32 %v346, %v3772
      %v3804 = vmul.f32 %v347, %v3772
      %v3805 = vmul.f32 %v348, %v3772
      %v3806 = vmul.f32 %v349, %v3772
      %v3807 = vmul.f32 %v350, %v3772
      %v3808 = vmul.f32 %v351, %v3772
      %v3809 = vmul.f32 %v352, %v3772
      %v3810 = vmul.f32 %v353, %v3772
      %v3811 = vmul.f32 %v354, %v3772
      %v3812 = vmul.f32 %v355, %v3772
      %v3813 = vmul.f32 %v356, %v3772
      %v3814 = vmul.f32 %v357, %v3772
      %v3815 = vmul.f32 %v358, %v3772
      %v3816 = vmul.f32 %v359, %v3772
      %v3817 = vmul.f32 %v360, %v3772
      %v3818 = vmul.f32 %v361, %v3772
      %v3819 = vmul.f32 %v362, %v3772
      %v3820 = vmul.f32 %v363, %v3772
      %v3869 = vrot.slane %v3773, 2
      %v3870 = vrot.slane %v3774, 2
      %v3871 = vsel %vm779, %v3869, %v3870
      %v3872 = vrot.slane %v3775, 2
      %v3873 = vsel %vm779, %v3870, %v3872
      %v3874 = vrot.slane %v3776, 2
      %v3875 = vrot.slane %v3777, 2
      %v3876 = vsel %vm779, %v3874, %v3875
      %v3877 = vrot.slane %v3778, 2
      %v3878 = vsel %vm779, %v3875, %v3877
      %v3879 = vrot.slane %v3779, 2
      %v3880 = vrot.slane %v3780, 2
      %v3881 = vsel %vm779, %v3879, %v3880
      %v3882 = vrot.slane %v3781, 2
      %v3883 = vsel %vm779, %v3880, %v3882
      %v3884 = vrot.slane %v3782, 2
      %v3885 = vrot.slane %v3783, 2
      %v3886 = vsel %vm779, %v3884, %v3885
      %v3887 = vrot.slane %v3784, 2
      %v3888 = vsel %vm779, %v3885, %v3887
      %v3889 = vrot.slane %v3785, 2
      %v3890 = vrot.slane %v3786, 2
      %v3891 = vsel %vm779, %v3889, %v3890
      %v3892 = vrot.slane %v3787, 2
      %v3893 = vsel %vm779, %v3890, %v3892
      %v3894 = vrot.slane %v3788, 2
      %v3895 = vrot.slane %v3789, 2
      %v3896 = vsel %vm779, %v3894, %v3895
      %v3897 = vrot.slane %v3790, 2
      %v3898 = vsel %vm779, %v3895, %v3897
      %v3899 = vrot.slane %v3791, 2
      %v3900 = vrot.slane %v3792, 2
      %v3901 = vsel %vm779, %v3899, %v3900
      %v3902 = vrot.slane %v3793, 2
      %v3903 = vsel %vm779, %v3900, %v3902
      %v3904 = vrot.slane %v3794, 2
      %v3905 = vrot.slane %v3795, 2
      %v3906 = vsel %vm779, %v3904, %v3905
      %v3907 = vrot.slane %v3796, 2
      %v3908 = vsel %vm779, %v3905, %v3907
      %v3909 = vrot.slane %v3797, 2
      %v3910 = vrot.slane %v3798, 2
      %v3911 = vsel %vm779, %v3909, %v3910
      %v3912 = vrot.slane %v3799, 2
      %v3913 = vsel %vm779, %v3910, %v3912
      %v3914 = vrot.slane %v3800, 2
      %v3915 = vrot.slane %v3801, 2
      %v3916 = vsel %vm779, %v3914, %v3915
      %v3917 = vrot.slane %v3802, 2
      %v3918 = vsel %vm779, %v3915, %v3917
      %v3919 = vrot.slane %v3803, 2
      %v3920 = vrot.slane %v3804, 2
      %v3921 = vsel %vm779, %v3919, %v3920
      %v3922 = vrot.slane %v3805, 2
      %v3923 = vsel %vm779, %v3920, %v3922
      %v3924 = vrot.slane %v3806, 2
      %v3925 = vrot.slane %v3807, 2
      %v3926 = vsel %vm779, %v3924, %v3925
      %v3927 = vrot.slane %v3808, 2
      %v3928 = vsel %vm779, %v3925, %v3927
      %v3929 = vrot.slane %v3809, 2
      %v3930 = vrot.slane %v3810, 2
      %v3931 = vsel %vm779, %v3929, %v3930
      %v3932 = vrot.slane %v3811, 2
      %v3933 = vsel %vm779, %v3930, %v3932
      %v3934 = vrot.slane %v3812, 2
      %v3935 = vrot.slane %v3813, 2
      %v3936 = vsel %vm779, %v3934, %v3935
      %v3937 = vrot.slane %v3814, 2
      %v3938 = vsel %vm779, %v3935, %v3937
      %v3939 = vrot.slane %v3815, 2
      %v3940 = vrot.slane %v3816, 2
      %v3941 = vsel %vm779, %v3939, %v3940
      %v3942 = vrot.slane %v3817, 2
      %v3943 = vsel %vm779, %v3940, %v3942
      %v3944 = vrot.slane %v3818, 2
      %v3945 = vrot.slane %v3819, 2
      %v3946 = vsel %vm779, %v3944, %v3945
      %v3947 = vrot.slane %v3820, 2
      %v3948 = vsel %vm779, %v3945, %v3947
      %v3981 = vadd.f32 %v3740, %v3871
      %v3982 = vadd.f32 %v3741, %v3873
      %v3983 = vadd.f32 %v3742, %v3876
      %v3984 = vadd.f32 %v3743, %v3878
      %v3985 = vadd.f32 %v3744, %v3881
      %v3986 = vadd.f32 %v3745, %v3883
      %v3987 = vadd.f32 %v3746, %v3886
      %v3988 = vadd.f32 %v3747, %v3888
      %v3989 = vadd.f32 %v3748, %v3891
      %v3990 = vadd.f32 %v3749, %v3893
      %v3991 = vadd.f32 %v3750, %v3896
      %v3992 = vadd.f32 %v3751, %v3898
      %v3993 = vadd.f32 %v3752, %v3901
      %v3994 = vadd.f32 %v3753, %v3903
      %v3995 = vadd.f32 %v3754, %v3906
      %v3996 = vadd.f32 %v3755, %v3908
      %v3997 = vadd.f32 %v3756, %v3911
      %v3998 = vadd.f32 %v3757, %v3913
      %v3999 = vadd.f32 %v3758, %v3916
      %v4000 = vadd.f32 %v3759, %v3918
      %v4001 = vadd.f32 %v3760, %v3921
      %v4002 = vadd.f32 %v3761, %v3923
      %v4003 = vadd.f32 %v3762, %v3926
      %v4004 = vadd.f32 %v3763, %v3928
      %v4005 = vadd.f32 %v3764, %v3931
      %v4006 = vadd.f32 %v3765, %v3933
      %v4007 = vadd.f32 %v3766, %v3936
      %v4008 = vadd.f32 %v3767, %v3938
      %v4009 = vadd.f32 %v3768, %v3941
      %v4010 = vadd.f32 %v3769, %v3943
      %v4011 = vadd.f32 %v3770, %v3946
      %v4012 = vadd.f32 %v3771, %v3948
      %v4013 = vperm.slane %v369, 2
      %v4014 = vmul.f32 %v316, %v4013
      %v4015 = vmul.f32 %v317, %v4013
      %v4016 = vmul.f32 %v318, %v4013
      %v4017 = vmul.f32 %v319, %v4013
      %v4018 = vmul.f32 %v320, %v4013
      %v4019 = vmul.f32 %v321, %v4013
      %v4020 = vmul.f32 %v322, %v4013
      %v4021 = vmul.f32 %v323, %v4013
      %v4022 = vmul.f32 %v324, %v4013
      %v4023 = vmul.f32 %v325, %v4013
      %v4024 = vmul.f32 %v326, %v4013
      %v4025 = vmul.f32 %v327, %v4013
      %v4026 = vmul.f32 %v328, %v4013
      %v4027 = vmul.f32 %v329, %v4013
      %v4028 = vmul.f32 %v330, %v4013
      %v4029 = vmul.f32 %v331, %v4013
      %v4030 = vmul.f32 %v332, %v4013
      %v4031 = vmul.f32 %v333, %v4013
      %v4032 = vmul.f32 %v334, %v4013
      %v4033 = vmul.f32 %v335, %v4013
      %v4034 = vmul.f32 %v336, %v4013
      %v4035 = vmul.f32 %v337, %v4013
      %v4036 = vmul.f32 %v338, %v4013
      %v4037 = vmul.f32 %v339, %v4013
      %v4038 = vmul.f32 %v340, %v4013
      %v4039 = vmul.f32 %v341, %v4013
      %v4040 = vmul.f32 %v342, %v4013
      %v4041 = vmul.f32 %v343, %v4013
      %v4042 = vmul.f32 %v344, %v4013
      %v4043 = vmul.f32 %v345, %v4013
      %v4044 = vmul.f32 %v346, %v4013
      %v4045 = vmul.f32 %v347, %v4013
      %v4046 = vmul.f32 %v348, %v4013
      %v4047 = vmul.f32 %v349, %v4013
      %v4048 = vmul.f32 %v350, %v4013
      %v4049 = vmul.f32 %v351, %v4013
      %v4050 = vmul.f32 %v352, %v4013
      %v4051 = vmul.f32 %v353, %v4013
      %v4052 = vmul.f32 %v354, %v4013
      %v4053 = vmul.f32 %v355, %v4013
      %v4054 = vmul.f32 %v356, %v4013
      %v4055 = vmul.f32 %v357, %v4013
      %v4056 = vmul.f32 %v358, %v4013
      %v4057 = vmul.f32 %v359, %v4013
      %v4058 = vmul.f32 %v360, %v4013
      %v4059 = vmul.f32 %v361, %v4013
      %v4060 = vmul.f32 %v362, %v4013
      %v4061 = vmul.f32 %v363, %v4013
      %v4110 = vrot.slane %v4014, 3
      %v4111 = vrot.slane %v4015, 3
      %v4112 = vsel %vm1021, %v4110, %v4111
      %v4113 = vrot.slane %v4016, 3
      %v4114 = vsel %vm1021, %v4111, %v4113
      %v4115 = vrot.slane %v4017, 3
      %v4116 = vrot.slane %v4018, 3
      %v4117 = vsel %vm1021, %v4115, %v4116
      %v4118 = vrot.slane %v4019, 3
      %v4119 = vsel %vm1021, %v4116, %v4118
      %v4120 = vrot.slane %v4020, 3
      %v4121 = vrot.slane %v4021, 3
      %v4122 = vsel %vm1021, %v4120, %v4121
      %v4123 = vrot.slane %v4022, 3
      %v4124 = vsel %vm1021, %v4121, %v4123
      %v4125 = vrot.slane %v4023, 3
      %v4126 = vrot.slane %v4024, 3
      %v4127 = vsel %vm1021, %v4125, %v4126
      %v4128 = vrot.slane %v4025, 3
      %v4129 = vsel %vm1021, %v4126, %v4128
      %v4130 = vrot.slane %v4026, 3
      %v4131 = vrot.slane %v4027, 3
      %v4132 = vsel %vm1021, %v4130, %v4131
      %v4133 = vrot.slane %v4028, 3
      %v4134 = vsel %vm1021, %v4131, %v4133
      %v4135 = vrot.slane %v4029, 3
      %v4136 = vrot.slane %v4030, 3
      %v4137 = vsel %vm1021, %v4135, %v4136
      %v4138 = vrot.slane %v4031, 3
      %v4139 = vsel %vm1021, %v4136, %v4138
      %v4140 = vrot.slane %v4032, 3
      %v4141 = vrot.slane %v4033, 3
      %v4142 = vsel %vm1021, %v4140, %v4141
      %v4143 = vrot.slane %v4034, 3
      %v4144 = vsel %vm1021, %v4141, %v4143
      %v4145 = vrot.slane %v4035, 3
      %v4146 = vrot.slane %v4036, 3
      %v4147 = vsel %vm1021, %v4145, %v4146
      %v4148 = vrot.slane %v4037, 3
      %v4149 = vsel %vm1021, %v4146, %v4148
      %v4150 = vrot.slane %v4038, 3
      %v4151 = vrot.slane %v4039, 3
      %v4152 = vsel %vm1021, %v4150, %v4151
      %v4153 = vrot.slane %v4040, 3
      %v4154 = vsel %vm1021, %v4151, %v4153
      %v4155 = vrot.slane %v4041, 3
      %v4156 = vrot.slane %v4042, 3
      %v4157 = vsel %vm1021, %v4155, %v4156
      %v4158 = vrot.slane %v4043, 3
      %v4159 = vsel %vm1021, %v4156, %v4158
      %v4160 = vrot.slane %v4044, 3
      %v4161 = vrot.slane %v4045, 3
      %v4162 = vsel %vm1021, %v4160, %v4161
      %v4163 = vrot.slane %v4046, 3
      %v4164 = vsel %vm1021, %v4161, %v4163
      %v4165 = vrot.slane %v4047, 3
      %v4166 = vrot.slane %v4048, 3
      %v4167 = vsel %vm1021, %v4165, %v4166
      %v4168 = vrot.slane %v4049, 3
      %v4169 = vsel %vm1021, %v4166, %v4168
      %v4170 = vrot.slane %v4050, 3
      %v4171 = vrot.slane %v4051, 3
      %v4172 = vsel %vm1021, %v4170, %v4171
      %v4173 = vrot.slane %v4052, 3
      %v4174 = vsel %vm1021, %v4171, %v4173
      %v4175 = vrot.slane %v4053, 3
      %v4176 = vrot.slane %v4054, 3
      %v4177 = vsel %vm1021, %v4175, %v4176
      %v4178 = vrot.slane %v4055, 3
      %v4179 = vsel %vm1021, %v4176, %v4178
      %v4180 = vrot.slane %v4056, 3
      %v4181 = vrot.slane %v4057, 3
      %v4182 = vsel %vm1021, %v4180, %v4181
      %v4183 = vrot.slane %v4058, 3
      %v4184 = vsel %vm1021, %v4181, %v4183
      %v4185 = vrot.slane %v4059, 3
      %v4186 = vrot.slane %v4060, 3
      %v4187 = vsel %vm1021, %v4185, %v4186
      %v4188 = vrot.slane %v4061, 3
      %v4189 = vsel %vm1021, %v4186, %v4188
      %v4222 = vadd.f32 %v3981, %v4112
      %v4223 = vadd.f32 %v3982, %v4114
      %v4224 = vadd.f32 %v3983, %v4117
      %v4225 = vadd.f32 %v3984, %v4119
      %v4226 = vadd.f32 %v3985, %v4122
      %v4227 = vadd.f32 %v3986, %v4124
      %v4228 = vadd.f32 %v3987, %v4127
      %v4229 = vadd.f32 %v3988, %v4129
      %v4230 = vadd.f32 %v3989, %v4132
      %v4231 = vadd.f32 %v3990, %v4134
      %v4232 = vadd.f32 %v3991, %v4137
      %v4233 = vadd.f32 %v3992, %v4139
      %v4234 = vadd.f32 %v3993, %v4142
      %v4235 = vadd.f32 %v3994, %v4144
      %v4236 = vadd.f32 %v3995, %v4147
      %v4237 = vadd.f32 %v3996, %v4149
      %v4238 = vadd.f32 %v3997, %v4152
      %v4239 = vadd.f32 %v3998, %v4154
      %v4240 = vadd.f32 %v3999, %v4157
      %v4241 = vadd.f32 %v4000, %v4159
      %v4242 = vadd.f32 %v4001, %v4162
      %v4243 = vadd.f32 %v4002, %v4164
      %v4244 = vadd.f32 %v4003, %v4167
      %v4245 = vadd.f32 %v4004, %v4169
      %v4246 = vadd.f32 %v4005, %v4172
      %v4247 = vadd.f32 %v4006, %v4174
      %v4248 = vadd.f32 %v4007, %v4177
      %v4249 = vadd.f32 %v4008, %v4179
      %v4250 = vadd.f32 %v4009, %v4182
      %v4251 = vadd.f32 %v4010, %v4184
      %v4252 = vadd.f32 %v4011, %v4187
      %v4253 = vadd.f32 %v4012, %v4189
      %v4254 = vperm.slane %v369, 3
      %v4255 = vmul.f32 %v316, %v4254
      %v4256 = vmul.f32 %v317, %v4254
      %v4257 = vmul.f32 %v318, %v4254
      %v4258 = vmul.f32 %v319, %v4254
      %v4259 = vmul.f32 %v320, %v4254
      %v4260 = vmul.f32 %v321, %v4254
      %v4261 = vmul.f32 %v322, %v4254
      %v4262 = vmul.f32 %v323, %v4254
      %v4263 = vmul.f32 %v324, %v4254
      %v4264 = vmul.f32 %v325, %v4254
      %v4265 = vmul.f32 %v326, %v4254
      %v4266 = vmul.f32 %v327, %v4254
      %v4267 = vmul.f32 %v328, %v4254
      %v4268 = vmul.f32 %v329, %v4254
      %v4269 = vmul.f32 %v330, %v4254
      %v4270 = vmul.f32 %v331, %v4254
      %v4271 = vmul.f32 %v332, %v4254
      %v4272 = vmul.f32 %v333, %v4254
      %v4273 = vmul.f32 %v334, %v4254
      %v4274 = vmul.f32 %v335, %v4254
      %v4275 = vmul.f32 %v336, %v4254
      %v4276 = vmul.f32 %v337, %v4254
      %v4277 = vmul.f32 %v338, %v4254
      %v4278 = vmul.f32 %v339, %v4254
      %v4279 = vmul.f32 %v340, %v4254
      %v4280 = vmul.f32 %v341, %v4254
      %v4281 = vmul.f32 %v342, %v4254
      %v4282 = vmul.f32 %v343, %v4254
      %v4283 = vmul.f32 %v344, %v4254
      %v4284 = vmul.f32 %v345, %v4254
      %v4285 = vmul.f32 %v346, %v4254
      %v4286 = vmul.f32 %v347, %v4254
      %v4287 = vmul.f32 %v348, %v4254
      %v4288 = vmul.f32 %v349, %v4254
      %v4289 = vmul.f32 %v350, %v4254
      %v4290 = vmul.f32 %v351, %v4254
      %v4291 = vmul.f32 %v352, %v4254
      %v4292 = vmul.f32 %v353, %v4254
      %v4293 = vmul.f32 %v354, %v4254
      %v4294 = vmul.f32 %v355, %v4254
      %v4295 = vmul.f32 %v356, %v4254
      %v4296 = vmul.f32 %v357, %v4254
      %v4297 = vmul.f32 %v358, %v4254
      %v4298 = vmul.f32 %v359, %v4254
      %v4299 = vmul.f32 %v360, %v4254
      %v4300 = vmul.f32 %v361, %v4254
      %v4301 = vmul.f32 %v362, %v4254
      %v4302 = vmul.f32 %v363, %v4254
      %v4351 = vrot.slane %v4255, 4
      %v4352 = vrot.slane %v4256, 4
      %v4353 = vsel %vm1263, %v4351, %v4352
      %v4354 = vrot.slane %v4257, 4
      %v4355 = vsel %vm1263, %v4352, %v4354
      %v4356 = vrot.slane %v4258, 4
      %v4357 = vrot.slane %v4259, 4
      %v4358 = vsel %vm1263, %v4356, %v4357
      %v4359 = vrot.slane %v4260, 4
      %v4360 = vsel %vm1263, %v4357, %v4359
      %v4361 = vrot.slane %v4261, 4
      %v4362 = vrot.slane %v4262, 4
      %v4363 = vsel %vm1263, %v4361, %v4362
      %v4364 = vrot.slane %v4263, 4
      %v4365 = vsel %vm1263, %v4362, %v4364
      %v4366 = vrot.slane %v4264, 4
      %v4367 = vrot.slane %v4265, 4
      %v4368 = vsel %vm1263, %v4366, %v4367
      %v4369 = vrot.slane %v4266, 4
      %v4370 = vsel %vm1263, %v4367, %v4369
      %v4371 = vrot.slane %v4267, 4
      %v4372 = vrot.slane %v4268, 4
      %v4373 = vsel %vm1263, %v4371, %v4372
      %v4374 = vrot.slane %v4269, 4
      %v4375 = vsel %vm1263, %v4372, %v4374
      %v4376 = vrot.slane %v4270, 4
      %v4377 = vrot.slane %v4271, 4
      %v4378 = vsel %vm1263, %v4376, %v4377
      %v4379 = vrot.slane %v4272, 4
      %v4380 = vsel %vm1263, %v4377, %v4379
      %v4381 = vrot.slane %v4273, 4
      %v4382 = vrot.slane %v4274, 4
      %v4383 = vsel %vm1263, %v4381, %v4382
      %v4384 = vrot.slane %v4275, 4
      %v4385 = vsel %vm1263, %v4382, %v4384
      %v4386 = vrot.slane %v4276, 4
      %v4387 = vrot.slane %v4277, 4
      %v4388 = vsel %vm1263, %v4386, %v4387
      %v4389 = vrot.slane %v4278, 4
      %v4390 = vsel %vm1263, %v4387, %v4389
      %v4391 = vrot.slane %v4279, 4
      %v4392 = vrot.slane %v4280, 4
      %v4393 = vsel %vm1263, %v4391, %v4392
      %v4394 = vrot.slane %v4281, 4
      %v4395 = vsel %vm1263, %v4392, %v4394
      %v4396 = vrot.slane %v4282, 4
      %v4397 = vrot.slane %v4283, 4
      %v4398 = vsel %vm1263, %v4396, %v4397
      %v4399 = vrot.slane %v4284, 4
      %v4400 = vsel %vm1263, %v4397, %v4399
      %v4401 = vrot.slane %v4285, 4
      %v4402 = vrot.slane %v4286, 4
      %v4403 = vsel %vm1263, %v4401, %v4402
      %v4404 = vrot.slane %v4287, 4
      %v4405 = vsel %vm1263, %v4402, %v4404
      %v4406 = vrot.slane %v4288, 4
      %v4407 = vrot.slane %v4289, 4
      %v4408 = vsel %vm1263, %v4406, %v4407
      %v4409 = vrot.slane %v4290, 4
      %v4410 = vsel %vm1263, %v4407, %v4409
      %v4411 = vrot.slane %v4291, 4
      %v4412 = vrot.slane %v4292, 4
      %v4413 = vsel %vm1263, %v4411, %v4412
      %v4414 = vrot.slane %v4293, 4
      %v4415 = vsel %vm1263, %v4412, %v4414
      %v4416 = vrot.slane %v4294, 4
      %v4417 = vrot.slane %v4295, 4
      %v4418 = vsel %vm1263, %v4416, %v4417
      %v4419 = vrot.slane %v4296, 4
      %v4420 = vsel %vm1263, %v4417, %v4419
      %v4421 = vrot.slane %v4297, 4
      %v4422 = vrot.slane %v4298, 4
      %v4423 = vsel %vm1263, %v4421, %v4422
      %v4424 = vrot.slane %v4299, 4
      %v4425 = vsel %vm1263, %v4422, %v4424
      %v4426 = vrot.slane %v4300, 4
      %v4427 = vrot.slane %v4301, 4
      %v4428 = vsel %vm1263, %v4426, %v4427
      %v4429 = vrot.slane %v4302, 4
      %v4430 = vsel %vm1263, %v4427, %v4429
      %v4463 = vadd.f32 %v4222, %v4353
      %v4464 = vadd.f32 %v4223, %v4355
      %v4465 = vadd.f32 %v4224, %v4358
      %v4466 = vadd.f32 %v4225, %v4360
      %v4467 = vadd.f32 %v4226, %v4363
      %v4468 = vadd.f32 %v4227, %v4365
      %v4469 = vadd.f32 %v4228, %v4368
      %v4470 = vadd.f32 %v4229, %v4370
      %v4471 = vadd.f32 %v4230, %v4373
      %v4472 = vadd.f32 %v4231, %v4375
      %v4473 = vadd.f32 %v4232, %v4378
      %v4474 = vadd.f32 %v4233, %v4380
      %v4475 = vadd.f32 %v4234, %v4383
      %v4476 = vadd.f32 %v4235, %v4385
      %v4477 = vadd.f32 %v4236, %v4388
      %v4478 = vadd.f32 %v4237, %v4390
      %v4479 = vadd.f32 %v4238, %v4393
      %v4480 = vadd.f32 %v4239, %v4395
      %v4481 = vadd.f32 %v4240, %v4398
      %v4482 = vadd.f32 %v4241, %v4400
      %v4483 = vadd.f32 %v4242, %v4403
      %v4484 = vadd.f32 %v4243, %v4405
      %v4485 = vadd.f32 %v4244, %v4408
      %v4486 = vadd.f32 %v4245, %v4410
      %v4487 = vadd.f32 %v4246, %v4413
      %v4488 = vadd.f32 %v4247, %v4415
      %v4489 = vadd.f32 %v4248, %v4418
      %v4490 = vadd.f32 %v4249, %v4420
      %v4491 = vadd.f32 %v4250, %v4423
      %v4492 = vadd.f32 %v4251, %v4425
      %v4493 = vadd.f32 %v4252, %v4428
      %v4494 = vadd.f32 %v4253, %v4430
      %v4495 = vperm.slane %v369, 4
      %v4496 = vmul.f32 %v319, %v4495
      %v4497 = vmul.f32 %v320, %v4495
      %v4498 = vmul.f32 %v322, %v4495
      %v4499 = vmul.f32 %v323, %v4495
      %v4500 = vmul.f32 %v325, %v4495
      %v4501 = vmul.f32 %v326, %v4495
      %v4502 = vmul.f32 %v328, %v4495
      %v4503 = vmul.f32 %v329, %v4495
      %v4504 = vmul.f32 %v331, %v4495
      %v4505 = vmul.f32 %v332, %v4495
      %v4506 = vmul.f32 %v334, %v4495
      %v4507 = vmul.f32 %v335, %v4495
      %v4508 = vmul.f32 %v337, %v4495
      %v4509 = vmul.f32 %v338, %v4495
      %v4510 = vmul.f32 %v340, %v4495
      %v4511 = vmul.f32 %v341, %v4495
      %v4512 = vmul.f32 %v343, %v4495
      %v4513 = vmul.f32 %v344, %v4495
      %v4514 = vmul.f32 %v346, %v4495
      %v4515 = vmul.f32 %v347, %v4495
      %v4516 = vmul.f32 %v349, %v4495
      %v4517 = vmul.f32 %v350, %v4495
      %v4518 = vmul.f32 %v352, %v4495
      %v4519 = vmul.f32 %v353, %v4495
      %v4520 = vmul.f32 %v355, %v4495
      %v4521 = vmul.f32 %v356, %v4495
      %v4522 = vmul.f32 %v358, %v4495
      %v4523 = vmul.f32 %v359, %v4495
      %v4524 = vmul.f32 %v361, %v4495
      %v4525 = vmul.f32 %v362, %v4495
      %v4526 = vmul.f32 %v364, %v4495
      %v4527 = vmul.f32 %v365, %v4495
      %v4528 = vadd.f32 %v4463, %v4496
      %v4529 = vadd.f32 %v4464, %v4497
      %v4530 = vadd.f32 %v4465, %v4498
      %v4531 = vadd.f32 %v4466, %v4499
      %v4532 = vadd.f32 %v4467, %v4500
      %v4533 = vadd.f32 %v4468, %v4501
      %v4534 = vadd.f32 %v4469, %v4502
      %v4535 = vadd.f32 %v4470, %v4503
      %v4536 = vadd.f32 %v4471, %v4504
      %v4537 = vadd.f32 %v4472, %v4505
      %v4538 = vadd.f32 %v4473, %v4506
      %v4539 = vadd.f32 %v4474, %v4507
      %v4540 = vadd.f32 %v4475, %v4508
      %v4541 = vadd.f32 %v4476, %v4509
      %v4542 = vadd.f32 %v4477, %v4510
      %v4543 = vadd.f32 %v4478, %v4511
      %v4544 = vadd.f32 %v4479, %v4512
      %v4545 = vadd.f32 %v4480, %v4513
      %v4546 = vadd.f32 %v4481, %v4514
      %v4547 = vadd.f32 %v4482, %v4515
      %v4548 = vadd.f32 %v4483, %v4516
      %v4549 = vadd.f32 %v4484, %v4517
      %v4550 = vadd.f32 %v4485, %v4518
      %v4551 = vadd.f32 %v4486, %v4519
      %v4552 = vadd.f32 %v4487, %v4520
      %v4553 = vadd.f32 %v4488, %v4521
      %v4554 = vadd.f32 %v4489, %v4522
      %v4555 = vadd.f32 %v4490, %v4523
      %v4556 = vadd.f32 %v4491, %v4524
      %v4557 = vadd.f32 %v4492, %v4525
      %v4558 = vadd.f32 %v4493, %v4526
      %v4559 = vadd.f32 %v4494, %v4527
      %v4560 = vperm.slane %v369, 5
      %v4561 = vmul.f32 %v319, %v4560
      %v4562 = vmul.f32 %v320, %v4560
      %v4563 = vmul.f32 %v321, %v4560
      %v4564 = vmul.f32 %v322, %v4560
      %v4565 = vmul.f32 %v323, %v4560
      %v4566 = vmul.f32 %v324, %v4560
      %v4567 = vmul.f32 %v325, %v4560
      %v4568 = vmul.f32 %v326, %v4560
      %v4569 = vmul.f32 %v327, %v4560
      %v4570 = vmul.f32 %v328, %v4560
      %v4571 = vmul.f32 %v329, %v4560
      %v4572 = vmul.f32 %v330, %v4560
      %v4573 = vmul.f32 %v331, %v4560
      %v4574 = vmul.f32 %v332, %v4560
      %v4575 = vmul.f32 %v333, %v4560
      %v4576 = vmul.f32 %v334, %v4560
      %v4577 = vmul.f32 %v335, %v4560
      %v4578 = vmul.f32 %v336, %v4560
      %v4579 = vmul.f32 %v337, %v4560
      %v4580 = vmul.f32 %v338, %v4560
      %v4581 = vmul.f32 %v339, %v4560
      %v4582 = vmul.f32 %v340, %v4560
      %v4583 = vmul.f32 %v341, %v4560
      %v4584 = vmul.f32 %v342, %v4560
      %v4585 = vmul.f32 %v343, %v4560
      %v4586 = vmul.f32 %v344, %v4560
      %v4587 = vmul.f32 %v345, %v4560
      %v4588 = vmul.f32 %v346, %v4560
      %v4589 = vmul.f32 %v347, %v4560
      %v4590 = vmul.f32 %v348, %v4560
      %v4591 = vmul.f32 %v349, %v4560
      %v4592 = vmul.f32 %v350, %v4560
      %v4593 = vmul.f32 %v351, %v4560
      %v4594 = vmul.f32 %v352, %v4560
      %v4595 = vmul.f32 %v353, %v4560
      %v4596 = vmul.f32 %v354, %v4560
      %v4597 = vmul.f32 %v355, %v4560
      %v4598 = vmul.f32 %v356, %v4560
      %v4599 = vmul.f32 %v357, %v4560
      %v4600 = vmul.f32 %v358, %v4560
      %v4601 = vmul.f32 %v359, %v4560
      %v4602 = vmul.f32 %v360, %v4560
      %v4603 = vmul.f32 %v361, %v4560
      %v4604 = vmul.f32 %v362, %v4560
      %v4605 = vmul.f32 %v363, %v4560
      %v4606 = vmul.f32 %v364, %v4560
      %v4607 = vmul.f32 %v365, %v4560
      %v4608 = vmul.f32 %v366, %v4560
      %v4657 = vrot.slane %v4561, 1
      %v4658 = vrot.slane %v4562, 1
      %v4659 = vsel %vm537, %v4657, %v4658
      %v4660 = vrot.slane %v4563, 1
      %v4661 = vsel %vm537, %v4658, %v4660
      %v4662 = vrot.slane %v4564, 1
      %v4663 = vrot.slane %v4565, 1
      %v4664 = vsel %vm537, %v4662, %v4663
      %v4665 = vrot.slane %v4566, 1
      %v4666 = vsel %vm537, %v4663, %v4665
      %v4667 = vrot.slane %v4567, 1
      %v4668 = vrot.slane %v4568, 1
      %v4669 = vsel %vm537, %v4667, %v4668
      %v4670 = vrot.slane %v4569, 1
      %v4671 = vsel %vm537, %v4668, %v4670
      %v4672 = vrot.slane %v4570, 1
      %v4673 = vrot.slane %v4571, 1
      %v4674 = vsel %vm537, %v4672, %v4673
      %v4675 = vrot.slane %v4572, 1
      %v4676 = vsel %vm537, %v4673, %v4675
      %v4677 = vrot.slane %v4573, 1
      %v4678 = vrot.slane %v4574, 1
      %v4679 = vsel %vm537, %v4677, %v4678
      %v4680 = vrot.slane %v4575, 1
      %v4681 = vsel %vm537, %v4678, %v4680
      %v4682 = vrot.slane %v4576, 1
      %v4683 = vrot.slane %v4577, 1
      %v4684 = vsel %vm537, %v4682, %v4683
      %v4685 = vrot.slane %v4578, 1
      %v4686 = vsel %vm537, %v4683, %v4685
      %v4687 = vrot.slane %v4579, 1
      %v4688 = vrot.slane %v4580, 1
      %v4689 = vsel %vm537, %v4687, %v4688
      %v4690 = vrot.slane %v4581, 1
      %v4691 = vsel %vm537, %v4688, %v4690
      %v4692 = vrot.slane %v4582, 1
      %v4693 = vrot.slane %v4583, 1
      %v4694 = vsel %vm537, %v4692, %v4693
      %v4695 = vrot.slane %v4584, 1
      %v4696 = vsel %vm537, %v4693, %v4695
      %v4697 = vrot.slane %v4585, 1
      %v4698 = vrot.slane %v4586, 1
      %v4699 = vsel %vm537, %v4697, %v4698
      %v4700 = vrot.slane %v4587, 1
      %v4701 = vsel %vm537, %v4698, %v4700
      %v4702 = vrot.slane %v4588, 1
      %v4703 = vrot.slane %v4589, 1
      %v4704 = vsel %vm537, %v4702, %v4703
      %v4705 = vrot.slane %v4590, 1
      %v4706 = vsel %vm537, %v4703, %v4705
      %v4707 = vrot.slane %v4591, 1
      %v4708 = vrot.slane %v4592, 1
      %v4709 = vsel %vm537, %v4707, %v4708
      %v4710 = vrot.slane %v4593, 1
      %v4711 = vsel %vm537, %v4708, %v4710
      %v4712 = vrot.slane %v4594, 1
      %v4713 = vrot.slane %v4595, 1
      %v4714 = vsel %vm537, %v4712, %v4713
      %v4715 = vrot.slane %v4596, 1
      %v4716 = vsel %vm537, %v4713, %v4715
      %v4717 = vrot.slane %v4597, 1
      %v4718 = vrot.slane %v4598, 1
      %v4719 = vsel %vm537, %v4717, %v4718
      %v4720 = vrot.slane %v4599, 1
      %v4721 = vsel %vm537, %v4718, %v4720
      %v4722 = vrot.slane %v4600, 1
      %v4723 = vrot.slane %v4601, 1
      %v4724 = vsel %vm537, %v4722, %v4723
      %v4725 = vrot.slane %v4602, 1
      %v4726 = vsel %vm537, %v4723, %v4725
      %v4727 = vrot.slane %v4603, 1
      %v4728 = vrot.slane %v4604, 1
      %v4729 = vsel %vm537, %v4727, %v4728
      %v4730 = vrot.slane %v4605, 1
      %v4731 = vsel %vm537, %v4728, %v4730
      %v4732 = vrot.slane %v4606, 1
      %v4733 = vrot.slane %v4607, 1
      %v4734 = vsel %vm537, %v4732, %v4733
      %v4735 = vrot.slane %v4608, 1
      %v4736 = vsel %vm537, %v4733, %v4735
      %v4769 = vadd.f32 %v4528, %v4659
      %v4770 = vadd.f32 %v4529, %v4661
      %v4771 = vadd.f32 %v4530, %v4664
      %v4772 = vadd.f32 %v4531, %v4666
      %v4773 = vadd.f32 %v4532, %v4669
      %v4774 = vadd.f32 %v4533, %v4671
      %v4775 = vadd.f32 %v4534, %v4674
      %v4776 = vadd.f32 %v4535, %v4676
      %v4777 = vadd.f32 %v4536, %v4679
      %v4778 = vadd.f32 %v4537, %v4681
      %v4779 = vadd.f32 %v4538, %v4684
      %v4780 = vadd.f32 %v4539, %v4686
      %v4781 = vadd.f32 %v4540, %v4689
      %v4782 = vadd.f32 %v4541, %v4691
      %v4783 = vadd.f32 %v4542, %v4694
      %v4784 = vadd.f32 %v4543, %v4696
      %v4785 = vadd.f32 %v4544, %v4699
      %v4786 = vadd.f32 %v4545, %v4701
      %v4787 = vadd.f32 %v4546, %v4704
      %v4788 = vadd.f32 %v4547, %v4706
      %v4789 = vadd.f32 %v4548, %v4709
      %v4790 = vadd.f32 %v4549, %v4711
      %v4791 = vadd.f32 %v4550, %v4714
      %v4792 = vadd.f32 %v4551, %v4716
      %v4793 = vadd.f32 %v4552, %v4719
      %v4794 = vadd.f32 %v4553, %v4721
      %v4795 = vadd.f32 %v4554, %v4724
      %v4796 = vadd.f32 %v4555, %v4726
      %v4797 = vadd.f32 %v4556, %v4729
      %v4798 = vadd.f32 %v4557, %v4731
      %v4799 = vadd.f32 %v4558, %v4734
      %v4800 = vadd.f32 %v4559, %v4736
      %v4801 = vperm.slane %v369, 6
      %v4802 = vmul.f32 %v319, %v4801
      %v4803 = vmul.f32 %v320, %v4801
      %v4804 = vmul.f32 %v321, %v4801
      %v4805 = vmul.f32 %v322, %v4801
      %v4806 = vmul.f32 %v323, %v4801
      %v4807 = vmul.f32 %v324, %v4801
      %v4808 = vmul.f32 %v325, %v4801
      %v4809 = vmul.f32 %v326, %v4801
      %v4810 = vmul.f32 %v327, %v4801
      %v4811 = vmul.f32 %v328, %v4801
      %v4812 = vmul.f32 %v329, %v4801
      %v4813 = vmul.f32 %v330, %v4801
      %v4814 = vmul.f32 %v331, %v4801
      %v4815 = vmul.f32 %v332, %v4801
      %v4816 = vmul.f32 %v333, %v4801
      %v4817 = vmul.f32 %v334, %v4801
      %v4818 = vmul.f32 %v335, %v4801
      %v4819 = vmul.f32 %v336, %v4801
      %v4820 = vmul.f32 %v337, %v4801
      %v4821 = vmul.f32 %v338, %v4801
      %v4822 = vmul.f32 %v339, %v4801
      %v4823 = vmul.f32 %v340, %v4801
      %v4824 = vmul.f32 %v341, %v4801
      %v4825 = vmul.f32 %v342, %v4801
      %v4826 = vmul.f32 %v343, %v4801
      %v4827 = vmul.f32 %v344, %v4801
      %v4828 = vmul.f32 %v345, %v4801
      %v4829 = vmul.f32 %v346, %v4801
      %v4830 = vmul.f32 %v347, %v4801
      %v4831 = vmul.f32 %v348, %v4801
      %v4832 = vmul.f32 %v349, %v4801
      %v4833 = vmul.f32 %v350, %v4801
      %v4834 = vmul.f32 %v351, %v4801
      %v4835 = vmul.f32 %v352, %v4801
      %v4836 = vmul.f32 %v353, %v4801
      %v4837 = vmul.f32 %v354, %v4801
      %v4838 = vmul.f32 %v355, %v4801
      %v4839 = vmul.f32 %v356, %v4801
      %v4840 = vmul.f32 %v357, %v4801
      %v4841 = vmul.f32 %v358, %v4801
      %v4842 = vmul.f32 %v359, %v4801
      %v4843 = vmul.f32 %v360, %v4801
      %v4844 = vmul.f32 %v361, %v4801
      %v4845 = vmul.f32 %v362, %v4801
      %v4846 = vmul.f32 %v363, %v4801
      %v4847 = vmul.f32 %v364, %v4801
      %v4848 = vmul.f32 %v365, %v4801
      %v4849 = vmul.f32 %v366, %v4801
      %v4898 = vrot.slane %v4802, 2
      %v4899 = vrot.slane %v4803, 2
      %v4900 = vsel %vm779, %v4898, %v4899
      %v4901 = vrot.slane %v4804, 2
      %v4902 = vsel %vm779, %v4899, %v4901
      %v4903 = vrot.slane %v4805, 2
      %v4904 = vrot.slane %v4806, 2
      %v4905 = vsel %vm779, %v4903, %v4904
      %v4906 = vrot.slane %v4807, 2
      %v4907 = vsel %vm779, %v4904, %v4906
      %v4908 = vrot.slane %v4808, 2
      %v4909 = vrot.slane %v4809, 2
      %v4910 = vsel %vm779, %v4908, %v4909
      %v4911 = vrot.slane %v4810, 2
      %v4912 = vsel %vm779, %v4909, %v4911
      %v4913 = vrot.slane %v4811, 2
      %v4914 = vrot.slane %v4812, 2
      %v4915 = vsel %vm779, %v4913, %v4914
      %v4916 = vrot.slane %v4813, 2
      %v4917 = vsel %vm779, %v4914, %v4916
      %v4918 = vrot.slane %v4814, 2
      %v4919 = vrot.slane %v4815, 2
      %v4920 = vsel %vm779, %v4918, %v4919
      %v4921 = vrot.slane %v4816, 2
      %v4922 = vsel %vm779, %v4919, %v4921
      %v4923 = vrot.slane %v4817, 2
      %v4924 = vrot.slane %v4818, 2
      %v4925 = vsel %vm779, %v4923, %v4924
      %v4926 = vrot.slane %v4819, 2
      %v4927 = vsel %vm779, %v4924, %v4926
      %v4928 = vrot.slane %v4820, 2
      %v4929 = vrot.slane %v4821, 2
      %v4930 = vsel %vm779, %v4928, %v4929
      %v4931 = vrot.slane %v4822, 2
      %v4932 = vsel %vm779, %v4929, %v4931
      %v4933 = vrot.slane %v4823, 2
      %v4934 = vrot.slane %v4824, 2
      %v4935 = vsel %vm779, %v4933, %v4934
      %v4936 = vrot.slane %v4825, 2
      %v4937 = vsel %vm779, %v4934, %v4936
      %v4938 = vrot.slane %v4826, 2
      %v4939 = vrot.slane %v4827, 2
      %v4940 = vsel %vm779, %v4938, %v4939
      %v4941 = vrot.slane %v4828, 2
      %v4942 = vsel %vm779, %v4939, %v4941
      %v4943 = vrot.slane %v4829, 2
      %v4944 = vrot.slane %v4830, 2
      %v4945 = vsel %vm779, %v4943, %v4944
      %v4946 = vrot.slane %v4831, 2
      %v4947 = vsel %vm779, %v4944, %v4946
      %v4948 = vrot.slane %v4832, 2
      %v4949 = vrot.slane %v4833, 2
      %v4950 = vsel %vm779, %v4948, %v4949
      %v4951 = vrot.slane %v4834, 2
      %v4952 = vsel %vm779, %v4949, %v4951
      %v4953 = vrot.slane %v4835, 2
      %v4954 = vrot.slane %v4836, 2
      %v4955 = vsel %vm779, %v4953, %v4954
      %v4956 = vrot.slane %v4837, 2
      %v4957 = vsel %vm779, %v4954, %v4956
      %v4958 = vrot.slane %v4838, 2
      %v4959 = vrot.slane %v4839, 2
      %v4960 = vsel %vm779, %v4958, %v4959
      %v4961 = vrot.slane %v4840, 2
      %v4962 = vsel %vm779, %v4959, %v4961
      %v4963 = vrot.slane %v4841, 2
      %v4964 = vrot.slane %v4842, 2
      %v4965 = vsel %vm779, %v4963, %v4964
      %v4966 = vrot.slane %v4843, 2
      %v4967 = vsel %vm779, %v4964, %v4966
      %v4968 = vrot.slane %v4844, 2
      %v4969 = vrot.slane %v4845, 2
      %v4970 = vsel %vm779, %v4968, %v4969
      %v4971 = vrot.slane %v4846, 2
      %v4972 = vsel %vm779, %v4969, %v4971
      %v4973 = vrot.slane %v4847, 2
      %v4974 = vrot.slane %v4848, 2
      %v4975 = vsel %vm779, %v4973, %v4974
      %v4976 = vrot.slane %v4849, 2
      %v4977 = vsel %vm779, %v4974, %v4976
      %v5010 = vadd.f32 %v4769, %v4900
      %v5011 = vadd.f32 %v4770, %v4902
      %v5012 = vadd.f32 %v4771, %v4905
      %v5013 = vadd.f32 %v4772, %v4907
      %v5014 = vadd.f32 %v4773, %v4910
      %v5015 = vadd.f32 %v4774, %v4912
      %v5016 = vadd.f32 %v4775, %v4915
      %v5017 = vadd.f32 %v4776, %v4917
      %v5018 = vadd.f32 %v4777, %v4920
      %v5019 = vadd.f32 %v4778, %v4922
      %v5020 = vadd.f32 %v4779, %v4925
      %v5021 = vadd.f32 %v4780, %v4927
      %v5022 = vadd.f32 %v4781, %v4930
      %v5023 = vadd.f32 %v4782, %v4932
      %v5024 = vadd.f32 %v4783, %v4935
      %v5025 = vadd.f32 %v4784, %v4937
      %v5026 = vadd.f32 %v4785, %v4940
      %v5027 = vadd.f32 %v4786, %v4942
      %v5028 = vadd.f32 %v4787, %v4945
      %v5029 = vadd.f32 %v4788, %v4947
      %v5030 = vadd.f32 %v4789, %v4950
      %v5031 = vadd.f32 %v4790, %v4952
      %v5032 = vadd.f32 %v4791, %v4955
      %v5033 = vadd.f32 %v4792, %v4957
      %v5034 = vadd.f32 %v4793, %v4960
      %v5035 = vadd.f32 %v4794, %v4962
      %v5036 = vadd.f32 %v4795, %v4965
      %v5037 = vadd.f32 %v4796, %v4967
      %v5038 = vadd.f32 %v4797, %v4970
      %v5039 = vadd.f32 %v4798, %v4972
      %v5040 = vadd.f32 %v4799, %v4975
      %v5041 = vadd.f32 %v4800, %v4977
      %v5042 = vperm.slane %v369, 7
      %v5043 = vmul.f32 %v319, %v5042
      %v5044 = vmul.f32 %v320, %v5042
      %v5045 = vmul.f32 %v321, %v5042
      %v5046 = vmul.f32 %v322, %v5042
      %v5047 = vmul.f32 %v323, %v5042
      %v5048 = vmul.f32 %v324, %v5042
      %v5049 = vmul.f32 %v325, %v5042
      %v5050 = vmul.f32 %v326, %v5042
      %v5051 = vmul.f32 %v327, %v5042
      %v5052 = vmul.f32 %v328, %v5042
      %v5053 = vmul.f32 %v329, %v5042
      %v5054 = vmul.f32 %v330, %v5042
      %v5055 = vmul.f32 %v331, %v5042
      %v5056 = vmul.f32 %v332, %v5042
      %v5057 = vmul.f32 %v333, %v5042
      %v5058 = vmul.f32 %v334, %v5042
      %v5059 = vmul.f32 %v335, %v5042
      %v5060 = vmul.f32 %v336, %v5042
      %v5061 = vmul.f32 %v337, %v5042
      %v5062 = vmul.f32 %v338, %v5042
      %v5063 = vmul.f32 %v339, %v5042
      %v5064 = vmul.f32 %v340, %v5042
      %v5065 = vmul.f32 %v341, %v5042
      %v5066 = vmul.f32 %v342, %v5042
      %v5067 = vmul.f32 %v343, %v5042
      %v5068 = vmul.f32 %v344, %v5042
      %v5069 = vmul.f32 %v345, %v5042
      %v5070 = vmul.f32 %v346, %v5042
      %v5071 = vmul.f32 %v347, %v5042
      %v5072 = vmul.f32 %v348, %v5042
      %v5073 = vmul.f32 %v349, %v5042
      %v5074 = vmul.f32 %v350, %v5042
      %v5075 = vmul.f32 %v351, %v5042
      %v5076 = vmul.f32 %v352, %v5042
      %v5077 = vmul.f32 %v353, %v5042
      %v5078 = vmul.f32 %v354, %v5042
      %v5079 = vmul.f32 %v355, %v5042
      %v5080 = vmul.f32 %v356, %v5042
      %v5081 = vmul.f32 %v357, %v5042
      %v5082 = vmul.f32 %v358, %v5042
      %v5083 = vmul.f32 %v359, %v5042
      %v5084 = vmul.f32 %v360, %v5042
      %v5085 = vmul.f32 %v361, %v5042
      %v5086 = vmul.f32 %v362, %v5042
      %v5087 = vmul.f32 %v363, %v5042
      %v5088 = vmul.f32 %v364, %v5042
      %v5089 = vmul.f32 %v365, %v5042
      %v5090 = vmul.f32 %v366, %v5042
      %v5139 = vrot.slane %v5043, 3
      %v5140 = vrot.slane %v5044, 3
      %v5141 = vsel %vm1021, %v5139, %v5140
      %v5142 = vrot.slane %v5045, 3
      %v5143 = vsel %vm1021, %v5140, %v5142
      %v5144 = vrot.slane %v5046, 3
      %v5145 = vrot.slane %v5047, 3
      %v5146 = vsel %vm1021, %v5144, %v5145
      %v5147 = vrot.slane %v5048, 3
      %v5148 = vsel %vm1021, %v5145, %v5147
      %v5149 = vrot.slane %v5049, 3
      %v5150 = vrot.slane %v5050, 3
      %v5151 = vsel %vm1021, %v5149, %v5150
      %v5152 = vrot.slane %v5051, 3
      %v5153 = vsel %vm1021, %v5150, %v5152
      %v5154 = vrot.slane %v5052, 3
      %v5155 = vrot.slane %v5053, 3
      %v5156 = vsel %vm1021, %v5154, %v5155
      %v5157 = vrot.slane %v5054, 3
      %v5158 = vsel %vm1021, %v5155, %v5157
      %v5159 = vrot.slane %v5055, 3
      %v5160 = vrot.slane %v5056, 3
      %v5161 = vsel %vm1021, %v5159, %v5160
      %v5162 = vrot.slane %v5057, 3
      %v5163 = vsel %vm1021, %v5160, %v5162
      %v5164 = vrot.slane %v5058, 3
      %v5165 = vrot.slane %v5059, 3
      %v5166 = vsel %vm1021, %v5164, %v5165
      %v5167 = vrot.slane %v5060, 3
      %v5168 = vsel %vm1021, %v5165, %v5167
      %v5169 = vrot.slane %v5061, 3
      %v5170 = vrot.slane %v5062, 3
      %v5171 = vsel %vm1021, %v5169, %v5170
      %v5172 = vrot.slane %v5063, 3
      %v5173 = vsel %vm1021, %v5170, %v5172
      %v5174 = vrot.slane %v5064, 3
      %v5175 = vrot.slane %v5065, 3
      %v5176 = vsel %vm1021, %v5174, %v5175
      %v5177 = vrot.slane %v5066, 3
      %v5178 = vsel %vm1021, %v5175, %v5177
      %v5179 = vrot.slane %v5067, 3
      %v5180 = vrot.slane %v5068, 3
      %v5181 = vsel %vm1021, %v5179, %v5180
      %v5182 = vrot.slane %v5069, 3
      %v5183 = vsel %vm1021, %v5180, %v5182
      %v5184 = vrot.slane %v5070, 3
      %v5185 = vrot.slane %v5071, 3
      %v5186 = vsel %vm1021, %v5184, %v5185
      %v5187 = vrot.slane %v5072, 3
      %v5188 = vsel %vm1021, %v5185, %v5187
      %v5189 = vrot.slane %v5073, 3
      %v5190 = vrot.slane %v5074, 3
      %v5191 = vsel %vm1021, %v5189, %v5190
      %v5192 = vrot.slane %v5075, 3
      %v5193 = vsel %vm1021, %v5190, %v5192
      %v5194 = vrot.slane %v5076, 3
      %v5195 = vrot.slane %v5077, 3
      %v5196 = vsel %vm1021, %v5194, %v5195
      %v5197 = vrot.slane %v5078, 3
      %v5198 = vsel %vm1021, %v5195, %v5197
      %v5199 = vrot.slane %v5079, 3
      %v5200 = vrot.slane %v5080, 3
      %v5201 = vsel %vm1021, %v5199, %v5200
      %v5202 = vrot.slane %v5081, 3
      %v5203 = vsel %vm1021, %v5200, %v5202
      %v5204 = vrot.slane %v5082, 3
      %v5205 = vrot.slane %v5083, 3
      %v5206 = vsel %vm1021, %v5204, %v5205
      %v5207 = vrot.slane %v5084, 3
      %v5208 = vsel %vm1021, %v5205, %v5207
      %v5209 = vrot.slane %v5085, 3
      %v5210 = vrot.slane %v5086, 3
      %v5211 = vsel %vm1021, %v5209, %v5210
      %v5212 = vrot.slane %v5087, 3
      %v5213 = vsel %vm1021, %v5210, %v5212
      %v5214 = vrot.slane %v5088, 3
      %v5215 = vrot.slane %v5089, 3
      %v5216 = vsel %vm1021, %v5214, %v5215
      %v5217 = vrot.slane %v5090, 3
      %v5218 = vsel %vm1021, %v5215, %v5217
      %v5251 = vadd.f32 %v5010, %v5141
      %v5252 = vadd.f32 %v5011, %v5143
      %v5253 = vadd.f32 %v5012, %v5146
      %v5254 = vadd.f32 %v5013, %v5148
      %v5255 = vadd.f32 %v5014, %v5151
      %v5256 = vadd.f32 %v5015, %v5153
      %v5257 = vadd.f32 %v5016, %v5156
      %v5258 = vadd.f32 %v5017, %v5158
      %v5259 = vadd.f32 %v5018, %v5161
      %v5260 = vadd.f32 %v5019, %v5163
      %v5261 = vadd.f32 %v5020, %v5166
      %v5262 = vadd.f32 %v5021, %v5168
      %v5263 = vadd.f32 %v5022, %v5171
      %v5264 = vadd.f32 %v5023, %v5173
      %v5265 = vadd.f32 %v5024, %v5176
      %v5266 = vadd.f32 %v5025, %v5178
      %v5267 = vadd.f32 %v5026, %v5181
      %v5268 = vadd.f32 %v5027, %v5183
      %v5269 = vadd.f32 %v5028, %v5186
      %v5270 = vadd.f32 %v5029, %v5188
      %v5271 = vadd.f32 %v5030, %v5191
      %v5272 = vadd.f32 %v5031, %v5193
      %v5273 = vadd.f32 %v5032, %v5196
      %v5274 = vadd.f32 %v5033, %v5198
      %v5275 = vadd.f32 %v5034, %v5201
      %v5276 = vadd.f32 %v5035, %v5203
      %v5277 = vadd.f32 %v5036, %v5206
      %v5278 = vadd.f32 %v5037, %v5208
      %v5279 = vadd.f32 %v5038, %v5211
      %v5280 = vadd.f32 %v5039, %v5213
      %v5281 = vadd.f32 %v5040, %v5216
      %v5282 = vadd.f32 %v5041, %v5218
      %v5283 = vperm.slane %v370, 0
      %v5284 = vmul.f32 %v319, %v5283
      %v5285 = vmul.f32 %v320, %v5283
      %v5286 = vmul.f32 %v321, %v5283
      %v5287 = vmul.f32 %v322, %v5283
      %v5288 = vmul.f32 %v323, %v5283
      %v5289 = vmul.f32 %v324, %v5283
      %v5290 = vmul.f32 %v325, %v5283
      %v5291 = vmul.f32 %v326, %v5283
      %v5292 = vmul.f32 %v327, %v5283
      %v5293 = vmul.f32 %v328, %v5283
      %v5294 = vmul.f32 %v329, %v5283
      %v5295 = vmul.f32 %v330, %v5283
      %v5296 = vmul.f32 %v331, %v5283
      %v5297 = vmul.f32 %v332, %v5283
      %v5298 = vmul.f32 %v333, %v5283
      %v5299 = vmul.f32 %v334, %v5283
      %v5300 = vmul.f32 %v335, %v5283
      %v5301 = vmul.f32 %v336, %v5283
      %v5302 = vmul.f32 %v337, %v5283
      %v5303 = vmul.f32 %v338, %v5283
      %v5304 = vmul.f32 %v339, %v5283
      %v5305 = vmul.f32 %v340, %v5283
      %v5306 = vmul.f32 %v341, %v5283
      %v5307 = vmul.f32 %v342, %v5283
      %v5308 = vmul.f32 %v343, %v5283
      %v5309 = vmul.f32 %v344, %v5283
      %v5310 = vmul.f32 %v345, %v5283
      %v5311 = vmul.f32 %v346, %v5283
      %v5312 = vmul.f32 %v347, %v5283
      %v5313 = vmul.f32 %v348, %v5283
      %v5314 = vmul.f32 %v349, %v5283
      %v5315 = vmul.f32 %v350, %v5283
      %v5316 = vmul.f32 %v351, %v5283
      %v5317 = vmul.f32 %v352, %v5283
      %v5318 = vmul.f32 %v353, %v5283
      %v5319 = vmul.f32 %v354, %v5283
      %v5320 = vmul.f32 %v355, %v5283
      %v5321 = vmul.f32 %v356, %v5283
      %v5322 = vmul.f32 %v357, %v5283
      %v5323 = vmul.f32 %v358, %v5283
      %v5324 = vmul.f32 %v359, %v5283
      %v5325 = vmul.f32 %v360, %v5283
      %v5326 = vmul.f32 %v361, %v5283
      %v5327 = vmul.f32 %v362, %v5283
      %v5328 = vmul.f32 %v363, %v5283
      %v5329 = vmul.f32 %v364, %v5283
      %v5330 = vmul.f32 %v365, %v5283
      %v5331 = vmul.f32 %v366, %v5283
      %v5380 = vrot.slane %v5284, 4
      %v5381 = vrot.slane %v5285, 4
      %v5382 = vsel %vm1263, %v5380, %v5381
      %v5383 = vrot.slane %v5286, 4
      %v5384 = vsel %vm1263, %v5381, %v5383
      %v5385 = vrot.slane %v5287, 4
      %v5386 = vrot.slane %v5288, 4
      %v5387 = vsel %vm1263, %v5385, %v5386
      %v5388 = vrot.slane %v5289, 4
      %v5389 = vsel %vm1263, %v5386, %v5388
      %v5390 = vrot.slane %v5290, 4
      %v5391 = vrot.slane %v5291, 4
      %v5392 = vsel %vm1263, %v5390, %v5391
      %v5393 = vrot.slane %v5292, 4
      %v5394 = vsel %vm1263, %v5391, %v5393
      %v5395 = vrot.slane %v5293, 4
      %v5396 = vrot.slane %v5294, 4
      %v5397 = vsel %vm1263, %v5395, %v5396
      %v5398 = vrot.slane %v5295, 4
      %v5399 = vsel %vm1263, %v5396, %v5398
      %v5400 = vrot.slane %v5296, 4
      %v5401 = vrot.slane %v5297, 4
      %v5402 = vsel %vm1263, %v5400, %v5401
      %v5403 = vrot.slane %v5298, 4
      %v5404 = vsel %vm1263, %v5401, %v5403
      %v5405 = vrot.slane %v5299, 4
      %v5406 = vrot.slane %v5300, 4
      %v5407 = vsel %vm1263, %v5405, %v5406
      %v5408 = vrot.slane %v5301, 4
      %v5409 = vsel %vm1263, %v5406, %v5408
      %v5410 = vrot.slane %v5302, 4
      %v5411 = vrot.slane %v5303, 4
      %v5412 = vsel %vm1263, %v5410, %v5411
      %v5413 = vrot.slane %v5304, 4
      %v5414 = vsel %vm1263, %v5411, %v5413
      %v5415 = vrot.slane %v5305, 4
      %v5416 = vrot.slane %v5306, 4
      %v5417 = vsel %vm1263, %v5415, %v5416
      %v5418 = vrot.slane %v5307, 4
      %v5419 = vsel %vm1263, %v5416, %v5418
      %v5420 = vrot.slane %v5308, 4
      %v5421 = vrot.slane %v5309, 4
      %v5422 = vsel %vm1263, %v5420, %v5421
      %v5423 = vrot.slane %v5310, 4
      %v5424 = vsel %vm1263, %v5421, %v5423
      %v5425 = vrot.slane %v5311, 4
      %v5426 = vrot.slane %v5312, 4
      %v5427 = vsel %vm1263, %v5425, %v5426
      %v5428 = vrot.slane %v5313, 4
      %v5429 = vsel %vm1263, %v5426, %v5428
      %v5430 = vrot.slane %v5314, 4
      %v5431 = vrot.slane %v5315, 4
      %v5432 = vsel %vm1263, %v5430, %v5431
      %v5433 = vrot.slane %v5316, 4
      %v5434 = vsel %vm1263, %v5431, %v5433
      %v5435 = vrot.slane %v5317, 4
      %v5436 = vrot.slane %v5318, 4
      %v5437 = vsel %vm1263, %v5435, %v5436
      %v5438 = vrot.slane %v5319, 4
      %v5439 = vsel %vm1263, %v5436, %v5438
      %v5440 = vrot.slane %v5320, 4
      %v5441 = vrot.slane %v5321, 4
      %v5442 = vsel %vm1263, %v5440, %v5441
      %v5443 = vrot.slane %v5322, 4
      %v5444 = vsel %vm1263, %v5441, %v5443
      %v5445 = vrot.slane %v5323, 4
      %v5446 = vrot.slane %v5324, 4
      %v5447 = vsel %vm1263, %v5445, %v5446
      %v5448 = vrot.slane %v5325, 4
      %v5449 = vsel %vm1263, %v5446, %v5448
      %v5450 = vrot.slane %v5326, 4
      %v5451 = vrot.slane %v5327, 4
      %v5452 = vsel %vm1263, %v5450, %v5451
      %v5453 = vrot.slane %v5328, 4
      %v5454 = vsel %vm1263, %v5451, %v5453
      %v5455 = vrot.slane %v5329, 4
      %v5456 = vrot.slane %v5330, 4
      %v5457 = vsel %vm1263, %v5455, %v5456
      %v5458 = vrot.slane %v5331, 4
      %v5459 = vsel %vm1263, %v5456, %v5458
      %v5492 = vadd.f32 %v5251, %v5382
      %v5493 = vadd.f32 %v5252, %v5384
      %v5494 = vadd.f32 %v5253, %v5387
      %v5495 = vadd.f32 %v5254, %v5389
      %v5496 = vadd.f32 %v5255, %v5392
      %v5497 = vadd.f32 %v5256, %v5394
      %v5498 = vadd.f32 %v5257, %v5397
      %v5499 = vadd.f32 %v5258, %v5399
      %v5500 = vadd.f32 %v5259, %v5402
      %v5501 = vadd.f32 %v5260, %v5404
      %v5502 = vadd.f32 %v5261, %v5407
      %v5503 = vadd.f32 %v5262, %v5409
      %v5504 = vadd.f32 %v5263, %v5412
      %v5505 = vadd.f32 %v5264, %v5414
      %v5506 = vadd.f32 %v5265, %v5417
      %v5507 = vadd.f32 %v5266, %v5419
      %v5508 = vadd.f32 %v5267, %v5422
      %v5509 = vadd.f32 %v5268, %v5424
      %v5510 = vadd.f32 %v5269, %v5427
      %v5511 = vadd.f32 %v5270, %v5429
      %v5512 = vadd.f32 %v5271, %v5432
      %v5513 = vadd.f32 %v5272, %v5434
      %v5514 = vadd.f32 %v5273, %v5437
      %v5515 = vadd.f32 %v5274, %v5439
      %v5516 = vadd.f32 %v5275, %v5442
      %v5517 = vadd.f32 %v5276, %v5444
      %v5518 = vadd.f32 %v5277, %v5447
      %v5519 = vadd.f32 %v5278, %v5449
      %v5520 = vadd.f32 %v5279, %v5452
      %v5521 = vadd.f32 %v5280, %v5454
      %v5522 = vadd.f32 %v5281, %v5457
      %v5523 = vadd.f32 %v5282, %v5459
      %vm5524 = vcmask 31744
      %v5525 = vsel %vm5524, %v5492, 0.0
      %5526 = vadd.xlane.f32.xlu0 %v5525
      %v5527 = vpop.xlane.xlu0 %5526
      %v5528 = vsel %vm5524, %v5493, 0.0
      %5529 = vadd.xlane.f32.xlu0 %v5528
      %v5530 = vpop.xlane.xlu0 %5529
      %v5531 = vsel %vm5524, %v5494, 0.0
      %5532 = vadd.xlane.f32.xlu0 %v5531
      %v5533 = vpop.xlane.xlu0 %5532
      %v5534 = vsel %vm5524, %v5495, 0.0
      %5535 = vadd.xlane.f32.xlu0 %v5534
      %v5536 = vpop.xlane.xlu0 %5535
      %v5537 = vsel %vm5524, %v5496, 0.0
      %5538 = vadd.xlane.f32.xlu0 %v5537
      %v5539 = vpop.xlane.xlu0 %5538
      %v5540 = vsel %vm5524, %v5497, 0.0
      %5541 = vadd.xlane.f32.xlu0 %v5540
      %v5542 = vpop.xlane.xlu0 %5541
      %v5543 = vsel %vm5524, %v5498, 0.0
      %5544 = vadd.xlane.f32.xlu0 %v5543
      %v5545 = vpop.xlane.xlu0 %5544
      %v5546 = vsel %vm5524, %v5499, 0.0
      %5547 = vadd.xlane.f32.xlu0 %v5546
      %v5548 = vpop.xlane.xlu0 %5547
      %v5549 = vsel %vm5524, %v5500, 0.0
      %5550 = vadd.xlane.f32.xlu0 %v5549
      %v5551 = vpop.xlane.xlu0 %5550
      %v5552 = vsel %vm5524, %v5501, 0.0
      %5553 = vadd.xlane.f32.xlu0 %v5552
      %v5554 = vpop.xlane.xlu0 %5553
      %v5555 = vsel %vm5524, %v5502, 0.0
      %5556 = vadd.xlane.f32.xlu0 %v5555
      %v5557 = vpop.xlane.xlu0 %5556
      %v5558 = vsel %vm5524, %v5503, 0.0
      %5559 = vadd.xlane.f32.xlu0 %v5558
      %v5560 = vpop.xlane.xlu0 %5559
      %v5561 = vsel %vm5524, %v5504, 0.0
      %5562 = vadd.xlane.f32.xlu0 %v5561
      %v5563 = vpop.xlane.xlu0 %5562
      %v5564 = vsel %vm5524, %v5505, 0.0
      %5565 = vadd.xlane.f32.xlu0 %v5564
      %v5566 = vpop.xlane.xlu0 %5565
      %v5567 = vsel %vm5524, %v5506, 0.0
      %5568 = vadd.xlane.f32.xlu0 %v5567
      %v5569 = vpop.xlane.xlu0 %5568
      %v5570 = vsel %vm5524, %v5507, 0.0
      %5571 = vadd.xlane.f32.xlu0 %v5570
      %v5572 = vpop.xlane.xlu0 %5571
      %v5573 = vsel %vm5524, %v5508, 0.0
      %5574 = vadd.xlane.f32.xlu0 %v5573
      %v5575 = vpop.xlane.xlu0 %5574
      %v5576 = vsel %vm5524, %v5509, 0.0
      %5577 = vadd.xlane.f32.xlu0 %v5576
      %v5578 = vpop.xlane.xlu0 %5577
      %v5579 = vsel %vm5524, %v5510, 0.0
      %5580 = vadd.xlane.f32.xlu0 %v5579
      %v5581 = vpop.xlane.xlu0 %5580
      %v5582 = vsel %vm5524, %v5511, 0.0
      %5583 = vadd.xlane.f32.xlu0 %v5582
      %v5584 = vpop.xlane.xlu0 %5583
      %v5585 = vsel %vm5524, %v5512, 0.0
      %5586 = vadd.xlane.f32.xlu0 %v5585
      %v5587 = vpop.xlane.xlu0 %5586
      %v5588 = vsel %vm5524, %v5513, 0.0
      %5589 = vadd.xlane.f32.xlu0 %v5588
      %v5590 = vpop.xlane.xlu0 %5589
      %v5591 = vsel %vm5524, %v5514, 0.0
      %5592 = vadd.xlane.f32.xlu0 %v5591
      %v5593 = vpop.xlane.xlu0 %5592
      %v5594 = vsel %vm5524, %v5515, 0.0
      %5595 = vadd.xlane.f32.xlu0 %v5594
      %v5596 = vpop.xlane.xlu0 %5595
      %v5597 = vsel %vm5524, %v5516, 0.0
      %5598 = vadd.xlane.f32.xlu0 %v5597
      %v5599 = vpop.xlane.xlu0 %5598
      %v5600 = vsel %vm5524, %v5517, 0.0
      %5601 = vadd.xlane.f32.xlu0 %v5600
      %v5602 = vpop.xlane.xlu0 %5601
      %v5603 = vsel %vm5524, %v5518, 0.0
      %5604 = vadd.xlane.f32.xlu0 %v5603
      %v5605 = vpop.xlane.xlu0 %5604
      %v5606 = vsel %vm5524, %v5519, 0.0
      %5607 = vadd.xlane.f32.xlu0 %v5606
      %v5608 = vpop.xlane.xlu0 %5607
      %v5609 = vsel %vm5524, %v5520, 0.0
      %5610 = vadd.xlane.f32.xlu0 %v5609
      %v5611 = vpop.xlane.xlu0 %5610
      %v5612 = vsel %vm5524, %v5521, 0.0
      %5613 = vadd.xlane.f32.xlu0 %v5612
      %v5614 = vpop.xlane.xlu0 %5613
      %v5615 = vsel %vm5524, %v5522, 0.0
      %5616 = vadd.xlane.f32.xlu0 %v5615
      %v5617 = vpop.xlane.xlu0 %5616
      %v5618 = vsel %vm5524, %v5523, 0.0
      %5619 = vadd.xlane.f32.xlu0 %v5618
      %v5620 = vpop.xlane.xlu0 %5619
      %v5621 = vrcp.pop 4.0
      %v5622 = vmul.f32 4.0, %v5621
      %v5623 = vsub.f32 1.0, %v5622
      %v5624 = vmul.f32 %v5621, %v5623
      %v5625 = vadd.f32 %v5621, %v5624
      %vm5626 = vweird.f32 %v5621
      %v5627 = vsel %vm5626, %v5621, %v5625
      %v5628 = vmul.f32 %v5527, %v5627
      %v5629 = vmul.f32 %v5530, %v5627
      %v5630 = vmul.f32 %v5533, %v5627
      %v5631 = vmul.f32 %v5536, %v5627
      %v5632 = vmul.f32 %v5539, %v5627
      %v5633 = vmul.f32 %v5542, %v5627
      %v5634 = vmul.f32 %v5545, %v5627
      %v5635 = vmul.f32 %v5548, %v5627
      %v5636 = vmul.f32 %v5551, %v5627
      %v5637 = vmul.f32 %v5554, %v5627
      %v5638 = vmul.f32 %v5557, %v5627
      %v5639 = vmul.f32 %v5560, %v5627
      %v5640 = vmul.f32 %v5563, %v5627
      %v5641 = vmul.f32 %v5566, %v5627
      %v5642 = vmul.f32 %v5569, %v5627
      %v5643 = vmul.f32 %v5572, %v5627
      %v5644 = vmul.f32 %v5575, %v5627
      %v5645 = vmul.f32 %v5578, %v5627
      %v5646 = vmul.f32 %v5581, %v5627
      %v5647 = vmul.f32 %v5584, %v5627
      %v5648 = vmul.f32 %v5587, %v5627
      %v5649 = vmul.f32 %v5590, %v5627
      %v5650 = vmul.f32 %v5593, %v5627
      %v5651 = vmul.f32 %v5596, %v5627
      %v5652 = vmul.f32 %v5599, %v5627
      %v5653 = vmul.f32 %v5602, %v5627
      %v5654 = vmul.f32 %v5605, %v5627
      %v5655 = vmul.f32 %v5608, %v5627
      %v5656 = vmul.f32 %v5611, %v5627
      %v5657 = vmul.f32 %v5614, %v5627
      %v5658 = vmul.f32 %v5617, %v5627
      %v5659 = vmul.f32 %v5620, %v5627
      %v5660 = vmul.f32 %v5492, %v5492
      %v5661 = vmul.f32 %v5493, %v5493
      %v5662 = vmul.f32 %v5494, %v5494
      %v5663 = vmul.f32 %v5495, %v5495
      %v5664 = vmul.f32 %v5496, %v5496
      %v5665 = vmul.f32 %v5497, %v5497
      %v5666 = vmul.f32 %v5498, %v5498
      %v5667 = vmul.f32 %v5499, %v5499
      %v5668 = vmul.f32 %v5500, %v5500
      %v5669 = vmul.f32 %v5501, %v5501
      %v5670 = vmul.f32 %v5502, %v5502
      %v5671 = vmul.f32 %v5503, %v5503
      %v5672 = vmul.f32 %v5504, %v5504
      %v5673 = vmul.f32 %v5505, %v5505
      %v5674 = vmul.f32 %v5506, %v5506
      %v5675 = vmul.f32 %v5507, %v5507
      %v5676 = vmul.f32 %v5508, %v5508
      %v5677 = vmul.f32 %v5509, %v5509
      %v5678 = vmul.f32 %v5510, %v5510
      %v5679 = vmul.f32 %v5511, %v5511
      %v5680 = vmul.f32 %v5512, %v5512
      %v5681 = vmul.f32 %v5513, %v5513
      %v5682 = vmul.f32 %v5514, %v5514
      %v5683 = vmul.f32 %v5515, %v5515
      %v5684 = vmul.f32 %v5516, %v5516
      %v5685 = vmul.f32 %v5517, %v5517
      %v5686 = vmul.f32 %v5518, %v5518
      %v5687 = vmul.f32 %v5519, %v5519
      %v5688 = vmul.f32 %v5520, %v5520
      %v5689 = vmul.f32 %v5521, %v5521
      %v5690 = vmul.f32 %v5522, %v5522
      %v5691 = vmul.f32 %v5523, %v5523
      %v5692 = vsel %vm5524, %v5660, 0.0
      %5693 = vadd.xlane.f32.xlu0 %v5692
      %v5694 = vpop.xlane.xlu0 %5693
      %v5695 = vsel %vm5524, %v5661, 0.0
      %5696 = vadd.xlane.f32.xlu0 %v5695
      %v5697 = vpop.xlane.xlu0 %5696
      %v5698 = vsel %vm5524, %v5662, 0.0
      %5699 = vadd.xlane.f32.xlu0 %v5698
      %v5700 = vpop.xlane.xlu0 %5699
      %v5701 = vsel %vm5524, %v5663, 0.0
      %5702 = vadd.xlane.f32.xlu0 %v5701
      %v5703 = vpop.xlane.xlu0 %5702
      %v5704 = vsel %vm5524, %v5664, 0.0
      %5705 = vadd.xlane.f32.xlu0 %v5704
      %v5706 = vpop.xlane.xlu0 %5705
      %v5707 = vsel %vm5524, %v5665, 0.0
      %5708 = vadd.xlane.f32.xlu0 %v5707
      %v5709 = vpop.xlane.xlu0 %5708
      %v5710 = vsel %vm5524, %v5666, 0.0
      %5711 = vadd.xlane.f32.xlu0 %v5710
      %v5712 = vpop.xlane.xlu0 %5711
      %v5713 = vsel %vm5524, %v5667, 0.0
      %5714 = vadd.xlane.f32.xlu0 %v5713
      %v5715 = vpop.xlane.xlu0 %5714
      %v5716 = vsel %vm5524, %v5668, 0.0
      %5717 = vadd.xlane.f32.xlu0 %v5716
      %v5718 = vpop.xlane.xlu0 %5717
      %v5719 = vsel %vm5524, %v5669, 0.0
      %5720 = vadd.xlane.f32.xlu0 %v5719
      %v5721 = vpop.xlane.xlu0 %5720
      %v5722 = vsel %vm5524, %v5670, 0.0
      %5723 = vadd.xlane.f32.xlu0 %v5722
      %v5724 = vpop.xlane.xlu0 %5723
      %v5725 = vsel %vm5524, %v5671, 0.0
      %5726 = vadd.xlane.f32.xlu0 %v5725
      %v5727 = vpop.xlane.xlu0 %5726
      %v5728 = vsel %vm5524, %v5672, 0.0
      %5729 = vadd.xlane.f32.xlu0 %v5728
      %v5730 = vpop.xlane.xlu0 %5729
      %v5731 = vsel %vm5524, %v5673, 0.0
      %5732 = vadd.xlane.f32.xlu0 %v5731
      %v5733 = vpop.xlane.xlu0 %5732
      %v5734 = vsel %vm5524, %v5674, 0.0
      %5735 = vadd.xlane.f32.xlu0 %v5734
      %v5736 = vpop.xlane.xlu0 %5735
      %v5737 = vsel %vm5524, %v5675, 0.0
      %5738 = vadd.xlane.f32.xlu0 %v5737
      %v5739 = vpop.xlane.xlu0 %5738
      %v5740 = vsel %vm5524, %v5676, 0.0
      %5741 = vadd.xlane.f32.xlu0 %v5740
      %v5742 = vpop.xlane.xlu0 %5741
      %v5743 = vsel %vm5524, %v5677, 0.0
      %5744 = vadd.xlane.f32.xlu0 %v5743
      %v5745 = vpop.xlane.xlu0 %5744
      %v5746 = vsel %vm5524, %v5678, 0.0
      %5747 = vadd.xlane.f32.xlu0 %v5746
      %v5748 = vpop.xlane.xlu0 %5747
      %v5749 = vsel %vm5524, %v5679, 0.0
      %5750 = vadd.xlane.f32.xlu0 %v5749
      %v5751 = vpop.xlane.xlu0 %5750
      %v5752 = vsel %vm5524, %v5680, 0.0
      %5753 = vadd.xlane.f32.xlu0 %v5752
      %v5754 = vpop.xlane.xlu0 %5753
      %v5755 = vsel %vm5524, %v5681, 0.0
      %5756 = vadd.xlane.f32.xlu0 %v5755
      %v5757 = vpop.xlane.xlu0 %5756
      %v5758 = vsel %vm5524, %v5682, 0.0
      %5759 = vadd.xlane.f32.xlu0 %v5758
      %v5760 = vpop.xlane.xlu0 %5759
      %v5761 = vsel %vm5524, %v5683, 0.0
      %5762 = vadd.xlane.f32.xlu0 %v5761
      %v5763 = vpop.xlane.xlu0 %5762
      %v5764 = vsel %vm5524, %v5684, 0.0
      %5765 = vadd.xlane.f32.xlu0 %v5764
      %v5766 = vpop.xlane.xlu0 %5765
      %v5767 = vsel %vm5524, %v5685, 0.0
      %5768 = vadd.xlane.f32.xlu0 %v5767
      %v5769 = vpop.xlane.xlu0 %5768
      %v5770 = vsel %vm5524, %v5686, 0.0
      %5771 = vadd.xlane.f32.xlu0 %v5770
      %v5772 = vpop.xlane.xlu0 %5771
      %v5773 = vsel %vm5524, %v5687, 0.0
      %5774 = vadd.xlane.f32.xlu0 %v5773
      %v5775 = vpop.xlane.xlu0 %5774
      %v5776 = vsel %vm5524, %v5688, 0.0
      %5777 = vadd.xlane.f32.xlu0 %v5776
      %v5778 = vpop.xlane.xlu0 %5777
      %v5779 = vsel %vm5524, %v5689, 0.0
      %5780 = vadd.xlane.f32.xlu0 %v5779
      %v5781 = vpop.xlane.xlu0 %5780
      %v5782 = vsel %vm5524, %v5690, 0.0
      %5783 = vadd.xlane.f32.xlu0 %v5782
      %v5784 = vpop.xlane.xlu0 %5783
      %v5785 = vsel %vm5524, %v5691, 0.0
      %5786 = vadd.xlane.f32.xlu0 %v5785
      %v5787 = vpop.xlane.xlu0 %5786
      %v5788 = vmul.f32 %v5694, %v5627
      %v5789 = vmul.f32 %v5697, %v5627
      %v5790 = vmul.f32 %v5700, %v5627
      %v5791 = vmul.f32 %v5703, %v5627
      %v5792 = vmul.f32 %v5706, %v5627
      %v5793 = vmul.f32 %v5709, %v5627
      %v5794 = vmul.f32 %v5712, %v5627
      %v5795 = vmul.f32 %v5715, %v5627
      %v5796 = vmul.f32 %v5718, %v5627
      %v5797 = vmul.f32 %v5721, %v5627
      %v5798 = vmul.f32 %v5724, %v5627
      %v5799 = vmul.f32 %v5727, %v5627
      %v5800 = vmul.f32 %v5730, %v5627
      %v5801 = vmul.f32 %v5733, %v5627
      %v5802 = vmul.f32 %v5736, %v5627
      %v5803 = vmul.f32 %v5739, %v5627
      %v5804 = vmul.f32 %v5742, %v5627
      %v5805 = vmul.f32 %v5745, %v5627
      %v5806 = vmul.f32 %v5748, %v5627
      %v5807 = vmul.f32 %v5751, %v5627
      %v5808 = vmul.f32 %v5754, %v5627
      %v5809 = vmul.f32 %v5757, %v5627
      %v5810 = vmul.f32 %v5760, %v5627
      %v5811 = vmul.f32 %v5763, %v5627
      %v5812 = vmul.f32 %v5766, %v5627
      %v5813 = vmul.f32 %v5769, %v5627
      %v5814 = vmul.f32 %v5772, %v5627
      %v5815 = vmul.f32 %v5775, %v5627
      %v5816 = vmul.f32 %v5778, %v5627
      %v5817 = vmul.f32 %v5781, %v5627
      %v5818 = vmul.f32 %v5784, %v5627
      %v5819 = vmul.f32 %v5787, %v5627
      %v5820 = vsub.f32 %v5492, %v5628
      %v5821 = vsub.f32 %v5493, %v5629
      %v5822 = vsub.f32 %v5494, %v5630
      %v5823 = vsub.f32 %v5495, %v5631
      %v5824 = vsub.f32 %v5496, %v5632
      %v5825 = vsub.f32 %v5497, %v5633
      %v5826 = vsub.f32 %v5498, %v5634
      %v5827 = vsub.f32 %v5499, %v5635
      %v5828 = vsub.f32 %v5500, %v5636
      %v5829 = vsub.f32 %v5501, %v5637
      %v5830 = vsub.f32 %v5502, %v5638
      %v5831 = vsub.f32 %v5503, %v5639
      %v5832 = vsub.f32 %v5504, %v5640
      %v5833 = vsub.f32 %v5505, %v5641
      %v5834 = vsub.f32 %v5506, %v5642
      %v5835 = vsub.f32 %v5507, %v5643
      %v5836 = vsub.f32 %v5508, %v5644
      %v5837 = vsub.f32 %v5509, %v5645
      %v5838 = vsub.f32 %v5510, %v5646
      %v5839 = vsub.f32 %v5511, %v5647
      %v5840 = vsub.f32 %v5512, %v5648
      %v5841 = vsub.f32 %v5513, %v5649
      %v5842 = vsub.f32 %v5514, %v5650
      %v5843 = vsub.f32 %v5515, %v5651
      %v5844 = vsub.f32 %v5516, %v5652
      %v5845 = vsub.f32 %v5517, %v5653
      %v5846 = vsub.f32 %v5518, %v5654
      %v5847 = vsub.f32 %v5519, %v5655
      %v5848 = vsub.f32 %v5520, %v5656
      %v5849 = vsub.f32 %v5521, %v5657
      %v5850 = vsub.f32 %v5522, %v5658
      %v5851 = vsub.f32 %v5523, %v5659
      %v5852 = vmul.f32 %v5628, %v5628
      %v5853 = vmul.f32 %v5629, %v5629
      %v5854 = vmul.f32 %v5630, %v5630
      %v5855 = vmul.f32 %v5631, %v5631
      %v5856 = vmul.f32 %v5632, %v5632
      %v5857 = vmul.f32 %v5633, %v5633
      %v5858 = vmul.f32 %v5634, %v5634
      %v5859 = vmul.f32 %v5635, %v5635
      %v5860 = vmul.f32 %v5636, %v5636
      %v5861 = vmul.f32 %v5637, %v5637
      %v5862 = vmul.f32 %v5638, %v5638
      %v5863 = vmul.f32 %v5639, %v5639
      %v5864 = vmul.f32 %v5640, %v5640
      %v5865 = vmul.f32 %v5641, %v5641
      %v5866 = vmul.f32 %v5642, %v5642
      %v5867 = vmul.f32 %v5643, %v5643
      %v5868 = vmul.f32 %v5644, %v5644
      %v5869 = vmul.f32 %v5645, %v5645
      %v5870 = vmul.f32 %v5646, %v5646
      %v5871 = vmul.f32 %v5647, %v5647
      %v5872 = vmul.f32 %v5648, %v5648
      %v5873 = vmul.f32 %v5649, %v5649
      %v5874 = vmul.f32 %v5650, %v5650
      %v5875 = vmul.f32 %v5651, %v5651
      %v5876 = vmul.f32 %v5652, %v5652
      %v5877 = vmul.f32 %v5653, %v5653
      %v5878 = vmul.f32 %v5654, %v5654
      %v5879 = vmul.f32 %v5655, %v5655
      %v5880 = vmul.f32 %v5656, %v5656
      %v5881 = vmul.f32 %v5657, %v5657
      %v5882 = vmul.f32 %v5658, %v5658
      %v5883 = vmul.f32 %v5659, %v5659
      %v5884 = vsub.f32 %v5788, %v5852
      %v5885 = vsub.f32 %v5789, %v5853
      %v5886 = vsub.f32 %v5790, %v5854
      %v5887 = vsub.f32 %v5791, %v5855
      %v5888 = vsub.f32 %v5792, %v5856
      %v5889 = vsub.f32 %v5793, %v5857
      %v5890 = vsub.f32 %v5794, %v5858
      %v5891 = vsub.f32 %v5795, %v5859
      %v5892 = vsub.f32 %v5796, %v5860
      %v5893 = vsub.f32 %v5797, %v5861
      %v5894 = vsub.f32 %v5798, %v5862
      %v5895 = vsub.f32 %v5799, %v5863
      %v5896 = vsub.f32 %v5800, %v5864
      %v5897 = vsub.f32 %v5801, %v5865
      %v5898 = vsub.f32 %v5802, %v5866
      %v5899 = vsub.f32 %v5803, %v5867
      %v5900 = vsub.f32 %v5804, %v5868
      %v5901 = vsub.f32 %v5805, %v5869
      %v5902 = vsub.f32 %v5806, %v5870
      %v5903 = vsub.f32 %v5807, %v5871
      %v5904 = vsub.f32 %v5808, %v5872
      %v5905 = vsub.f32 %v5809, %v5873
      %v5906 = vsub.f32 %v5810, %v5874
      %v5907 = vsub.f32 %v5811, %v5875
      %v5908 = vsub.f32 %v5812, %v5876
      %v5909 = vsub.f32 %v5813, %v5877
      %v5910 = vsub.f32 %v5814, %v5878
      %v5911 = vsub.f32 %v5815, %v5879
      %v5912 = vsub.f32 %v5816, %v5880
      %v5913 = vsub.f32 %v5817, %v5881
      %v5914 = vsub.f32 %v5818, %v5882
      %v5915 = vsub.f32 %v5819, %v5883
      %v5916 = vadd.f32 %v5884, 1e-06
      %v5917 = vadd.f32 %v5885, 1e-06
      %v5918 = vadd.f32 %v5886, 1e-06
      %v5919 = vadd.f32 %v5887, 1e-06
      %v5920 = vadd.f32 %v5888, 1e-06
      %v5921 = vadd.f32 %v5889, 1e-06
      %v5922 = vadd.f32 %v5890, 1e-06
      %v5923 = vadd.f32 %v5891, 1e-06
      %v5924 = vadd.f32 %v5892, 1e-06
      %v5925 = vadd.f32 %v5893, 1e-06
      %v5926 = vadd.f32 %v5894, 1e-06
      %v5927 = vadd.f32 %v5895, 1e-06
      %v5928 = vadd.f32 %v5896, 1e-06
      %v5929 = vadd.f32 %v5897, 1e-06
      %v5930 = vadd.f32 %v5898, 1e-06
      %v5931 = vadd.f32 %v5899, 1e-06
      %v5932 = vadd.f32 %v5900, 1e-06
      %v5933 = vadd.f32 %v5901, 1e-06
      %v5934 = vadd.f32 %v5902, 1e-06
      %v5935 = vadd.f32 %v5903, 1e-06
      %v5936 = vadd.f32 %v5904, 1e-06
      %v5937 = vadd.f32 %v5905, 1e-06
      %v5938 = vadd.f32 %v5906, 1e-06
      %v5939 = vadd.f32 %v5907, 1e-06
      %v5940 = vadd.f32 %v5908, 1e-06
      %v5941 = vadd.f32 %v5909, 1e-06
      %v5942 = vadd.f32 %v5910, 1e-06
      %v5943 = vadd.f32 %v5911, 1e-06
      %v5944 = vadd.f32 %v5912, 1e-06
      %v5945 = vadd.f32 %v5913, 1e-06
      %v5946 = vadd.f32 %v5914, 1e-06
      %v5947 = vadd.f32 %v5915, 1e-06
      %v5948 = vrsqrt.pop %v5916
      %v5949 = vmul.f32 %v5948, %v5916
      %v5950 = vmul.f32 %v5949, %v5948
      %v5951 = vmul.f32 0.5, %v5950
      %v5952 = vsub.f32 1.5, %v5951
      %v5953 = vmul.f32 %v5948, %v5952
      %vm5954 = vweird.f32 %v5916
      %vm5955 = vweird.f32 %v5948
      %vm5956 = vmor %vm5954, %vm5955
      %v5957 = vsel %vm5956, %v5948, %v5953
      %v5958 = vrsqrt.pop %v5917
      %v5959 = vmul.f32 %v5958, %v5917
      %v5960 = vmul.f32 %v5959, %v5958
      %v5961 = vmul.f32 0.5, %v5960
      %v5962 = vsub.f32 1.5, %v5961
      %v5963 = vmul.f32 %v5958, %v5962
      %vm5964 = vweird.f32 %v5917
      %vm5965 = vweird.f32 %v5958
      %vm5966 = vmor %vm5964, %vm5965
      %v5967 = vsel %vm5966, %v5958, %v5963
      %v5968 = vrsqrt.pop %v5918
      %v5969 = vmul.f32 %v5968, %v5918
      %v5970 = vmul.f32 %v5969, %v5968
      %v5971 = vmul.f32 0.5, %v5970
      %v5972 = vsub.f32 1.5, %v5971
      %v5973 = vmul.f32 %v5968, %v5972
      %vm5974 = vweird.f32 %v5918
      %vm5975 = vweird.f32 %v5968
      %vm5976 = vmor %vm5974, %vm5975
      %v5977 = vsel %vm5976, %v5968, %v5973
      %v5978 = vrsqrt.pop %v5919
      %v5979 = vmul.f32 %v5978, %v5919
      %v5980 = vmul.f32 %v5979, %v5978
      %v5981 = vmul.f32 0.5, %v5980
      %v5982 = vsub.f32 1.5, %v5981
      %v5983 = vmul.f32 %v5978, %v5982
      %vm5984 = vweird.f32 %v5919
      %vm5985 = vweird.f32 %v5978
      %vm5986 = vmor %vm5984, %vm5985
      %v5987 = vsel %vm5986, %v5978, %v5983
      %v5988 = vrsqrt.pop %v5920
      %v5989 = vmul.f32 %v5988, %v5920
      %v5990 = vmul.f32 %v5989, %v5988
      %v5991 = vmul.f32 0.5, %v5990
      %v5992 = vsub.f32 1.5, %v5991
      %v5993 = vmul.f32 %v5988, %v5992
      %vm5994 = vweird.f32 %v5920
      %vm5995 = vweird.f32 %v5988
      %vm5996 = vmor %vm5994, %vm5995
      %v5997 = vsel %vm5996, %v5988, %v5993
      %v5998 = vrsqrt.pop %v5921
      %v5999 = vmul.f32 %v5998, %v5921
      %v6000 = vmul.f32 %v5999, %v5998
      %v6001 = vmul.f32 0.5, %v6000
      %v6002 = vsub.f32 1.5, %v6001
      %v6003 = vmul.f32 %v5998, %v6002
      %vm6004 = vweird.f32 %v5921
      %vm6005 = vweird.f32 %v5998
      %vm6006 = vmor %vm6004, %vm6005
      %v6007 = vsel %vm6006, %v5998, %v6003
      %v6008 = vrsqrt.pop %v5922
      %v6009 = vmul.f32 %v6008, %v5922
      %v6010 = vmul.f32 %v6009, %v6008
      %v6011 = vmul.f32 0.5, %v6010
      %v6012 = vsub.f32 1.5, %v6011
      %v6013 = vmul.f32 %v6008, %v6012
      %vm6014 = vweird.f32 %v5922
      %vm6015 = vweird.f32 %v6008
      %vm6016 = vmor %vm6014, %vm6015
      %v6017 = vsel %vm6016, %v6008, %v6013
      %v6018 = vrsqrt.pop %v5923
      %v6019 = vmul.f32 %v6018, %v5923
      %v6020 = vmul.f32 %v6019, %v6018
      %v6021 = vmul.f32 0.5, %v6020
      %v6022 = vsub.f32 1.5, %v6021
      %v6023 = vmul.f32 %v6018, %v6022
      %vm6024 = vweird.f32 %v5923
      %vm6025 = vweird.f32 %v6018
      %vm6026 = vmor %vm6024, %vm6025
      %v6027 = vsel %vm6026, %v6018, %v6023
      %v6028 = vrsqrt.pop %v5924
      %v6029 = vmul.f32 %v6028, %v5924
      %v6030 = vmul.f32 %v6029, %v6028
      %v6031 = vmul.f32 0.5, %v6030
      %v6032 = vsub.f32 1.5, %v6031
      %v6033 = vmul.f32 %v6028, %v6032
      %vm6034 = vweird.f32 %v5924
      %vm6035 = vweird.f32 %v6028
      %vm6036 = vmor %vm6034, %vm6035
      %v6037 = vsel %vm6036, %v6028, %v6033
      %v6038 = vrsqrt.pop %v5925
      %v6039 = vmul.f32 %v6038, %v5925
      %v6040 = vmul.f32 %v6039, %v6038
      %v6041 = vmul.f32 0.5, %v6040
      %v6042 = vsub.f32 1.5, %v6041
      %v6043 = vmul.f32 %v6038, %v6042
      %vm6044 = vweird.f32 %v5925
      %vm6045 = vweird.f32 %v6038
      %vm6046 = vmor %vm6044, %vm6045
      %v6047 = vsel %vm6046, %v6038, %v6043
      %v6048 = vrsqrt.pop %v5926
      %v6049 = vmul.f32 %v6048, %v5926
      %v6050 = vmul.f32 %v6049, %v6048
      %v6051 = vmul.f32 0.5, %v6050
      %v6052 = vsub.f32 1.5, %v6051
      %v6053 = vmul.f32 %v6048, %v6052
      %vm6054 = vweird.f32 %v5926
      %vm6055 = vweird.f32 %v6048
      %vm6056 = vmor %vm6054, %vm6055
      %v6057 = vsel %vm6056, %v6048, %v6053
      %v6058 = vrsqrt.pop %v5927
      %v6059 = vmul.f32 %v6058, %v5927
      %v6060 = vmul.f32 %v6059, %v6058
      %v6061 = vmul.f32 0.5, %v6060
      %v6062 = vsub.f32 1.5, %v6061
      %v6063 = vmul.f32 %v6058, %v6062
      %vm6064 = vweird.f32 %v5927
      %vm6065 = vweird.f32 %v6058
      %vm6066 = vmor %vm6064, %vm6065
      %v6067 = vsel %vm6066, %v6058, %v6063
      %v6068 = vrsqrt.pop %v5928
      %v6069 = vmul.f32 %v6068, %v5928
      %v6070 = vmul.f32 %v6069, %v6068
      %v6071 = vmul.f32 0.5, %v6070
      %v6072 = vsub.f32 1.5, %v6071
      %v6073 = vmul.f32 %v6068, %v6072
      %vm6074 = vweird.f32 %v5928
      %vm6075 = vweird.f32 %v6068
      %vm6076 = vmor %vm6074, %vm6075
      %v6077 = vsel %vm6076, %v6068, %v6073
      %v6078 = vrsqrt.pop %v5929
      %v6079 = vmul.f32 %v6078, %v5929
      %v6080 = vmul.f32 %v6079, %v6078
      %v6081 = vmul.f32 0.5, %v6080
      %v6082 = vsub.f32 1.5, %v6081
      %v6083 = vmul.f32 %v6078, %v6082
      %vm6084 = vweird.f32 %v5929
      %vm6085 = vweird.f32 %v6078
      %vm6086 = vmor %vm6084, %vm6085
      %v6087 = vsel %vm6086, %v6078, %v6083
      %v6088 = vrsqrt.pop %v5930
      %v6089 = vmul.f32 %v6088, %v5930
      %v6090 = vmul.f32 %v6089, %v6088
      %v6091 = vmul.f32 0.5, %v6090
      %v6092 = vsub.f32 1.5, %v6091
      %v6093 = vmul.f32 %v6088, %v6092
      %vm6094 = vweird.f32 %v5930
      %vm6095 = vweird.f32 %v6088
      %vm6096 = vmor %vm6094, %vm6095
      %v6097 = vsel %vm6096, %v6088, %v6093
      %v6098 = vrsqrt.pop %v5931
      %v6099 = vmul.f32 %v6098, %v5931
      %v6100 = vmul.f32 %v6099, %v6098
      %v6101 = vmul.f32 0.5, %v6100
      %v6102 = vsub.f32 1.5, %v6101
      %v6103 = vmul.f32 %v6098, %v6102
      %vm6104 = vweird.f32 %v5931
      %vm6105 = vweird.f32 %v6098
      %vm6106 = vmor %vm6104, %vm6105
      %v6107 = vsel %vm6106, %v6098, %v6103
      %v6108 = vrsqrt.pop %v5932
      %v6109 = vmul.f32 %v6108, %v5932
      %v6110 = vmul.f32 %v6109, %v6108
      %v6111 = vmul.f32 0.5, %v6110
      %v6112 = vsub.f32 1.5, %v6111
      %v6113 = vmul.f32 %v6108, %v6112
      %vm6114 = vweird.f32 %v5932
      %vm6115 = vweird.f32 %v6108
      %vm6116 = vmor %vm6114, %vm6115
      %v6117 = vsel %vm6116, %v6108, %v6113
      %v6118 = vrsqrt.pop %v5933
      %v6119 = vmul.f32 %v6118, %v5933
      %v6120 = vmul.f32 %v6119, %v6118
      %v6121 = vmul.f32 0.5, %v6120
      %v6122 = vsub.f32 1.5, %v6121
      %v6123 = vmul.f32 %v6118, %v6122
      %vm6124 = vweird.f32 %v5933
      %vm6125 = vweird.f32 %v6118
      %vm6126 = vmor %vm6124, %vm6125
      %v6127 = vsel %vm6126, %v6118, %v6123
      %v6128 = vrsqrt.pop %v5934
      %v6129 = vmul.f32 %v6128, %v5934
      %v6130 = vmul.f32 %v6129, %v6128
      %v6131 = vmul.f32 0.5, %v6130
      %v6132 = vsub.f32 1.5, %v6131
      %v6133 = vmul.f32 %v6128, %v6132
      %vm6134 = vweird.f32 %v5934
      %vm6135 = vweird.f32 %v6128
      %vm6136 = vmor %vm6134, %vm6135
      %v6137 = vsel %vm6136, %v6128, %v6133
      %v6138 = vrsqrt.pop %v5935
      %v6139 = vmul.f32 %v6138, %v5935
      %v6140 = vmul.f32 %v6139, %v6138
      %v6141 = vmul.f32 0.5, %v6140
      %v6142 = vsub.f32 1.5, %v6141
      %v6143 = vmul.f32 %v6138, %v6142
      %vm6144 = vweird.f32 %v5935
      %vm6145 = vweird.f32 %v6138
      %vm6146 = vmor %vm6144, %vm6145
      %v6147 = vsel %vm6146, %v6138, %v6143
      %v6148 = vrsqrt.pop %v5936
      %v6149 = vmul.f32 %v6148, %v5936
      %v6150 = vmul.f32 %v6149, %v6148
      %v6151 = vmul.f32 0.5, %v6150
      %v6152 = vsub.f32 1.5, %v6151
      %v6153 = vmul.f32 %v6148, %v6152
      %vm6154 = vweird.f32 %v5936
      %vm6155 = vweird.f32 %v6148
      %vm6156 = vmor %vm6154, %vm6155
      %v6157 = vsel %vm6156, %v6148, %v6153
      %v6158 = vrsqrt.pop %v5937
      %v6159 = vmul.f32 %v6158, %v5937
      %v6160 = vmul.f32 %v6159, %v6158
      %v6161 = vmul.f32 0.5, %v6160
      %v6162 = vsub.f32 1.5, %v6161
      %v6163 = vmul.f32 %v6158, %v6162
      %vm6164 = vweird.f32 %v5937
      %vm6165 = vweird.f32 %v6158
      %vm6166 = vmor %vm6164, %vm6165
      %v6167 = vsel %vm6166, %v6158, %v6163
      %v6168 = vrsqrt.pop %v5938
      %v6169 = vmul.f32 %v6168, %v5938
      %v6170 = vmul.f32 %v6169, %v6168
      %v6171 = vmul.f32 0.5, %v6170
      %v6172 = vsub.f32 1.5, %v6171
      %v6173 = vmul.f32 %v6168, %v6172
      %vm6174 = vweird.f32 %v5938
      %vm6175 = vweird.f32 %v6168
      %vm6176 = vmor %vm6174, %vm6175
      %v6177 = vsel %vm6176, %v6168, %v6173
      %v6178 = vrsqrt.pop %v5939
      %v6179 = vmul.f32 %v6178, %v5939
      %v6180 = vmul.f32 %v6179, %v6178
      %v6181 = vmul.f32 0.5, %v6180
      %v6182 = vsub.f32 1.5, %v6181
      %v6183 = vmul.f32 %v6178, %v6182
      %vm6184 = vweird.f32 %v5939
      %vm6185 = vweird.f32 %v6178
      %vm6186 = vmor %vm6184, %vm6185
      %v6187 = vsel %vm6186, %v6178, %v6183
      %v6188 = vrsqrt.pop %v5940
      %v6189 = vmul.f32 %v6188, %v5940
      %v6190 = vmul.f32 %v6189, %v6188
      %v6191 = vmul.f32 0.5, %v6190
      %v6192 = vsub.f32 1.5, %v6191
      %v6193 = vmul.f32 %v6188, %v6192
      %vm6194 = vweird.f32 %v5940
      %vm6195 = vweird.f32 %v6188
      %vm6196 = vmor %vm6194, %vm6195
      %v6197 = vsel %vm6196, %v6188, %v6193
      %v6198 = vrsqrt.pop %v5941
      %v6199 = vmul.f32 %v6198, %v5941
      %v6200 = vmul.f32 %v6199, %v6198
      %v6201 = vmul.f32 0.5, %v6200
      %v6202 = vsub.f32 1.5, %v6201
      %v6203 = vmul.f32 %v6198, %v6202
      %vm6204 = vweird.f32 %v5941
      %vm6205 = vweird.f32 %v6198
      %vm6206 = vmor %vm6204, %vm6205
      %v6207 = vsel %vm6206, %v6198, %v6203
      %v6208 = vrsqrt.pop %v5942
      %v6209 = vmul.f32 %v6208, %v5942
      %v6210 = vmul.f32 %v6209, %v6208
      %v6211 = vmul.f32 0.5, %v6210
      %v6212 = vsub.f32 1.5, %v6211
      %v6213 = vmul.f32 %v6208, %v6212
      %vm6214 = vweird.f32 %v5942
      %vm6215 = vweird.f32 %v6208
      %vm6216 = vmor %vm6214, %vm6215
      %v6217 = vsel %vm6216, %v6208, %v6213
      %v6218 = vrsqrt.pop %v5943
      %v6219 = vmul.f32 %v6218, %v5943
      %v6220 = vmul.f32 %v6219, %v6218
      %v6221 = vmul.f32 0.5, %v6220
      %v6222 = vsub.f32 1.5, %v6221
      %v6223 = vmul.f32 %v6218, %v6222
      %vm6224 = vweird.f32 %v5943
      %vm6225 = vweird.f32 %v6218
      %vm6226 = vmor %vm6224, %vm6225
      %v6227 = vsel %vm6226, %v6218, %v6223
      %v6228 = vrsqrt.pop %v5944
      %v6229 = vmul.f32 %v6228, %v5944
      %v6230 = vmul.f32 %v6229, %v6228
      %v6231 = vmul.f32 0.5, %v6230
      %v6232 = vsub.f32 1.5, %v6231
      %v6233 = vmul.f32 %v6228, %v6232
      %vm6234 = vweird.f32 %v5944
      %vm6235 = vweird.f32 %v6228
      %vm6236 = vmor %vm6234, %vm6235
      %v6237 = vsel %vm6236, %v6228, %v6233
      %v6238 = vrsqrt.pop %v5945
      %v6239 = vmul.f32 %v6238, %v5945
      %v6240 = vmul.f32 %v6239, %v6238
      %v6241 = vmul.f32 0.5, %v6240
      %v6242 = vsub.f32 1.5, %v6241
      %v6243 = vmul.f32 %v6238, %v6242
      %vm6244 = vweird.f32 %v5945
      %vm6245 = vweird.f32 %v6238
      %vm6246 = vmor %vm6244, %vm6245
      %v6247 = vsel %vm6246, %v6238, %v6243
      %v6248 = vrsqrt.pop %v5946
      %v6249 = vmul.f32 %v6248, %v5946
      %v6250 = vmul.f32 %v6249, %v6248
      %v6251 = vmul.f32 0.5, %v6250
      %v6252 = vsub.f32 1.5, %v6251
      %v6253 = vmul.f32 %v6248, %v6252
      %vm6254 = vweird.f32 %v5946
      %vm6255 = vweird.f32 %v6248
      %vm6256 = vmor %vm6254, %vm6255
      %v6257 = vsel %vm6256, %v6248, %v6253
      %v6258 = vrsqrt.pop %v5947
      %v6259 = vmul.f32 %v6258, %v5947
      %v6260 = vmul.f32 %v6259, %v6258
      %v6261 = vmul.f32 0.5, %v6260
      %v6262 = vsub.f32 1.5, %v6261
      %v6263 = vmul.f32 %v6258, %v6262
      %vm6264 = vweird.f32 %v5947
      %vm6265 = vweird.f32 %v6258
      %vm6266 = vmor %vm6264, %vm6265
      %v6267 = vsel %vm6266, %v6258, %v6263
      %v6268 = vmul.f32 %v5820, %v5957
      %v6269 = vmul.f32 %v5821, %v5967
      %v6270 = vmul.f32 %v5822, %v5977
      %v6271 = vmul.f32 %v5823, %v5987
      %v6272 = vmul.f32 %v5824, %v5997
      %v6273 = vmul.f32 %v5825, %v6007
      %v6274 = vmul.f32 %v5826, %v6017
      %v6275 = vmul.f32 %v5827, %v6027
      %v6276 = vmul.f32 %v5828, %v6037
      %v6277 = vmul.f32 %v5829, %v6047
      %v6278 = vmul.f32 %v5830, %v6057
      %v6279 = vmul.f32 %v5831, %v6067
      %v6280 = vmul.f32 %v5832, %v6077
      %v6281 = vmul.f32 %v5833, %v6087
      %v6282 = vmul.f32 %v5834, %v6097
      %v6283 = vmul.f32 %v5835, %v6107
      %v6284 = vmul.f32 %v5836, %v6117
      %v6285 = vmul.f32 %v5837, %v6127
      %v6286 = vmul.f32 %v5838, %v6137
      %v6287 = vmul.f32 %v5839, %v6147
      %v6288 = vmul.f32 %v5840, %v6157
      %v6289 = vmul.f32 %v5841, %v6167
      %v6290 = vmul.f32 %v5842, %v6177
      %v6291 = vmul.f32 %v5843, %v6187
      %v6292 = vmul.f32 %v5844, %v6197
      %v6293 = vmul.f32 %v5845, %v6207
      %v6294 = vmul.f32 %v5846, %v6217
      %v6295 = vmul.f32 %v5847, %v6227
      %v6296 = vmul.f32 %v5848, %v6237
      %v6297 = vmul.f32 %v5849, %v6247
      %v6298 = vmul.f32 %v5850, %v6257
      %v6299 = vmul.f32 %v5851, %v6267
      %v6300 = vpack.c.bf16 %v6269, %v6268
      %v6301 = vpack.c.bf16 %v6271, %v6270
      %v6302 = vpack.c.bf16 %v6273, %v6272
      %v6303 = vpack.c.bf16 %v6275, %v6274
      %v6304 = vpack.c.bf16 %v6277, %v6276
      %v6305 = vpack.c.bf16 %v6279, %v6278
      %v6306 = vpack.c.bf16 %v6281, %v6280
      %v6307 = vpack.c.bf16 %v6283, %v6282
      %v6308 = vpack.c.bf16 %v6285, %v6284
      %v6309 = vpack.c.bf16 %v6287, %v6286
      %v6310 = vpack.c.bf16 %v6289, %v6288
      %v6311 = vpack.c.bf16 %v6291, %v6290
      %v6312 = vpack.c.bf16 %v6293, %v6292
      %v6313 = vpack.c.bf16 %v6295, %v6294
      %v6314 = vpack.c.bf16 %v6297, %v6296
      %v6315 = vpack.c.bf16 %v6299, %v6298
      %v6316 = vld [vmem:[%s3] sm:$0x3]
      %v6317 = vld [vmem:[%s4] sm:$0x1]
      %v6319 = vperm.slane %v6317, 0
      %v6322 = vsel %vm5524, %v6300, 0
      %v6325 = vsel %vm5524, %v6301, 0
      %v6328 = vsel %vm5524, %v6302, 0
      %v6331 = vsel %vm5524, %v6303, 0
      %v6334 = vsel %vm5524, %v6304, 0
      %v6337 = vsel %vm5524, %v6305, 0
      %v6340 = vsel %vm5524, %v6306, 0
      %v6343 = vsel %vm5524, %v6307, 0
      %v6346 = vsel %vm5524, %v6308, 0
      %v6349 = vsel %vm5524, %v6309, 0
      %v6352 = vsel %vm5524, %v6310, 0
      %v6355 = vsel %vm5524, %v6311, 0
      %v6358 = vsel %vm5524, %v6312, 0
      %v6361 = vsel %vm5524, %v6313, 0
      %v6364 = vsel %vm5524, %v6314, 0
      %v6367 = vsel %vm5524, %v6315, 0
      %vm6369 = vcmask 1041408
      %v6371 = vsel %vm6369, %v6316, 0
      %6373 = vmatpush.bf16.msra.mxu0 0
      %6374 = vmatpush.bf16.msra.mxu0 0
      %6375 = vmatpush.bf16.msra.mxu0 0
      %6376 = vmatpush.bf16.msra.mxu0 0
      %6377 = vmatpush.bf16.msra.mxu0 0
      %6378 = vmatpush.bf16.msra.mxu0 0
      %6379 = vmatpush.bf16.msra.mxu0 0
      %6380 = vmatpush.bf16.msra.mxu0 %v6371
      %6381 = vmatmul.bf16.gmra.mxu0 %v6322
      %v6382 = vpop.f32.mrf.mxu0
      %v6383 = vadd.f32 %v6319, %v6382
      %v6384 = vpop.f32.mrf.mxu0
      %v6385 = vadd.f32 %v6319, %v6384
      %6386 = vmatmul.bf16.gmra.mxu0 %v6325
      %v6387 = vpop.f32.mrf.mxu0
      %v6388 = vadd.f32 %v6319, %v6387
      %v6389 = vpop.f32.mrf.mxu0
      %v6390 = vadd.f32 %v6319, %v6389
      %6391 = vmatmul.bf16.gmra.mxu0 %v6328
      %v6392 = vpop.f32.mrf.mxu0
      %v6393 = vadd.f32 %v6319, %v6392
      %v6394 = vpop.f32.mrf.mxu0
      %v6395 = vadd.f32 %v6319, %v6394
      %6396 = vmatmul.bf16.gmra.mxu0 %v6331
      %v6397 = vpop.f32.mrf.mxu0
      %v6398 = vadd.f32 %v6319, %v6397
      %v6399 = vpop.f32.mrf.mxu0
      %v6400 = vadd.f32 %v6319, %v6399
      %6401 = vmatmul.bf16.gmra.mxu0 %v6334
      %v6402 = vpop.f32.mrf.mxu0
      %v6403 = vadd.f32 %v6319, %v6402
      %v6404 = vpop.f32.mrf.mxu0
      %v6405 = vadd.f32 %v6319, %v6404
      %6406 = vmatmul.bf16.gmra.mxu0 %v6337
      %v6407 = vpop.f32.mrf.mxu0
      %v6408 = vadd.f32 %v6319, %v6407
      %v6409 = vpop.f32.mrf.mxu0
      %v6410 = vadd.f32 %v6319, %v6409
      %6411 = vmatmul.bf16.gmra.mxu0 %v6340
      %v6412 = vpop.f32.mrf.mxu0
      %v6413 = vadd.f32 %v6319, %v6412
      %v6414 = vpop.f32.mrf.mxu0
      %v6415 = vadd.f32 %v6319, %v6414
      %6416 = vmatmul.bf16.gmra.mxu0 %v6343
      %v6417 = vpop.f32.mrf.mxu0
      %v6418 = vadd.f32 %v6319, %v6417
      %v6419 = vpop.f32.mrf.mxu0
      %v6420 = vadd.f32 %v6319, %v6419
      %6421 = vmatmul.bf16.gmra.mxu0 %v6346
      %v6422 = vpop.f32.mrf.mxu0
      %v6423 = vadd.f32 %v6319, %v6422
      %v6424 = vpop.f32.mrf.mxu0
      %v6425 = vadd.f32 %v6319, %v6424
      %6426 = vmatmul.bf16.gmra.mxu0 %v6349
      %v6427 = vpop.f32.mrf.mxu0
      %v6428 = vadd.f32 %v6319, %v6427
      %v6429 = vpop.f32.mrf.mxu0
      %v6430 = vadd.f32 %v6319, %v6429
      %6431 = vmatmul.bf16.gmra.mxu0 %v6352
      %v6432 = vpop.f32.mrf.mxu0
      %v6433 = vadd.f32 %v6319, %v6432
      %v6434 = vpop.f32.mrf.mxu0
      %v6435 = vadd.f32 %v6319, %v6434
      %6436 = vmatmul.bf16.gmra.mxu0 %v6355
      %v6437 = vpop.f32.mrf.mxu0
      %v6438 = vadd.f32 %v6319, %v6437
      %v6439 = vpop.f32.mrf.mxu0
      %v6440 = vadd.f32 %v6319, %v6439
      %6441 = vmatmul.bf16.gmra.mxu0 %v6358
      %v6442 = vpop.f32.mrf.mxu0
      %v6443 = vadd.f32 %v6319, %v6442
      %v6444 = vpop.f32.mrf.mxu0
      %v6445 = vadd.f32 %v6319, %v6444
      %6446 = vmatmul.bf16.gmra.mxu0 %v6361
      %v6447 = vpop.f32.mrf.mxu0
      %v6448 = vadd.f32 %v6319, %v6447
      %v6449 = vpop.f32.mrf.mxu0
      %v6450 = vadd.f32 %v6319, %v6449
      %6451 = vmatmul.bf16.gmra.mxu0 %v6364
      %v6452 = vpop.f32.mrf.mxu0
      %v6453 = vadd.f32 %v6319, %v6452
      %v6454 = vpop.f32.mrf.mxu0
      %v6455 = vadd.f32 %v6319, %v6454
      %6456 = vmatmul.bf16.gmra.mxu0 %v6367
      %v6457 = vpop.f32.mrf.mxu0
      %v6458 = vadd.f32 %v6319, %v6457
      %v6459 = vpop.f32.mrf.mxu0
      %v6460 = vadd.f32 %v6319, %v6459
      %6461 = vdwg.mxu0
      %v6462 = vmul.f32 %v6383, 0.5
      %v6463 = vmul.f32 %v6385, 0.5
      %v6464 = vmul.f32 %v6388, 0.5
      %v6465 = vmul.f32 %v6390, 0.5
      %v6466 = vmul.f32 %v6393, 0.5
      %v6467 = vmul.f32 %v6395, 0.5
      %v6468 = vmul.f32 %v6398, 0.5
      %v6469 = vmul.f32 %v6400, 0.5
      %v6470 = vmul.f32 %v6403, 0.5
      %v6471 = vmul.f32 %v6405, 0.5
      %v6472 = vmul.f32 %v6408, 0.5
      %v6473 = vmul.f32 %v6410, 0.5
      %v6474 = vmul.f32 %v6413, 0.5
      %v6475 = vmul.f32 %v6415, 0.5
      %v6476 = vmul.f32 %v6418, 0.5
      %v6477 = vmul.f32 %v6420, 0.5
      %v6478 = vmul.f32 %v6423, 0.5
      %v6479 = vmul.f32 %v6425, 0.5
      %v6480 = vmul.f32 %v6428, 0.5
      %v6481 = vmul.f32 %v6430, 0.5
      %v6482 = vmul.f32 %v6433, 0.5
      %v6483 = vmul.f32 %v6435, 0.5
      %v6484 = vmul.f32 %v6438, 0.5
      %v6485 = vmul.f32 %v6440, 0.5
      %v6486 = vmul.f32 %v6443, 0.5
      %v6487 = vmul.f32 %v6445, 0.5
      %v6488 = vmul.f32 %v6448, 0.5
      %v6489 = vmul.f32 %v6450, 0.5
      %v6490 = vmul.f32 %v6453, 0.5
      %v6491 = vmul.f32 %v6455, 0.5
      %v6492 = vmul.f32 %v6458, 0.5
      %v6493 = vmul.f32 %v6460, 0.5
      %v6494 = vmul.f32 %v6383, 0.70710677
      %v6495 = vmul.f32 %v6385, 0.70710677
      %v6496 = vmul.f32 %v6388, 0.70710677
      %v6497 = vmul.f32 %v6390, 0.70710677
      %v6498 = vmul.f32 %v6393, 0.70710677
      %v6499 = vmul.f32 %v6395, 0.70710677
      %v6500 = vmul.f32 %v6398, 0.70710677
      %v6501 = vmul.f32 %v6400, 0.70710677
      %v6502 = vmul.f32 %v6403, 0.70710677
      %v6503 = vmul.f32 %v6405, 0.70710677
      %v6504 = vmul.f32 %v6408, 0.70710677
      %v6505 = vmul.f32 %v6410, 0.70710677
      %v6506 = vmul.f32 %v6413, 0.70710677
      %v6507 = vmul.f32 %v6415, 0.70710677
      %v6508 = vmul.f32 %v6418, 0.70710677
      %v6509 = vmul.f32 %v6420, 0.70710677
      %v6510 = vmul.f32 %v6423, 0.70710677
      %v6511 = vmul.f32 %v6425, 0.70710677
      %v6512 = vmul.f32 %v6428, 0.70710677
      %v6513 = vmul.f32 %v6430, 0.70710677
      %v6514 = vmul.f32 %v6433, 0.70710677
      %v6515 = vmul.f32 %v6435, 0.70710677
      %v6516 = vmul.f32 %v6438, 0.70710677
      %v6517 = vmul.f32 %v6440, 0.70710677
      %v6518 = vmul.f32 %v6443, 0.70710677
      %v6519 = vmul.f32 %v6445, 0.70710677
      %v6520 = vmul.f32 %v6448, 0.70710677
      %v6521 = vmul.f32 %v6450, 0.70710677
      %v6522 = vmul.f32 %v6453, 0.70710677
      %v6523 = vmul.f32 %v6455, 0.70710677
      %v6524 = vmul.f32 %v6458, 0.70710677
      %v6525 = vmul.f32 %v6460, 0.70710677
      %v6526 = vmul.f32 %v6494, %v6494
      %v6527 = vmin.f32 16.0, %v6526
      %v6528 = vmul.f32 %v6527, 2.1237322e-06
      %v6529 = vadd.f32 %v6528, 0.00028619796
      %v6530 = vmul.f32 %v6527, %v6529
      %v6531 = vadd.f32 %v6530, 0.0036580483
      %v6532 = vmul.f32 %v6527, %v6531
      %v6533 = vadd.f32 %v6532, 0.05243302
      %v6534 = vmul.f32 %v6527, %v6533
      %v6535 = vadd.f32 %v6534, 0.18741608
      %v6536 = vmul.f32 %v6527, %v6535
      %v6537 = vadd.f32 %v6536, 1.1283791
      %v6538 = vmul.f32 %v6494, %v6537
      %v6539 = vmul.f32 %v6527, 3.8918573e-05
      %v6540 = vadd.f32 %v6539, 0.001143296
      %v6541 = vmul.f32 %v6527, %v6540
      %v6542 = vadd.f32 %v6541, 0.014752088
      %v6543 = vmul.f32 %v6527, %v6542
      %v6544 = vadd.f32 %v6543, 0.112945676
      %v6545 = vmul.f32 %v6527, %v6544
      %v6546 = vadd.f32 %v6545, 0.4994258
      %v6547 = vmul.f32 %v6527, %v6546
      %v6548 = vadd.f32 %v6547, 1.0
      %v6549 = vrcp.pop %v6548
      %v6550 = vmul.f32 %v6548, %v6549
      %v6551 = vsub.f32 1.0, %v6550
      %v6552 = vmul.f32 %v6549, %v6551
      %v6553 = vadd.f32 %v6549, %v6552
      %vm6554 = vweird.f32 %v6548
      %vm6555 = vweird.f32 %v6549
      %vm6556 = vmor %vm6554, %vm6555
      %v6557 = vsel %vm6556, %v6549, %v6553
      %v6558 = vand.u32 2147483647, %v6548
      %vm6559 = vcmp.eq.f32.partialorder %v6558, 8.507059e+37
      %v6560 = vand.u32 %v6548, 2147483648
      %v6561 = vor.u32 1.1754944e-38, %v6560
      %v6562 = vsel %vm6559, %v6561, %v6557
      %v6563 = vmul.f32 %v6538, %v6562
      %v6564 = vmin.f32 %v6563, 1.0
      %v6565 = vmax.f32 %v6564, -1.0
      %v6566 = vmul.f32 %v6495, %v6495
      %v6567 = vmin.f32 16.0, %v6566
      %v6568 = vmul.f32 %v6567, 2.1237322e-06
      %v6569 = vadd.f32 %v6568, 0.00028619796
      %v6570 = vmul.f32 %v6567, %v6569
      %v6571 = vadd.f32 %v6570, 0.0036580483
      %v6572 = vmul.f32 %v6567, %v6571
      %v6573 = vadd.f32 %v6572, 0.05243302
      %v6574 = vmul.f32 %v6567, %v6573
      %v6575 = vadd.f32 %v6574, 0.18741608
      %v6576 = vmul.f32 %v6567, %v6575
      %v6577 = vadd.f32 %v6576, 1.1283791
      %v6578 = vmul.f32 %v6495, %v6577
      %v6579 = vmul.f32 %v6567, 3.8918573e-05
      %v6580 = vadd.f32 %v6579, 0.001143296
      %v6581 = vmul.f32 %v6567, %v6580
      %v6582 = vadd.f32 %v6581, 0.014752088
      %v6583 = vmul.f32 %v6567, %v6582
      %v6584 = vadd.f32 %v6583, 0.112945676
      %v6585 = vmul.f32 %v6567, %v6584
      %v6586 = vadd.f32 %v6585, 0.4994258
      %v6587 = vmul.f32 %v6567, %v6586
      %v6588 = vadd.f32 %v6587, 1.0
      %v6589 = vrcp.pop %v6588
      %v6590 = vmul.f32 %v6588, %v6589
      %v6591 = vsub.f32 1.0, %v6590
      %v6592 = vmul.f32 %v6589, %v6591
      %v6593 = vadd.f32 %v6589, %v6592
      %vm6594 = vweird.f32 %v6588
      %vm6595 = vweird.f32 %v6589
      %vm6596 = vmor %vm6594, %vm6595
      %v6597 = vsel %vm6596, %v6589, %v6593
      %v6598 = vand.u32 2147483647, %v6588
      %vm6599 = vcmp.eq.f32.partialorder %v6598, 8.507059e+37
      %v6600 = vand.u32 %v6588, 2147483648
      %v6601 = vor.u32 1.1754944e-38, %v6600
      %v6602 = vsel %vm6599, %v6601, %v6597
      %v6603 = vmul.f32 %v6578, %v6602
      %v6604 = vmin.f32 %v6603, 1.0
      %v6605 = vmax.f32 %v6604, -1.0
      %v6606 = vmul.f32 %v6496, %v6496
      %v6607 = vmin.f32 16.0, %v6606
      %v6608 = vmul.f32 %v6607, 2.1237322e-06
      %v6609 = vadd.f32 %v6608, 0.00028619796
      %v6610 = vmul.f32 %v6607, %v6609
      %v6611 = vadd.f32 %v6610, 0.0036580483
      %v6612 = vmul.f32 %v6607, %v6611
      %v6613 = vadd.f32 %v6612, 0.05243302
      %v6614 = vmul.f32 %v6607, %v6613
      %v6615 = vadd.f32 %v6614, 0.18741608
      %v6616 = vmul.f32 %v6607, %v6615
      %v6617 = vadd.f32 %v6616, 1.1283791
      %v6618 = vmul.f32 %v6496, %v6617
      %v6619 = vmul.f32 %v6607, 3.8918573e-05
      %v6620 = vadd.f32 %v6619, 0.001143296
      %v6621 = vmul.f32 %v6607, %v6620
      %v6622 = vadd.f32 %v6621, 0.014752088
      %v6623 = vmul.f32 %v6607, %v6622
      %v6624 = vadd.f32 %v6623, 0.112945676
      %v6625 = vmul.f32 %v6607, %v6624
      %v6626 = vadd.f32 %v6625, 0.4994258
      %v6627 = vmul.f32 %v6607, %v6626
      %v6628 = vadd.f32 %v6627, 1.0
      %v6629 = vrcp.pop %v6628
      %v6630 = vmul.f32 %v6628, %v6629
      %v6631 = vsub.f32 1.0, %v6630
      %v6632 = vmul.f32 %v6629, %v6631
      %v6633 = vadd.f32 %v6629, %v6632
      %vm6634 = vweird.f32 %v6628
      %vm6635 = vweird.f32 %v6629
      %vm6636 = vmor %vm6634, %vm6635
      %v6637 = vsel %vm6636, %v6629, %v6633
      %v6638 = vand.u32 2147483647, %v6628
      %vm6639 = vcmp.eq.f32.partialorder %v6638, 8.507059e+37
      %v6640 = vand.u32 %v6628, 2147483648
      %v6641 = vor.u32 1.1754944e-38, %v6640
      %v6642 = vsel %vm6639, %v6641, %v6637
      %v6643 = vmul.f32 %v6618, %v6642
      %v6644 = vmin.f32 %v6643, 1.0
      %v6645 = vmax.f32 %v6644, -1.0
      %v6646 = vmul.f32 %v6497, %v6497
      %v6647 = vmin.f32 16.0, %v6646
      %v6648 = vmul.f32 %v6647, 2.1237322e-06
      %v6649 = vadd.f32 %v6648, 0.00028619796
      %v6650 = vmul.f32 %v6647, %v6649
      %v6651 = vadd.f32 %v6650, 0.0036580483
      %v6652 = vmul.f32 %v6647, %v6651
      %v6653 = vadd.f32 %v6652, 0.05243302
      %v6654 = vmul.f32 %v6647, %v6653
      %v6655 = vadd.f32 %v6654, 0.18741608
      %v6656 = vmul.f32 %v6647, %v6655
      %v6657 = vadd.f32 %v6656, 1.1283791
      %v6658 = vmul.f32 %v6497, %v6657
      %v6659 = vmul.f32 %v6647, 3.8918573e-05
      %v6660 = vadd.f32 %v6659, 0.001143296
      %v6661 = vmul.f32 %v6647, %v6660
      %v6662 = vadd.f32 %v6661, 0.014752088
      %v6663 = vmul.f32 %v6647, %v6662
      %v6664 = vadd.f32 %v6663, 0.112945676
      %v6665 = vmul.f32 %v6647, %v6664
      %v6666 = vadd.f32 %v6665, 0.4994258
      %v6667 = vmul.f32 %v6647, %v6666
      %v6668 = vadd.f32 %v6667, 1.0
      %v6669 = vrcp.pop %v6668
      %v6670 = vmul.f32 %v6668, %v6669
      %v6671 = vsub.f32 1.0, %v6670
      %v6672 = vmul.f32 %v6669, %v6671
      %v6673 = vadd.f32 %v6669, %v6672
      %vm6674 = vweird.f32 %v6668
      %vm6675 = vweird.f32 %v6669
      %vm6676 = vmor %vm6674, %vm6675
      %v6677 = vsel %vm6676, %v6669, %v6673
      %v6678 = vand.u32 2147483647, %v6668
      %vm6679 = vcmp.eq.f32.partialorder %v6678, 8.507059e+37
      %v6680 = vand.u32 %v6668, 2147483648
      %v6681 = vor.u32 1.1754944e-38, %v6680
      %v6682 = vsel %vm6679, %v6681, %v6677
      %v6683 = vmul.f32 %v6658, %v6682
      %v6684 = vmin.f32 %v6683, 1.0
      %v6685 = vmax.f32 %v6684, -1.0
      %v6686 = vmul.f32 %v6498, %v6498
      %v6687 = vmin.f32 16.0, %v6686
      %v6688 = vmul.f32 %v6687, 2.1237322e-06
      %v6689 = vadd.f32 %v6688, 0.00028619796
      %v6690 = vmul.f32 %v6687, %v6689
      %v6691 = vadd.f32 %v6690, 0.0036580483
      %v6692 = vmul.f32 %v6687, %v6691
      %v6693 = vadd.f32 %v6692, 0.05243302
      %v6694 = vmul.f32 %v6687, %v6693
      %v6695 = vadd.f32 %v6694, 0.18741608
      %v6696 = vmul.f32 %v6687, %v6695
      %v6697 = vadd.f32 %v6696, 1.1283791
      %v6698 = vmul.f32 %v6498, %v6697
      %v6699 = vmul.f32 %v6687, 3.8918573e-05
      %v6700 = vadd.f32 %v6699, 0.001143296
      %v6701 = vmul.f32 %v6687, %v6700
      %v6702 = vadd.f32 %v6701, 0.014752088
      %v6703 = vmul.f32 %v6687, %v6702
      %v6704 = vadd.f32 %v6703, 0.112945676
      %v6705 = vmul.f32 %v6687, %v6704
      %v6706 = vadd.f32 %v6705, 0.4994258
      %v6707 = vmul.f32 %v6687, %v6706
      %v6708 = vadd.f32 %v6707, 1.0
      %v6709 = vrcp.pop %v6708
      %v6710 = vmul.f32 %v6708, %v6709
      %v6711 = vsub.f32 1.0, %v6710
      %v6712 = vmul.f32 %v6709, %v6711
      %v6713 = vadd.f32 %v6709, %v6712
      %vm6714 = vweird.f32 %v6708
      %vm6715 = vweird.f32 %v6709
      %vm6716 = vmor %vm6714, %vm6715
      %v6717 = vsel %vm6716, %v6709, %v6713
      %v6718 = vand.u32 2147483647, %v6708
      %vm6719 = vcmp.eq.f32.partialorder %v6718, 8.507059e+37
      %v6720 = vand.u32 %v6708, 2147483648
      %v6721 = vor.u32 1.1754944e-38, %v6720
      %v6722 = vsel %vm6719, %v6721, %v6717
      %v6723 = vmul.f32 %v6698, %v6722
      %v6724 = vmin.f32 %v6723, 1.0
      %v6725 = vmax.f32 %v6724, -1.0
      %v6726 = vmul.f32 %v6499, %v6499
      %v6727 = vmin.f32 16.0, %v6726
      %v6728 = vmul.f32 %v6727, 2.1237322e-06
      %v6729 = vadd.f32 %v6728, 0.00028619796
      %v6730 = vmul.f32 %v6727, %v6729
      %v6731 = vadd.f32 %v6730, 0.0036580483
      %v6732 = vmul.f32 %v6727, %v6731
      %v6733 = vadd.f32 %v6732, 0.05243302
      %v6734 = vmul.f32 %v6727, %v6733
      %v6735 = vadd.f32 %v6734, 0.18741608
      %v6736 = vmul.f32 %v6727, %v6735
      %v6737 = vadd.f32 %v6736, 1.1283791
      %v6738 = vmul.f32 %v6499, %v6737
      %v6739 = vmul.f32 %v6727, 3.8918573e-05
      %v6740 = vadd.f32 %v6739, 0.001143296
      %v6741 = vmul.f32 %v6727, %v6740
      %v6742 = vadd.f32 %v6741, 0.014752088
      %v6743 = vmul.f32 %v6727, %v6742
      %v6744 = vadd.f32 %v6743, 0.112945676
      %v6745 = vmul.f32 %v6727, %v6744
      %v6746 = vadd.f32 %v6745, 0.4994258
      %v6747 = vmul.f32 %v6727, %v6746
      %v6748 = vadd.f32 %v6747, 1.0
      %v6749 = vrcp.pop %v6748
      %v6750 = vmul.f32 %v6748, %v6749
      %v6751 = vsub.f32 1.0, %v6750
      %v6752 = vmul.f32 %v6749, %v6751
      %v6753 = vadd.f32 %v6749, %v6752
      %vm6754 = vweird.f32 %v6748
      %vm6755 = vweird.f32 %v6749
      %vm6756 = vmor %vm6754, %vm6755
      %v6757 = vsel %vm6756, %v6749, %v6753
      %v6758 = vand.u32 2147483647, %v6748
      %vm6759 = vcmp.eq.f32.partialorder %v6758, 8.507059e+37
      %v6760 = vand.u32 %v6748, 2147483648
      %v6761 = vor.u32 1.1754944e-38, %v6760
      %v6762 = vsel %vm6759, %v6761, %v6757
      %v6763 = vmul.f32 %v6738, %v6762
      %v6764 = vmin.f32 %v6763, 1.0
      %v6765 = vmax.f32 %v6764, -1.0
      %v6766 = vmul.f32 %v6500, %v6500
      %v6767 = vmin.f32 16.0, %v6766
      %v6768 = vmul.f32 %v6767, 2.1237322e-06
      %v6769 = vadd.f32 %v6768, 0.00028619796
      %v6770 = vmul.f32 %v6767, %v6769
      %v6771 = vadd.f32 %v6770, 0.0036580483
      %v6772 = vmul.f32 %v6767, %v6771
      %v6773 = vadd.f32 %v6772, 0.05243302
      %v6774 = vmul.f32 %v6767, %v6773
      %v6775 = vadd.f32 %v6774, 0.18741608
      %v6776 = vmul.f32 %v6767, %v6775
      %v6777 = vadd.f32 %v6776, 1.1283791
      %v6778 = vmul.f32 %v6500, %v6777
      %v6779 = vmul.f32 %v6767, 3.8918573e-05
      %v6780 = vadd.f32 %v6779, 0.001143296
      %v6781 = vmul.f32 %v6767, %v6780
      %v6782 = vadd.f32 %v6781, 0.014752088
      %v6783 = vmul.f32 %v6767, %v6782
      %v6784 = vadd.f32 %v6783, 0.112945676
      %v6785 = vmul.f32 %v6767, %v6784
      %v6786 = vadd.f32 %v6785, 0.4994258
      %v6787 = vmul.f32 %v6767, %v6786
      %v6788 = vadd.f32 %v6787, 1.0
      %v6789 = vrcp.pop %v6788
      %v6790 = vmul.f32 %v6788, %v6789
      %v6791 = vsub.f32 1.0, %v6790
      %v6792 = vmul.f32 %v6789, %v6791
      %v6793 = vadd.f32 %v6789, %v6792
      %vm6794 = vweird.f32 %v6788
      %vm6795 = vweird.f32 %v6789
      %vm6796 = vmor %vm6794, %vm6795
      %v6797 = vsel %vm6796, %v6789, %v6793
      %v6798 = vand.u32 2147483647, %v6788
      %vm6799 = vcmp.eq.f32.partialorder %v6798, 8.507059e+37
      %v6800 = vand.u32 %v6788, 2147483648
      %v6801 = vor.u32 1.1754944e-38, %v6800
      %v6802 = vsel %vm6799, %v6801, %v6797
      %v6803 = vmul.f32 %v6778, %v6802
      %v6804 = vmin.f32 %v6803, 1.0
      %v6805 = vmax.f32 %v6804, -1.0
      %v6806 = vmul.f32 %v6501, %v6501
      %v6807 = vmin.f32 16.0, %v6806
      %v6808 = vmul.f32 %v6807, 2.1237322e-06
      %v6809 = vadd.f32 %v6808, 0.00028619796
      %v6810 = vmul.f32 %v6807, %v6809
      %v6811 = vadd.f32 %v6810, 0.0036580483
      %v6812 = vmul.f32 %v6807, %v6811
      %v6813 = vadd.f32 %v6812, 0.05243302
      %v6814 = vmul.f32 %v6807, %v6813
      %v6815 = vadd.f32 %v6814, 0.18741608
      %v6816 = vmul.f32 %v6807, %v6815
      %v6817 = vadd.f32 %v6816, 1.1283791
      %v6818 = vmul.f32 %v6501, %v6817
      %v6819 = vmul.f32 %v6807, 3.8918573e-05
      %v6820 = vadd.f32 %v6819, 0.001143296
      %v6821 = vmul.f32 %v6807, %v6820
      %v6822 = vadd.f32 %v6821, 0.014752088
      %v6823 = vmul.f32 %v6807, %v6822
      %v6824 = vadd.f32 %v6823, 0.112945676
      %v6825 = vmul.f32 %v6807, %v6824
      %v6826 = vadd.f32 %v6825, 0.4994258
      %v6827 = vmul.f32 %v6807, %v6826
      %v6828 = vadd.f32 %v6827, 1.0
      %v6829 = vrcp.pop %v6828
      %v6830 = vmul.f32 %v6828, %v6829
      %v6831 = vsub.f32 1.0, %v6830
      %v6832 = vmul.f32 %v6829, %v6831
      %v6833 = vadd.f32 %v6829, %v6832
      %vm6834 = vweird.f32 %v6828
      %vm6835 = vweird.f32 %v6829
      %vm6836 = vmor %vm6834, %vm6835
      %v6837 = vsel %vm6836, %v6829, %v6833
      %v6838 = vand.u32 2147483647, %v6828
      %vm6839 = vcmp.eq.f32.partialorder %v6838, 8.507059e+37
      %v6840 = vand.u32 %v6828, 2147483648
      %v6841 = vor.u32 1.1754944e-38, %v6840
      %v6842 = vsel %vm6839, %v6841, %v6837
      %v6843 = vmul.f32 %v6818, %v6842
      %v6844 = vmin.f32 %v6843, 1.0
      %v6845 = vmax.f32 %v6844, -1.0
      %v6846 = vmul.f32 %v6502, %v6502
      %v6847 = vmin.f32 16.0, %v6846
      %v6848 = vmul.f32 %v6847, 2.1237322e-06
      %v6849 = vadd.f32 %v6848, 0.00028619796
      %v6850 = vmul.f32 %v6847, %v6849
      %v6851 = vadd.f32 %v6850, 0.0036580483
      %v6852 = vmul.f32 %v6847, %v6851
      %v6853 = vadd.f32 %v6852, 0.05243302
      %v6854 = vmul.f32 %v6847, %v6853
      %v6855 = vadd.f32 %v6854, 0.18741608
      %v6856 = vmul.f32 %v6847, %v6855
      %v6857 = vadd.f32 %v6856, 1.1283791
      %v6858 = vmul.f32 %v6502, %v6857
      %v6859 = vmul.f32 %v6847, 3.8918573e-05
      %v6860 = vadd.f32 %v6859, 0.001143296
      %v6861 = vmul.f32 %v6847, %v6860
      %v6862 = vadd.f32 %v6861, 0.014752088
      %v6863 = vmul.f32 %v6847, %v6862
      %v6864 = vadd.f32 %v6863, 0.112945676
      %v6865 = vmul.f32 %v6847, %v6864
      %v6866 = vadd.f32 %v6865, 0.4994258
      %v6867 = vmul.f32 %v6847, %v6866
      %v6868 = vadd.f32 %v6867, 1.0
      %v6869 = vrcp.pop %v6868
      %v6870 = vmul.f32 %v6868, %v6869
      %v6871 = vsub.f32 1.0, %v6870
      %v6872 = vmul.f32 %v6869, %v6871
      %v6873 = vadd.f32 %v6869, %v6872
      %vm6874 = vweird.f32 %v6868
      %vm6875 = vweird.f32 %v6869
      %vm6876 = vmor %vm6874, %vm6875
      %v6877 = vsel %vm6876, %v6869, %v6873
      %v6878 = vand.u32 2147483647, %v6868
      %vm6879 = vcmp.eq.f32.partialorder %v6878, 8.507059e+37
      %v6880 = vand.u32 %v6868, 2147483648
      %v6881 = vor.u32 1.1754944e-38, %v6880
      %v6882 = vsel %vm6879, %v6881, %v6877
      %v6883 = vmul.f32 %v6858, %v6882
      %v6884 = vmin.f32 %v6883, 1.0
      %v6885 = vmax.f32 %v6884, -1.0
      %v6886 = vmul.f32 %v6503, %v6503
      %v6887 = vmin.f32 16.0, %v6886
      %v6888 = vmul.f32 %v6887, 2.1237322e-06
      %v6889 = vadd.f32 %v6888, 0.00028619796
      %v6890 = vmul.f32 %v6887, %v6889
      %v6891 = vadd.f32 %v6890, 0.0036580483
      %v6892 = vmul.f32 %v6887, %v6891
      %v6893 = vadd.f32 %v6892, 0.05243302
      %v6894 = vmul.f32 %v6887, %v6893
      %v6895 = vadd.f32 %v6894, 0.18741608
      %v6896 = vmul.f32 %v6887, %v6895
      %v6897 = vadd.f32 %v6896, 1.1283791
      %v6898 = vmul.f32 %v6503, %v6897
      %v6899 = vmul.f32 %v6887, 3.8918573e-05
      %v6900 = vadd.f32 %v6899, 0.001143296
      %v6901 = vmul.f32 %v6887, %v6900
      %v6902 = vadd.f32 %v6901, 0.014752088
      %v6903 = vmul.f32 %v6887, %v6902
      %v6904 = vadd.f32 %v6903, 0.112945676
      %v6905 = vmul.f32 %v6887, %v6904
      %v6906 = vadd.f32 %v6905, 0.4994258
      %v6907 = vmul.f32 %v6887, %v6906
      %v6908 = vadd.f32 %v6907, 1.0
      %v6909 = vrcp.pop %v6908
      %v6910 = vmul.f32 %v6908, %v6909
      %v6911 = vsub.f32 1.0, %v6910
      %v6912 = vmul.f32 %v6909, %v6911
      %v6913 = vadd.f32 %v6909, %v6912
      %vm6914 = vweird.f32 %v6908
      %vm6915 = vweird.f32 %v6909
      %vm6916 = vmor %vm6914, %vm6915
      %v6917 = vsel %vm6916, %v6909, %v6913
      %v6918 = vand.u32 2147483647, %v6908
      %vm6919 = vcmp.eq.f32.partialorder %v6918, 8.507059e+37
      %v6920 = vand.u32 %v6908, 2147483648
      %v6921 = vor.u32 1.1754944e-38, %v6920
      %v6922 = vsel %vm6919, %v6921, %v6917
      %v6923 = vmul.f32 %v6898, %v6922
      %v6924 = vmin.f32 %v6923, 1.0
      %v6925 = vmax.f32 %v6924, -1.0
      %v6926 = vmul.f32 %v6504, %v6504
      %v6927 = vmin.f32 16.0, %v6926
      %v6928 = vmul.f32 %v6927, 2.1237322e-06
      %v6929 = vadd.f32 %v6928, 0.00028619796
      %v6930 = vmul.f32 %v6927, %v6929
      %v6931 = vadd.f32 %v6930, 0.0036580483
      %v6932 = vmul.f32 %v6927, %v6931
      %v6933 = vadd.f32 %v6932, 0.05243302
      %v6934 = vmul.f32 %v6927, %v6933
      %v6935 = vadd.f32 %v6934, 0.18741608
      %v6936 = vmul.f32 %v6927, %v6935
      %v6937 = vadd.f32 %v6936, 1.1283791
      %v6938 = vmul.f32 %v6504, %v6937
      %v6939 = vmul.f32 %v6927, 3.8918573e-05
      %v6940 = vadd.f32 %v6939, 0.001143296
      %v6941 = vmul.f32 %v6927, %v6940
      %v6942 = vadd.f32 %v6941, 0.014752088
      %v6943 = vmul.f32 %v6927, %v6942
      %v6944 = vadd.f32 %v6943, 0.112945676
      %v6945 = vmul.f32 %v6927, %v6944
      %v6946 = vadd.f32 %v6945, 0.4994258
      %v6947 = vmul.f32 %v6927, %v6946
      %v6948 = vadd.f32 %v6947, 1.0
      %v6949 = vrcp.pop %v6948
      %v6950 = vmul.f32 %v6948, %v6949
      %v6951 = vsub.f32 1.0, %v6950
      %v6952 = vmul.f32 %v6949, %v6951
      %v6953 = vadd.f32 %v6949, %v6952
      %vm6954 = vweird.f32 %v6948
      %vm6955 = vweird.f32 %v6949
      %vm6956 = vmor %vm6954, %vm6955
      %v6957 = vsel %vm6956, %v6949, %v6953
      %v6958 = vand.u32 2147483647, %v6948
      %vm6959 = vcmp.eq.f32.partialorder %v6958, 8.507059e+37
      %v6960 = vand.u32 %v6948, 2147483648
      %v6961 = vor.u32 1.1754944e-38, %v6960
      %v6962 = vsel %vm6959, %v6961, %v6957
      %v6963 = vmul.f32 %v6938, %v6962
      %v6964 = vmin.f32 %v6963, 1.0
      %v6965 = vmax.f32 %v6964, -1.0
      %v6966 = vmul.f32 %v6505, %v6505
      %v6967 = vmin.f32 16.0, %v6966
      %v6968 = vmul.f32 %v6967, 2.1237322e-06
      %v6969 = vadd.f32 %v6968, 0.00028619796
      %v6970 = vmul.f32 %v6967, %v6969
      %v6971 = vadd.f32 %v6970, 0.0036580483
      %v6972 = vmul.f32 %v6967, %v6971
      %v6973 = vadd.f32 %v6972, 0.05243302
      %v6974 = vmul.f32 %v6967, %v6973
      %v6975 = vadd.f32 %v6974, 0.18741608
      %v6976 = vmul.f32 %v6967, %v6975
      %v6977 = vadd.f32 %v6976, 1.1283791
      %v6978 = vmul.f32 %v6505, %v6977
      %v6979 = vmul.f32 %v6967, 3.8918573e-05
      %v6980 = vadd.f32 %v6979, 0.001143296
      %v6981 = vmul.f32 %v6967, %v6980
      %v6982 = vadd.f32 %v6981, 0.014752088
      %v6983 = vmul.f32 %v6967, %v6982
      %v6984 = vadd.f32 %v6983, 0.112945676
      %v6985 = vmul.f32 %v6967, %v6984
      %v6986 = vadd.f32 %v6985, 0.4994258
      %v6987 = vmul.f32 %v6967, %v6986
      %v6988 = vadd.f32 %v6987, 1.0
      %v6989 = vrcp.pop %v6988
      %v6990 = vmul.f32 %v6988, %v6989
      %v6991 = vsub.f32 1.0, %v6990
      %v6992 = vmul.f32 %v6989, %v6991
      %v6993 = vadd.f32 %v6989, %v6992
      %vm6994 = vweird.f32 %v6988
      %vm6995 = vweird.f32 %v6989
      %vm6996 = vmor %vm6994, %vm6995
      %v6997 = vsel %vm6996, %v6989, %v6993
      %v6998 = vand.u32 2147483647, %v6988
      %vm6999 = vcmp.eq.f32.partialorder %v6998, 8.507059e+37
      %v7000 = vand.u32 %v6988, 2147483648
      %v7001 = vor.u32 1.1754944e-38, %v7000
      %v7002 = vsel %vm6999, %v7001, %v6997
      %v7003 = vmul.f32 %v6978, %v7002
      %v7004 = vmin.f32 %v7003, 1.0
      %v7005 = vmax.f32 %v7004, -1.0
      %v7006 = vmul.f32 %v6506, %v6506
      %v7007 = vmin.f32 16.0, %v7006
      %v7008 = vmul.f32 %v7007, 2.1237322e-06
      %v7009 = vadd.f32 %v7008, 0.00028619796
      %v7010 = vmul.f32 %v7007, %v7009
      %v7011 = vadd.f32 %v7010, 0.0036580483
      %v7012 = vmul.f32 %v7007, %v7011
      %v7013 = vadd.f32 %v7012, 0.05243302
      %v7014 = vmul.f32 %v7007, %v7013
      %v7015 = vadd.f32 %v7014, 0.18741608
      %v7016 = vmul.f32 %v7007, %v7015
      %v7017 = vadd.f32 %v7016, 1.1283791
      %v7018 = vmul.f32 %v6506, %v7017
      %v7019 = vmul.f32 %v7007, 3.8918573e-05
      %v7020 = vadd.f32 %v7019, 0.001143296
      %v7021 = vmul.f32 %v7007, %v7020
      %v7022 = vadd.f32 %v7021, 0.014752088
      %v7023 = vmul.f32 %v7007, %v7022
      %v7024 = vadd.f32 %v7023, 0.112945676
      %v7025 = vmul.f32 %v7007, %v7024
      %v7026 = vadd.f32 %v7025, 0.4994258
      %v7027 = vmul.f32 %v7007, %v7026
      %v7028 = vadd.f32 %v7027, 1.0
      %v7029 = vrcp.pop %v7028
      %v7030 = vmul.f32 %v7028, %v7029
      %v7031 = vsub.f32 1.0, %v7030
      %v7032 = vmul.f32 %v7029, %v7031
      %v7033 = vadd.f32 %v7029, %v7032
      %vm7034 = vweird.f32 %v7028
      %vm7035 = vweird.f32 %v7029
      %vm7036 = vmor %vm7034, %vm7035
      %v7037 = vsel %vm7036, %v7029, %v7033
      %v7038 = vand.u32 2147483647, %v7028
      %vm7039 = vcmp.eq.f32.partialorder %v7038, 8.507059e+37
      %v7040 = vand.u32 %v7028, 2147483648
      %v7041 = vor.u32 1.1754944e-38, %v7040
      %v7042 = vsel %vm7039, %v7041, %v7037
      %v7043 = vmul.f32 %v7018, %v7042
      %v7044 = vmin.f32 %v7043, 1.0
      %v7045 = vmax.f32 %v7044, -1.0
      %v7046 = vmul.f32 %v6507, %v6507
      %v7047 = vmin.f32 16.0, %v7046
      %v7048 = vmul.f32 %v7047, 2.1237322e-06
      %v7049 = vadd.f32 %v7048, 0.00028619796
      %v7050 = vmul.f32 %v7047, %v7049
      %v7051 = vadd.f32 %v7050, 0.0036580483
      %v7052 = vmul.f32 %v7047, %v7051
      %v7053 = vadd.f32 %v7052, 0.05243302
      %v7054 = vmul.f32 %v7047, %v7053
      %v7055 = vadd.f32 %v7054, 0.18741608
      %v7056 = vmul.f32 %v7047, %v7055
      %v7057 = vadd.f32 %v7056, 1.1283791
      %v7058 = vmul.f32 %v6507, %v7057
      %v7059 = vmul.f32 %v7047, 3.8918573e-05
      %v7060 = vadd.f32 %v7059, 0.001143296
      %v7061 = vmul.f32 %v7047, %v7060
      %v7062 = vadd.f32 %v7061, 0.014752088
      %v7063 = vmul.f32 %v7047, %v7062
      %v7064 = vadd.f32 %v7063, 0.112945676
      %v7065 = vmul.f32 %v7047, %v7064
      %v7066 = vadd.f32 %v7065, 0.4994258
      %v7067 = vmul.f32 %v7047, %v7066
      %v7068 = vadd.f32 %v7067, 1.0
      %v7069 = vrcp.pop %v7068
      %v7070 = vmul.f32 %v7068, %v7069
      %v7071 = vsub.f32 1.0, %v7070
      %v7072 = vmul.f32 %v7069, %v7071
      %v7073 = vadd.f32 %v7069, %v7072
      %vm7074 = vweird.f32 %v7068
      %vm7075 = vweird.f32 %v7069
      %vm7076 = vmor %vm7074, %vm7075
      %v7077 = vsel %vm7076, %v7069, %v7073
      %v7078 = vand.u32 2147483647, %v7068
      %vm7079 = vcmp.eq.f32.partialorder %v7078, 8.507059e+37
      %v7080 = vand.u32 %v7068, 2147483648
      %v7081 = vor.u32 1.1754944e-38, %v7080
      %v7082 = vsel %vm7079, %v7081, %v7077
      %v7083 = vmul.f32 %v7058, %v7082
      %v7084 = vmin.f32 %v7083, 1.0
      %v7085 = vmax.f32 %v7084, -1.0
      %v7086 = vmul.f32 %v6508, %v6508
      %v7087 = vmin.f32 16.0, %v7086
      %v7088 = vmul.f32 %v7087, 2.1237322e-06
      %v7089 = vadd.f32 %v7088, 0.00028619796
      %v7090 = vmul.f32 %v7087, %v7089
      %v7091 = vadd.f32 %v7090, 0.0036580483
      %v7092 = vmul.f32 %v7087, %v7091
      %v7093 = vadd.f32 %v7092, 0.05243302
      %v7094 = vmul.f32 %v7087, %v7093
      %v7095 = vadd.f32 %v7094, 0.18741608
      %v7096 = vmul.f32 %v7087, %v7095
      %v7097 = vadd.f32 %v7096, 1.1283791
      %v7098 = vmul.f32 %v6508, %v7097
      %v7099 = vmul.f32 %v7087, 3.8918573e-05
      %v7100 = vadd.f32 %v7099, 0.001143296
      %v7101 = vmul.f32 %v7087, %v7100
      %v7102 = vadd.f32 %v7101, 0.014752088
      %v7103 = vmul.f32 %v7087, %v7102
      %v7104 = vadd.f32 %v7103, 0.112945676
      %v7105 = vmul.f32 %v7087, %v7104
      %v7106 = vadd.f32 %v7105, 0.4994258
      %v7107 = vmul.f32 %v7087, %v7106
      %v7108 = vadd.f32 %v7107, 1.0
      %v7109 = vrcp.pop %v7108
      %v7110 = vmul.f32 %v7108, %v7109
      %v7111 = vsub.f32 1.0, %v7110
      %v7112 = vmul.f32 %v7109, %v7111
      %v7113 = vadd.f32 %v7109, %v7112
      %vm7114 = vweird.f32 %v7108
      %vm7115 = vweird.f32 %v7109
      %vm7116 = vmor %vm7114, %vm7115
      %v7117 = vsel %vm7116, %v7109, %v7113
      %v7118 = vand.u32 2147483647, %v7108
      %vm7119 = vcmp.eq.f32.partialorder %v7118, 8.507059e+37
      %v7120 = vand.u32 %v7108, 2147483648
      %v7121 = vor.u32 1.1754944e-38, %v7120
      %v7122 = vsel %vm7119, %v7121, %v7117
      %v7123 = vmul.f32 %v7098, %v7122
      %v7124 = vmin.f32 %v7123, 1.0
      %v7125 = vmax.f32 %v7124, -1.0
      %v7126 = vmul.f32 %v6509, %v6509
      %v7127 = vmin.f32 16.0, %v7126
      %v7128 = vmul.f32 %v7127, 2.1237322e-06
      %v7129 = vadd.f32 %v7128, 0.00028619796
      %v7130 = vmul.f32 %v7127, %v7129
      %v7131 = vadd.f32 %v7130, 0.0036580483
      %v7132 = vmul.f32 %v7127, %v7131
      %v7133 = vadd.f32 %v7132, 0.05243302
      %v7134 = vmul.f32 %v7127, %v7133
      %v7135 = vadd.f32 %v7134, 0.18741608
      %v7136 = vmul.f32 %v7127, %v7135
      %v7137 = vadd.f32 %v7136, 1.1283791
      %v7138 = vmul.f32 %v6509, %v7137
      %v7139 = vmul.f32 %v7127, 3.8918573e-05
      %v7140 = vadd.f32 %v7139, 0.001143296
      %v7141 = vmul.f32 %v7127, %v7140
      %v7142 = vadd.f32 %v7141, 0.014752088
      %v7143 = vmul.f32 %v7127, %v7142
      %v7144 = vadd.f32 %v7143, 0.112945676
      %v7145 = vmul.f32 %v7127, %v7144
      %v7146 = vadd.f32 %v7145, 0.4994258
      %v7147 = vmul.f32 %v7127, %v7146
      %v7148 = vadd.f32 %v7147, 1.0
      %v7149 = vrcp.pop %v7148
      %v7150 = vmul.f32 %v7148, %v7149
      %v7151 = vsub.f32 1.0, %v7150
      %v7152 = vmul.f32 %v7149, %v7151
      %v7153 = vadd.f32 %v7149, %v7152
      %vm7154 = vweird.f32 %v7148
      %vm7155 = vweird.f32 %v7149
      %vm7156 = vmor %vm7154, %vm7155
      %v7157 = vsel %vm7156, %v7149, %v7153
      %v7158 = vand.u32 2147483647, %v7148
      %vm7159 = vcmp.eq.f32.partialorder %v7158, 8.507059e+37
      %v7160 = vand.u32 %v7148, 2147483648
      %v7161 = vor.u32 1.1754944e-38, %v7160
      %v7162 = vsel %vm7159, %v7161, %v7157
      %v7163 = vmul.f32 %v7138, %v7162
      %v7164 = vmin.f32 %v7163, 1.0
      %v7165 = vmax.f32 %v7164, -1.0
      %v7166 = vmul.f32 %v6510, %v6510
      %v7167 = vmin.f32 16.0, %v7166
      %v7168 = vmul.f32 %v7167, 2.1237322e-06
      %v7169 = vadd.f32 %v7168, 0.00028619796
      %v7170 = vmul.f32 %v7167, %v7169
      %v7171 = vadd.f32 %v7170, 0.0036580483
      %v7172 = vmul.f32 %v7167, %v7171
      %v7173 = vadd.f32 %v7172, 0.05243302
      %v7174 = vmul.f32 %v7167, %v7173
      %v7175 = vadd.f32 %v7174, 0.18741608
      %v7176 = vmul.f32 %v7167, %v7175
      %v7177 = vadd.f32 %v7176, 1.1283791
      %v7178 = vmul.f32 %v6510, %v7177
      %v7179 = vmul.f32 %v7167, 3.8918573e-05
      %v7180 = vadd.f32 %v7179, 0.001143296
      %v7181 = vmul.f32 %v7167, %v7180
      %v7182 = vadd.f32 %v7181, 0.014752088
      %v7183 = vmul.f32 %v7167, %v7182
      %v7184 = vadd.f32 %v7183, 0.112945676
      %v7185 = vmul.f32 %v7167, %v7184
      %v7186 = vadd.f32 %v7185, 0.4994258
      %v7187 = vmul.f32 %v7167, %v7186
      %v7188 = vadd.f32 %v7187, 1.0
      %v7189 = vrcp.pop %v7188
      %v7190 = vmul.f32 %v7188, %v7189
      %v7191 = vsub.f32 1.0, %v7190
      %v7192 = vmul.f32 %v7189, %v7191
      %v7193 = vadd.f32 %v7189, %v7192
      %vm7194 = vweird.f32 %v7188
      %vm7195 = vweird.f32 %v7189
      %vm7196 = vmor %vm7194, %vm7195
      %v7197 = vsel %vm7196, %v7189, %v7193
      %v7198 = vand.u32 2147483647, %v7188
      %vm7199 = vcmp.eq.f32.partialorder %v7198, 8.507059e+37
      %v7200 = vand.u32 %v7188, 2147483648
      %v7201 = vor.u32 1.1754944e-38, %v7200
      %v7202 = vsel %vm7199, %v7201, %v7197
      %v7203 = vmul.f32 %v7178, %v7202
      %v7204 = vmin.f32 %v7203, 1.0
      %v7205 = vmax.f32 %v7204, -1.0
      %v7206 = vmul.f32 %v6511, %v6511
      %v7207 = vmin.f32 16.0, %v7206
      %v7208 = vmul.f32 %v7207, 2.1237322e-06
      %v7209 = vadd.f32 %v7208, 0.00028619796
      %v7210 = vmul.f32 %v7207, %v7209
      %v7211 = vadd.f32 %v7210, 0.0036580483
      %v7212 = vmul.f32 %v7207, %v7211
      %v7213 = vadd.f32 %v7212, 0.05243302
      %v7214 = vmul.f32 %v7207, %v7213
      %v7215 = vadd.f32 %v7214, 0.18741608
      %v7216 = vmul.f32 %v7207, %v7215
      %v7217 = vadd.f32 %v7216, 1.1283791
      %v7218 = vmul.f32 %v6511, %v7217
      %v7219 = vmul.f32 %v7207, 3.8918573e-05
      %v7220 = vadd.f32 %v7219, 0.001143296
      %v7221 = vmul.f32 %v7207, %v7220
      %v7222 = vadd.f32 %v7221, 0.014752088
      %v7223 = vmul.f32 %v7207, %v7222
      %v7224 = vadd.f32 %v7223, 0.112945676
      %v7225 = vmul.f32 %v7207, %v7224
      %v7226 = vadd.f32 %v7225, 0.4994258
      %v7227 = vmul.f32 %v7207, %v7226
      %v7228 = vadd.f32 %v7227, 1.0
      %v7229 = vrcp.pop %v7228
      %v7230 = vmul.f32 %v7228, %v7229
      %v7231 = vsub.f32 1.0, %v7230
      %v7232 = vmul.f32 %v7229, %v7231
      %v7233 = vadd.f32 %v7229, %v7232
      %vm7234 = vweird.f32 %v7228
      %vm7235 = vweird.f32 %v7229
      %vm7236 = vmor %vm7234, %vm7235
      %v7237 = vsel %vm7236, %v7229, %v7233
      %v7238 = vand.u32 2147483647, %v7228
      %vm7239 = vcmp.eq.f32.partialorder %v7238, 8.507059e+37
      %v7240 = vand.u32 %v7228, 2147483648
      %v7241 = vor.u32 1.1754944e-38, %v7240
      %v7242 = vsel %vm7239, %v7241, %v7237
      %v7243 = vmul.f32 %v7218, %v7242
      %v7244 = vmin.f32 %v7243, 1.0
      %v7245 = vmax.f32 %v7244, -1.0
      %v7246 = vmul.f32 %v6512, %v6512
      %v7247 = vmin.f32 16.0, %v7246
      %v7248 = vmul.f32 %v7247, 2.1237322e-06
      %v7249 = vadd.f32 %v7248, 0.00028619796
      %v7250 = vmul.f32 %v7247, %v7249
      %v7251 = vadd.f32 %v7250, 0.0036580483
      %v7252 = vmul.f32 %v7247, %v7251
      %v7253 = vadd.f32 %v7252, 0.05243302
      %v7254 = vmul.f32 %v7247, %v7253
      %v7255 = vadd.f32 %v7254, 0.18741608
      %v7256 = vmul.f32 %v7247, %v7255
      %v7257 = vadd.f32 %v7256, 1.1283791
      %v7258 = vmul.f32 %v6512, %v7257
      %v7259 = vmul.f32 %v7247, 3.8918573e-05
      %v7260 = vadd.f32 %v7259, 0.001143296
      %v7261 = vmul.f32 %v7247, %v7260
      %v7262 = vadd.f32 %v7261, 0.014752088
      %v7263 = vmul.f32 %v7247, %v7262
      %v7264 = vadd.f32 %v7263, 0.112945676
      %v7265 = vmul.f32 %v7247, %v7264
      %v7266 = vadd.f32 %v7265, 0.4994258
      %v7267 = vmul.f32 %v7247, %v7266
      %v7268 = vadd.f32 %v7267, 1.0
      %v7269 = vrcp.pop %v7268
      %v7270 = vmul.f32 %v7268, %v7269
      %v7271 = vsub.f32 1.0, %v7270
      %v7272 = vmul.f32 %v7269, %v7271
      %v7273 = vadd.f32 %v7269, %v7272
      %vm7274 = vweird.f32 %v7268
      %vm7275 = vweird.f32 %v7269
      %vm7276 = vmor %vm7274, %vm7275
      %v7277 = vsel %vm7276, %v7269, %v7273
      %v7278 = vand.u32 2147483647, %v7268
      %vm7279 = vcmp.eq.f32.partialorder %v7278, 8.507059e+37
      %v7280 = vand.u32 %v7268, 2147483648
      %v7281 = vor.u32 1.1754944e-38, %v7280
      %v7282 = vsel %vm7279, %v7281, %v7277
      %v7283 = vmul.f32 %v7258, %v7282
      %v7284 = vmin.f32 %v7283, 1.0
      %v7285 = vmax.f32 %v7284, -1.0
      %v7286 = vmul.f32 %v6513, %v6513
      %v7287 = vmin.f32 16.0, %v7286
      %v7288 = vmul.f32 %v7287, 2.1237322e-06
      %v7289 = vadd.f32 %v7288, 0.00028619796
      %v7290 = vmul.f32 %v7287, %v7289
      %v7291 = vadd.f32 %v7290, 0.0036580483
      %v7292 = vmul.f32 %v7287, %v7291
      %v7293 = vadd.f32 %v7292, 0.05243302
      %v7294 = vmul.f32 %v7287, %v7293
      %v7295 = vadd.f32 %v7294, 0.18741608
      %v7296 = vmul.f32 %v7287, %v7295
      %v7297 = vadd.f32 %v7296, 1.1283791
      %v7298 = vmul.f32 %v6513, %v7297
      %v7299 = vmul.f32 %v7287, 3.8918573e-05
      %v7300 = vadd.f32 %v7299, 0.001143296
      %v7301 = vmul.f32 %v7287, %v7300
      %v7302 = vadd.f32 %v7301, 0.014752088
      %v7303 = vmul.f32 %v7287, %v7302
      %v7304 = vadd.f32 %v7303, 0.112945676
      %v7305 = vmul.f32 %v7287, %v7304
      %v7306 = vadd.f32 %v7305, 0.4994258
      %v7307 = vmul.f32 %v7287, %v7306
      %v7308 = vadd.f32 %v7307, 1.0
      %v7309 = vrcp.pop %v7308
      %v7310 = vmul.f32 %v7308, %v7309
      %v7311 = vsub.f32 1.0, %v7310
      %v7312 = vmul.f32 %v7309, %v7311
      %v7313 = vadd.f32 %v7309, %v7312
      %vm7314 = vweird.f32 %v7308
      %vm7315 = vweird.f32 %v7309
      %vm7316 = vmor %vm7314, %vm7315
      %v7317 = vsel %vm7316, %v7309, %v7313
      %v7318 = vand.u32 2147483647, %v7308
      %vm7319 = vcmp.eq.f32.partialorder %v7318, 8.507059e+37
      %v7320 = vand.u32 %v7308, 2147483648
      %v7321 = vor.u32 1.1754944e-38, %v7320
      %v7322 = vsel %vm7319, %v7321, %v7317
      %v7323 = vmul.f32 %v7298, %v7322
      %v7324 = vmin.f32 %v7323, 1.0
      %v7325 = vmax.f32 %v7324, -1.0
      %v7326 = vmul.f32 %v6514, %v6514
      %v7327 = vmin.f32 16.0, %v7326
      %v7328 = vmul.f32 %v7327, 2.1237322e-06
      %v7329 = vadd.f32 %v7328, 0.00028619796
      %v7330 = vmul.f32 %v7327, %v7329
      %v7331 = vadd.f32 %v7330, 0.0036580483
      %v7332 = vmul.f32 %v7327, %v7331
      %v7333 = vadd.f32 %v7332, 0.05243302
      %v7334 = vmul.f32 %v7327, %v7333
      %v7335 = vadd.f32 %v7334, 0.18741608
      %v7336 = vmul.f32 %v7327, %v7335
      %v7337 = vadd.f32 %v7336, 1.1283791
      %v7338 = vmul.f32 %v6514, %v7337
      %v7339 = vmul.f32 %v7327, 3.8918573e-05
      %v7340 = vadd.f32 %v7339, 0.001143296
      %v7341 = vmul.f32 %v7327, %v7340
      %v7342 = vadd.f32 %v7341, 0.014752088
      %v7343 = vmul.f32 %v7327, %v7342
      %v7344 = vadd.f32 %v7343, 0.112945676
      %v7345 = vmul.f32 %v7327, %v7344
      %v7346 = vadd.f32 %v7345, 0.4994258
      %v7347 = vmul.f32 %v7327, %v7346
      %v7348 = vadd.f32 %v7347, 1.0
      %v7349 = vrcp.pop %v7348
      %v7350 = vmul.f32 %v7348, %v7349
      %v7351 = vsub.f32 1.0, %v7350
      %v7352 = vmul.f32 %v7349, %v7351
      %v7353 = vadd.f32 %v7349, %v7352
      %vm7354 = vweird.f32 %v7348
      %vm7355 = vweird.f32 %v7349
      %vm7356 = vmor %vm7354, %vm7355
      %v7357 = vsel %vm7356, %v7349, %v7353
      %v7358 = vand.u32 2147483647, %v7348
      %vm7359 = vcmp.eq.f32.partialorder %v7358, 8.507059e+37
      %v7360 = vand.u32 %v7348, 2147483648
      %v7361 = vor.u32 1.1754944e-38, %v7360
      %v7362 = vsel %vm7359, %v7361, %v7357
      %v7363 = vmul.f32 %v7338, %v7362
      %v7364 = vmin.f32 %v7363, 1.0
      %v7365 = vmax.f32 %v7364, -1.0
      %v7366 = vmul.f32 %v6515, %v6515
      %v7367 = vmin.f32 16.0, %v7366
      %v7368 = vmul.f32 %v7367, 2.1237322e-06
      %v7369 = vadd.f32 %v7368, 0.00028619796
      %v7370 = vmul.f32 %v7367, %v7369
      %v7371 = vadd.f32 %v7370, 0.0036580483
      %v7372 = vmul.f32 %v7367, %v7371
      %v7373 = vadd.f32 %v7372, 0.05243302
      %v7374 = vmul.f32 %v7367, %v7373
      %v7375 = vadd.f32 %v7374, 0.18741608
      %v7376 = vmul.f32 %v7367, %v7375
      %v7377 = vadd.f32 %v7376, 1.1283791
      %v7378 = vmul.f32 %v6515, %v7377
      %v7379 = vmul.f32 %v7367, 3.8918573e-05
      %v7380 = vadd.f32 %v7379, 0.001143296
      %v7381 = vmul.f32 %v7367, %v7380
      %v7382 = vadd.f32 %v7381, 0.014752088
      %v7383 = vmul.f32 %v7367, %v7382
      %v7384 = vadd.f32 %v7383, 0.112945676
      %v7385 = vmul.f32 %v7367, %v7384
      %v7386 = vadd.f32 %v7385, 0.4994258
      %v7387 = vmul.f32 %v7367, %v7386
      %v7388 = vadd.f32 %v7387, 1.0
      %v7389 = vrcp.pop %v7388
      %v7390 = vmul.f32 %v7388, %v7389
      %v7391 = vsub.f32 1.0, %v7390
      %v7392 = vmul.f32 %v7389, %v7391
      %v7393 = vadd.f32 %v7389, %v7392
      %vm7394 = vweird.f32 %v7388
      %vm7395 = vweird.f32 %v7389
      %vm7396 = vmor %vm7394, %vm7395
      %v7397 = vsel %vm7396, %v7389, %v7393
      %v7398 = vand.u32 2147483647, %v7388
      %vm7399 = vcmp.eq.f32.partialorder %v7398, 8.507059e+37
      %v7400 = vand.u32 %v7388, 2147483648
      %v7401 = vor.u32 1.1754944e-38, %v7400
      %v7402 = vsel %vm7399, %v7401, %v7397
      %v7403 = vmul.f32 %v7378, %v7402
      %v7404 = vmin.f32 %v7403, 1.0
      %v7405 = vmax.f32 %v7404, -1.0
      %v7406 = vmul.f32 %v6516, %v6516
      %v7407 = vmin.f32 16.0, %v7406
      %v7408 = vmul.f32 %v7407, 2.1237322e-06
      %v7409 = vadd.f32 %v7408, 0.00028619796
      %v7410 = vmul.f32 %v7407, %v7409
      %v7411 = vadd.f32 %v7410, 0.0036580483
      %v7412 = vmul.f32 %v7407, %v7411
      %v7413 = vadd.f32 %v7412, 0.05243302
      %v7414 = vmul.f32 %v7407, %v7413
      %v7415 = vadd.f32 %v7414, 0.18741608
      %v7416 = vmul.f32 %v7407, %v7415
      %v7417 = vadd.f32 %v7416, 1.1283791
      %v7418 = vmul.f32 %v6516, %v7417
      %v7419 = vmul.f32 %v7407, 3.8918573e-05
      %v7420 = vadd.f32 %v7419, 0.001143296
      %v7421 = vmul.f32 %v7407, %v7420
      %v7422 = vadd.f32 %v7421, 0.014752088
      %v7423 = vmul.f32 %v7407, %v7422
      %v7424 = vadd.f32 %v7423, 0.112945676
      %v7425 = vmul.f32 %v7407, %v7424
      %v7426 = vadd.f32 %v7425, 0.4994258
      %v7427 = vmul.f32 %v7407, %v7426
      %v7428 = vadd.f32 %v7427, 1.0
      %v7429 = vrcp.pop %v7428
      %v7430 = vmul.f32 %v7428, %v7429
      %v7431 = vsub.f32 1.0, %v7430
      %v7432 = vmul.f32 %v7429, %v7431
      %v7433 = vadd.f32 %v7429, %v7432
      %vm7434 = vweird.f32 %v7428
      %vm7435 = vweird.f32 %v7429
      %vm7436 = vmor %vm7434, %vm7435
      %v7437 = vsel %vm7436, %v7429, %v7433
      %v7438 = vand.u32 2147483647, %v7428
      %vm7439 = vcmp.eq.f32.partialorder %v7438, 8.507059e+37
      %v7440 = vand.u32 %v7428, 2147483648
      %v7441 = vor.u32 1.1754944e-38, %v7440
      %v7442 = vsel %vm7439, %v7441, %v7437
      %v7443 = vmul.f32 %v7418, %v7442
      %v7444 = vmin.f32 %v7443, 1.0
      %v7445 = vmax.f32 %v7444, -1.0
      %v7446 = vmul.f32 %v6517, %v6517
      %v7447 = vmin.f32 16.0, %v7446
      %v7448 = vmul.f32 %v7447, 2.1237322e-06
      %v7449 = vadd.f32 %v7448, 0.00028619796
      %v7450 = vmul.f32 %v7447, %v7449
      %v7451 = vadd.f32 %v7450, 0.0036580483
      %v7452 = vmul.f32 %v7447, %v7451
      %v7453 = vadd.f32 %v7452, 0.05243302
      %v7454 = vmul.f32 %v7447, %v7453
      %v7455 = vadd.f32 %v7454, 0.18741608
      %v7456 = vmul.f32 %v7447, %v7455
      %v7457 = vadd.f32 %v7456, 1.1283791
      %v7458 = vmul.f32 %v6517, %v7457
      %v7459 = vmul.f32 %v7447, 3.8918573e-05
      %v7460 = vadd.f32 %v7459, 0.001143296
      %v7461 = vmul.f32 %v7447, %v7460
      %v7462 = vadd.f32 %v7461, 0.014752088
      %v7463 = vmul.f32 %v7447, %v7462
      %v7464 = vadd.f32 %v7463, 0.112945676
      %v7465 = vmul.f32 %v7447, %v7464
      %v7466 = vadd.f32 %v7465, 0.4994258
      %v7467 = vmul.f32 %v7447, %v7466
      %v7468 = vadd.f32 %v7467, 1.0
      %v7469 = vrcp.pop %v7468
      %v7470 = vmul.f32 %v7468, %v7469
      %v7471 = vsub.f32 1.0, %v7470
      %v7472 = vmul.f32 %v7469, %v7471
      %v7473 = vadd.f32 %v7469, %v7472
      %vm7474 = vweird.f32 %v7468
      %vm7475 = vweird.f32 %v7469
      %vm7476 = vmor %vm7474, %vm7475
      %v7477 = vsel %vm7476, %v7469, %v7473
      %v7478 = vand.u32 2147483647, %v7468
      %vm7479 = vcmp.eq.f32.partialorder %v7478, 8.507059e+37
      %v7480 = vand.u32 %v7468, 2147483648
      %v7481 = vor.u32 1.1754944e-38, %v7480
      %v7482 = vsel %vm7479, %v7481, %v7477
      %v7483 = vmul.f32 %v7458, %v7482
      %v7484 = vmin.f32 %v7483, 1.0
      %v7485 = vmax.f32 %v7484, -1.0
      %v7486 = vmul.f32 %v6518, %v6518
      %v7487 = vmin.f32 16.0, %v7486
      %v7488 = vmul.f32 %v7487, 2.1237322e-06
      %v7489 = vadd.f32 %v7488, 0.00028619796
      %v7490 = vmul.f32 %v7487, %v7489
      %v7491 = vadd.f32 %v7490, 0.0036580483
      %v7492 = vmul.f32 %v7487, %v7491
      %v7493 = vadd.f32 %v7492, 0.05243302
      %v7494 = vmul.f32 %v7487, %v7493
      %v7495 = vadd.f32 %v7494, 0.18741608
      %v7496 = vmul.f32 %v7487, %v7495
      %v7497 = vadd.f32 %v7496, 1.1283791
      %v7498 = vmul.f32 %v6518, %v7497
      %v7499 = vmul.f32 %v7487, 3.8918573e-05
      %v7500 = vadd.f32 %v7499, 0.001143296
      %v7501 = vmul.f32 %v7487, %v7500
      %v7502 = vadd.f32 %v7501, 0.014752088
      %v7503 = vmul.f32 %v7487, %v7502
      %v7504 = vadd.f32 %v7503, 0.112945676
      %v7505 = vmul.f32 %v7487, %v7504
      %v7506 = vadd.f32 %v7505, 0.4994258
      %v7507 = vmul.f32 %v7487, %v7506
      %v7508 = vadd.f32 %v7507, 1.0
      %v7509 = vrcp.pop %v7508
      %v7510 = vmul.f32 %v7508, %v7509
      %v7511 = vsub.f32 1.0, %v7510
      %v7512 = vmul.f32 %v7509, %v7511
      %v7513 = vadd.f32 %v7509, %v7512
      %vm7514 = vweird.f32 %v7508
      %vm7515 = vweird.f32 %v7509
      %vm7516 = vmor %vm7514, %vm7515
      %v7517 = vsel %vm7516, %v7509, %v7513
      %v7518 = vand.u32 2147483647, %v7508
      %vm7519 = vcmp.eq.f32.partialorder %v7518, 8.507059e+37
      %v7520 = vand.u32 %v7508, 2147483648
      %v7521 = vor.u32 1.1754944e-38, %v7520
      %v7522 = vsel %vm7519, %v7521, %v7517
      %v7523 = vmul.f32 %v7498, %v7522
      %v7524 = vmin.f32 %v7523, 1.0
      %v7525 = vmax.f32 %v7524, -1.0
      %v7526 = vmul.f32 %v6519, %v6519
      %v7527 = vmin.f32 16.0, %v7526
      %v7528 = vmul.f32 %v7527, 2.1237322e-06
      %v7529 = vadd.f32 %v7528, 0.00028619796
      %v7530 = vmul.f32 %v7527, %v7529
      %v7531 = vadd.f32 %v7530, 0.0036580483
      %v7532 = vmul.f32 %v7527, %v7531
      %v7533 = vadd.f32 %v7532, 0.05243302
      %v7534 = vmul.f32 %v7527, %v7533
      %v7535 = vadd.f32 %v7534, 0.18741608
      %v7536 = vmul.f32 %v7527, %v7535
      %v7537 = vadd.f32 %v7536, 1.1283791
      %v7538 = vmul.f32 %v6519, %v7537
      %v7539 = vmul.f32 %v7527, 3.8918573e-05
      %v7540 = vadd.f32 %v7539, 0.001143296
      %v7541 = vmul.f32 %v7527, %v7540
      %v7542 = vadd.f32 %v7541, 0.014752088
      %v7543 = vmul.f32 %v7527, %v7542
      %v7544 = vadd.f32 %v7543, 0.112945676
      %v7545 = vmul.f32 %v7527, %v7544
      %v7546 = vadd.f32 %v7545, 0.4994258
      %v7547 = vmul.f32 %v7527, %v7546
      %v7548 = vadd.f32 %v7547, 1.0
      %v7549 = vrcp.pop %v7548
      %v7550 = vmul.f32 %v7548, %v7549
      %v7551 = vsub.f32 1.0, %v7550
      %v7552 = vmul.f32 %v7549, %v7551
      %v7553 = vadd.f32 %v7549, %v7552
      %vm7554 = vweird.f32 %v7548
      %vm7555 = vweird.f32 %v7549
      %vm7556 = vmor %vm7554, %vm7555
      %v7557 = vsel %vm7556, %v7549, %v7553
      %v7558 = vand.u32 2147483647, %v7548
      %vm7559 = vcmp.eq.f32.partialorder %v7558, 8.507059e+37
      %v7560 = vand.u32 %v7548, 2147483648
      %v7561 = vor.u32 1.1754944e-38, %v7560
      %v7562 = vsel %vm7559, %v7561, %v7557
      %v7563 = vmul.f32 %v7538, %v7562
      %v7564 = vmin.f32 %v7563, 1.0
      %v7565 = vmax.f32 %v7564, -1.0
      %v7566 = vmul.f32 %v6520, %v6520
      %v7567 = vmin.f32 16.0, %v7566
      %v7568 = vmul.f32 %v7567, 2.1237322e-06
      %v7569 = vadd.f32 %v7568, 0.00028619796
      %v7570 = vmul.f32 %v7567, %v7569
      %v7571 = vadd.f32 %v7570, 0.0036580483
      %v7572 = vmul.f32 %v7567, %v7571
      %v7573 = vadd.f32 %v7572, 0.05243302
      %v7574 = vmul.f32 %v7567, %v7573
      %v7575 = vadd.f32 %v7574, 0.18741608
      %v7576 = vmul.f32 %v7567, %v7575
      %v7577 = vadd.f32 %v7576, 1.1283791
      %v7578 = vmul.f32 %v6520, %v7577
      %v7579 = vmul.f32 %v7567, 3.8918573e-05
      %v7580 = vadd.f32 %v7579, 0.001143296
      %v7581 = vmul.f32 %v7567, %v7580
      %v7582 = vadd.f32 %v7581, 0.014752088
      %v7583 = vmul.f32 %v7567, %v7582
      %v7584 = vadd.f32 %v7583, 0.112945676
      %v7585 = vmul.f32 %v7567, %v7584
      %v7586 = vadd.f32 %v7585, 0.4994258
      %v7587 = vmul.f32 %v7567, %v7586
      %v7588 = vadd.f32 %v7587, 1.0
      %v7589 = vrcp.pop %v7588
      %v7590 = vmul.f32 %v7588, %v7589
      %v7591 = vsub.f32 1.0, %v7590
      %v7592 = vmul.f32 %v7589, %v7591
      %v7593 = vadd.f32 %v7589, %v7592
      %vm7594 = vweird.f32 %v7588
      %vm7595 = vweird.f32 %v7589
      %vm7596 = vmor %vm7594, %vm7595
      %v7597 = vsel %vm7596, %v7589, %v7593
      %v7598 = vand.u32 2147483647, %v7588
      %vm7599 = vcmp.eq.f32.partialorder %v7598, 8.507059e+37
      %v7600 = vand.u32 %v7588, 2147483648
      %v7601 = vor.u32 1.1754944e-38, %v7600
      %v7602 = vsel %vm7599, %v7601, %v7597
      %v7603 = vmul.f32 %v7578, %v7602
      %v7604 = vmin.f32 %v7603, 1.0
      %v7605 = vmax.f32 %v7604, -1.0
      %v7606 = vmul.f32 %v6521, %v6521
      %v7607 = vmin.f32 16.0, %v7606
      %v7608 = vmul.f32 %v7607, 2.1237322e-06
      %v7609 = vadd.f32 %v7608, 0.00028619796
      %v7610 = vmul.f32 %v7607, %v7609
      %v7611 = vadd.f32 %v7610, 0.0036580483
      %v7612 = vmul.f32 %v7607, %v7611
      %v7613 = vadd.f32 %v7612, 0.05243302
      %v7614 = vmul.f32 %v7607, %v7613
      %v7615 = vadd.f32 %v7614, 0.18741608
      %v7616 = vmul.f32 %v7607, %v7615
      %v7617 = vadd.f32 %v7616, 1.1283791
      %v7618 = vmul.f32 %v6521, %v7617
      %v7619 = vmul.f32 %v7607, 3.8918573e-05
      %v7620 = vadd.f32 %v7619, 0.001143296
      %v7621 = vmul.f32 %v7607, %v7620
      %v7622 = vadd.f32 %v7621, 0.014752088
      %v7623 = vmul.f32 %v7607, %v7622
      %v7624 = vadd.f32 %v7623, 0.112945676
      %v7625 = vmul.f32 %v7607, %v7624
      %v7626 = vadd.f32 %v7625, 0.4994258
      %v7627 = vmul.f32 %v7607, %v7626
      %v7628 = vadd.f32 %v7627, 1.0
      %v7629 = vrcp.pop %v7628
      %v7630 = vmul.f32 %v7628, %v7629
      %v7631 = vsub.f32 1.0, %v7630
      %v7632 = vmul.f32 %v7629, %v7631
      %v7633 = vadd.f32 %v7629, %v7632
      %vm7634 = vweird.f32 %v7628
      %vm7635 = vweird.f32 %v7629
      %vm7636 = vmor %vm7634, %vm7635
      %v7637 = vsel %vm7636, %v7629, %v7633
      %v7638 = vand.u32 2147483647, %v7628
      %vm7639 = vcmp.eq.f32.partialorder %v7638, 8.507059e+37
      %v7640 = vand.u32 %v7628, 2147483648
      %v7641 = vor.u32 1.1754944e-38, %v7640
      %v7642 = vsel %vm7639, %v7641, %v7637
      %v7643 = vmul.f32 %v7618, %v7642
      %v7644 = vmin.f32 %v7643, 1.0
      %v7645 = vmax.f32 %v7644, -1.0
      %v7646 = vmul.f32 %v6522, %v6522
      %v7647 = vmin.f32 16.0, %v7646
      %v7648 = vmul.f32 %v7647, 2.1237322e-06
      %v7649 = vadd.f32 %v7648, 0.00028619796
      %v7650 = vmul.f32 %v7647, %v7649
      %v7651 = vadd.f32 %v7650, 0.0036580483
      %v7652 = vmul.f32 %v7647, %v7651
      %v7653 = vadd.f32 %v7652, 0.05243302
      %v7654 = vmul.f32 %v7647, %v7653
      %v7655 = vadd.f32 %v7654, 0.18741608
      %v7656 = vmul.f32 %v7647, %v7655
      %v7657 = vadd.f32 %v7656, 1.1283791
      %v7658 = vmul.f32 %v6522, %v7657
      %v7659 = vmul.f32 %v7647, 3.8918573e-05
      %v7660 = vadd.f32 %v7659, 0.001143296
      %v7661 = vmul.f32 %v7647, %v7660
      %v7662 = vadd.f32 %v7661, 0.014752088
      %v7663 = vmul.f32 %v7647, %v7662
      %v7664 = vadd.f32 %v7663, 0.112945676
      %v7665 = vmul.f32 %v7647, %v7664
      %v7666 = vadd.f32 %v7665, 0.4994258
      %v7667 = vmul.f32 %v7647, %v7666
      %v7668 = vadd.f32 %v7667, 1.0
      %v7669 = vrcp.pop %v7668
      %v7670 = vmul.f32 %v7668, %v7669
      %v7671 = vsub.f32 1.0, %v7670
      %v7672 = vmul.f32 %v7669, %v7671
      %v7673 = vadd.f32 %v7669, %v7672
      %vm7674 = vweird.f32 %v7668
      %vm7675 = vweird.f32 %v7669
      %vm7676 = vmor %vm7674, %vm7675
      %v7677 = vsel %vm7676, %v7669, %v7673
      %v7678 = vand.u32 2147483647, %v7668
      %vm7679 = vcmp.eq.f32.partialorder %v7678, 8.507059e+37
      %v7680 = vand.u32 %v7668, 2147483648
      %v7681 = vor.u32 1.1754944e-38, %v7680
      %v7682 = vsel %vm7679, %v7681, %v7677
      %v7683 = vmul.f32 %v7658, %v7682
      %v7684 = vmin.f32 %v7683, 1.0
      %v7685 = vmax.f32 %v7684, -1.0
      %v7686 = vmul.f32 %v6523, %v6523
      %v7687 = vmin.f32 16.0, %v7686
      %v7688 = vmul.f32 %v7687, 2.1237322e-06
      %v7689 = vadd.f32 %v7688, 0.00028619796
      %v7690 = vmul.f32 %v7687, %v7689
      %v7691 = vadd.f32 %v7690, 0.0036580483
      %v7692 = vmul.f32 %v7687, %v7691
      %v7693 = vadd.f32 %v7692, 0.05243302
      %v7694 = vmul.f32 %v7687, %v7693
      %v7695 = vadd.f32 %v7694, 0.18741608
      %v7696 = vmul.f32 %v7687, %v7695
      %v7697 = vadd.f32 %v7696, 1.1283791
      %v7698 = vmul.f32 %v6523, %v7697
      %v7699 = vmul.f32 %v7687, 3.8918573e-05
      %v7700 = vadd.f32 %v7699, 0.001143296
      %v7701 = vmul.f32 %v7687, %v7700
      %v7702 = vadd.f32 %v7701, 0.014752088
      %v7703 = vmul.f32 %v7687, %v7702
      %v7704 = vadd.f32 %v7703, 0.112945676
      %v7705 = vmul.f32 %v7687, %v7704
      %v7706 = vadd.f32 %v7705, 0.4994258
      %v7707 = vmul.f32 %v7687, %v7706
      %v7708 = vadd.f32 %v7707, 1.0
      %v7709 = vrcp.pop %v7708
      %v7710 = vmul.f32 %v7708, %v7709
      %v7711 = vsub.f32 1.0, %v7710
      %v7712 = vmul.f32 %v7709, %v7711
      %v7713 = vadd.f32 %v7709, %v7712
      %vm7714 = vweird.f32 %v7708
      %vm7715 = vweird.f32 %v7709
      %vm7716 = vmor %vm7714, %vm7715
      %v7717 = vsel %vm7716, %v7709, %v7713
      %v7718 = vand.u32 2147483647, %v7708
      %vm7719 = vcmp.eq.f32.partialorder %v7718, 8.507059e+37
      %v7720 = vand.u32 %v7708, 2147483648
      %v7721 = vor.u32 1.1754944e-38, %v7720
      %v7722 = vsel %vm7719, %v7721, %v7717
      %v7723 = vmul.f32 %v7698, %v7722
      %v7724 = vmin.f32 %v7723, 1.0
      %v7725 = vmax.f32 %v7724, -1.0
      %v7726 = vmul.f32 %v6524, %v6524
      %v7727 = vmin.f32 16.0, %v7726
      %v7728 = vmul.f32 %v7727, 2.1237322e-06
      %v7729 = vadd.f32 %v7728, 0.00028619796
      %v7730 = vmul.f32 %v7727, %v7729
      %v7731 = vadd.f32 %v7730, 0.0036580483
      %v7732 = vmul.f32 %v7727, %v7731
      %v7733 = vadd.f32 %v7732, 0.05243302
      %v7734 = vmul.f32 %v7727, %v7733
      %v7735 = vadd.f32 %v7734, 0.18741608
      %v7736 = vmul.f32 %v7727, %v7735
      %v7737 = vadd.f32 %v7736, 1.1283791
      %v7738 = vmul.f32 %v6524, %v7737
      %v7739 = vmul.f32 %v7727, 3.8918573e-05
      %v7740 = vadd.f32 %v7739, 0.001143296
      %v7741 = vmul.f32 %v7727, %v7740
      %v7742 = vadd.f32 %v7741, 0.014752088
      %v7743 = vmul.f32 %v7727, %v7742
      %v7744 = vadd.f32 %v7743, 0.112945676
      %v7745 = vmul.f32 %v7727, %v7744
      %v7746 = vadd.f32 %v7745, 0.4994258
      %v7747 = vmul.f32 %v7727, %v7746
      %v7748 = vadd.f32 %v7747, 1.0
      %v7749 = vrcp.pop %v7748
      %v7750 = vmul.f32 %v7748, %v7749
      %v7751 = vsub.f32 1.0, %v7750
      %v7752 = vmul.f32 %v7749, %v7751
      %v7753 = vadd.f32 %v7749, %v7752
      %vm7754 = vweird.f32 %v7748
      %vm7755 = vweird.f32 %v7749
      %vm7756 = vmor %vm7754, %vm7755
      %v7757 = vsel %vm7756, %v7749, %v7753
      %v7758 = vand.u32 2147483647, %v7748
      %vm7759 = vcmp.eq.f32.partialorder %v7758, 8.507059e+37
      %v7760 = vand.u32 %v7748, 2147483648
      %v7761 = vor.u32 1.1754944e-38, %v7760
      %v7762 = vsel %vm7759, %v7761, %v7757
      %v7763 = vmul.f32 %v7738, %v7762
      %v7764 = vmin.f32 %v7763, 1.0
      %v7765 = vmax.f32 %v7764, -1.0
      %v7766 = vmul.f32 %v6525, %v6525
      %v7767 = vmin.f32 16.0, %v7766
      %v7768 = vmul.f32 %v7767, 2.1237322e-06
      %v7769 = vadd.f32 %v7768, 0.00028619796
      %v7770 = vmul.f32 %v7767, %v7769
      %v7771 = vadd.f32 %v7770, 0.0036580483
      %v7772 = vmul.f32 %v7767, %v7771
      %v7773 = vadd.f32 %v7772, 0.05243302
      %v7774 = vmul.f32 %v7767, %v7773
      %v7775 = vadd.f32 %v7774, 0.18741608
      %v7776 = vmul.f32 %v7767, %v7775
      %v7777 = vadd.f32 %v7776, 1.1283791
      %v7778 = vmul.f32 %v6525, %v7777
      %v7779 = vmul.f32 %v7767, 3.8918573e-05
      %v7780 = vadd.f32 %v7779, 0.001143296
      %v7781 = vmul.f32 %v7767, %v7780
      %v7782 = vadd.f32 %v7781, 0.014752088
      %v7783 = vmul.f32 %v7767, %v7782
      %v7784 = vadd.f32 %v7783, 0.112945676
      %v7785 = vmul.f32 %v7767, %v7784
      %v7786 = vadd.f32 %v7785, 0.4994258
      %v7787 = vmul.f32 %v7767, %v7786
      %v7788 = vadd.f32 %v7787, 1.0
      %v7789 = vrcp.pop %v7788
      %v7790 = vmul.f32 %v7788, %v7789
      %v7791 = vsub.f32 1.0, %v7790
      %v7792 = vmul.f32 %v7789, %v7791
      %v7793 = vadd.f32 %v7789, %v7792
      %vm7794 = vweird.f32 %v7788
      %vm7795 = vweird.f32 %v7789
      %vm7796 = vmor %vm7794, %vm7795
      %v7797 = vsel %vm7796, %v7789, %v7793
      %v7798 = vand.u32 2147483647, %v7788
      %vm7799 = vcmp.eq.f32.partialorder %v7798, 8.507059e+37
      %v7800 = vand.u32 %v7788, 2147483648
      %v7801 = vor.u32 1.1754944e-38, %v7800
      %v7802 = vsel %vm7799, %v7801, %v7797
      %v7803 = vmul.f32 %v7778, %v7802
      %v7804 = vmin.f32 %v7803, 1.0
      %v7805 = vmax.f32 %v7804, -1.0
      %v7806 = vadd.f32 %v6565, 1.0
      %v7807 = vadd.f32 %v6605, 1.0
      %v7808 = vadd.f32 %v6645, 1.0
      %v7809 = vadd.f32 %v6685, 1.0
      %v7810 = vadd.f32 %v6725, 1.0
      %v7811 = vadd.f32 %v6765, 1.0
      %v7812 = vadd.f32 %v6805, 1.0
      %v7813 = vadd.f32 %v6845, 1.0
      %v7814 = vadd.f32 %v6885, 1.0
      %v7815 = vadd.f32 %v6925, 1.0
      %v7816 = vadd.f32 %v6965, 1.0
      %v7817 = vadd.f32 %v7005, 1.0
      %v7818 = vadd.f32 %v7045, 1.0
      %v7819 = vadd.f32 %v7085, 1.0
      %v7820 = vadd.f32 %v7125, 1.0
      %v7821 = vadd.f32 %v7165, 1.0
      %v7822 = vadd.f32 %v7205, 1.0
      %v7823 = vadd.f32 %v7245, 1.0
      %v7824 = vadd.f32 %v7285, 1.0
      %v7825 = vadd.f32 %v7325, 1.0
      %v7826 = vadd.f32 %v7365, 1.0
      %v7827 = vadd.f32 %v7405, 1.0
      %v7828 = vadd.f32 %v7445, 1.0
      %v7829 = vadd.f32 %v7485, 1.0
      %v7830 = vadd.f32 %v7525, 1.0
      %v7831 = vadd.f32 %v7565, 1.0
      %v7832 = vadd.f32 %v7605, 1.0
      %v7833 = vadd.f32 %v7645, 1.0
      %v7834 = vadd.f32 %v7685, 1.0
      %v7835 = vadd.f32 %v7725, 1.0
      %v7836 = vadd.f32 %v7765, 1.0
      %v7837 = vadd.f32 %v7805, 1.0
      %v7838 = vmul.f32 %v6462, %v7806
      %v7839 = vmul.f32 %v6463, %v7807
      %v7840 = vmul.f32 %v6464, %v7808
      %v7841 = vmul.f32 %v6465, %v7809
      %v7842 = vmul.f32 %v6466, %v7810
      %v7843 = vmul.f32 %v6467, %v7811
      %v7844 = vmul.f32 %v6468, %v7812
      %v7845 = vmul.f32 %v6469, %v7813
      %v7846 = vmul.f32 %v6470, %v7814
      %v7847 = vmul.f32 %v6471, %v7815
      %v7848 = vmul.f32 %v6472, %v7816
      %v7849 = vmul.f32 %v6473, %v7817
      %v7850 = vmul.f32 %v6474, %v7818
      %v7851 = vmul.f32 %v6475, %v7819
      %v7852 = vmul.f32 %v6476, %v7820
      %v7853 = vmul.f32 %v6477, %v7821
      %v7854 = vmul.f32 %v6478, %v7822
      %v7855 = vmul.f32 %v6479, %v7823
      %v7856 = vmul.f32 %v6480, %v7824
      %v7857 = vmul.f32 %v6481, %v7825
      %v7858 = vmul.f32 %v6482, %v7826
      %v7859 = vmul.f32 %v6483, %v7827
      %v7860 = vmul.f32 %v6484, %v7828
      %v7861 = vmul.f32 %v6485, %v7829
      %v7862 = vmul.f32 %v6486, %v7830
      %v7863 = vmul.f32 %v6487, %v7831
      %v7864 = vmul.f32 %v6488, %v7832
      %v7865 = vmul.f32 %v6489, %v7833
      %v7866 = vmul.f32 %v6490, %v7834
      %v7867 = vmul.f32 %v6491, %v7835
      %v7868 = vmul.f32 %v6492, %v7836
      %v7869 = vmul.f32 %v6493, %v7837
      %v7870 = vmul.f32 %v7838, %v7838
      %v7871 = vmul.f32 %v7839, %v7839
      %v7872 = vmul.f32 %v7840, %v7840
      %v7873 = vmul.f32 %v7841, %v7841
      %v7874 = vmul.f32 %v7842, %v7842
      %v7875 = vmul.f32 %v7843, %v7843
      %v7876 = vmul.f32 %v7844, %v7844
      %v7877 = vmul.f32 %v7845, %v7845
      %v7878 = vmul.f32 %v7846, %v7846
      %v7879 = vmul.f32 %v7847, %v7847
      %v7880 = vmul.f32 %v7848, %v7848
      %v7881 = vmul.f32 %v7849, %v7849
      %v7882 = vmul.f32 %v7850, %v7850
      %v7883 = vmul.f32 %v7851, %v7851
      %v7884 = vmul.f32 %v7852, %v7852
      %v7885 = vmul.f32 %v7853, %v7853
      %v7886 = vmul.f32 %v7854, %v7854
      %v7887 = vmul.f32 %v7855, %v7855
      %v7888 = vmul.f32 %v7856, %v7856
      %v7889 = vmul.f32 %v7857, %v7857
      %v7890 = vmul.f32 %v7858, %v7858
      %v7891 = vmul.f32 %v7859, %v7859
      %v7892 = vmul.f32 %v7860, %v7860
      %v7893 = vmul.f32 %v7861, %v7861
      %v7894 = vmul.f32 %v7862, %v7862
      %v7895 = vmul.f32 %v7863, %v7863
      %v7896 = vmul.f32 %v7864, %v7864
      %v7897 = vmul.f32 %v7865, %v7865
      %v7898 = vmul.f32 %v7866, %v7866
      %v7899 = vmul.f32 %v7867, %v7867
      %v7900 = vmul.f32 %v7868, %v7868
      %v7901 = vmul.f32 %v7869, %v7869
      %vm7902 = vcmask 130048
      %v7903 = vsel %vm7902, %v7870, 0.0
      %v7904 = vsel %vm7902, %v7871, 0.0
      %v7905 = vadd.f32 %v7903, %v7904
      %v7906 = vsel %vm7902, %v7872, 0.0
      %v7907 = vadd.f32 %v7905, %v7906
      %v7908 = vsel %vm7902, %v7873, 0.0
      %v7909 = vadd.f32 %v7907, %v7908
      %v7910 = vsel %vm7902, %v7874, 0.0
      %v7911 = vadd.f32 %v7909, %v7910
      %v7912 = vsel %vm7902, %v7875, 0.0
      %v7913 = vadd.f32 %v7911, %v7912
      %v7914 = vsel %vm7902, %v7876, 0.0
      %v7915 = vadd.f32 %v7913, %v7914
      %v7916 = vsel %vm7902, %v7877, 0.0
      %v7917 = vadd.f32 %v7915, %v7916
      %v7918 = vsel %vm7902, %v7878, 0.0
      %v7919 = vadd.f32 %v7917, %v7918
      %v7920 = vsel %vm7902, %v7879, 0.0
      %v7921 = vadd.f32 %v7919, %v7920
      %v7922 = vsel %vm7902, %v7880, 0.0
      %v7923 = vadd.f32 %v7921, %v7922
      %v7924 = vsel %vm7902, %v7881, 0.0
      %v7925 = vadd.f32 %v7923, %v7924
      %v7926 = vsel %vm7902, %v7882, 0.0
      %v7927 = vadd.f32 %v7925, %v7926
      %v7928 = vsel %vm7902, %v7883, 0.0
      %v7929 = vadd.f32 %v7927, %v7928
      %v7930 = vsel %vm7902, %v7884, 0.0
      %v7931 = vadd.f32 %v7929, %v7930
      %v7932 = vsel %vm7902, %v7885, 0.0
      %v7933 = vadd.f32 %v7931, %v7932
      %v7934 = vsel %vm7902, %v7886, 0.0
      %v7935 = vadd.f32 %v7933, %v7934
      %v7936 = vsel %vm7902, %v7887, 0.0
      %v7937 = vadd.f32 %v7935, %v7936
      %v7938 = vsel %vm7902, %v7888, 0.0
      %v7939 = vadd.f32 %v7937, %v7938
      %v7940 = vsel %vm7902, %v7889, 0.0
      %v7941 = vadd.f32 %v7939, %v7940
      %v7942 = vsel %vm7902, %v7890, 0.0
      %v7943 = vadd.f32 %v7941, %v7942
      %v7944 = vsel %vm7902, %v7891, 0.0
      %v7945 = vadd.f32 %v7943, %v7944
      %v7946 = vsel %vm7902, %v7892, 0.0
      %v7947 = vadd.f32 %v7945, %v7946
      %v7948 = vsel %vm7902, %v7893, 0.0
      %v7949 = vadd.f32 %v7947, %v7948
      %v7950 = vsel %vm7902, %v7894, 0.0
      %v7951 = vadd.f32 %v7949, %v7950
      %v7952 = vsel %vm7902, %v7895, 0.0
      %v7953 = vadd.f32 %v7951, %v7952
      %v7954 = vsel %vm7902, %v7896, 0.0
      %v7955 = vadd.f32 %v7953, %v7954
      %v7956 = vsel %vm7902, %v7897, 0.0
      %v7957 = vadd.f32 %v7955, %v7956
      %v7958 = vsel %vm7902, %v7898, 0.0
      %v7959 = vadd.f32 %v7957, %v7958
      %v7960 = vsel %vm7902, %v7899, 0.0
      %v7961 = vadd.f32 %v7959, %v7960
      %v7962 = vsel %vm7902, %v7900, 0.0
      %v7963 = vadd.f32 %v7961, %v7962
      %v7964 = vsel %vm7902, %v7901, 0.0
      %v7965 = vadd.f32 %v7963, %v7964
      %v7966 = vrot.slane %v7965, 4
      %v7967 = vadd.f32 %v7965, %v7966
      %v7968 = vrot.slane %v7967, 2
      %v7969 = vadd.f32 %v7967, %v7968
      %v7970 = vrot.slane %v7969, 1
      %v7971 = vadd.f32 %v7969, %v7970
      %v7972 = vrsqrt.pop %v7971
      %v7973 = vmul.f32 %v7972, %v7971
      %v7974 = vmul.f32 %v7973, %v7972
      %v7975 = vmul.f32 0.5, %v7974
      %v7976 = vsub.f32 1.5, %v7975
      %v7977 = vmul.f32 %v7972, %v7976
      %v7978 = vmul.f32 %v7971, %v7977
      %vm7979 = vcmp.eq.f32.partialorder %v7971, inf
      %v7980 = vsel %vm7979, %v7971, %v7978
      %vm7981 = vcmp.eq.f32.partialorder %v7971, 0.0
      %v7982 = vand.u32 %v7971, 2147483648
      %v7983 = vsel %vm7981, %v7982, %v7980
      %v7984 = vsel %vm7902, %v7983, 0.0
      %7985 = vadd.xlane.f32.xlu0 %v7984
      %v7986 = vpop.xlane.xlu0 %7985
      %v7987 = vrcp.pop 16.0
      %v7988 = vmul.f32 16.0, %v7987
      %v7989 = vsub.f32 1.0, %v7988
      %v7990 = vmul.f32 %v7987, %v7989
      %v7991 = vadd.f32 %v7987, %v7990
      %vm7992 = vweird.f32 %v7987
      %v7993 = vsel %vm7992, %v7987, %v7991
      %v7994 = vmul.f32 %v7986, %v7993
      %v7995 = vadd.f32 %v7994, 1e-06
      %v7996 = vrcp.pop %v7995
      %v7997 = vld [vmem:[%s5] sm:$0x1]
      %v7998 = vmul.f32 %v7983, %v7996
      %v7999 = vmul.f32 %v7997, %v7998
      %v8000 = vadd.f32 %v7999, 1.0
      %v8002 = vperm.slane %v8000, 0
      %v8004 = vmul.f32 %v7838, %v8002
      %v8005 = vmul.f32 %v7839, %v8002
      %v8006 = vmul.f32 %v7840, %v8002
      %v8007 = vmul.f32 %v7841, %v8002
      %v8008 = vmul.f32 %v7842, %v8002
      %v8009 = vmul.f32 %v7843, %v8002
      %v8010 = vmul.f32 %v7844, %v8002
      %v8011 = vmul.f32 %v7845, %v8002
      %v8012 = vmul.f32 %v7846, %v8002
      %v8013 = vmul.f32 %v7847, %v8002
      %v8014 = vmul.f32 %v7848, %v8002
      %v8015 = vmul.f32 %v7849, %v8002
      %v8016 = vmul.f32 %v7850, %v8002
      %v8017 = vmul.f32 %v7851, %v8002
      %v8018 = vmul.f32 %v7852, %v8002
      %v8019 = vmul.f32 %v7853, %v8002
      %v8020 = vmul.f32 %v7854, %v8002
      %v8021 = vmul.f32 %v7855, %v8002
      %v8022 = vmul.f32 %v7856, %v8002
      %v8023 = vmul.f32 %v7857, %v8002
      %v8024 = vmul.f32 %v7858, %v8002
      %v8025 = vmul.f32 %v7859, %v8002
      %v8026 = vmul.f32 %v7860, %v8002
      %v8027 = vmul.f32 %v7861, %v8002
      %v8028 = vmul.f32 %v7862, %v8002
      %v8029 = vmul.f32 %v7863, %v8002
      %v8030 = vmul.f32 %v7864, %v8002
      %v8031 = vmul.f32 %v7865, %v8002
      %v8032 = vmul.f32 %v7866, %v8002
      %v8033 = vmul.f32 %v7867, %v8002
      %v8034 = vmul.f32 %v7868, %v8002
      %v8035 = vmul.f32 %v7869, %v8002
      %v8036 = vpack.c.bf16 %v8005, %v8004
      %v8037 = vpack.c.bf16 %v8007, %v8006
      %v8038 = vpack.c.bf16 %v8009, %v8008
      %v8039 = vpack.c.bf16 %v8011, %v8010
      %v8040 = vpack.c.bf16 %v8013, %v8012
      %v8041 = vpack.c.bf16 %v8015, %v8014
      %v8042 = vpack.c.bf16 %v8017, %v8016
      %v8043 = vpack.c.bf16 %v8019, %v8018
      %v8044 = vpack.c.bf16 %v8021, %v8020
      %v8045 = vpack.c.bf16 %v8023, %v8022
      %v8046 = vpack.c.bf16 %v8025, %v8024
      %v8047 = vpack.c.bf16 %v8027, %v8026
      %v8048 = vpack.c.bf16 %v8029, %v8028
      %v8049 = vpack.c.bf16 %v8031, %v8030
      %v8050 = vpack.c.bf16 %v8033, %v8032
      %v8051 = vpack.c.bf16 %v8035, %v8034
      %v8052 = vld [vmem:[%s6] sm:$0xf]
      %v8053 = vld [vmem:[%s6 + $0x4] sm:$0xf]
      %v8054 = vld [vmem:[%s7] sm:$0x1]
      %v8056 = vperm.slane %v8054, 0
      %v8060 = vunpack.c.l.b16 %v8052
      %v8061 = vunpack.c.l.b16 %v8053
      %v8062 = vpack.c.b16 %v8061, %v8060
      %v8065 = vsel %vm7902, %v8036, 0
      %v8068 = vsel %vm7902, %v8037, 0
      %v8071 = vsel %vm7902, %v8038, 0
      %v8074 = vsel %vm7902, %v8039, 0
      %v8077 = vsel %vm7902, %v8040, 0
      %v8080 = vsel %vm7902, %v8041, 0
      %v8083 = vsel %vm7902, %v8042, 0
      %v8086 = vsel %vm7902, %v8043, 0
      %v8089 = vsel %vm7902, %v8044, 0
      %v8092 = vsel %vm7902, %v8045, 0
      %v8095 = vsel %vm7902, %v8046, 0
      %v8098 = vsel %vm7902, %v8047, 0
      %v8101 = vsel %vm7902, %v8048, 0
      %v8104 = vsel %vm7902, %v8049, 0
      %v8107 = vsel %vm7902, %v8050, 0
      %v8110 = vsel %vm7902, %v8051, 0
      %8112 = vmatpush.bf16.msra.mxu0 0
      %8113 = vmatpush.bf16.msra.mxu0 0
      %8114 = vmatpush.bf16.msra.mxu0 0
      %8115 = vmatpush.bf16.msra.mxu0 0
      %8116 = vmatpush.bf16.msra.mxu0 0
      %8117 = vmatpush.bf16.msra.mxu0 0
      %8118 = vmatpush.bf16.msra.mxu0 0
      %8119 = vmatpush.bf16.msra.mxu0 %v8062
      %8120 = vmatmul.bf16.gmra.mxu0 %v8065
      %v8121 = vpop.f32.mrf.mxu0
      %v8122 = vadd.f32 %v8056, %v8121
      %v8123 = vpop.f32.mrf.mxu0
      %v8124 = vadd.f32 %v8056, %v8123
      %8125 = vmatmul.bf16.gmra.mxu0 %v8068
      %v8126 = vpop.f32.mrf.mxu0
      %v8127 = vadd.f32 %v8056, %v8126
      %v8128 = vpop.f32.mrf.mxu0
      %v8129 = vadd.f32 %v8056, %v8128
      %8130 = vmatmul.bf16.gmra.mxu0 %v8071
      %v8131 = vpop.f32.mrf.mxu0
      %v8132 = vadd.f32 %v8056, %v8131
      %v8133 = vpop.f32.mrf.mxu0
      %v8134 = vadd.f32 %v8056, %v8133
      %8135 = vmatmul.bf16.gmra.mxu0 %v8074
      %v8136 = vpop.f32.mrf.mxu0
      %v8137 = vadd.f32 %v8056, %v8136
      %v8138 = vpop.f32.mrf.mxu0
      %v8139 = vadd.f32 %v8056, %v8138
      %8140 = vmatmul.bf16.gmra.mxu0 %v8077
      %v8141 = vpop.f32.mrf.mxu0
      %v8142 = vadd.f32 %v8056, %v8141
      %v8143 = vpop.f32.mrf.mxu0
      %v8144 = vadd.f32 %v8056, %v8143
      %8145 = vmatmul.bf16.gmra.mxu0 %v8080
      %v8146 = vpop.f32.mrf.mxu0
      %v8147 = vadd.f32 %v8056, %v8146
      %v8148 = vpop.f32.mrf.mxu0
      %v8149 = vadd.f32 %v8056, %v8148
      %8150 = vmatmul.bf16.gmra.mxu0 %v8083
      %v8151 = vpop.f32.mrf.mxu0
      %v8152 = vadd.f32 %v8056, %v8151
      %v8153 = vpop.f32.mrf.mxu0
      %v8154 = vadd.f32 %v8056, %v8153
      %8155 = vmatmul.bf16.gmra.mxu0 %v8086
      %v8156 = vpop.f32.mrf.mxu0
      %v8157 = vadd.f32 %v8056, %v8156
      %v8158 = vpop.f32.mrf.mxu0
      %v8159 = vadd.f32 %v8056, %v8158
      %8160 = vmatmul.bf16.gmra.mxu0 %v8089
      %v8161 = vpop.f32.mrf.mxu0
      %v8162 = vadd.f32 %v8056, %v8161
      %v8163 = vpop.f32.mrf.mxu0
      %v8164 = vadd.f32 %v8056, %v8163
      %8165 = vmatmul.bf16.gmra.mxu0 %v8092
      %v8166 = vpop.f32.mrf.mxu0
      %v8167 = vadd.f32 %v8056, %v8166
      %v8168 = vpop.f32.mrf.mxu0
      %v8169 = vadd.f32 %v8056, %v8168
      %8170 = vmatmul.bf16.gmra.mxu0 %v8095
      %v8171 = vpop.f32.mrf.mxu0
      %v8172 = vadd.f32 %v8056, %v8171
      %v8173 = vpop.f32.mrf.mxu0
      %v8174 = vadd.f32 %v8056, %v8173
      %8175 = vmatmul.bf16.gmra.mxu0 %v8098
      %v8176 = vpop.f32.mrf.mxu0
      %v8177 = vadd.f32 %v8056, %v8176
      %v8178 = vpop.f32.mrf.mxu0
      %v8179 = vadd.f32 %v8056, %v8178
      %8180 = vmatmul.bf16.gmra.mxu0 %v8101
      %v8181 = vpop.f32.mrf.mxu0
      %v8182 = vadd.f32 %v8056, %v8181
      %v8183 = vpop.f32.mrf.mxu0
      %v8184 = vadd.f32 %v8056, %v8183
      %8185 = vmatmul.bf16.gmra.mxu0 %v8104
      %v8186 = vpop.f32.mrf.mxu0
      %v8187 = vadd.f32 %v8056, %v8186
      %v8188 = vpop.f32.mrf.mxu0
      %v8189 = vadd.f32 %v8056, %v8188
      %8190 = vmatmul.bf16.gmra.mxu0 %v8107
      %v8191 = vpop.f32.mrf.mxu0
      %v8192 = vadd.f32 %v8056, %v8191
      %v8193 = vpop.f32.mrf.mxu0
      %v8194 = vadd.f32 %v8056, %v8193
      %8195 = vmatmul.bf16.gmra.mxu0 %v8110
      %v8196 = vpop.f32.mrf.mxu0
      %v8197 = vadd.f32 %v8056, %v8196
      %v8198 = vpop.f32.mrf.mxu0
      %v8199 = vadd.f32 %v8056, %v8198
      %8200 = vdwg.mxu0
      %v8233 = vrot.slane %v8122, 6
      %v8234 = vrot.slane %v8124, 6
      %v8235 = vsel %vm6369, %v8233, %v8234
      %v8236 = vrot.slane %v8127, 6
      %v8237 = vrot.slane %v8129, 6
      %v8238 = vsel %vm6369, %v8236, %v8237
      %v8239 = vrot.slane %v8132, 6
      %v8240 = vrot.slane %v8134, 6
      %v8241 = vsel %vm6369, %v8239, %v8240
      %v8242 = vrot.slane %v8137, 6
      %v8243 = vrot.slane %v8139, 6
      %v8244 = vsel %vm6369, %v8242, %v8243
      %v8245 = vrot.slane %v8142, 6
      %v8246 = vrot.slane %v8144, 6
      %v8247 = vsel %vm6369, %v8245, %v8246
      %v8248 = vrot.slane %v8147, 6
      %v8249 = vrot.slane %v8149, 6
      %v8250 = vsel %vm6369, %v8248, %v8249
      %v8251 = vrot.slane %v8152, 6
      %v8252 = vrot.slane %v8154, 6
      %v8253 = vsel %vm6369, %v8251, %v8252
      %v8254 = vrot.slane %v8157, 6
      %v8255 = vrot.slane %v8159, 6
      %v8256 = vsel %vm6369, %v8254, %v8255
      %v8257 = vrot.slane %v8162, 6
      %v8258 = vrot.slane %v8164, 6
      %v8259 = vsel %vm6369, %v8257, %v8258
      %v8260 = vrot.slane %v8167, 6
      %v8261 = vrot.slane %v8169, 6
      %v8262 = vsel %vm6369, %v8260, %v8261
      %v8263 = vrot.slane %v8172, 6
      %v8264 = vrot.slane %v8174, 6
      %v8265 = vsel %vm6369, %v8263, %v8264
      %v8266 = vrot.slane %v8177, 6
      %v8267 = vrot.slane %v8179, 6
      %v8268 = vsel %vm6369, %v8266, %v8267
      %v8269 = vrot.slane %v8182, 6
      %v8270 = vrot.slane %v8184, 6
      %v8271 = vsel %vm6369, %v8269, %v8270
      %v8272 = vrot.slane %v8187, 6
      %v8273 = vrot.slane %v8189, 6
      %v8274 = vsel %vm6369, %v8272, %v8273
      %v8275 = vrot.slane %v8192, 6
      %v8276 = vrot.slane %v8194, 6
      %v8277 = vsel %vm6369, %v8275, %v8276
      %v8278 = vrot.slane %v8197, 6
      %v8279 = vrot.slane %v8199, 6
      %v8280 = vsel %vm6369, %v8278, %v8279
      %v8329 = vadd.f32 %v313, %v8233
      %v8330 = vadd.f32 %v314, %v8235
      %v8331 = vadd.f32 %v315, %v8234
      %v8332 = vadd.f32 %v316, %v8236
      %v8333 = vadd.f32 %v317, %v8238
      %v8334 = vadd.f32 %v318, %v8237
      %v8335 = vadd.f32 %v319, %v8239
      %v8336 = vadd.f32 %v320, %v8241
      %v8337 = vadd.f32 %v321, %v8240
      %v8338 = vadd.f32 %v322, %v8242
      %v8339 = vadd.f32 %v323, %v8244
      %v8340 = vadd.f32 %v324, %v8243
      %v8341 = vadd.f32 %v325, %v8245
      %v8342 = vadd.f32 %v326, %v8247
      %v8343 = vadd.f32 %v327, %v8246
      %v8344 = vadd.f32 %v328, %v8248
      %v8345 = vadd.f32 %v329, %v8250
      %v8346 = vadd.f32 %v330, %v8249
      %v8347 = vadd.f32 %v331, %v8251
      %v8348 = vadd.f32 %v332, %v8253
      %v8349 = vadd.f32 %v333, %v8252
      %v8350 = vadd.f32 %v334, %v8254
      %v8351 = vadd.f32 %v335, %v8256
      %v8352 = vadd.f32 %v336, %v8255
      %v8353 = vadd.f32 %v337, %v8257
      %v8354 = vadd.f32 %v338, %v8259
      %v8355 = vadd.f32 %v339, %v8258
      %v8356 = vadd.f32 %v340, %v8260
      %v8357 = vadd.f32 %v341, %v8262
      %v8358 = vadd.f32 %v342, %v8261
      %v8359 = vadd.f32 %v343, %v8263
      %v8360 = vadd.f32 %v344, %v8265
      %v8361 = vadd.f32 %v345, %v8264
      %v8362 = vadd.f32 %v346, %v8266
      %v8363 = vadd.f32 %v347, %v8268
      %v8364 = vadd.f32 %v348, %v8267
      %v8365 = vadd.f32 %v349, %v8269
      %v8366 = vadd.f32 %v350, %v8271
      %v8367 = vadd.f32 %v351, %v8270
      %v8368 = vadd.f32 %v352, %v8272
      %v8369 = vadd.f32 %v353, %v8274
      %v8370 = vadd.f32 %v354, %v8273
      %v8371 = vadd.f32 %v355, %v8275
      %v8372 = vadd.f32 %v356, %v8277
      %v8373 = vadd.f32 %v357, %v8276
      %v8374 = vadd.f32 %v358, %v8278
      %v8375 = vadd.f32 %v359, %v8280
      %v8376 = vadd.f32 %v360, %v8279
      %vm8377 = vcmask 31746
      %8378 = vst.msk [vmem:[%s305 - $0x2] sm:$0xfc] %vm8377, %v8329
      %8379 = vst.msk [vmem:[%s305 + $0x6] sm:$0xff] %vm5524, %v8330
      %vm8380 = vcmask 25600
      %8381 = vst.msk [vmem:[%s305 + $0xe] sm:$0x3] %vm8380, %v8331
      %8382 = vst.msk [vmem:[%s305 + $0xe] sm:$0xfc] %vm8377, %v8332
      %8383 = vst.msk [vmem:[%s305 + $0x16] sm:$0xff] %vm5524, %v8333
      %8384 = vst.msk [vmem:[%s305 + $0x1e] sm:$0x3] %vm8380, %v8334
      %8385 = vst.msk [vmem:[%s305 + $0x1e] sm:$0xfc] %vm8377, %v8335
      %8386 = vst.msk [vmem:[%s305 + $0x26] sm:$0xff] %vm5524, %v8336
      %8387 = vst.msk [vmem:[%s305 + $0x2e] sm:$0x3] %vm8380, %v8337
      %8388 = vst.msk [vmem:[%s305 + $0x2e] sm:$0xfc] %vm8377, %v8338
      %8389 = vst.msk [vmem:[%s305 + $0x36] sm:$0xff] %vm5524, %v8339
      %8390 = vst.msk [vmem:[%s305 + $0x3e] sm:$0x3] %vm8380, %v8340
      %8391 = vst.msk [vmem:[%s305 + $0x3e] sm:$0xfc] %vm8377, %v8341
      %8392 = vst.msk [vmem:[%s305 + $0x46] sm:$0xff] %vm5524, %v8342
      %8393 = vst.msk [vmem:[%s305 + $0x4e] sm:$0x3] %vm8380, %v8343
      %8394 = vst.msk [vmem:[%s305 + $0x4e] sm:$0xfc] %vm8377, %v8344
      %8395 = vst.msk [vmem:[%s305 + $0x56] sm:$0xff] %vm5524, %v8345
      %8396 = vst.msk [vmem:[%s305 + $0x5e] sm:$0x3] %vm8380, %v8346
      %8397 = vst.msk [vmem:[%s305 + $0x5e] sm:$0xfc] %vm8377, %v8347
      %8398 = vst.msk [vmem:[%s305 + $0x66] sm:$0xff] %vm5524, %v8348
      %8399 = vst.msk [vmem:[%s305 + $0x6e] sm:$0x3] %vm8380, %v8349
      %8400 = vst.msk [vmem:[%s305 + $0x6e] sm:$0xfc] %vm8377, %v8350
      %8401 = vst.msk [vmem:[%s305 + $0x76] sm:$0xff] %vm5524, %v8351
      %8402 = vst.msk [vmem:[%s305 + $0x7e] sm:$0x3] %vm8380, %v8352
      %8403 = vst.msk [vmem:[%s305 + $0x7e] sm:$0xfc] %vm8377, %v8353
      %8404 = vst.msk [vmem:[%s305 + $0x86] sm:$0xff] %vm5524, %v8354
      %8405 = vst.msk [vmem:[%s305 + $0x8e] sm:$0x3] %vm8380, %v8355
      %8406 = vst.msk [vmem:[%s305 + $0x8e] sm:$0xfc] %vm8377, %v8356
      %8407 = vst.msk [vmem:[%s305 + $0x96] sm:$0xff] %vm5524, %v8357
      %8408 = vst.msk [vmem:[%s305 + $0x9e] sm:$0x3] %vm8380, %v8358
      %8409 = vst.msk [vmem:[%s305 + $0x9e] sm:$0xfc] %vm8377, %v8359
      %8410 = vst.msk [vmem:[%s305 + $0xa6] sm:$0xff] %vm5524, %v8360
      %8411 = vst.msk [vmem:[%s305 + $0xae] sm:$0x3] %vm8380, %v8361
      %8412 = vst.msk [vmem:[%s305 + $0xae] sm:$0xfc] %vm8377, %v8362
      %8413 = vst.msk [vmem:[%s305 + $0xb6] sm:$0xff] %vm5524, %v8363
      %8414 = vst.msk [vmem:[%s305 + $0xbe] sm:$0x3] %vm8380, %v8364
      %8415 = vst.msk [vmem:[%s305 + $0xbe] sm:$0xfc] %vm8377, %v8365
      %8416 = vst.msk [vmem:[%s305 + $0xc6] sm:$0xff] %vm5524, %v8366
      %8417 = vst.msk [vmem:[%s305 + $0xce] sm:$0x3] %vm8380, %v8367
      %8418 = vst.msk [vmem:[%s305 + $0xce] sm:$0xfc] %vm8377, %v8368
      %8419 = vst.msk [vmem:[%s305 + $0xd6] sm:$0xff] %vm5524, %v8369
      %8420 = vst.msk [vmem:[%s305 + $0xde] sm:$0x3] %vm8380, %v8370
      %8421 = vst.msk [vmem:[%s305 + $0xde] sm:$0xfc] %vm8377, %v8371
      %8422 = vst.msk [vmem:[%s305 + $0xe6] sm:$0xff] %vm5524, %v8372
      %8423 = vst.msk [vmem:[%s305 + $0xee] sm:$0x3] %vm8380, %v8373
      %8424 = vst.msk [vmem:[%s305 + $0xee] sm:$0xfc] %vm8377, %v8374
      %8425 = vst.msk [vmem:[%s305 + $0xf6] sm:$0xff] %vm5524, %v8375
      %8426 = vst.msk [vmem:[%s305 + $0xfe] sm:$0x3] %vm8380, %v8376
      %p8427 = scmp.lt.s32.totalorder %s19, 1
      %s8428 = scalar_select %p8427, %s19, 1
      %s8429 = smul.addr %s8428, 32
      %s8430 = smul.addr %s8429, 8
      %s8431 = scalar_lea.vmem %s8, %s8430
      // Predicated region
      $region53: #{src_block_pallas.1} parent=51 // pred_check
        %p8432 = pneg %p210
      $region54: #{src_block_pallas.1} parent=51 // pred_check_branch
        %8434 = sbr.rel (%p8432) target = $region56
      $region55: #{src_block_pallas.1} parent=51 // pred_region
        _
      $region56: #{src_block_pallas.1} parent=51 // pred_fallthru
        _
    $region52: #{src_block_pallas.1} parent=5 // pred_fallthru
      _
    %p8435 = scmp.le.s32.totalorder 2, %s14
    // Predicated region
    $region57: #{src_block_pallas.1} parent=5 // pred_check
      %p8436 = pneg %p8435
    $region58: #{src_block_pallas.1} parent=5 // pred_check_branch
      %8438 = sbr.rel (%p8436) target = $region60
    $region59: #{src_block_pallas.1} parent=5 // pred_region
      %s8439 = ssub.s32 %s14, 2
      // Predicated region
      $region61: #{src_block_pallas.1} parent=59 // pred_check
        %p8440 = pneg %p216
      $region62: #{src_block_pallas.1} parent=59 // pred_check_branch
        %8442 = sbr.rel (%p8440) target = $region64
      $region63: #{src_block_pallas.1} parent=59 // pred_region
        %p8443 = scmp.lt.s32.totalorder %s20, 1
        %s8444 = scalar_select %p8443, %s20, 1
        %s8445 = smul.addr %s8444, 32
        %s8446 = smul.addr %s8445, 8
        %s8447 = scalar_lea.vmem %s8, %s8446
      $region64: #{src_block_pallas.1} parent=59 // pred_fallthru
        _
    $region60: #{src_block_pallas.1} parent=5 // pred_fallthru
      _
  $region6: #{src_block_pallas.1} parent=0 // loop_footer
    %s18 = sadd.s32 1, %s14
  $region7: #{src_block_pallas.1} parent=0 // loop_footer_branch
    %13 = sbr.rel target = $region3
  $region8: #{src_block_pallas.1} parent=0 // loop_exit
    _

</llo_original>
